<compile_context>
chip_gen: v5e
topology: v5e:2x2
jax: 0.10.0
libtpu: 0.0.40
codegen_flags: <defaults>
</compile_context>

<pallas_src>
import math

import jax
import jax.numpy as jnp
from jax.experimental import pallas as pl
from jax.experimental.pallas import tpu as pltpu

D_MODEL = 256          # fixed by nn.Embedding(200, 256)
N_HEADS = 8
D_HEAD = D_MODEL // N_HEADS
D_FF = 512
N_LAYERS = 2
EPS = 1e-5
NEG_INF = -1e9


# ----------------------------- in-kernel helpers -----------------------------

def _layernorm(x, g, b):
    """nn.LayerNorm over last dim; x: (M, D) f32, g/b: (1, D) f32."""
    mean = jnp.mean(x, axis=-1, keepdims=True)
    xc = x - mean
    var = jnp.mean(xc * xc, axis=-1, keepdims=True)
    return xc * jax.lax.rsqrt(var + EPS) * g + b


def _split_heads(slab, offset):
    """(L, *) slab -> (H, L, dk) by stacking static 32-lane column slices."""
    return jnp.stack(
        [slab[:, offset + h * D_HEAD: offset + (h + 1) * D_HEAD]
         for h in range(N_HEADS)],
        axis=0)


def _mha(q_slab, k_slab, v_slab, wo_bf, bo, keep):
    """Head-batched scaled-dot attention + fused output projection.

    q_slab: (Lq, D) f32, k_slab/v_slab: (Lk, D) f32 (head-major lanes),
    wo_bf: (D, D) bf16 head-major rows, bo: (1, D) f32, keep: (Lq, Lk) bool|None.
    """
    q = _split_heads(q_slab, 0)                           # (H, Lq, dk)
    k = _split_heads(k_slab, 0)                           # (H, Lk, dk)
    v = _split_heads(v_slab, 0)                           # (H, Lk, dk)

    s = jnp.einsum('hqd,hkd->hqk', q, k,
                   preferred_element_type=jnp.float32) * (1.0 / math.sqrt(D_HEAD))
    if keep is not None:
        s = jnp.where(keep[None, :, :], s, NEG_INF)
    s = s - jnp.max(s, axis=-1, keepdims=True)            # one XLU reduction over slab
    p = jnp.exp(s)
    p = p * pl.reciprocal(jnp.sum(p, axis=-1, keepdims=True), approx=True)

    ctx = jnp.einsum('hqk,hkd->hqd', p, v,
                     preferred_element_type=jnp.float32)  # (H, Lq, dk)
    ctx_slab = jnp.concatenate([ctx[h] for h in range(N_HEADS)], axis=-1)  # (Lq, D)
    out = jnp.dot(ctx_slab.astype(jnp.bfloat16), wo_bf,
                  preferred_element_type=jnp.float32)     # single K=256 MXU pass
    return out + bo


# ------------------------------- fused kernel --------------------------------

def _decoder_kernel(x_ref, mem_ref, pos_ref,
                    sa_g_ref, sa_b_ref, sa_wqkv_ref, sa_bqkv_ref, sa_wo_ref, sa_bo_ref,
                    ca_g_ref, ca_b_ref, ca_wq_ref, ca_bq_ref, ca_wkv_ref, ca_bkv_ref,
                    ca_wo_ref, ca_bo_ref,
                    ff_g_ref, ff_b_ref, ff_w1_ref, ff_b1_ref, ff_w2_ref, ff_b2_ref,
                    fn_g_ref, fn_b_ref,
                    o_ref):
    """Whole decoder forward for one batch element (grid=(B,))."""
    x = x_ref[0] + pos_ref[...]                           # (L, D): fused positional add
    mem_bf = mem_ref[0].astype(jnp.bfloat16)              # (Lk, D): cast once, reused
    L = x.shape[0]

    row = jax.lax.broadcasted_iota(jnp.int32, (L, L), 0)
    col = jax.lax.broadcasted_iota(jnp.int32, (L, L), 1)
    keep = row >= col                                     # causal ("subsequent") mask

    for layer in range(N_LAYERS):
        # ---- SublayerConnection 0: x + SelfAttn(LN(x)) ----
        n = _layernorm(x, sa_g_ref[layer], sa_b_ref[layer]).astype(jnp.bfloat16)
        qkv = jnp.dot(n, sa_wqkv_ref[layer],
                      preferred_element_type=jnp.float32) + sa_bqkv_ref[layer]
        attn = _mha(qkv[:, 0:D_MODEL],
                    qkv[:, D_MODEL:2 * D_MODEL],
                    qkv[:, 2 * D_MODEL:3 * D_MODEL],
                    sa_wo_ref[layer], sa_bo_ref[layer], keep)
        x = x + attn

        # ---- SublayerConnection 1: x + SrcAttn(LN(x), memory) ----
        n = _layernorm(x, ca_g_ref[layer], ca_b_ref[layer]).astype(jnp.bfloat16)
        q_slab = jnp.dot(n, ca_wq_ref[layer],
                         preferred_element_type=jnp.float32) + ca_bq_ref[layer]
        kv = jnp.dot(mem_bf, ca_wkv_ref[layer],
                     preferred_element_type=jnp.float32) + ca_bkv_ref[layer]
        attn = _mha(q_slab,
                    kv[:, 0:D_MODEL],
                    kv[:, D_MODEL:2 * D_MODEL],
                    ca_wo_ref[layer], ca_bo_ref[layer], None)
        x = x + attn

        # ---- SublayerConnection 2: x + FFN(LN(x)) ----
        n = _layernorm(x, ff_g_ref[layer], ff_b_ref[layer]).astype(jnp.bfloat16)
        h = jnp.dot(n, ff_w1_ref[layer],
                    preferred_element_type=jnp.float32) + ff_b1_ref[layer]
        h = jnp.maximum(h, 0.0).astype(jnp.bfloat16)
        y = jnp.dot(h, ff_w2_ref[layer],
                    preferred_element_type=jnp.float32) + ff_b2_ref[layer]
        x = x + y

    # final nn.LayerNorm fused into the epilogue (lane-dense (L, 256) store)
    o_ref[0] = _layernorm(x, fn_g_ref[...], fn_b_ref[...])


# ------------------------------- host wrapper ---------------------------------

def decoder_forward(x, memory, params):
    B, L, D = x.shape
    Lk = memory.shape[1]
    pos = params["count_weight"][:L]                      # (L, D) positional "count" embed
    NL = N_LAYERS

    def rep(shape):
        """Grid-constant BlockSpec: operand DMA'd once, resident across the batch grid."""
        zeros = (0,) * len(shape)
        return pl.BlockSpec(shape, lambda b: zeros)

    in_specs = [
        pl.BlockSpec((1, L, D), lambda b: (b, 0, 0)),     # x
        pl.BlockSpec((1, Lk, D), lambda b: (b, 0, 0)),    # memory
        rep((L, D)),                                      # positional embedding
        rep((NL, 1, D)), rep((NL, 1, D)),                 # self-attn LN g, b
        rep((NL, D, 3 * D)), rep((NL, 1, 3 * D)),         # self-attn Wqkv (bf16), bqkv
        rep((NL, D, D)), rep((NL, 1, D)),                 # self-attn Wo (bf16), bo
        rep((NL, 1, D)), rep((NL, 1, D)),                 # cross-attn LN g, b
        rep((NL, D, D)), rep((NL, 1, D)),                 # cross-attn Wq (bf16), bq
        rep((NL, D, 2 * D)), rep((NL, 1, 2 * D)),         # cross-attn Wkv (bf16), bkv
        rep((NL, D, D)), rep((NL, 1, D)),                 # cross-attn Wo (bf16), bo
        rep((NL, 1, D)), rep((NL, 1, D)),                 # FFN LN g, b
        rep((NL, D, D_FF)), rep((NL, 1, D_FF)),           # FFN W1 (bf16), b1
        rep((NL, D_FF, D)), rep((NL, 1, D)),              # FFN W2 (bf16), b2
        rep((1, D)), rep((1, D)),                         # final LN g, b
    ]

    return pl.pallas_call(
        _decoder_kernel,
        out_shape=jax.ShapeDtypeStruct((B, L, D), jnp.float32),
        grid=(B,),
        in_specs=in_specs,
        out_specs=pl.BlockSpec((1, L, D), lambda b: (b, 0, 0)),
        input_output_aliases={0: 0},                      # reuse x's HBM buffer for out
        compiler_params=pltpu.CompilerParams(
            # At B=2 splitting across v7x's 2 TCs duplicates the resident weight
            # DMA for one grid step each -> keep sequential; flip to ("parallel",)
            # for larger batch.
            dimension_semantics=("arbitrary",),
            vmem_limit_bytes=32 * 1024 * 1024),
    )(x, memory, pos,
      params["sa_g"], params["sa_b"], params["sa_wqkv"], params["sa_bqkv"],
      params["sa_wo"], params["sa_bo"],
      params["ca_g"], params["ca_b"], params["ca_wq"], params["ca_bq"],
      params["ca_wkv"], params["ca_bkv"], params["ca_wo"], params["ca_bo"],
      params["ff_g"], params["ff_b"], params["ff_w1"], params["ff_b1"],
      params["ff_w2"], params["ff_b2"],
      params["fn_g"], params["fn_b"])


# --------------------------- deterministic parameters --------------------------
# Weight packing (if loading a real PyTorch checkpoint):
#   Wqkv columns = [q_h0..q_h7 | k_h0..k_h7 | v_h0..v_h7] (head-major, dk=32 each),
#   Wkv columns  = [k_h0..k_h7 | v_h0..v_h7],
#   Wo rows      = head-major [h0 dk | h1 dk | ...]; a packing mismatch is silent.

def init_params(key):
    def nrm_bf16(k, shape, scale=0.02):
        return (scale * jax.random.normal(k, shape, dtype=jnp.float32)).astype(jnp.bfloat16)

    keys = jax.random.split(key, 16)
    it = iter(keys)
    NL, f32 = N_LAYERS, jnp.float32
    return {
        "count_weight": jax.random.normal(next(it), (200, D_MODEL), dtype=f32),
        "sa_g": jnp.ones((NL, 1, D_MODEL), f32),
        "sa_b": jnp.zeros((NL, 1, D_MODEL), f32),
        "sa_wqkv": nrm_bf16(next(it), (NL, D_MODEL, 3 * D_MODEL)),
        "sa_bqkv": jnp.zeros((NL, 1, 3 * D_MODEL), f32),
        "sa_wo": nrm_bf16(next(it), (NL, D_MODEL, D_MODEL)),
        "sa_bo": jnp.zeros((NL, 1, D_MODEL), f32),
        "ca_g": jnp.ones((NL, 1, D_MODEL), f32),
        "ca_b": jnp.zeros((NL, 1, D_MODEL), f32),
        "ca_wq": nrm_bf16(next(it), (NL, D_MODEL, D_MODEL)),
        "ca_bq": jnp.zeros((NL, 1, D_MODEL), f32),
        "ca_wkv": nrm_bf16(next(it), (NL, D_MODEL, 2 * D_MODEL)),
        "ca_bkv": jnp.zeros((NL, 1, 2 * D_MODEL), f32),
        "ca_wo": nrm_bf16(next(it), (NL, D_MODEL, D_MODEL)),
        "ca_bo": jnp.zeros((NL, 1, D_MODEL), f32),
        "ff_g": jnp.ones((NL, 1, D_MODEL), f32),
        "ff_b": jnp.zeros((NL, 1, D_MODEL), f32),
        "ff_w1": nrm_bf16(next(it), (NL, D_MODEL, D_FF)),
        "ff_b1": jnp.zeros((NL, 1, D_FF), f32),
        "ff_w2": nrm_bf16(next(it), (NL, D_FF, D_MODEL)),
        "ff_b2": jnp.zeros((NL, 1, D_MODEL), f32),
        "fn_g": jnp.ones((1, D_MODEL), f32),
        "fn_b": jnp.zeros((1, D_MODEL), f32),
    }


# ------------------------------------ main -------------------------------------

if __name__ == "__main__":
    B, L_TGT, L_SRC = 2, 8, 16

    key = jax.random.PRNGKey(0)
    k_p, k_x, k_m = jax.random.split(key, 3)

    params = init_params(k_p)
    x = jax.random.normal(k_x, (B, L_TGT, D_MODEL), dtype=jnp.float32)
    memory = jax.random.normal(k_m, (B, L_SRC, D_MODEL), dtype=jnp.float32)

    fwd = jax.jit(decoder_forward)
    out = jax.block_until_ready(fwd(x, memory, params))

    assert out.shape == (B, L_TGT, D_MODEL)
    assert bool(jnp.all(jnp.isfinite(out)))
    print("KERNEL_OK")
</pallas_src>

<mosaic_0001>
module attributes {stable_mosaic.version = 11 : i64} {
  func.func @_decoder_kernel(%arg0: i32, %arg1: memref<1x8x256xf32, #tpu.memory_space<vmem>>, %arg2: memref<1x16x256xf32, #tpu.memory_space<vmem>>, %arg3: memref<8x256xf32, #tpu.memory_space<vmem>>, %arg4: memref<2x1x256xf32, #tpu.memory_space<vmem>>, %arg5: memref<2x1x256xf32, #tpu.memory_space<vmem>>, %arg6: memref<2x256x768xbf16, #tpu.memory_space<vmem>>, %arg7: memref<2x1x768xf32, #tpu.memory_space<vmem>>, %arg8: memref<2x256x256xbf16, #tpu.memory_space<vmem>>, %arg9: memref<2x1x256xf32, #tpu.memory_space<vmem>>, %arg10: memref<2x1x256xf32, #tpu.memory_space<vmem>>, %arg11: memref<2x1x256xf32, #tpu.memory_space<vmem>>, %arg12: memref<2x256x256xbf16, #tpu.memory_space<vmem>>, %arg13: memref<2x1x256xf32, #tpu.memory_space<vmem>>, %arg14: memref<2x256x512xbf16, #tpu.memory_space<vmem>>, %arg15: memref<2x1x512xf32, #tpu.memory_space<vmem>>, %arg16: memref<2x256x256xbf16, #tpu.memory_space<vmem>>, %arg17: memref<2x1x256xf32, #tpu.memory_space<vmem>>, %arg18: memref<2x1x256xf32, #tpu.memory_space<vmem>>, %arg19: memref<2x1x256xf32, #tpu.memory_space<vmem>>, %arg20: memref<2x256x512xbf16, #tpu.memory_space<vmem>>, %arg21: memref<2x1x512xf32, #tpu.memory_space<vmem>>, %arg22: memref<2x512x256xbf16, #tpu.memory_space<vmem>>, %arg23: memref<2x1x256xf32, #tpu.memory_space<vmem>>, %arg24: memref<1x256xf32, #tpu.memory_space<vmem>>, %arg25: memref<1x256xf32, #tpu.memory_space<vmem>>, %arg26: memref<1x8x256xf32, #tpu.memory_space<vmem>>) attributes {dimension_semantics = [#tpu.dimension_semantics<arbitrary>], iteration_bounds = array<i64: 2>, scalar_prefetch = 0 : i64, scratch_operands = 0 : i64, tpu.core_type = #tpu.core_type<tc>, window_params = [{transform_indices = @transform_0, window_bounds = array<i64: 1, 8, 256>}, {transform_indices = @transform_1, window_bounds = array<i64: 1, 16, 256>}, {pipeline_mode = #tpu.pipeline_mode<synchronous>, transform_indices = @transform_2, window_bounds = array<i64: 8, 256>}, {pipeline_mode = #tpu.pipeline_mode<synchronous>, transform_indices = @transform_3, window_bounds = array<i64: 2, 1, 256>}, {pipeline_mode = #tpu.pipeline_mode<synchronous>, transform_indices = @transform_4, window_bounds = array<i64: 2, 1, 256>}, {pipeline_mode = #tpu.pipeline_mode<synchronous>, transform_indices = @transform_5, window_bounds = array<i64: 2, 256, 768>}, {pipeline_mode = #tpu.pipeline_mode<synchronous>, transform_indices = @transform_6, window_bounds = array<i64: 2, 1, 768>}, {pipeline_mode = #tpu.pipeline_mode<synchronous>, transform_indices = @transform_7, window_bounds = array<i64: 2, 256, 256>}, {pipeline_mode = #tpu.pipeline_mode<synchronous>, transform_indices = @transform_8, window_bounds = array<i64: 2, 1, 256>}, {pipeline_mode = #tpu.pipeline_mode<synchronous>, transform_indices = @transform_9, window_bounds = array<i64: 2, 1, 256>}, {pipeline_mode = #tpu.pipeline_mode<synchronous>, transform_indices = @transform_10, window_bounds = array<i64: 2, 1, 256>}, {pipeline_mode = #tpu.pipeline_mode<synchronous>, transform_indices = @transform_11, window_bounds = array<i64: 2, 256, 256>}, {pipeline_mode = #tpu.pipeline_mode<synchronous>, transform_indices = @transform_12, window_bounds = array<i64: 2, 1, 256>}, {pipeline_mode = #tpu.pipeline_mode<synchronous>, transform_indices = @transform_13, window_bounds = array<i64: 2, 256, 512>}, {pipeline_mode = #tpu.pipeline_mode<synchronous>, transform_indices = @transform_14, window_bounds = array<i64: 2, 1, 512>}, {pipeline_mode = #tpu.pipeline_mode<synchronous>, transform_indices = @transform_15, window_bounds = array<i64: 2, 256, 256>}, {pipeline_mode = #tpu.pipeline_mode<synchronous>, transform_indices = @transform_16, window_bounds = array<i64: 2, 1, 256>}, {pipeline_mode = #tpu.pipeline_mode<synchronous>, transform_indices = @transform_17, window_bounds = array<i64: 2, 1, 256>}, {pipeline_mode = #tpu.pipeline_mode<synchronous>, transform_indices = @transform_18, window_bounds = array<i64: 2, 1, 256>}, {pipeline_mode = #tpu.pipeline_mode<synchronous>, transform_indices = @transform_19, window_bounds = array<i64: 2, 256, 512>}, {pipeline_mode = #tpu.pipeline_mode<synchronous>, transform_indices = @transform_20, window_bounds = array<i64: 2, 1, 512>}, {pipeline_mode = #tpu.pipeline_mode<synchronous>, transform_indices = @transform_21, window_bounds = array<i64: 2, 512, 256>}, {pipeline_mode = #tpu.pipeline_mode<synchronous>, transform_indices = @transform_22, window_bounds = array<i64: 2, 1, 256>}, {pipeline_mode = #tpu.pipeline_mode<synchronous>, transform_indices = @transform_23, window_bounds = array<i64: 1, 256>}, {pipeline_mode = #tpu.pipeline_mode<synchronous>, transform_indices = @transform_24, window_bounds = array<i64: 1, 256>}, {transform_indices = @transform_25, window_bounds = array<i64: 1, 8, 256>}]} {
    %c0 = arith.constant 0 : index
    %c0_0 = arith.constant 0 : index
    %c0_1 = arith.constant 0 : index
    %0 = vector.load %arg1[%c0, %c0_0, %c0_1] : memref<1x8x256xf32, #tpu.memory_space<vmem>>, vector<1x8x256xf32>
    %1 = vector.shape_cast %0 : vector<1x8x256xf32> to vector<8x256xf32>
    %c0_2 = arith.constant 0 : index
    %c0_3 = arith.constant 0 : index
    %2 = vector.load %arg3[%c0_2, %c0_3] : memref<8x256xf32, #tpu.memory_space<vmem>>, vector<8x256xf32>
    %3 = arith.addf %1, %2 : vector<8x256xf32>
    %c0_4 = arith.constant 0 : index
    %c0_5 = arith.constant 0 : index
    %c0_6 = arith.constant 0 : index
    %4 = vector.load %arg2[%c0_4, %c0_5, %c0_6] : memref<1x16x256xf32, #tpu.memory_space<vmem>>, vector<1x16x256xf32>
    %5 = vector.shape_cast %4 : vector<1x16x256xf32> to vector<16x256xf32>
    %6 = arith.truncf %5 : vector<16x256xf32> to vector<16x256xbf16>
    %7 = tpu.iota {dimensions = array<i32: 0>} : vector<8x8xi32>
    %8 = tpu.iota {dimensions = array<i32: 1>} : vector<8x8xi32>
    %9 = arith.cmpi sge, %7, %8 : vector<8x8xi32>
    %c0_7 = arith.constant 0 : index
    %c0_8 = arith.constant 0 : index
    %c0_9 = arith.constant 0 : index
    %10 = vector.load %arg4[%c0_7, %c0_8, %c0_9] : memref<2x1x256xf32, #tpu.memory_space<vmem>>, vector<1x1x256xf32>
    %11 = vector.shape_cast %10 : vector<1x1x256xf32> to vector<1x256xf32>
    %c0_10 = arith.constant 0 : index
    %c0_11 = arith.constant 0 : index
    %c0_12 = arith.constant 0 : index
    %12 = vector.load %arg5[%c0_10, %c0_11, %c0_12] : memref<2x1x256xf32, #tpu.memory_space<vmem>>, vector<1x1x256xf32>
    %13 = vector.shape_cast %12 : vector<1x1x256xf32> to vector<1x256xf32>
    %cst = arith.constant dense<0.000000e+00> : vector<8xf32>
    %14 = vector.multi_reduction <add>, %3, %cst [1] : vector<8x256xf32> to vector<8xf32>
    %15 = vector.shape_cast %14 : vector<8xf32> to vector<8x1xf32>
    %cst_13 = arith.constant 2.560000e+02 : f32
    %16 = vector.broadcast %cst_13 : f32 to vector<8x1xf32>
    %17 = arith.divf %15, %16 : vector<8x1xf32>
    %18 = vector.broadcast %17 : vector<8x1xf32> to vector<8x256xf32>
    %19 = arith.subf %3, %18 : vector<8x256xf32>
    %20 = arith.mulf %19, %19 : vector<8x256xf32>
    %cst_14 = arith.constant dense<0.000000e+00> : vector<8xf32>
    %21 = vector.multi_reduction <add>, %20, %cst_14 [1] : vector<8x256xf32> to vector<8xf32>
    %22 = vector.shape_cast %21 : vector<8xf32> to vector<8x1xf32>
    %cst_15 = arith.constant 2.560000e+02 : f32
    %23 = vector.broadcast %cst_15 : f32 to vector<8x1xf32>
    %24 = arith.divf %22, %23 : vector<8x1xf32>
    %cst_16 = arith.constant 9.99999974E-6 : f32
    %25 = vector.broadcast %cst_16 : f32 to vector<8x1xf32>
    %26 = arith.addf %24, %25 : vector<8x1xf32>
    %27 = math.rsqrt %26 : vector<8x1xf32>
    %28 = vector.broadcast %27 : vector<8x1xf32> to vector<8x256xf32>
    %29 = arith.mulf %19, %28 : vector<8x256xf32>
    %30 = vector.broadcast %11 : vector<1x256xf32> to vector<8x256xf32>
    %31 = arith.mulf %29, %30 : vector<8x256xf32>
    %32 = vector.broadcast %13 : vector<1x256xf32> to vector<8x256xf32>
    %33 = arith.addf %31, %32 : vector<8x256xf32>
    %34 = arith.truncf %33 : vector<8x256xf32> to vector<8x256xbf16>
    %c0_17 = arith.constant 0 : index
    %c0_18 = arith.constant 0 : index
    %c0_19 = arith.constant 0 : index
    %35 = vector.load %arg6[%c0_17, %c0_18, %c0_19] : memref<2x256x768xbf16, #tpu.memory_space<vmem>>, vector<1x256x768xbf16>
    %36 = vector.shape_cast %35 : vector<1x256x768xbf16> to vector<256x768xbf16>
    %cst_20 = arith.constant dense<0.000000e+00> : vector<8x768xf32>
    %37 = tpu.matmul %34, %36, %cst_20 {dimension_numbers = #tpu.dot_dimension_numbers<[1], [0], [0], [1], [0, 0, 1, 1], [], []>} : vector<8x256xbf16>, vector<256x768xbf16>, vector<8x768xf32> -> vector<8x768xf32>
    %c0_21 = arith.constant 0 : index
    %c0_22 = arith.constant 0 : index
    %c0_23 = arith.constant 0 : index
    %38 = vector.load %arg7[%c0_21, %c0_22, %c0_23] : memref<2x1x768xf32, #tpu.memory_space<vmem>>, vector<1x1x768xf32>
    %39 = vector.shape_cast %38 : vector<1x1x768xf32> to vector<1x768xf32>
    %40 = vector.broadcast %39 : vector<1x768xf32> to vector<8x768xf32>
    %41 = arith.addf %37, %40 : vector<8x768xf32>
    %42 = vector.extract_strided_slice %41 {offsets = [0, 0], sizes = [8, 256], strides = [1, 1]} : vector<8x768xf32> to vector<8x256xf32>
    %43 = vector.extract_strided_slice %41 {offsets = [0, 256], sizes = [8, 256], strides = [1, 1]} : vector<8x768xf32> to vector<8x256xf32>
    %44 = vector.extract_strided_slice %41 {offsets = [0, 512], sizes = [8, 256], strides = [1, 1]} : vector<8x768xf32> to vector<8x256xf32>
    %c0_24 = arith.constant 0 : index
    %c0_25 = arith.constant 0 : index
    %c0_26 = arith.constant 0 : index
    %45 = vector.load %arg8[%c0_24, %c0_25, %c0_26] : memref<2x256x256xbf16, #tpu.memory_space<vmem>>, vector<1x256x256xbf16>
    %46 = vector.shape_cast %45 : vector<1x256x256xbf16> to vector<256x256xbf16>
    %c0_27 = arith.constant 0 : index
    %c0_28 = arith.constant 0 : index
    %c0_29 = arith.constant 0 : index
    %47 = vector.load %arg9[%c0_27, %c0_28, %c0_29] : memref<2x1x256xf32, #tpu.memory_space<vmem>>, vector<1x1x256xf32>
    %48 = vector.shape_cast %47 : vector<1x1x256xf32> to vector<1x256xf32>
    %49 = vector.extract_strided_slice %42 {offsets = [0, 0], sizes = [8, 32], strides = [1, 1]} : vector<8x256xf32> to vector<8x32xf32>
    %50 = vector.extract_strided_slice %42 {offsets = [0, 32], sizes = [8, 32], strides = [1, 1]} : vector<8x256xf32> to vector<8x32xf32>
    %51 = vector.extract_strided_slice %42 {offsets = [0, 64], sizes = [8, 32], strides = [1, 1]} : vector<8x256xf32> to vector<8x32xf32>
    %52 = vector.extract_strided_slice %42 {offsets = [0, 96], sizes = [8, 32], strides = [1, 1]} : vector<8x256xf32> to vector<8x32xf32>
    %53 = vector.extract_strided_slice %42 {offsets = [0, 128], sizes = [8, 32], strides = [1, 1]} : vector<8x256xf32> to vector<8x32xf32>
    %54 = vector.extract_strided_slice %42 {offsets = [0, 160], sizes = [8, 32], strides = [1, 1]} : vector<8x256xf32> to vector<8x32xf32>
    %55 = vector.extract_strided_slice %42 {offsets = [0, 192], sizes = [8, 32], strides = [1, 1]} : vector<8x256xf32> to vector<8x32xf32>
    %56 = vector.extract_strided_slice %42 {offsets = [0, 224], sizes = [8, 32], strides = [1, 1]} : vector<8x256xf32> to vector<8x32xf32>
    %57 = vector.shape_cast %49 : vector<8x32xf32> to vector<1x8x32xf32>
    %58 = vector.shape_cast %50 : vector<8x32xf32> to vector<1x8x32xf32>
    %59 = vector.shape_cast %51 : vector<8x32xf32> to vector<1x8x32xf32>
    %60 = vector.shape_cast %52 : vector<8x32xf32> to vector<1x8x32xf32>
    %61 = vector.shape_cast %53 : vector<8x32xf32> to vector<1x8x32xf32>
    %62 = vector.shape_cast %54 : vector<8x32xf32> to vector<1x8x32xf32>
    %63 = vector.shape_cast %55 : vector<8x32xf32> to vector<1x8x32xf32>
    %64 = vector.shape_cast %56 : vector<8x32xf32> to vector<1x8x32xf32>
    %65 = tpu.concatenate %57, %58, %59, %60, %61, %62, %63, %64 in 0 : vector<1x8x32xf32>, vector<1x8x32xf32>, vector<1x8x32xf32>, vector<1x8x32xf32>, vector<1x8x32xf32>, vector<1x8x32xf32>, vector<1x8x32xf32>, vector<1x8x32xf32> -> vector<8x8x32xf32>
    %66 = vector.extract_strided_slice %43 {offsets = [0, 0], sizes = [8, 32], strides = [1, 1]} : vector<8x256xf32> to vector<8x32xf32>
    %67 = vector.extract_strided_slice %43 {offsets = [0, 32], sizes = [8, 32], strides = [1, 1]} : vector<8x256xf32> to vector<8x32xf32>
    %68 = vector.extract_strided_slice %43 {offsets = [0, 64], sizes = [8, 32], strides = [1, 1]} : vector<8x256xf32> to vector<8x32xf32>
    %69 = vector.extract_strided_slice %43 {offsets = [0, 96], sizes = [8, 32], strides = [1, 1]} : vector<8x256xf32> to vector<8x32xf32>
    %70 = vector.extract_strided_slice %43 {offsets = [0, 128], sizes = [8, 32], strides = [1, 1]} : vector<8x256xf32> to vector<8x32xf32>
    %71 = vector.extract_strided_slice %43 {offsets = [0, 160], sizes = [8, 32], strides = [1, 1]} : vector<8x256xf32> to vector<8x32xf32>
    %72 = vector.extract_strided_slice %43 {offsets = [0, 192], sizes = [8, 32], strides = [1, 1]} : vector<8x256xf32> to vector<8x32xf32>
    %73 = vector.extract_strided_slice %43 {offsets = [0, 224], sizes = [8, 32], strides = [1, 1]} : vector<8x256xf32> to vector<8x32xf32>
    %74 = vector.shape_cast %66 : vector<8x32xf32> to vector<1x8x32xf32>
    %75 = vector.shape_cast %67 : vector<8x32xf32> to vector<1x8x32xf32>
    %76 = vector.shape_cast %68 : vector<8x32xf32> to vector<1x8x32xf32>
    %77 = vector.shape_cast %69 : vector<8x32xf32> to vector<1x8x32xf32>
    %78 = vector.shape_cast %70 : vector<8x32xf32> to vector<1x8x32xf32>
    %79 = vector.shape_cast %71 : vector<8x32xf32> to vector<1x8x32xf32>
    %80 = vector.shape_cast %72 : vector<8x32xf32> to vector<1x8x32xf32>
    %81 = vector.shape_cast %73 : vector<8x32xf32> to vector<1x8x32xf32>
    %82 = tpu.concatenate %74, %75, %76, %77, %78, %79, %80, %81 in 0 : vector<1x8x32xf32>, vector<1x8x32xf32>, vector<1x8x32xf32>, vector<1x8x32xf32>, vector<1x8x32xf32>, vector<1x8x32xf32>, vector<1x8x32xf32>, vector<1x8x32xf32> -> vector<8x8x32xf32>
    %83 = vector.extract_strided_slice %44 {offsets = [0, 0], sizes = [8, 32], strides = [1, 1]} : vector<8x256xf32> to vector<8x32xf32>
    %84 = vector.extract_strided_slice %44 {offsets = [0, 32], sizes = [8, 32], strides = [1, 1]} : vector<8x256xf32> to vector<8x32xf32>
    %85 = vector.extract_strided_slice %44 {offsets = [0, 64], sizes = [8, 32], strides = [1, 1]} : vector<8x256xf32> to vector<8x32xf32>
    %86 = vector.extract_strided_slice %44 {offsets = [0, 96], sizes = [8, 32], strides = [1, 1]} : vector<8x256xf32> to vector<8x32xf32>
    %87 = vector.extract_strided_slice %44 {offsets = [0, 128], sizes = [8, 32], strides = [1, 1]} : vector<8x256xf32> to vector<8x32xf32>
    %88 = vector.extract_strided_slice %44 {offsets = [0, 160], sizes = [8, 32], strides = [1, 1]} : vector<8x256xf32> to vector<8x32xf32>
    %89 = vector.extract_strided_slice %44 {offsets = [0, 192], sizes = [8, 32], strides = [1, 1]} : vector<8x256xf32> to vector<8x32xf32>
    %90 = vector.extract_strided_slice %44 {offsets = [0, 224], sizes = [8, 32], strides = [1, 1]} : vector<8x256xf32> to vector<8x32xf32>
    %91 = vector.shape_cast %83 : vector<8x32xf32> to vector<1x8x32xf32>
    %92 = vector.shape_cast %84 : vector<8x32xf32> to vector<1x8x32xf32>
    %93 = vector.shape_cast %85 : vector<8x32xf32> to vector<1x8x32xf32>
    %94 = vector.shape_cast %86 : vector<8x32xf32> to vector<1x8x32xf32>
    %95 = vector.shape_cast %87 : vector<8x32xf32> to vector<1x8x32xf32>
    %96 = vector.shape_cast %88 : vector<8x32xf32> to vector<1x8x32xf32>
    %97 = vector.shape_cast %89 : vector<8x32xf32> to vector<1x8x32xf32>
    %98 = vector.shape_cast %90 : vector<8x32xf32> to vector<1x8x32xf32>
    %99 = tpu.concatenate %91, %92, %93, %94, %95, %96, %97, %98 in 0 : vector<1x8x32xf32>, vector<1x8x32xf32>, vector<1x8x32xf32>, vector<1x8x32xf32>, vector<1x8x32xf32>, vector<1x8x32xf32>, vector<1x8x32xf32>, vector<1x8x32xf32> -> vector<8x8x32xf32>
    "tpu.trace_start"() <{level = 10 : i32, message = "hqd,hkd->hqk"}> : () -> ()
    %cst_30 = arith.constant dense<0.000000e+00> : vector<8x8x8xf32>
    %100 = tpu.matmul %65, %82, %cst_30 {dimension_numbers = #tpu.dot_dimension_numbers<[2], [2], [1], [1], [0, 0, 0, 1, 1, 1], [0], [0]>} : vector<8x8x32xf32>, vector<8x8x32xf32>, vector<8x8x8xf32> -> vector<8x8x8xf32>
    "tpu.trace_stop"() : () -> ()
    %cst_31 = arith.constant 0.176776692 : f32
    %101 = vector.broadcast %cst_31 : f32 to vector<8x8x8xf32>
    %102 = arith.mulf %100, %101 : vector<8x8x8xf32>
    %103 = vector.shape_cast %9 : vector<8x8xi1> to vector<1x8x8xi1>
    %cst_32 = arith.constant -1.000000e+09 : f32
    %104 = vector.shape_cast %103 : vector<1x8x8xi1> to vector<1x8x8xi1>
    %105 = vector.broadcast %104 : vector<1x8x8xi1> to vector<8x8x8xi1>
    %106 = vector.broadcast %cst_32 : f32 to vector<8x8x8xf32>
    %107 = arith.select %105, %102, %106 : vector<8x8x8xi1>, vector<8x8x8xf32>
    %cst_33 = arith.constant dense<0xFF800000> : vector<8x8xf32>
    %108 = vector.multi_reduction <maximumf>, %107, %cst_33 [2] : vector<8x8x8xf32> to vector<8x8xf32>
    %109 = vector.shape_cast %108 : vector<8x8xf32> to vector<8x8x1xf32>
    %110 = vector.broadcast %109 : vector<8x8x1xf32> to vector<8x8x8xf32>
    %111 = arith.subf %107, %110 : vector<8x8x8xf32>
    %112 = math.exp %111 : vector<8x8x8xf32>
    %cst_34 = arith.constant dense<0.000000e+00> : vector<8x8xf32>
    %113 = vector.multi_reduction <add>, %112, %cst_34 [2] : vector<8x8x8xf32> to vector<8x8xf32>
    %114 = vector.shape_cast %113 : vector<8x8xf32> to vector<8x8x1xf32>
    %115 = tpu.reciprocal %114 {approx = true} : vector<8x8x1xf32> -> vector<8x8x1xf32>
    %116 = vector.broadcast %115 : vector<8x8x1xf32> to vector<8x8x8xf32>
    %117 = arith.mulf %112, %116 : vector<8x8x8xf32>
    "tpu.trace_start"() <{level = 10 : i32, message = "hqk,hkd->hqd"}> : () -> ()
    %cst_35 = arith.constant dense<0.000000e+00> : vector<8x8x32xf32>
    %118 = tpu.matmul %117, %99, %cst_35 {dimension_numbers = #tpu.dot_dimension_numbers<[2], [1], [1], [2], [0, 0, 0, 1, 1, 2], [0], [0]>} : vector<8x8x8xf32>, vector<8x8x32xf32>, vector<8x8x32xf32> -> vector<8x8x32xf32>
    "tpu.trace_stop"() : () -> ()
    %119 = vector.extract_strided_slice %118 {offsets = [0, 0, 0], sizes = [1, 8, 32], strides = [1, 1, 1]} : vector<8x8x32xf32> to vector<1x8x32xf32>
    %120 = vector.shape_cast %119 : vector<1x8x32xf32> to vector<8x32xf32>
    %121 = vector.extract_strided_slice %118 {offsets = [1, 0, 0], sizes = [1, 8, 32], strides = [1, 1, 1]} : vector<8x8x32xf32> to vector<1x8x32xf32>
    %122 = vector.shape_cast %121 : vector<1x8x32xf32> to vector<8x32xf32>
    %123 = vector.extract_strided_slice %118 {offsets = [2, 0, 0], sizes = [1, 8, 32], strides = [1, 1, 1]} : vector<8x8x32xf32> to vector<1x8x32xf32>
    %124 = vector.shape_cast %123 : vector<1x8x32xf32> to vector<8x32xf32>
    %125 = vector.extract_strided_slice %118 {offsets = [3, 0, 0], sizes = [1, 8, 32], strides = [1, 1, 1]} : vector<8x8x32xf32> to vector<1x8x32xf32>
    %126 = vector.shape_cast %125 : vector<1x8x32xf32> to vector<8x32xf32>
    %127 = vector.extract_strided_slice %118 {offsets = [4, 0, 0], sizes = [1, 8, 32], strides = [1, 1, 1]} : vector<8x8x32xf32> to vector<1x8x32xf32>
    %128 = vector.shape_cast %127 : vector<1x8x32xf32> to vector<8x32xf32>
    %129 = vector.extract_strided_slice %118 {offsets = [5, 0, 0], sizes = [1, 8, 32], strides = [1, 1, 1]} : vector<8x8x32xf32> to vector<1x8x32xf32>
    %130 = vector.shape_cast %129 : vector<1x8x32xf32> to vector<8x32xf32>
    %131 = vector.extract_strided_slice %118 {offsets = [6, 0, 0], sizes = [1, 8, 32], strides = [1, 1, 1]} : vector<8x8x32xf32> to vector<1x8x32xf32>
    %132 = vector.shape_cast %131 : vector<1x8x32xf32> to vector<8x32xf32>
    %133 = vector.extract_strided_slice %118 {offsets = [7, 0, 0], sizes = [1, 8, 32], strides = [1, 1, 1]} : vector<8x8x32xf32> to vector<1x8x32xf32>
    %134 = vector.shape_cast %133 : vector<1x8x32xf32> to vector<8x32xf32>
    %135 = tpu.concatenate %120, %122, %124, %126, %128, %130, %132, %134 in 1 : vector<8x32xf32>, vector<8x32xf32>, vector<8x32xf32>, vector<8x32xf32>, vector<8x32xf32>, vector<8x32xf32>, vector<8x32xf32>, vector<8x32xf32> -> vector<8x256xf32>
    %136 = arith.truncf %135 : vector<8x256xf32> to vector<8x256xbf16>
    %cst_36 = arith.constant dense<0.000000e+00> : vector<8x256xf32>
    %137 = tpu.matmul %136, %46, %cst_36 {dimension_numbers = #tpu.dot_dimension_numbers<[1], [0], [0], [1], [0, 0, 1, 1], [], []>} : vector<8x256xbf16>, vector<256x256xbf16>, vector<8x256xf32> -> vector<8x256xf32>
    %138 = vector.broadcast %48 : vector<1x256xf32> to vector<8x256xf32>
    %139 = arith.addf %137, %138 : vector<8x256xf32>
    %140 = arith.addf %3, %139 : vector<8x256xf32>
    %c0_37 = arith.constant 0 : index
    %c0_38 = arith.constant 0 : index
    %c0_39 = arith.constant 0 : index
    %141 = vector.load %arg10[%c0_37, %c0_38, %c0_39] : memref<2x1x256xf32, #tpu.memory_space<vmem>>, vector<1x1x256xf32>
    %142 = vector.shape_cast %141 : vector<1x1x256xf32> to vector<1x256xf32>
    %c0_40 = arith.constant 0 : index
    %c0_41 = arith.constant 0 : index
    %c0_42 = arith.constant 0 : index
    %143 = vector.load %arg11[%c0_40, %c0_41, %c0_42] : memref<2x1x256xf32, #tpu.memory_space<vmem>>, vector<1x1x256xf32>
    %144 = vector.shape_cast %143 : vector<1x1x256xf32> to vector<1x256xf32>
    %cst_43 = arith.constant dense<0.000000e+00> : vector<8xf32>
    %145 = vector.multi_reduction <add>, %140, %cst_43 [1] : vector<8x256xf32> to vector<8xf32>
    %146 = vector.shape_cast %145 : vector<8xf32> to vector<8x1xf32>
    %cst_44 = arith.constant 2.560000e+02 : f32
    %147 = vector.broadcast %cst_44 : f32 to vector<8x1xf32>
    %148 = arith.divf %146, %147 : vector<8x1xf32>
    %149 = vector.broadcast %148 : vector<8x1xf32> to vector<8x256xf32>
    %150 = arith.subf %140, %149 : vector<8x256xf32>
    %151 = arith.mulf %150, %150 : vector<8x256xf32>
    %cst_45 = arith.constant dense<0.000000e+00> : vector<8xf32>
    %152 = vector.multi_reduction <add>, %151, %cst_45 [1] : vector<8x256xf32> to vector<8xf32>
    %153 = vector.shape_cast %152 : vector<8xf32> to vector<8x1xf32>
    %cst_46 = arith.constant 2.560000e+02 : f32
    %154 = vector.broadcast %cst_46 : f32 to vector<8x1xf32>
    %155 = arith.divf %153, %154 : vector<8x1xf32>
    %cst_47 = arith.constant 9.99999974E-6 : f32
    %156 = vector.broadcast %cst_47 : f32 to vector<8x1xf32>
    %157 = arith.addf %155, %156 : vector<8x1xf32>
    %158 = math.rsqrt %157 : vector<8x1xf32>
    %159 = vector.broadcast %158 : vector<8x1xf32> to vector<8x256xf32>
    %160 = arith.mulf %150, %159 : vector<8x256xf32>
    %161 = vector.broadcast %142 : vector<1x256xf32> to vector<8x256xf32>
    %162 = arith.mulf %160, %161 : vector<8x256xf32>
    %163 = vector.broadcast %144 : vector<1x256xf32> to vector<8x256xf32>
    %164 = arith.addf %162, %163 : vector<8x256xf32>
    %165 = arith.truncf %164 : vector<8x256xf32> to vector<8x256xbf16>
    %c0_48 = arith.constant 0 : index
    %c0_49 = arith.constant 0 : index
    %c0_50 = arith.constant 0 : index
    %166 = vector.load %arg12[%c0_48, %c0_49, %c0_50] : memref<2x256x256xbf16, #tpu.memory_space<vmem>>, vector<1x256x256xbf16>
    %167 = vector.shape_cast %166 : vector<1x256x256xbf16> to vector<256x256xbf16>
    %cst_51 = arith.constant dense<0.000000e+00> : vector<8x256xf32>
    %168 = tpu.matmul %165, %167, %cst_51 {dimension_numbers = #tpu.dot_dimension_numbers<[1], [0], [0], [1], [0, 0, 1, 1], [], []>} : vector<8x256xbf16>, vector<256x256xbf16>, vector<8x256xf32> -> vector<8x256xf32>
    %c0_52 = arith.constant 0 : index
    %c0_53 = arith.constant 0 : index
    %c0_54 = arith.constant 0 : index
    %169 = vector.load %arg13[%c0_52, %c0_53, %c0_54] : memref<2x1x256xf32, #tpu.memory_space<vmem>>, vector<1x1x256xf32>
    %170 = vector.shape_cast %169 : vector<1x1x256xf32> to vector<1x256xf32>
    %171 = vector.broadcast %170 : vector<1x256xf32> to vector<8x256xf32>
    %172 = arith.addf %168, %171 : vector<8x256xf32>
    %c0_55 = arith.constant 0 : index
    %c0_56 = arith.constant 0 : index
    %c0_57 = arith.constant 0 : index
    %173 = vector.load %arg14[%c0_55, %c0_56, %c0_57] : memref<2x256x512xbf16, #tpu.memory_space<vmem>>, vector<1x256x512xbf16>
    %174 = vector.shape_cast %173 : vector<1x256x512xbf16> to vector<256x512xbf16>
    %cst_58 = arith.constant dense<0.000000e+00> : vector<16x512xf32>
    %175 = tpu.matmul %6, %174, %cst_58 {dimension_numbers = #tpu.dot_dimension_numbers<[1], [0], [0], [1], [0, 0, 1, 1], [], []>} : vector<16x256xbf16>, vector<256x512xbf16>, vector<16x512xf32> -> vector<16x512xf32>
    %c0_59 = arith.constant 0 : index
    %c0_60 = arith.constant 0 : index
    %c0_61 = arith.constant 0 : index
    %176 = vector.load %arg15[%c0_59, %c0_60, %c0_61] : memref<2x1x512xf32, #tpu.memory_space<vmem>>, vector<1x1x512xf32>
    %177 = vector.shape_cast %176 : vector<1x1x512xf32> to vector<1x512xf32>
    %178 = vector.broadcast %177 : vector<1x512xf32> to vector<16x512xf32>
    %179 = arith.addf %175, %178 : vector<16x512xf32>
    %180 = vector.extract_strided_slice %179 {offsets = [0, 0], sizes = [16, 256], strides = [1, 1]} : vector<16x512xf32> to vector<16x256xf32>
    %181 = vector.extract_strided_slice %179 {offsets = [0, 256], sizes = [16, 256], strides = [1, 1]} : vector<16x512xf32> to vector<16x256xf32>
    %c0_62 = arith.constant 0 : index
    %c0_63 = arith.constant 0 : index
    %c0_64 = arith.constant 0 : index
    %182 = vector.load %arg16[%c0_62, %c0_63, %c0_64] : memref<2x256x256xbf16, #tpu.memory_space<vmem>>, vector<1x256x256xbf16>
    %183 = vector.shape_cast %182 : vector<1x256x256xbf16> to vector<256x256xbf16>
    %c0_65 = arith.constant 0 : index
    %c0_66 = arith.constant 0 : index
    %c0_67 = arith.constant 0 : index
    %184 = vector.load %arg17[%c0_65, %c0_66, %c0_67] : memref<2x1x256xf32, #tpu.memory_space<vmem>>, vector<1x1x256xf32>
    %185 = vector.shape_cast %184 : vector<1x1x256xf32> to vector<1x256xf32>
    %186 = vector.extract_strided_slice %172 {offsets = [0, 0], sizes = [8, 32], strides = [1, 1]} : vector<8x256xf32> to vector<8x32xf32>
    %187 = vector.extract_strided_slice %172 {offsets = [0, 32], sizes = [8, 32], strides = [1, 1]} : vector<8x256xf32> to vector<8x32xf32>
    %188 = vector.extract_strided_slice %172 {offsets = [0, 64], sizes = [8, 32], strides = [1, 1]} : vector<8x256xf32> to vector<8x32xf32>
    %189 = vector.extract_strided_slice %172 {offsets = [0, 96], sizes = [8, 32], strides = [1, 1]} : vector<8x256xf32> to vector<8x32xf32>
    %190 = vector.extract_strided_slice %172 {offsets = [0, 128], sizes = [8, 32], strides = [1, 1]} : vector<8x256xf32> to vector<8x32xf32>
    %191 = vector.extract_strided_slice %172 {offsets = [0, 160], sizes = [8, 32], strides = [1, 1]} : vector<8x256xf32> to vector<8x32xf32>
    %192 = vector.extract_strided_slice %172 {offsets = [0, 192], sizes = [8, 32], strides = [1, 1]} : vector<8x256xf32> to vector<8x32xf32>
    %193 = vector.extract_strided_slice %172 {offsets = [0, 224], sizes = [8, 32], strides = [1, 1]} : vector<8x256xf32> to vector<8x32xf32>
    %194 = vector.shape_cast %186 : vector<8x32xf32> to vector<1x8x32xf32>
    %195 = vector.shape_cast %187 : vector<8x32xf32> to vector<1x8x32xf32>
    %196 = vector.shape_cast %188 : vector<8x32xf32> to vector<1x8x32xf32>
    %197 = vector.shape_cast %189 : vector<8x32xf32> to vector<1x8x32xf32>
    %198 = vector.shape_cast %190 : vector<8x32xf32> to vector<1x8x32xf32>
    %199 = vector.shape_cast %191 : vector<8x32xf32> to vector<1x8x32xf32>
    %200 = vector.shape_cast %192 : vector<8x32xf32> to vector<1x8x32xf32>
    %201 = vector.shape_cast %193 : vector<8x32xf32> to vector<1x8x32xf32>
    %202 = tpu.concatenate %194, %195, %196, %197, %198, %199, %200, %201 in 0 : vector<1x8x32xf32>, vector<1x8x32xf32>, vector<1x8x32xf32>, vector<1x8x32xf32>, vector<1x8x32xf32>, vector<1x8x32xf32>, vector<1x8x32xf32>, vector<1x8x32xf32> -> vector<8x8x32xf32>
    %203 = vector.extract_strided_slice %180 {offsets = [0, 0], sizes = [16, 32], strides = [1, 1]} : vector<16x256xf32> to vector<16x32xf32>
    %204 = vector.extract_strided_slice %180 {offsets = [0, 32], sizes = [16, 32], strides = [1, 1]} : vector<16x256xf32> to vector<16x32xf32>
    %205 = vector.extract_strided_slice %180 {offsets = [0, 64], sizes = [16, 32], strides = [1, 1]} : vector<16x256xf32> to vector<16x32xf32>
    %206 = vector.extract_strided_slice %180 {offsets = [0, 96], sizes = [16, 32], strides = [1, 1]} : vector<16x256xf32> to vector<16x32xf32>
    %207 = vector.extract_strided_slice %180 {offsets = [0, 128], sizes = [16, 32], strides = [1, 1]} : vector<16x256xf32> to vector<16x32xf32>
    %208 = vector.extract_strided_slice %180 {offsets = [0, 160], sizes = [16, 32], strides = [1, 1]} : vector<16x256xf32> to vector<16x32xf32>
    %209 = vector.extract_strided_slice %180 {offsets = [0, 192], sizes = [16, 32], strides = [1, 1]} : vector<16x256xf32> to vector<16x32xf32>
    %210 = vector.extract_strided_slice %180 {offsets = [0, 224], sizes = [16, 32], strides = [1, 1]} : vector<16x256xf32> to vector<16x32xf32>
    %211 = vector.shape_cast %203 : vector<16x32xf32> to vector<1x16x32xf32>
    %212 = vector.shape_cast %204 : vector<16x32xf32> to vector<1x16x32xf32>
    %213 = vector.shape_cast %205 : vector<16x32xf32> to vector<1x16x32xf32>
    %214 = vector.shape_cast %206 : vector<16x32xf32> to vector<1x16x32xf32>
    %215 = vector.shape_cast %207 : vector<16x32xf32> to vector<1x16x32xf32>
    %216 = vector.shape_cast %208 : vector<16x32xf32> to vector<1x16x32xf32>
    %217 = vector.shape_cast %209 : vector<16x32xf32> to vector<1x16x32xf32>
    %218 = vector.shape_cast %210 : vector<16x32xf32> to vector<1x16x32xf32>
    %219 = tpu.concatenate %211, %212, %213, %214, %215, %216, %217, %218 in 0 : vector<1x16x32xf32>, vector<1x16x32xf32>, vector<1x16x32xf32>, vector<1x16x32xf32>, vector<1x16x32xf32>, vector<1x16x32xf32>, vector<1x16x32xf32>, vector<1x16x32xf32> -> vector<8x16x32xf32>
    %220 = vector.extract_strided_slice %181 {offsets = [0, 0], sizes = [16, 32], strides = [1, 1]} : vector<16x256xf32> to vector<16x32xf32>
    %221 = vector.extract_strided_slice %181 {offsets = [0, 32], sizes = [16, 32], strides = [1, 1]} : vector<16x256xf32> to vector<16x32xf32>
    %222 = vector.extract_strided_slice %181 {offsets = [0, 64], sizes = [16, 32], strides = [1, 1]} : vector<16x256xf32> to vector<16x32xf32>
    %223 = vector.extract_strided_slice %181 {offsets = [0, 96], sizes = [16, 32], strides = [1, 1]} : vector<16x256xf32> to vector<16x32xf32>
    %224 = vector.extract_strided_slice %181 {offsets = [0, 128], sizes = [16, 32], strides = [1, 1]} : vector<16x256xf32> to vector<16x32xf32>
    %225 = vector.extract_strided_slice %181 {offsets = [0, 160], sizes = [16, 32], strides = [1, 1]} : vector<16x256xf32> to vector<16x32xf32>
    %226 = vector.extract_strided_slice %181 {offsets = [0, 192], sizes = [16, 32], strides = [1, 1]} : vector<16x256xf32> to vector<16x32xf32>
    %227 = vector.extract_strided_slice %181 {offsets = [0, 224], sizes = [16, 32], strides = [1, 1]} : vector<16x256xf32> to vector<16x32xf32>
    %228 = vector.shape_cast %220 : vector<16x32xf32> to vector<1x16x32xf32>
    %229 = vector.shape_cast %221 : vector<16x32xf32> to vector<1x16x32xf32>
    %230 = vector.shape_cast %222 : vector<16x32xf32> to vector<1x16x32xf32>
    %231 = vector.shape_cast %223 : vector<16x32xf32> to vector<1x16x32xf32>
    %232 = vector.shape_cast %224 : vector<16x32xf32> to vector<1x16x32xf32>
    %233 = vector.shape_cast %225 : vector<16x32xf32> to vector<1x16x32xf32>
    %234 = vector.shape_cast %226 : vector<16x32xf32> to vector<1x16x32xf32>
    %235 = vector.shape_cast %227 : vector<16x32xf32> to vector<1x16x32xf32>
    %236 = tpu.concatenate %228, %229, %230, %231, %232, %233, %234, %235 in 0 : vector<1x16x32xf32>, vector<1x16x32xf32>, vector<1x16x32xf32>, vector<1x16x32xf32>, vector<1x16x32xf32>, vector<1x16x32xf32>, vector<1x16x32xf32>, vector<1x16x32xf32> -> vector<8x16x32xf32>
    "tpu.trace_start"() <{level = 10 : i32, message = "hqd,hkd->hqk"}> : () -> ()
    %cst_68 = arith.constant dense<0.000000e+00> : vector<8x8x16xf32>
    %237 = tpu.matmul %202, %219, %cst_68 {dimension_numbers = #tpu.dot_dimension_numbers<[2], [2], [1], [1], [0, 0, 0, 1, 1, 1], [0], [0]>} : vector<8x8x32xf32>, vector<8x16x32xf32>, vector<8x8x16xf32> -> vector<8x8x16xf32>
    "tpu.trace_stop"() : () -> ()
    %cst_69 = arith.constant 0.176776692 : f32
    %238 = vector.broadcast %cst_69 : f32 to vector<8x8x16xf32>
    %239 = arith.mulf %237, %238 : vector<8x8x16xf32>
    %cst_70 = arith.constant dense<0xFF800000> : vector<8x8xf32>
    %240 = vector.multi_reduction <maximumf>, %239, %cst_70 [2] : vector<8x8x16xf32> to vector<8x8xf32>
    %241 = vector.shape_cast %240 : vector<8x8xf32> to vector<8x8x1xf32>
    %242 = vector.broadcast %241 : vector<8x8x1xf32> to vector<8x8x16xf32>
    %243 = arith.subf %239, %242 : vector<8x8x16xf32>
    %244 = math.exp %243 : vector<8x8x16xf32>
    %cst_71 = arith.constant dense<0.000000e+00> : vector<8x8xf32>
    %245 = vector.multi_reduction <add>, %244, %cst_71 [2] : vector<8x8x16xf32> to vector<8x8xf32>
    %246 = vector.shape_cast %245 : vector<8x8xf32> to vector<8x8x1xf32>
    %247 = tpu.reciprocal %246 {approx = true} : vector<8x8x1xf32> -> vector<8x8x1xf32>
    %248 = vector.broadcast %247 : vector<8x8x1xf32> to vector<8x8x16xf32>
    %249 = arith.mulf %244, %248 : vector<8x8x16xf32>
    "tpu.trace_start"() <{level = 10 : i32, message = "hqk,hkd->hqd"}> : () -> ()
    %cst_72 = arith.constant dense<0.000000e+00> : vector<8x8x32xf32>
    %250 = tpu.matmul %249, %236, %cst_72 {dimension_numbers = #tpu.dot_dimension_numbers<[2], [1], [1], [2], [0, 0, 0, 1, 1, 2], [0], [0]>} : vector<8x8x16xf32>, vector<8x16x32xf32>, vector<8x8x32xf32> -> vector<8x8x32xf32>
    "tpu.trace_stop"() : () -> ()
    %251 = vector.extract_strided_slice %250 {offsets = [0, 0, 0], sizes = [1, 8, 32], strides = [1, 1, 1]} : vector<8x8x32xf32> to vector<1x8x32xf32>
    %252 = vector.shape_cast %251 : vector<1x8x32xf32> to vector<8x32xf32>
    %253 = vector.extract_strided_slice %250 {offsets = [1, 0, 0], sizes = [1, 8, 32], strides = [1, 1, 1]} : vector<8x8x32xf32> to vector<1x8x32xf32>
    %254 = vector.shape_cast %253 : vector<1x8x32xf32> to vector<8x32xf32>
    %255 = vector.extract_strided_slice %250 {offsets = [2, 0, 0], sizes = [1, 8, 32], strides = [1, 1, 1]} : vector<8x8x32xf32> to vector<1x8x32xf32>
    %256 = vector.shape_cast %255 : vector<1x8x32xf32> to vector<8x32xf32>
    %257 = vector.extract_strided_slice %250 {offsets = [3, 0, 0], sizes = [1, 8, 32], strides = [1, 1, 1]} : vector<8x8x32xf32> to vector<1x8x32xf32>
    %258 = vector.shape_cast %257 : vector<1x8x32xf32> to vector<8x32xf32>
    %259 = vector.extract_strided_slice %250 {offsets = [4, 0, 0], sizes = [1, 8, 32], strides = [1, 1, 1]} : vector<8x8x32xf32> to vector<1x8x32xf32>
    %260 = vector.shape_cast %259 : vector<1x8x32xf32> to vector<8x32xf32>
    %261 = vector.extract_strided_slice %250 {offsets = [5, 0, 0], sizes = [1, 8, 32], strides = [1, 1, 1]} : vector<8x8x32xf32> to vector<1x8x32xf32>
    %262 = vector.shape_cast %261 : vector<1x8x32xf32> to vector<8x32xf32>
    %263 = vector.extract_strided_slice %250 {offsets = [6, 0, 0], sizes = [1, 8, 32], strides = [1, 1, 1]} : vector<8x8x32xf32> to vector<1x8x32xf32>
    %264 = vector.shape_cast %263 : vector<1x8x32xf32> to vector<8x32xf32>
    %265 = vector.extract_strided_slice %250 {offsets = [7, 0, 0], sizes = [1, 8, 32], strides = [1, 1, 1]} : vector<8x8x32xf32> to vector<1x8x32xf32>
    %266 = vector.shape_cast %265 : vector<1x8x32xf32> to vector<8x32xf32>
    %267 = tpu.concatenate %252, %254, %256, %258, %260, %262, %264, %266 in 1 : vector<8x32xf32>, vector<8x32xf32>, vector<8x32xf32>, vector<8x32xf32>, vector<8x32xf32>, vector<8x32xf32>, vector<8x32xf32>, vector<8x32xf32> -> vector<8x256xf32>
    %268 = arith.truncf %267 : vector<8x256xf32> to vector<8x256xbf16>
    %cst_73 = arith.constant dense<0.000000e+00> : vector<8x256xf32>
    %269 = tpu.matmul %268, %183, %cst_73 {dimension_numbers = #tpu.dot_dimension_numbers<[1], [0], [0], [1], [0, 0, 1, 1], [], []>} : vector<8x256xbf16>, vector<256x256xbf16>, vector<8x256xf32> -> vector<8x256xf32>
    %270 = vector.broadcast %185 : vector<1x256xf32> to vector<8x256xf32>
    %271 = arith.addf %269, %270 : vector<8x256xf32>
    %272 = arith.addf %140, %271 : vector<8x256xf32>
    %c0_74 = arith.constant 0 : index
    %c0_75 = arith.constant 0 : index
    %c0_76 = arith.constant 0 : index
    %273 = vector.load %arg18[%c0_74, %c0_75, %c0_76] : memref<2x1x256xf32, #tpu.memory_space<vmem>>, vector<1x1x256xf32>
    %274 = vector.shape_cast %273 : vector<1x1x256xf32> to vector<1x256xf32>
    %c0_77 = arith.constant 0 : index
    %c0_78 = arith.constant 0 : index
    %c0_79 = arith.constant 0 : index
    %275 = vector.load %arg19[%c0_77, %c0_78, %c0_79] : memref<2x1x256xf32, #tpu.memory_space<vmem>>, vector<1x1x256xf32>
    %276 = vector.shape_cast %275 : vector<1x1x256xf32> to vector<1x256xf32>
    %cst_80 = arith.constant dense<0.000000e+00> : vector<8xf32>
    %277 = vector.multi_reduction <add>, %272, %cst_80 [1] : vector<8x256xf32> to vector<8xf32>
    %278 = vector.shape_cast %277 : vector<8xf32> to vector<8x1xf32>
    %cst_81 = arith.constant 2.560000e+02 : f32
    %279 = vector.broadcast %cst_81 : f32 to vector<8x1xf32>
    %280 = arith.divf %278, %279 : vector<8x1xf32>
    %281 = vector.broadcast %280 : vector<8x1xf32> to vector<8x256xf32>
    %282 = arith.subf %272, %281 : vector<8x256xf32>
    %283 = arith.mulf %282, %282 : vector<8x256xf32>
    %cst_82 = arith.constant dense<0.000000e+00> : vector<8xf32>
    %284 = vector.multi_reduction <add>, %283, %cst_82 [1] : vector<8x256xf32> to vector<8xf32>
    %285 = vector.shape_cast %284 : vector<8xf32> to vector<8x1xf32>
    %cst_83 = arith.constant 2.560000e+02 : f32
    %286 = vector.broadcast %cst_83 : f32 to vector<8x1xf32>
    %287 = arith.divf %285, %286 : vector<8x1xf32>
    %cst_84 = arith.constant 9.99999974E-6 : f32
    %288 = vector.broadcast %cst_84 : f32 to vector<8x1xf32>
    %289 = arith.addf %287, %288 : vector<8x1xf32>
    %290 = math.rsqrt %289 : vector<8x1xf32>
    %291 = vector.broadcast %290 : vector<8x1xf32> to vector<8x256xf32>
    %292 = arith.mulf %282, %291 : vector<8x256xf32>
    %293 = vector.broadcast %274 : vector<1x256xf32> to vector<8x256xf32>
    %294 = arith.mulf %292, %293 : vector<8x256xf32>
    %295 = vector.broadcast %276 : vector<1x256xf32> to vector<8x256xf32>
    %296 = arith.addf %294, %295 : vector<8x256xf32>
    %297 = arith.truncf %296 : vector<8x256xf32> to vector<8x256xbf16>
    %c0_85 = arith.constant 0 : index
    %c0_86 = arith.constant 0 : index
    %c0_87 = arith.constant 0 : index
    %298 = vector.load %arg20[%c0_85, %c0_86, %c0_87] : memref<2x256x512xbf16, #tpu.memory_space<vmem>>, vector<1x256x512xbf16>
    %299 = vector.shape_cast %298 : vector<1x256x512xbf16> to vector<256x512xbf16>
    %cst_88 = arith.constant dense<0.000000e+00> : vector<8x512xf32>
    %300 = tpu.matmul %297, %299, %cst_88 {dimension_numbers = #tpu.dot_dimension_numbers<[1], [0], [0], [1], [0, 0, 1, 1], [], []>} : vector<8x256xbf16>, vector<256x512xbf16>, vector<8x512xf32> -> vector<8x512xf32>
    %c0_89 = arith.constant 0 : index
    %c0_90 = arith.constant 0 : index
    %c0_91 = arith.constant 0 : index
    %301 = vector.load %arg21[%c0_89, %c0_90, %c0_91] : memref<2x1x512xf32, #tpu.memory_space<vmem>>, vector<1x1x512xf32>
    %302 = vector.shape_cast %301 : vector<1x1x512xf32> to vector<1x512xf32>
    %303 = vector.broadcast %302 : vector<1x512xf32> to vector<8x512xf32>
    %304 = arith.addf %300, %303 : vector<8x512xf32>
    %cst_92 = arith.constant 0.000000e+00 : f32
    %305 = vector.broadcast %cst_92 : f32 to vector<8x512xf32>
    %306 = arith.maximumf %304, %305 : vector<8x512xf32>
    %307 = arith.truncf %306 : vector<8x512xf32> to vector<8x512xbf16>
    %c0_93 = arith.constant 0 : index
    %c0_94 = arith.constant 0 : index
    %c0_95 = arith.constant 0 : index
    %308 = vector.load %arg22[%c0_93, %c0_94, %c0_95] : memref<2x512x256xbf16, #tpu.memory_space<vmem>>, vector<1x512x256xbf16>
    %309 = vector.shape_cast %308 : vector<1x512x256xbf16> to vector<512x256xbf16>
    %cst_96 = arith.constant dense<0.000000e+00> : vector<8x256xf32>
    %310 = tpu.matmul %307, %309, %cst_96 {dimension_numbers = #tpu.dot_dimension_numbers<[1], [0], [0], [1], [0, 0, 1, 1], [], []>} : vector<8x512xbf16>, vector<512x256xbf16>, vector<8x256xf32> -> vector<8x256xf32>
    %c0_97 = arith.constant 0 : index
    %c0_98 = arith.constant 0 : index
    %c0_99 = arith.constant 0 : index
    %311 = vector.load %arg23[%c0_97, %c0_98, %c0_99] : memref<2x1x256xf32, #tpu.memory_space<vmem>>, vector<1x1x256xf32>
    %312 = vector.shape_cast %311 : vector<1x1x256xf32> to vector<1x256xf32>
    %313 = vector.broadcast %312 : vector<1x256xf32> to vector<8x256xf32>
    %314 = arith.addf %310, %313 : vector<8x256xf32>
    %315 = arith.addf %272, %314 : vector<8x256xf32>
    %c1 = arith.constant 1 : index
    %c0_100 = arith.constant 0 : index
    %c0_101 = arith.constant 0 : index
    %316 = vector.load %arg4[%c1, %c0_100, %c0_101] : memref<2x1x256xf32, #tpu.memory_space<vmem>>, vector<1x1x256xf32>
    %317 = vector.shape_cast %316 : vector<1x1x256xf32> to vector<1x256xf32>
    %c1_102 = arith.constant 1 : index
    %c0_103 = arith.constant 0 : index
    %c0_104 = arith.constant 0 : index
    %318 = vector.load %arg5[%c1_102, %c0_103, %c0_104] : memref<2x1x256xf32, #tpu.memory_space<vmem>>, vector<1x1x256xf32>
    %319 = vector.shape_cast %318 : vector<1x1x256xf32> to vector<1x256xf32>
    %cst_105 = arith.constant dense<0.000000e+00> : vector<8xf32>
    %320 = vector.multi_reduction <add>, %315, %cst_105 [1] : vector<8x256xf32> to vector<8xf32>
    %321 = vector.shape_cast %320 : vector<8xf32> to vector<8x1xf32>
    %cst_106 = arith.constant 2.560000e+02 : f32
    %322 = vector.broadcast %cst_106 : f32 to vector<8x1xf32>
    %323 = arith.divf %321, %322 : vector<8x1xf32>
    %324 = vector.broadcast %323 : vector<8x1xf32> to vector<8x256xf32>
    %325 = arith.subf %315, %324 : vector<8x256xf32>
    %326 = arith.mulf %325, %325 : vector<8x256xf32>
    %cst_107 = arith.constant dense<0.000000e+00> : vector<8xf32>
    %327 = vector.multi_reduction <add>, %326, %cst_107 [1] : vector<8x256xf32> to vector<8xf32>
    %328 = vector.shape_cast %327 : vector<8xf32> to vector<8x1xf32>
    %cst_108 = arith.constant 2.560000e+02 : f32
    %329 = vector.broadcast %cst_108 : f32 to vector<8x1xf32>
    %330 = arith.divf %328, %329 : vector<8x1xf32>
    %cst_109 = arith.constant 9.99999974E-6 : f32
    %331 = vector.broadcast %cst_109 : f32 to vector<8x1xf32>
    %332 = arith.addf %330, %331 : vector<8x1xf32>
    %333 = math.rsqrt %332 : vector<8x1xf32>
    %334 = vector.broadcast %333 : vector<8x1xf32> to vector<8x256xf32>
    %335 = arith.mulf %325, %334 : vector<8x256xf32>
    %336 = vector.broadcast %317 : vector<1x256xf32> to vector<8x256xf32>
    %337 = arith.mulf %335, %336 : vector<8x256xf32>
    %338 = vector.broadcast %319 : vector<1x256xf32> to vector<8x256xf32>
    %339 = arith.addf %337, %338 : vector<8x256xf32>
    %340 = arith.truncf %339 : vector<8x256xf32> to vector<8x256xbf16>
    %c1_110 = arith.constant 1 : index
    %c0_111 = arith.constant 0 : index
    %c0_112 = arith.constant 0 : index
    %341 = vector.load %arg6[%c1_110, %c0_111, %c0_112] : memref<2x256x768xbf16, #tpu.memory_space<vmem>>, vector<1x256x768xbf16>
    %342 = vector.shape_cast %341 : vector<1x256x768xbf16> to vector<256x768xbf16>
    %cst_113 = arith.constant dense<0.000000e+00> : vector<8x768xf32>
    %343 = tpu.matmul %340, %342, %cst_113 {dimension_numbers = #tpu.dot_dimension_numbers<[1], [0], [0], [1], [0, 0, 1, 1], [], []>} : vector<8x256xbf16>, vector<256x768xbf16>, vector<8x768xf32> -> vector<8x768xf32>
    %c1_114 = arith.constant 1 : index
    %c0_115 = arith.constant 0 : index
    %c0_116 = arith.constant 0 : index
    %344 = vector.load %arg7[%c1_114, %c0_115, %c0_116] : memref<2x1x768xf32, #tpu.memory_space<vmem>>, vector<1x1x768xf32>
    %345 = vector.shape_cast %344 : vector<1x1x768xf32> to vector<1x768xf32>
    %346 = vector.broadcast %345 : vector<1x768xf32> to vector<8x768xf32>
    %347 = arith.addf %343, %346 : vector<8x768xf32>
    %348 = vector.extract_strided_slice %347 {offsets = [0, 0], sizes = [8, 256], strides = [1, 1]} : vector<8x768xf32> to vector<8x256xf32>
    %349 = vector.extract_strided_slice %347 {offsets = [0, 256], sizes = [8, 256], strides = [1, 1]} : vector<8x768xf32> to vector<8x256xf32>
    %350 = vector.extract_strided_slice %347 {offsets = [0, 512], sizes = [8, 256], strides = [1, 1]} : vector<8x768xf32> to vector<8x256xf32>
    %c1_117 = arith.constant 1 : index
    %c0_118 = arith.constant 0 : index
    %c0_119 = arith.constant 0 : index
    %351 = vector.load %arg8[%c1_117, %c0_118, %c0_119] : memref<2x256x256xbf16, #tpu.memory_space<vmem>>, vector<1x256x256xbf16>
    %352 = vector.shape_cast %351 : vector<1x256x256xbf16> to vector<256x256xbf16>
    %c1_120 = arith.constant 1 : index
    %c0_121 = arith.constant 0 : index
    %c0_122 = arith.constant 0 : index
    %353 = vector.load %arg9[%c1_120, %c0_121, %c0_122] : memref<2x1x256xf32, #tpu.memory_space<vmem>>, vector<1x1x256xf32>
    %354 = vector.shape_cast %353 : vector<1x1x256xf32> to vector<1x256xf32>
    %355 = vector.extract_strided_slice %348 {offsets = [0, 0], sizes = [8, 32], strides = [1, 1]} : vector<8x256xf32> to vector<8x32xf32>
    %356 = vector.extract_strided_slice %348 {offsets = [0, 32], sizes = [8, 32], strides = [1, 1]} : vector<8x256xf32> to vector<8x32xf32>
    %357 = vector.extract_strided_slice %348 {offsets = [0, 64], sizes = [8, 32], strides = [1, 1]} : vector<8x256xf32> to vector<8x32xf32>
    %358 = vector.extract_strided_slice %348 {offsets = [0, 96], sizes = [8, 32], strides = [1, 1]} : vector<8x256xf32> to vector<8x32xf32>
    %359 = vector.extract_strided_slice %348 {offsets = [0, 128], sizes = [8, 32], strides = [1, 1]} : vector<8x256xf32> to vector<8x32xf32>
    %360 = vector.extract_strided_slice %348 {offsets = [0, 160], sizes = [8, 32], strides = [1, 1]} : vector<8x256xf32> to vector<8x32xf32>
    %361 = vector.extract_strided_slice %348 {offsets = [0, 192], sizes = [8, 32], strides = [1, 1]} : vector<8x256xf32> to vector<8x32xf32>
    %362 = vector.extract_strided_slice %348 {offsets = [0, 224], sizes = [8, 32], strides = [1, 1]} : vector<8x256xf32> to vector<8x32xf32>
    %363 = vector.shape_cast %355 : vector<8x32xf32> to vector<1x8x32xf32>
    %364 = vector.shape_cast %356 : vector<8x32xf32> to vector<1x8x32xf32>
    %365 = vector.shape_cast %357 : vector<8x32xf32> to vector<1x8x32xf32>
    %366 = vector.shape_cast %358 : vector<8x32xf32> to vector<1x8x32xf32>
    %367 = vector.shape_cast %359 : vector<8x32xf32> to vector<1x8x32xf32>
    %368 = vector.shape_cast %360 : vector<8x32xf32> to vector<1x8x32xf32>
    %369 = vector.shape_cast %361 : vector<8x32xf32> to vector<1x8x32xf32>
    %370 = vector.shape_cast %362 : vector<8x32xf32> to vector<1x8x32xf32>
    %371 = tpu.concatenate %363, %364, %365, %366, %367, %368, %369, %370 in 0 : vector<1x8x32xf32>, vector<1x8x32xf32>, vector<1x8x32xf32>, vector<1x8x32xf32>, vector<1x8x32xf32>, vector<1x8x32xf32>, vector<1x8x32xf32>, vector<1x8x32xf32> -> vector<8x8x32xf32>
    %372 = vector.extract_strided_slice %349 {offsets = [0, 0], sizes = [8, 32], strides = [1, 1]} : vector<8x256xf32> to vector<8x32xf32>
    %373 = vector.extract_strided_slice %349 {offsets = [0, 32], sizes = [8, 32], strides = [1, 1]} : vector<8x256xf32> to vector<8x32xf32>
    %374 = vector.extract_strided_slice %349 {offsets = [0, 64], sizes = [8, 32], strides = [1, 1]} : vector<8x256xf32> to vector<8x32xf32>
    %375 = vector.extract_strided_slice %349 {offsets = [0, 96], sizes = [8, 32], strides = [1, 1]} : vector<8x256xf32> to vector<8x32xf32>
    %376 = vector.extract_strided_slice %349 {offsets = [0, 128], sizes = [8, 32], strides = [1, 1]} : vector<8x256xf32> to vector<8x32xf32>
    %377 = vector.extract_strided_slice %349 {offsets = [0, 160], sizes = [8, 32], strides = [1, 1]} : vector<8x256xf32> to vector<8x32xf32>
    %378 = vector.extract_strided_slice %349 {offsets = [0, 192], sizes = [8, 32], strides = [1, 1]} : vector<8x256xf32> to vector<8x32xf32>
    %379 = vector.extract_strided_slice %349 {offsets = [0, 224], sizes = [8, 32], strides = [1, 1]} : vector<8x256xf32> to vector<8x32xf32>
    %380 = vector.shape_cast %372 : vector<8x32xf32> to vector<1x8x32xf32>
    %381 = vector.shape_cast %373 : vector<8x32xf32> to vector<1x8x32xf32>
    %382 = vector.shape_cast %374 : vector<8x32xf32> to vector<1x8x32xf32>
    %383 = vector.shape_cast %375 : vector<8x32xf32> to vector<1x8x32xf32>
    %384 = vector.shape_cast %376 : vector<8x32xf32> to vector<1x8x32xf32>
    %385 = vector.shape_cast %377 : vector<8x32xf32> to vector<1x8x32xf32>
    %386 = vector.shape_cast %378 : vector<8x32xf32> to vector<1x8x32xf32>
    %387 = vector.shape_cast %379 : vector<8x32xf32> to vector<1x8x32xf32>
    %388 = tpu.concatenate %380, %381, %382, %383, %384, %385, %386, %387 in 0 : vector<1x8x32xf32>, vector<1x8x32xf32>, vector<1x8x32xf32>, vector<1x8x32xf32>, vector<1x8x32xf32>, vector<1x8x32xf32>, vector<1x8x32xf32>, vector<1x8x32xf32> -> vector<8x8x32xf32>
    %389 = vector.extract_strided_slice %350 {offsets = [0, 0], sizes = [8, 32], strides = [1, 1]} : vector<8x256xf32> to vector<8x32xf32>
    %390 = vector.extract_strided_slice %350 {offsets = [0, 32], sizes = [8, 32], strides = [1, 1]} : vector<8x256xf32> to vector<8x32xf32>
    %391 = vector.extract_strided_slice %350 {offsets = [0, 64], sizes = [8, 32], strides = [1, 1]} : vector<8x256xf32> to vector<8x32xf32>
    %392 = vector.extract_strided_slice %350 {offsets = [0, 96], sizes = [8, 32], strides = [1, 1]} : vector<8x256xf32> to vector<8x32xf32>
    %393 = vector.extract_strided_slice %350 {offsets = [0, 128], sizes = [8, 32], strides = [1, 1]} : vector<8x256xf32> to vector<8x32xf32>
    %394 = vector.extract_strided_slice %350 {offsets = [0, 160], sizes = [8, 32], strides = [1, 1]} : vector<8x256xf32> to vector<8x32xf32>
    %395 = vector.extract_strided_slice %350 {offsets = [0, 192], sizes = [8, 32], strides = [1, 1]} : vector<8x256xf32> to vector<8x32xf32>
    %396 = vector.extract_strided_slice %350 {offsets = [0, 224], sizes = [8, 32], strides = [1, 1]} : vector<8x256xf32> to vector<8x32xf32>
    %397 = vector.shape_cast %389 : vector<8x32xf32> to vector<1x8x32xf32>
    %398 = vector.shape_cast %390 : vector<8x32xf32> to vector<1x8x32xf32>
    %399 = vector.shape_cast %391 : vector<8x32xf32> to vector<1x8x32xf32>
    %400 = vector.shape_cast %392 : vector<8x32xf32> to vector<1x8x32xf32>
    %401 = vector.shape_cast %393 : vector<8x32xf32> to vector<1x8x32xf32>
    %402 = vector.shape_cast %394 : vector<8x32xf32> to vector<1x8x32xf32>
    %403 = vector.shape_cast %395 : vector<8x32xf32> to vector<1x8x32xf32>
    %404 = vector.shape_cast %396 : vector<8x32xf32> to vector<1x8x32xf32>
    %405 = tpu.concatenate %397, %398, %399, %400, %401, %402, %403, %404 in 0 : vector<1x8x32xf32>, vector<1x8x32xf32>, vector<1x8x32xf32>, vector<1x8x32xf32>, vector<1x8x32xf32>, vector<1x8x32xf32>, vector<1x8x32xf32>, vector<1x8x32xf32> -> vector<8x8x32xf32>
    "tpu.trace_start"() <{level = 10 : i32, message = "hqd,hkd->hqk"}> : () -> ()
    %cst_123 = arith.constant dense<0.000000e+00> : vector<8x8x8xf32>
    %406 = tpu.matmul %371, %388, %cst_123 {dimension_numbers = #tpu.dot_dimension_numbers<[2], [2], [1], [1], [0, 0, 0, 1, 1, 1], [0], [0]>} : vector<8x8x32xf32>, vector<8x8x32xf32>, vector<8x8x8xf32> -> vector<8x8x8xf32>
    "tpu.trace_stop"() : () -> ()
    %cst_124 = arith.constant 0.176776692 : f32
    %407 = vector.broadcast %cst_124 : f32 to vector<8x8x8xf32>
    %408 = arith.mulf %406, %407 : vector<8x8x8xf32>
    %409 = vector.shape_cast %9 : vector<8x8xi1> to vector<1x8x8xi1>
    %cst_125 = arith.constant -1.000000e+09 : f32
    %410 = vector.shape_cast %409 : vector<1x8x8xi1> to vector<1x8x8xi1>
    %411 = vector.broadcast %410 : vector<1x8x8xi1> to vector<8x8x8xi1>
    %412 = vector.broadcast %cst_125 : f32 to vector<8x8x8xf32>
    %413 = arith.select %411, %408, %412 : vector<8x8x8xi1>, vector<8x8x8xf32>
    %cst_126 = arith.constant dense<0xFF800000> : vector<8x8xf32>
    %414 = vector.multi_reduction <maximumf>, %413, %cst_126 [2] : vector<8x8x8xf32> to vector<8x8xf32>
    %415 = vector.shape_cast %414 : vector<8x8xf32> to vector<8x8x1xf32>
    %416 = vector.broadcast %415 : vector<8x8x1xf32> to vector<8x8x8xf32>
    %417 = arith.subf %413, %416 : vector<8x8x8xf32>
    %418 = math.exp %417 : vector<8x8x8xf32>
    %cst_127 = arith.constant dense<0.000000e+00> : vector<8x8xf32>
    %419 = vector.multi_reduction <add>, %418, %cst_127 [2] : vector<8x8x8xf32> to vector<8x8xf32>
    %420 = vector.shape_cast %419 : vector<8x8xf32> to vector<8x8x1xf32>
    %421 = tpu.reciprocal %420 {approx = true} : vector<8x8x1xf32> -> vector<8x8x1xf32>
    %422 = vector.broadcast %421 : vector<8x8x1xf32> to vector<8x8x8xf32>
    %423 = arith.mulf %418, %422 : vector<8x8x8xf32>
    "tpu.trace_start"() <{level = 10 : i32, message = "hqk,hkd->hqd"}> : () -> ()
    %cst_128 = arith.constant dense<0.000000e+00> : vector<8x8x32xf32>
    %424 = tpu.matmul %423, %405, %cst_128 {dimension_numbers = #tpu.dot_dimension_numbers<[2], [1], [1], [2], [0, 0, 0, 1, 1, 2], [0], [0]>} : vector<8x8x8xf32>, vector<8x8x32xf32>, vector<8x8x32xf32> -> vector<8x8x32xf32>
    "tpu.trace_stop"() : () -> ()
    %425 = vector.extract_strided_slice %424 {offsets = [0, 0, 0], sizes = [1, 8, 32], strides = [1, 1, 1]} : vector<8x8x32xf32> to vector<1x8x32xf32>
    %426 = vector.shape_cast %425 : vector<1x8x32xf32> to vector<8x32xf32>
    %427 = vector.extract_strided_slice %424 {offsets = [1, 0, 0], sizes = [1, 8, 32], strides = [1, 1, 1]} : vector<8x8x32xf32> to vector<1x8x32xf32>
    %428 = vector.shape_cast %427 : vector<1x8x32xf32> to vector<8x32xf32>
    %429 = vector.extract_strided_slice %424 {offsets = [2, 0, 0], sizes = [1, 8, 32], strides = [1, 1, 1]} : vector<8x8x32xf32> to vector<1x8x32xf32>
    %430 = vector.shape_cast %429 : vector<1x8x32xf32> to vector<8x32xf32>
    %431 = vector.extract_strided_slice %424 {offsets = [3, 0, 0], sizes = [1, 8, 32], strides = [1, 1, 1]} : vector<8x8x32xf32> to vector<1x8x32xf32>
    %432 = vector.shape_cast %431 : vector<1x8x32xf32> to vector<8x32xf32>
    %433 = vector.extract_strided_slice %424 {offsets = [4, 0, 0], sizes = [1, 8, 32], strides = [1, 1, 1]} : vector<8x8x32xf32> to vector<1x8x32xf32>
    %434 = vector.shape_cast %433 : vector<1x8x32xf32> to vector<8x32xf32>
    %435 = vector.extract_strided_slice %424 {offsets = [5, 0, 0], sizes = [1, 8, 32], strides = [1, 1, 1]} : vector<8x8x32xf32> to vector<1x8x32xf32>
    %436 = vector.shape_cast %435 : vector<1x8x32xf32> to vector<8x32xf32>
    %437 = vector.extract_strided_slice %424 {offsets = [6, 0, 0], sizes = [1, 8, 32], strides = [1, 1, 1]} : vector<8x8x32xf32> to vector<1x8x32xf32>
    %438 = vector.shape_cast %437 : vector<1x8x32xf32> to vector<8x32xf32>
    %439 = vector.extract_strided_slice %424 {offsets = [7, 0, 0], sizes = [1, 8, 32], strides = [1, 1, 1]} : vector<8x8x32xf32> to vector<1x8x32xf32>
    %440 = vector.shape_cast %439 : vector<1x8x32xf32> to vector<8x32xf32>
    %441 = tpu.concatenate %426, %428, %430, %432, %434, %436, %438, %440 in 1 : vector<8x32xf32>, vector<8x32xf32>, vector<8x32xf32>, vector<8x32xf32>, vector<8x32xf32>, vector<8x32xf32>, vector<8x32xf32>, vector<8x32xf32> -> vector<8x256xf32>
    %442 = arith.truncf %441 : vector<8x256xf32> to vector<8x256xbf16>
    %cst_129 = arith.constant dense<0.000000e+00> : vector<8x256xf32>
    %443 = tpu.matmul %442, %352, %cst_129 {dimension_numbers = #tpu.dot_dimension_numbers<[1], [0], [0], [1], [0, 0, 1, 1], [], []>} : vector<8x256xbf16>, vector<256x256xbf16>, vector<8x256xf32> -> vector<8x256xf32>
    %444 = vector.broadcast %354 : vector<1x256xf32> to vector<8x256xf32>
    %445 = arith.addf %443, %444 : vector<8x256xf32>
    %446 = arith.addf %315, %445 : vector<8x256xf32>
    %c1_130 = arith.constant 1 : index
    %c0_131 = arith.constant 0 : index
    %c0_132 = arith.constant 0 : index
    %447 = vector.load %arg10[%c1_130, %c0_131, %c0_132] : memref<2x1x256xf32, #tpu.memory_space<vmem>>, vector<1x1x256xf32>
    %448 = vector.shape_cast %447 : vector<1x1x256xf32> to vector<1x256xf32>
    %c1_133 = arith.constant 1 : index
    %c0_134 = arith.constant 0 : index
    %c0_135 = arith.constant 0 : index
    %449 = vector.load %arg11[%c1_133, %c0_134, %c0_135] : memref<2x1x256xf32, #tpu.memory_space<vmem>>, vector<1x1x256xf32>
    %450 = vector.shape_cast %449 : vector<1x1x256xf32> to vector<1x256xf32>
    %cst_136 = arith.constant dense<0.000000e+00> : vector<8xf32>
    %451 = vector.multi_reduction <add>, %446, %cst_136 [1] : vector<8x256xf32> to vector<8xf32>
    %452 = vector.shape_cast %451 : vector<8xf32> to vector<8x1xf32>
    %cst_137 = arith.constant 2.560000e+02 : f32
    %453 = vector.broadcast %cst_137 : f32 to vector<8x1xf32>
    %454 = arith.divf %452, %453 : vector<8x1xf32>
    %455 = vector.broadcast %454 : vector<8x1xf32> to vector<8x256xf32>
    %456 = arith.subf %446, %455 : vector<8x256xf32>
    %457 = arith.mulf %456, %456 : vector<8x256xf32>
    %cst_138 = arith.constant dense<0.000000e+00> : vector<8xf32>
    %458 = vector.multi_reduction <add>, %457, %cst_138 [1] : vector<8x256xf32> to vector<8xf32>
    %459 = vector.shape_cast %458 : vector<8xf32> to vector<8x1xf32>
    %cst_139 = arith.constant 2.560000e+02 : f32
    %460 = vector.broadcast %cst_139 : f32 to vector<8x1xf32>
    %461 = arith.divf %459, %460 : vector<8x1xf32>
    %cst_140 = arith.constant 9.99999974E-6 : f32
    %462 = vector.broadcast %cst_140 : f32 to vector<8x1xf32>
    %463 = arith.addf %461, %462 : vector<8x1xf32>
    %464 = math.rsqrt %463 : vector<8x1xf32>
    %465 = vector.broadcast %464 : vector<8x1xf32> to vector<8x256xf32>
    %466 = arith.mulf %456, %465 : vector<8x256xf32>
    %467 = vector.broadcast %448 : vector<1x256xf32> to vector<8x256xf32>
    %468 = arith.mulf %466, %467 : vector<8x256xf32>
    %469 = vector.broadcast %450 : vector<1x256xf32> to vector<8x256xf32>
    %470 = arith.addf %468, %469 : vector<8x256xf32>
    %471 = arith.truncf %470 : vector<8x256xf32> to vector<8x256xbf16>
    %c1_141 = arith.constant 1 : index
    %c0_142 = arith.constant 0 : index
    %c0_143 = arith.constant 0 : index
    %472 = vector.load %arg12[%c1_141, %c0_142, %c0_143] : memref<2x256x256xbf16, #tpu.memory_space<vmem>>, vector<1x256x256xbf16>
    %473 = vector.shape_cast %472 : vector<1x256x256xbf16> to vector<256x256xbf16>
    %cst_144 = arith.constant dense<0.000000e+00> : vector<8x256xf32>
    %474 = tpu.matmul %471, %473, %cst_144 {dimension_numbers = #tpu.dot_dimension_numbers<[1], [0], [0], [1], [0, 0, 1, 1], [], []>} : vector<8x256xbf16>, vector<256x256xbf16>, vector<8x256xf32> -> vector<8x256xf32>
    %c1_145 = arith.constant 1 : index
    %c0_146 = arith.constant 0 : index
    %c0_147 = arith.constant 0 : index
    %475 = vector.load %arg13[%c1_145, %c0_146, %c0_147] : memref<2x1x256xf32, #tpu.memory_space<vmem>>, vector<1x1x256xf32>
    %476 = vector.shape_cast %475 : vector<1x1x256xf32> to vector<1x256xf32>
    %477 = vector.broadcast %476 : vector<1x256xf32> to vector<8x256xf32>
    %478 = arith.addf %474, %477 : vector<8x256xf32>
    %c1_148 = arith.constant 1 : index
    %c0_149 = arith.constant 0 : index
    %c0_150 = arith.constant 0 : index
    %479 = vector.load %arg14[%c1_148, %c0_149, %c0_150] : memref<2x256x512xbf16, #tpu.memory_space<vmem>>, vector<1x256x512xbf16>
    %480 = vector.shape_cast %479 : vector<1x256x512xbf16> to vector<256x512xbf16>
    %cst_151 = arith.constant dense<0.000000e+00> : vector<16x512xf32>
    %481 = tpu.matmul %6, %480, %cst_151 {dimension_numbers = #tpu.dot_dimension_numbers<[1], [0], [0], [1], [0, 0, 1, 1], [], []>} : vector<16x256xbf16>, vector<256x512xbf16>, vector<16x512xf32> -> vector<16x512xf32>
    %c1_152 = arith.constant 1 : index
    %c0_153 = arith.constant 0 : index
    %c0_154 = arith.constant 0 : index
    %482 = vector.load %arg15[%c1_152, %c0_153, %c0_154] : memref<2x1x512xf32, #tpu.memory_space<vmem>>, vector<1x1x512xf32>
    %483 = vector.shape_cast %482 : vector<1x1x512xf32> to vector<1x512xf32>
    %484 = vector.broadcast %483 : vector<1x512xf32> to vector<16x512xf32>
    %485 = arith.addf %481, %484 : vector<16x512xf32>
    %486 = vector.extract_strided_slice %485 {offsets = [0, 0], sizes = [16, 256], strides = [1, 1]} : vector<16x512xf32> to vector<16x256xf32>
    %487 = vector.extract_strided_slice %485 {offsets = [0, 256], sizes = [16, 256], strides = [1, 1]} : vector<16x512xf32> to vector<16x256xf32>
    %c1_155 = arith.constant 1 : index
    %c0_156 = arith.constant 0 : index
    %c0_157 = arith.constant 0 : index
    %488 = vector.load %arg16[%c1_155, %c0_156, %c0_157] : memref<2x256x256xbf16, #tpu.memory_space<vmem>>, vector<1x256x256xbf16>
    %489 = vector.shape_cast %488 : vector<1x256x256xbf16> to vector<256x256xbf16>
    %c1_158 = arith.constant 1 : index
    %c0_159 = arith.constant 0 : index
    %c0_160 = arith.constant 0 : index
    %490 = vector.load %arg17[%c1_158, %c0_159, %c0_160] : memref<2x1x256xf32, #tpu.memory_space<vmem>>, vector<1x1x256xf32>
    %491 = vector.shape_cast %490 : vector<1x1x256xf32> to vector<1x256xf32>
    %492 = vector.extract_strided_slice %478 {offsets = [0, 0], sizes = [8, 32], strides = [1, 1]} : vector<8x256xf32> to vector<8x32xf32>
    %493 = vector.extract_strided_slice %478 {offsets = [0, 32], sizes = [8, 32], strides = [1, 1]} : vector<8x256xf32> to vector<8x32xf32>
    %494 = vector.extract_strided_slice %478 {offsets = [0, 64], sizes = [8, 32], strides = [1, 1]} : vector<8x256xf32> to vector<8x32xf32>
    %495 = vector.extract_strided_slice %478 {offsets = [0, 96], sizes = [8, 32], strides = [1, 1]} : vector<8x256xf32> to vector<8x32xf32>
    %496 = vector.extract_strided_slice %478 {offsets = [0, 128], sizes = [8, 32], strides = [1, 1]} : vector<8x256xf32> to vector<8x32xf32>
    %497 = vector.extract_strided_slice %478 {offsets = [0, 160], sizes = [8, 32], strides = [1, 1]} : vector<8x256xf32> to vector<8x32xf32>
    %498 = vector.extract_strided_slice %478 {offsets = [0, 192], sizes = [8, 32], strides = [1, 1]} : vector<8x256xf32> to vector<8x32xf32>
    %499 = vector.extract_strided_slice %478 {offsets = [0, 224], sizes = [8, 32], strides = [1, 1]} : vector<8x256xf32> to vector<8x32xf32>
    %500 = vector.shape_cast %492 : vector<8x32xf32> to vector<1x8x32xf32>
    %501 = vector.shape_cast %493 : vector<8x32xf32> to vector<1x8x32xf32>
    %502 = vector.shape_cast %494 : vector<8x32xf32> to vector<1x8x32xf32>
    %503 = vector.shape_cast %495 : vector<8x32xf32> to vector<1x8x32xf32>
    %504 = vector.shape_cast %496 : vector<8x32xf32> to vector<1x8x32xf32>
    %505 = vector.shape_cast %497 : vector<8x32xf32> to vector<1x8x32xf32>
    %506 = vector.shape_cast %498 : vector<8x32xf32> to vector<1x8x32xf32>
    %507 = vector.shape_cast %499 : vector<8x32xf32> to vector<1x8x32xf32>
    %508 = tpu.concatenate %500, %501, %502, %503, %504, %505, %506, %507 in 0 : vector<1x8x32xf32>, vector<1x8x32xf32>, vector<1x8x32xf32>, vector<1x8x32xf32>, vector<1x8x32xf32>, vector<1x8x32xf32>, vector<1x8x32xf32>, vector<1x8x32xf32> -> vector<8x8x32xf32>
    %509 = vector.extract_strided_slice %486 {offsets = [0, 0], sizes = [16, 32], strides = [1, 1]} : vector<16x256xf32> to vector<16x32xf32>
    %510 = vector.extract_strided_slice %486 {offsets = [0, 32], sizes = [16, 32], strides = [1, 1]} : vector<16x256xf32> to vector<16x32xf32>
    %511 = vector.extract_strided_slice %486 {offsets = [0, 64], sizes = [16, 32], strides = [1, 1]} : vector<16x256xf32> to vector<16x32xf32>
    %512 = vector.extract_strided_slice %486 {offsets = [0, 96], sizes = [16, 32], strides = [1, 1]} : vector<16x256xf32> to vector<16x32xf32>
    %513 = vector.extract_strided_slice %486 {offsets = [0, 128], sizes = [16, 32], strides = [1, 1]} : vector<16x256xf32> to vector<16x32xf32>
    %514 = vector.extract_strided_slice %486 {offsets = [0, 160], sizes = [16, 32], strides = [1, 1]} : vector<16x256xf32> to vector<16x32xf32>
    %515 = vector.extract_strided_slice %486 {offsets = [0, 192], sizes = [16, 32], strides = [1, 1]} : vector<16x256xf32> to vector<16x32xf32>
    %516 = vector.extract_strided_slice %486 {offsets = [0, 224], sizes = [16, 32], strides = [1, 1]} : vector<16x256xf32> to vector<16x32xf32>
    %517 = vector.shape_cast %509 : vector<16x32xf32> to vector<1x16x32xf32>
    %518 = vector.shape_cast %510 : vector<16x32xf32> to vector<1x16x32xf32>
    %519 = vector.shape_cast %511 : vector<16x32xf32> to vector<1x16x32xf32>
    %520 = vector.shape_cast %512 : vector<16x32xf32> to vector<1x16x32xf32>
    %521 = vector.shape_cast %513 : vector<16x32xf32> to vector<1x16x32xf32>
    %522 = vector.shape_cast %514 : vector<16x32xf32> to vector<1x16x32xf32>
    %523 = vector.shape_cast %515 : vector<16x32xf32> to vector<1x16x32xf32>
    %524 = vector.shape_cast %516 : vector<16x32xf32> to vector<1x16x32xf32>
    %525 = tpu.concatenate %517, %518, %519, %520, %521, %522, %523, %524 in 0 : vector<1x16x32xf32>, vector<1x16x32xf32>, vector<1x16x32xf32>, vector<1x16x32xf32>, vector<1x16x32xf32>, vector<1x16x32xf32>, vector<1x16x32xf32>, vector<1x16x32xf32> -> vector<8x16x32xf32>
    %526 = vector.extract_strided_slice %487 {offsets = [0, 0], sizes = [16, 32], strides = [1, 1]} : vector<16x256xf32> to vector<16x32xf32>
    %527 = vector.extract_strided_slice %487 {offsets = [0, 32], sizes = [16, 32], strides = [1, 1]} : vector<16x256xf32> to vector<16x32xf32>
    %528 = vector.extract_strided_slice %487 {offsets = [0, 64], sizes = [16, 32], strides = [1, 1]} : vector<16x256xf32> to vector<16x32xf32>
    %529 = vector.extract_strided_slice %487 {offsets = [0, 96], sizes = [16, 32], strides = [1, 1]} : vector<16x256xf32> to vector<16x32xf32>
    %530 = vector.extract_strided_slice %487 {offsets = [0, 128], sizes = [16, 32], strides = [1, 1]} : vector<16x256xf32> to vector<16x32xf32>
    %531 = vector.extract_strided_slice %487 {offsets = [0, 160], sizes = [16, 32], strides = [1, 1]} : vector<16x256xf32> to vector<16x32xf32>
    %532 = vector.extract_strided_slice %487 {offsets = [0, 192], sizes = [16, 32], strides = [1, 1]} : vector<16x256xf32> to vector<16x32xf32>
    %533 = vector.extract_strided_slice %487 {offsets = [0, 224], sizes = [16, 32], strides = [1, 1]} : vector<16x256xf32> to vector<16x32xf32>
    %534 = vector.shape_cast %526 : vector<16x32xf32> to vector<1x16x32xf32>
    %535 = vector.shape_cast %527 : vector<16x32xf32> to vector<1x16x32xf32>
    %536 = vector.shape_cast %528 : vector<16x32xf32> to vector<1x16x32xf32>
    %537 = vector.shape_cast %529 : vector<16x32xf32> to vector<1x16x32xf32>
    %538 = vector.shape_cast %530 : vector<16x32xf32> to vector<1x16x32xf32>
    %539 = vector.shape_cast %531 : vector<16x32xf32> to vector<1x16x32xf32>
    %540 = vector.shape_cast %532 : vector<16x32xf32> to vector<1x16x32xf32>
    %541 = vector.shape_cast %533 : vector<16x32xf32> to vector<1x16x32xf32>
    %542 = tpu.concatenate %534, %535, %536, %537, %538, %539, %540, %541 in 0 : vector<1x16x32xf32>, vector<1x16x32xf32>, vector<1x16x32xf32>, vector<1x16x32xf32>, vector<1x16x32xf32>, vector<1x16x32xf32>, vector<1x16x32xf32>, vector<1x16x32xf32> -> vector<8x16x32xf32>
    "tpu.trace_start"() <{level = 10 : i32, message = "hqd,hkd->hqk"}> : () -> ()
    %cst_161 = arith.constant dense<0.000000e+00> : vector<8x8x16xf32>
    %543 = tpu.matmul %508, %525, %cst_161 {dimension_numbers = #tpu.dot_dimension_numbers<[2], [2], [1], [1], [0, 0, 0, 1, 1, 1], [0], [0]>} : vector<8x8x32xf32>, vector<8x16x32xf32>, vector<8x8x16xf32> -> vector<8x8x16xf32>
    "tpu.trace_stop"() : () -> ()
    %cst_162 = arith.constant 0.176776692 : f32
    %544 = vector.broadcast %cst_162 : f32 to vector<8x8x16xf32>
    %545 = arith.mulf %543, %544 : vector<8x8x16xf32>
    %cst_163 = arith.constant dense<0xFF800000> : vector<8x8xf32>
    %546 = vector.multi_reduction <maximumf>, %545, %cst_163 [2] : vector<8x8x16xf32> to vector<8x8xf32>
    %547 = vector.shape_cast %546 : vector<8x8xf32> to vector<8x8x1xf32>
    %548 = vector.broadcast %547 : vector<8x8x1xf32> to vector<8x8x16xf32>
    %549 = arith.subf %545, %548 : vector<8x8x16xf32>
    %550 = math.exp %549 : vector<8x8x16xf32>
    %cst_164 = arith.constant dense<0.000000e+00> : vector<8x8xf32>
    %551 = vector.multi_reduction <add>, %550, %cst_164 [2] : vector<8x8x16xf32> to vector<8x8xf32>
    %552 = vector.shape_cast %551 : vector<8x8xf32> to vector<8x8x1xf32>
    %553 = tpu.reciprocal %552 {approx = true} : vector<8x8x1xf32> -> vector<8x8x1xf32>
    %554 = vector.broadcast %553 : vector<8x8x1xf32> to vector<8x8x16xf32>
    %555 = arith.mulf %550, %554 : vector<8x8x16xf32>
    "tpu.trace_start"() <{level = 10 : i32, message = "hqk,hkd->hqd"}> : () -> ()
    %cst_165 = arith.constant dense<0.000000e+00> : vector<8x8x32xf32>
    %556 = tpu.matmul %555, %542, %cst_165 {dimension_numbers = #tpu.dot_dimension_numbers<[2], [1], [1], [2], [0, 0, 0, 1, 1, 2], [0], [0]>} : vector<8x8x16xf32>, vector<8x16x32xf32>, vector<8x8x32xf32> -> vector<8x8x32xf32>
    "tpu.trace_stop"() : () -> ()
    %557 = vector.extract_strided_slice %556 {offsets = [0, 0, 0], sizes = [1, 8, 32], strides = [1, 1, 1]} : vector<8x8x32xf32> to vector<1x8x32xf32>
    %558 = vector.shape_cast %557 : vector<1x8x32xf32> to vector<8x32xf32>
    %559 = vector.extract_strided_slice %556 {offsets = [1, 0, 0], sizes = [1, 8, 32], strides = [1, 1, 1]} : vector<8x8x32xf32> to vector<1x8x32xf32>
    %560 = vector.shape_cast %559 : vector<1x8x32xf32> to vector<8x32xf32>
    %561 = vector.extract_strided_slice %556 {offsets = [2, 0, 0], sizes = [1, 8, 32], strides = [1, 1, 1]} : vector<8x8x32xf32> to vector<1x8x32xf32>
    %562 = vector.shape_cast %561 : vector<1x8x32xf32> to vector<8x32xf32>
    %563 = vector.extract_strided_slice %556 {offsets = [3, 0, 0], sizes = [1, 8, 32], strides = [1, 1, 1]} : vector<8x8x32xf32> to vector<1x8x32xf32>
    %564 = vector.shape_cast %563 : vector<1x8x32xf32> to vector<8x32xf32>
    %565 = vector.extract_strided_slice %556 {offsets = [4, 0, 0], sizes = [1, 8, 32], strides = [1, 1, 1]} : vector<8x8x32xf32> to vector<1x8x32xf32>
    %566 = vector.shape_cast %565 : vector<1x8x32xf32> to vector<8x32xf32>
    %567 = vector.extract_strided_slice %556 {offsets = [5, 0, 0], sizes = [1, 8, 32], strides = [1, 1, 1]} : vector<8x8x32xf32> to vector<1x8x32xf32>
    %568 = vector.shape_cast %567 : vector<1x8x32xf32> to vector<8x32xf32>
    %569 = vector.extract_strided_slice %556 {offsets = [6, 0, 0], sizes = [1, 8, 32], strides = [1, 1, 1]} : vector<8x8x32xf32> to vector<1x8x32xf32>
    %570 = vector.shape_cast %569 : vector<1x8x32xf32> to vector<8x32xf32>
    %571 = vector.extract_strided_slice %556 {offsets = [7, 0, 0], sizes = [1, 8, 32], strides = [1, 1, 1]} : vector<8x8x32xf32> to vector<1x8x32xf32>
    %572 = vector.shape_cast %571 : vector<1x8x32xf32> to vector<8x32xf32>
    %573 = tpu.concatenate %558, %560, %562, %564, %566, %568, %570, %572 in 1 : vector<8x32xf32>, vector<8x32xf32>, vector<8x32xf32>, vector<8x32xf32>, vector<8x32xf32>, vector<8x32xf32>, vector<8x32xf32>, vector<8x32xf32> -> vector<8x256xf32>
    %574 = arith.truncf %573 : vector<8x256xf32> to vector<8x256xbf16>
    %cst_166 = arith.constant dense<0.000000e+00> : vector<8x256xf32>
    %575 = tpu.matmul %574, %489, %cst_166 {dimension_numbers = #tpu.dot_dimension_numbers<[1], [0], [0], [1], [0, 0, 1, 1], [], []>} : vector<8x256xbf16>, vector<256x256xbf16>, vector<8x256xf32> -> vector<8x256xf32>
    %576 = vector.broadcast %491 : vector<1x256xf32> to vector<8x256xf32>
    %577 = arith.addf %575, %576 : vector<8x256xf32>
    %578 = arith.addf %446, %577 : vector<8x256xf32>
    %c1_167 = arith.constant 1 : index
    %c0_168 = arith.constant 0 : index
    %c0_169 = arith.constant 0 : index
    %579 = vector.load %arg18[%c1_167, %c0_168, %c0_169] : memref<2x1x256xf32, #tpu.memory_space<vmem>>, vector<1x1x256xf32>
    %580 = vector.shape_cast %579 : vector<1x1x256xf32> to vector<1x256xf32>
    %c1_170 = arith.constant 1 : index
    %c0_171 = arith.constant 0 : index
    %c0_172 = arith.constant 0 : index
    %581 = vector.load %arg19[%c1_170, %c0_171, %c0_172] : memref<2x1x256xf32, #tpu.memory_space<vmem>>, vector<1x1x256xf32>
    %582 = vector.shape_cast %581 : vector<1x1x256xf32> to vector<1x256xf32>
    %cst_173 = arith.constant dense<0.000000e+00> : vector<8xf32>
    %583 = vector.multi_reduction <add>, %578, %cst_173 [1] : vector<8x256xf32> to vector<8xf32>
    %584 = vector.shape_cast %583 : vector<8xf32> to vector<8x1xf32>
    %cst_174 = arith.constant 2.560000e+02 : f32
    %585 = vector.broadcast %cst_174 : f32 to vector<8x1xf32>
    %586 = arith.divf %584, %585 : vector<8x1xf32>
    %587 = vector.broadcast %586 : vector<8x1xf32> to vector<8x256xf32>
    %588 = arith.subf %578, %587 : vector<8x256xf32>
    %589 = arith.mulf %588, %588 : vector<8x256xf32>
    %cst_175 = arith.constant dense<0.000000e+00> : vector<8xf32>
    %590 = vector.multi_reduction <add>, %589, %cst_175 [1] : vector<8x256xf32> to vector<8xf32>
    %591 = vector.shape_cast %590 : vector<8xf32> to vector<8x1xf32>
    %cst_176 = arith.constant 2.560000e+02 : f32
    %592 = vector.broadcast %cst_176 : f32 to vector<8x1xf32>
    %593 = arith.divf %591, %592 : vector<8x1xf32>
    %cst_177 = arith.constant 9.99999974E-6 : f32
    %594 = vector.broadcast %cst_177 : f32 to vector<8x1xf32>
    %595 = arith.addf %593, %594 : vector<8x1xf32>
    %596 = math.rsqrt %595 : vector<8x1xf32>
    %597 = vector.broadcast %596 : vector<8x1xf32> to vector<8x256xf32>
    %598 = arith.mulf %588, %597 : vector<8x256xf32>
    %599 = vector.broadcast %580 : vector<1x256xf32> to vector<8x256xf32>
    %600 = arith.mulf %598, %599 : vector<8x256xf32>
    %601 = vector.broadcast %582 : vector<1x256xf32> to vector<8x256xf32>
    %602 = arith.addf %600, %601 : vector<8x256xf32>
    %603 = arith.truncf %602 : vector<8x256xf32> to vector<8x256xbf16>
    %c1_178 = arith.constant 1 : index
    %c0_179 = arith.constant 0 : index
    %c0_180 = arith.constant 0 : index
    %604 = vector.load %arg20[%c1_178, %c0_179, %c0_180] : memref<2x256x512xbf16, #tpu.memory_space<vmem>>, vector<1x256x512xbf16>
    %605 = vector.shape_cast %604 : vector<1x256x512xbf16> to vector<256x512xbf16>
    %cst_181 = arith.constant dense<0.000000e+00> : vector<8x512xf32>
    %606 = tpu.matmul %603, %605, %cst_181 {dimension_numbers = #tpu.dot_dimension_numbers<[1], [0], [0], [1], [0, 0, 1, 1], [], []>} : vector<8x256xbf16>, vector<256x512xbf16>, vector<8x512xf32> -> vector<8x512xf32>
    %c1_182 = arith.constant 1 : index
    %c0_183 = arith.constant 0 : index
    %c0_184 = arith.constant 0 : index
    %607 = vector.load %arg21[%c1_182, %c0_183, %c0_184] : memref<2x1x512xf32, #tpu.memory_space<vmem>>, vector<1x1x512xf32>
    %608 = vector.shape_cast %607 : vector<1x1x512xf32> to vector<1x512xf32>
    %609 = vector.broadcast %608 : vector<1x512xf32> to vector<8x512xf32>
    %610 = arith.addf %606, %609 : vector<8x512xf32>
    %cst_185 = arith.constant 0.000000e+00 : f32
    %611 = vector.broadcast %cst_185 : f32 to vector<8x512xf32>
    %612 = arith.maximumf %610, %611 : vector<8x512xf32>
    %613 = arith.truncf %612 : vector<8x512xf32> to vector<8x512xbf16>
    %c1_186 = arith.constant 1 : index
    %c0_187 = arith.constant 0 : index
    %c0_188 = arith.constant 0 : index
    %614 = vector.load %arg22[%c1_186, %c0_187, %c0_188] : memref<2x512x256xbf16, #tpu.memory_space<vmem>>, vector<1x512x256xbf16>
    %615 = vector.shape_cast %614 : vector<1x512x256xbf16> to vector<512x256xbf16>
    %cst_189 = arith.constant dense<0.000000e+00> : vector<8x256xf32>
    %616 = tpu.matmul %613, %615, %cst_189 {dimension_numbers = #tpu.dot_dimension_numbers<[1], [0], [0], [1], [0, 0, 1, 1], [], []>} : vector<8x512xbf16>, vector<512x256xbf16>, vector<8x256xf32> -> vector<8x256xf32>
    %c1_190 = arith.constant 1 : index
    %c0_191 = arith.constant 0 : index
    %c0_192 = arith.constant 0 : index
    %617 = vector.load %arg23[%c1_190, %c0_191, %c0_192] : memref<2x1x256xf32, #tpu.memory_space<vmem>>, vector<1x1x256xf32>
    %618 = vector.shape_cast %617 : vector<1x1x256xf32> to vector<1x256xf32>
    %619 = vector.broadcast %618 : vector<1x256xf32> to vector<8x256xf32>
    %620 = arith.addf %616, %619 : vector<8x256xf32>
    %621 = arith.addf %578, %620 : vector<8x256xf32>
    %c0_193 = arith.constant 0 : index
    %c0_194 = arith.constant 0 : index
    %622 = vector.load %arg24[%c0_193, %c0_194] : memref<1x256xf32, #tpu.memory_space<vmem>>, vector<1x256xf32>
    %c0_195 = arith.constant 0 : index
    %c0_196 = arith.constant 0 : index
    %623 = vector.load %arg25[%c0_195, %c0_196] : memref<1x256xf32, #tpu.memory_space<vmem>>, vector<1x256xf32>
    %cst_197 = arith.constant dense<0.000000e+00> : vector<8xf32>
    %624 = vector.multi_reduction <add>, %621, %cst_197 [1] : vector<8x256xf32> to vector<8xf32>
    %625 = vector.shape_cast %624 : vector<8xf32> to vector<8x1xf32>
    %cst_198 = arith.constant 2.560000e+02 : f32
    %626 = vector.broadcast %cst_198 : f32 to vector<8x1xf32>
    %627 = arith.divf %625, %626 : vector<8x1xf32>
    %628 = vector.broadcast %627 : vector<8x1xf32> to vector<8x256xf32>
    %629 = arith.subf %621, %628 : vector<8x256xf32>
    %630 = arith.mulf %629, %629 : vector<8x256xf32>
    %cst_199 = arith.constant dense<0.000000e+00> : vector<8xf32>
    %631 = vector.multi_reduction <add>, %630, %cst_199 [1] : vector<8x256xf32> to vector<8xf32>
    %632 = vector.shape_cast %631 : vector<8xf32> to vector<8x1xf32>
    %cst_200 = arith.constant 2.560000e+02 : f32
    %633 = vector.broadcast %cst_200 : f32 to vector<8x1xf32>
    %634 = arith.divf %632, %633 : vector<8x1xf32>
    %cst_201 = arith.constant 9.99999974E-6 : f32
    %635 = vector.broadcast %cst_201 : f32 to vector<8x1xf32>
    %636 = arith.addf %634, %635 : vector<8x1xf32>
    %637 = math.rsqrt %636 : vector<8x1xf32>
    %638 = vector.broadcast %637 : vector<8x1xf32> to vector<8x256xf32>
    %639 = arith.mulf %629, %638 : vector<8x256xf32>
    %640 = vector.broadcast %622 : vector<1x256xf32> to vector<8x256xf32>
    %641 = arith.mulf %639, %640 : vector<8x256xf32>
    %642 = vector.broadcast %623 : vector<1x256xf32> to vector<8x256xf32>
    %643 = arith.addf %641, %642 : vector<8x256xf32>
    %c0_202 = arith.constant 0 : index
    %c0_203 = arith.constant 0 : index
    %c0_204 = arith.constant 0 : index
    %644 = vector.load %arg26[%c0_202, %c0_203, %c0_204] : memref<1x8x256xf32, #tpu.memory_space<vmem>>, vector<1x8x256xf32>
    %645 = vector.shape_cast %644 : vector<1x8x256xf32> to vector<8x256xf32>
    %646 = vector.shape_cast %643 : vector<8x256xf32> to vector<1x8x256xf32>
    tpu.vector_store %arg26[%c0_202, %c0_203, %c0_204], %646 {strides = array<i32>} : memref<1x8x256xf32, #tpu.memory_space<vmem>>, vector<1x8x256xf32>,
    return
  }
  func.func @transform_0(%arg0: i32) -> (i32, i32, i32) {
    %c0_i32 = arith.constant 0 : i32
    %c0_i32_0 = arith.constant 0 : i32
    %c0_i32_1 = arith.constant 0 : i32
    return %arg0, %c0_i32, %c0_i32_0 : i32, i32, i32
  }
  func.func @transform_1(%arg0: i32) -> (i32, i32, i32) {
    %c0_i32 = arith.constant 0 : i32
    %c0_i32_0 = arith.constant 0 : i32
    %c0_i32_1 = arith.constant 0 : i32
    return %arg0, %c0_i32, %c0_i32_0 : i32, i32, i32
  }
  func.func @transform_2(%arg0: i32) -> (i32, i32) {
    %c0_i32 = arith.constant 0 : i32
    %c0_i32_0 = arith.constant 0 : i32
    %c0_i32_1 = arith.constant 0 : i32
    return %c0_i32, %c0_i32_0 : i32, i32
  }
  func.func @transform_3(%arg0: i32) -> (i32, i32, i32) {
    %c0_i32 = arith.constant 0 : i32
    %c0_i32_0 = arith.constant 0 : i32
    %c0_i32_1 = arith.constant 0 : i32
    %c0_i32_2 = arith.constant 0 : i32
    return %c0_i32, %c0_i32_0, %c0_i32_1 : i32, i32, i32
  }
  func.func @transform_4(%arg0: i32) -> (i32, i32, i32) {
    %c0_i32 = arith.constant 0 : i32
    %c0_i32_0 = arith.constant 0 : i32
    %c0_i32_1 = arith.constant 0 : i32
    %c0_i32_2 = arith.constant 0 : i32
    return %c0_i32, %c0_i32_0, %c0_i32_1 : i32, i32, i32
  }
  func.func @transform_5(%arg0: i32) -> (i32, i32, i32) {
    %c0_i32 = arith.constant 0 : i32
    %c0_i32_0 = arith.constant 0 : i32
    %c0_i32_1 = arith.constant 0 : i32
    %c0_i32_2 = arith.constant 0 : i32
    return %c0_i32, %c0_i32_0, %c0_i32_1 : i32, i32, i32
  }
  func.func @transform_6(%arg0: i32) -> (i32, i32, i32) {
    %c0_i32 = arith.constant 0 : i32
    %c0_i32_0 = arith.constant 0 : i32
    %c0_i32_1 = arith.constant 0 : i32
    %c0_i32_2 = arith.constant 0 : i32
    return %c0_i32, %c0_i32_0, %c0_i32_1 : i32, i32, i32
  }
  func.func @transform_7(%arg0: i32) -> (i32, i32, i32) {
    %c0_i32 = arith.constant 0 : i32
    %c0_i32_0 = arith.constant 0 : i32
    %c0_i32_1 = arith.constant 0 : i32
    %c0_i32_2 = arith.constant 0 : i32
    return %c0_i32, %c0_i32_0, %c0_i32_1 : i32, i32, i32
  }
  func.func @transform_8(%arg0: i32) -> (i32, i32, i32) {
    %c0_i32 = arith.constant 0 : i32
    %c0_i32_0 = arith.constant 0 : i32
    %c0_i32_1 = arith.constant 0 : i32
    %c0_i32_2 = arith.constant 0 : i32
    return %c0_i32, %c0_i32_0, %c0_i32_1 : i32, i32, i32
  }
  func.func @transform_9(%arg0: i32) -> (i32, i32, i32) {
    %c0_i32 = arith.constant 0 : i32
    %c0_i32_0 = arith.constant 0 : i32
    %c0_i32_1 = arith.constant 0 : i32
    %c0_i32_2 = arith.constant 0 : i32
    return %c0_i32, %c0_i32_0, %c0_i32_1 : i32, i32, i32
  }
  func.func @transform_10(%arg0: i32) -> (i32, i32, i32) {
    %c0_i32 = arith.constant 0 : i32
    %c0_i32_0 = arith.constant 0 : i32
    %c0_i32_1 = arith.constant 0 : i32
    %c0_i32_2 = arith.constant 0 : i32
    return %c0_i32, %c0_i32_0, %c0_i32_1 : i32, i32, i32
  }
  func.func @transform_11(%arg0: i32) -> (i32, i32, i32) {
    %c0_i32 = arith.constant 0 : i32
    %c0_i32_0 = arith.constant 0 : i32
    %c0_i32_1 = arith.constant 0 : i32
    %c0_i32_2 = arith.constant 0 : i32
    return %c0_i32, %c0_i32_0, %c0_i32_1 : i32, i32, i32
  }
  func.func @transform_12(%arg0: i32) -> (i32, i32, i32) {
    %c0_i32 = arith.constant 0 : i32
    %c0_i32_0 = arith.constant 0 : i32
    %c0_i32_1 = arith.constant 0 : i32
    %c0_i32_2 = arith.constant 0 : i32
    return %c0_i32, %c0_i32_0, %c0_i32_1 : i32, i32, i32
  }
  func.func @transform_13(%arg0: i32) -> (i32, i32, i32) {
    %c0_i32 = arith.constant 0 : i32
    %c0_i32_0 = arith.constant 0 : i32
    %c0_i32_1 = arith.constant 0 : i32
    %c0_i32_2 = arith.constant 0 : i32
    return %c0_i32, %c0_i32_0, %c0_i32_1 : i32, i32, i32
  }
  func.func @transform_14(%arg0: i32) -> (i32, i32, i32) {
    %c0_i32 = arith.constant 0 : i32
    %c0_i32_0 = arith.constant 0 : i32
    %c0_i32_1 = arith.constant 0 : i32
    %c0_i32_2 = arith.constant 0 : i32
    return %c0_i32, %c0_i32_0, %c0_i32_1 : i32, i32, i32
  }
  func.func @transform_15(%arg0: i32) -> (i32, i32, i32) {
    %c0_i32 = arith.constant 0 : i32
    %c0_i32_0 = arith.constant 0 : i32
    %c0_i32_1 = arith.constant 0 : i32
    %c0_i32_2 = arith.constant 0 : i32
    return %c0_i32, %c0_i32_0, %c0_i32_1 : i32, i32, i32
  }
  func.func @transform_16(%arg0: i32) -> (i32, i32, i32) {
    %c0_i32 = arith.constant 0 : i32
    %c0_i32_0 = arith.constant 0 : i32
    %c0_i32_1 = arith.constant 0 : i32
    %c0_i32_2 = arith.constant 0 : i32
    return %c0_i32, %c0_i32_0, %c0_i32_1 : i32, i32, i32
  }
  func.func @transform_17(%arg0: i32) -> (i32, i32, i32) {
    %c0_i32 = arith.constant 0 : i32
    %c0_i32_0 = arith.constant 0 : i32
    %c0_i32_1 = arith.constant 0 : i32
    %c0_i32_2 = arith.constant 0 : i32
    return %c0_i32, %c0_i32_0, %c0_i32_1 : i32, i32, i32
  }
  func.func @transform_18(%arg0: i32) -> (i32, i32, i32) {
    %c0_i32 = arith.constant 0 : i32
    %c0_i32_0 = arith.constant 0 : i32
    %c0_i32_1 = arith.constant 0 : i32
    %c0_i32_2 = arith.constant 0 : i32
    return %c0_i32, %c0_i32_0, %c0_i32_1 : i32, i32, i32
  }
  func.func @transform_19(%arg0: i32) -> (i32, i32, i32) {
    %c0_i32 = arith.constant 0 : i32
    %c0_i32_0 = arith.constant 0 : i32
    %c0_i32_1 = arith.constant 0 : i32
    %c0_i32_2 = arith.constant 0 : i32
    return %c0_i32, %c0_i32_0, %c0_i32_1 : i32, i32, i32
  }
  func.func @transform_20(%arg0: i32) -> (i32, i32, i32) {
    %c0_i32 = arith.constant 0 : i32
    %c0_i32_0 = arith.constant 0 : i32
    %c0_i32_1 = arith.constant 0 : i32
    %c0_i32_2 = arith.constant 0 : i32
    return %c0_i32, %c0_i32_0, %c0_i32_1 : i32, i32, i32
  }
  func.func @transform_21(%arg0: i32) -> (i32, i32, i32) {
    %c0_i32 = arith.constant 0 : i32
    %c0_i32_0 = arith.constant 0 : i32
    %c0_i32_1 = arith.constant 0 : i32
    %c0_i32_2 = arith.constant 0 : i32
    return %c0_i32, %c0_i32_0, %c0_i32_1 : i32, i32, i32
  }
  func.func @transform_22(%arg0: i32) -> (i32, i32, i32) {
    %c0_i32 = arith.constant 0 : i32
    %c0_i32_0 = arith.constant 0 : i32
    %c0_i32_1 = arith.constant 0 : i32
    %c0_i32_2 = arith.constant 0 : i32
    return %c0_i32, %c0_i32_0, %c0_i32_1 : i32, i32, i32
  }
  func.func @transform_23(%arg0: i32) -> (i32, i32) {
    %c0_i32 = arith.constant 0 : i32
    %c0_i32_0 = arith.constant 0 : i32
    %c0_i32_1 = arith.constant 0 : i32
    return %c0_i32, %c0_i32_0 : i32, i32
  }
  func.func @transform_24(%arg0: i32) -> (i32, i32) {
    %c0_i32 = arith.constant 0 : i32
    %c0_i32_0 = arith.constant 0 : i32
    %c0_i32_1 = arith.constant 0 : i32
    return %c0_i32, %c0_i32_0 : i32, i32
  }
  func.func @transform_25(%arg0: i32) -> (i32, i32, i32) {
    %c0_i32 = arith.constant 0 : i32
    %c0_i32_0 = arith.constant 0 : i32
    %c0_i32_1 = arith.constant 0 : i32
    return %arg0, %c0_i32, %c0_i32_0 : i32, i32, i32
  }
}

</mosaic_0001>

<llo_original>
// kernel: decoder_forward.1
$region0: #{decoder_forward.1}
  #allocation0 [shape = 'u32[]', space=smem, size = 0x4, offset = 0x4, fixed_abs, tag = 'smem constant byte address 0x4 - core index']
  #allocation1 [shape = 'u32[72,128]{1,0:T(1,128)}', space=vmem, size = 0x9000, scoped, tag = 'internal scratch']
  %s0 = inlined_call_operand.hbm [shape: f32[2,8,256], index: 0, kind: input, shape index: {}, may-alias: {0,25}]
  %s1 = inlined_call_operand.vmem [shape: f32[2,16,256], index: 1, kind: input, shape index: {}]
  %s2 = inlined_call_operand.vmem [shape: f32[8,256], index: 2, kind: input, shape index: {}]
  %s3 = inlined_call_operand.vmem [shape: f32[2,1,256], index: 3, kind: input, shape index: {}]
  %s4 = inlined_call_operand.vmem [shape: f32[2,1,256], index: 4, kind: input, shape index: {}]
  %s5 = inlined_call_operand.hbm [shape: bf16[2,256,768], index: 5, kind: input, shape index: {}]
  %s6 = inlined_call_operand.vmem [shape: f32[2,1,768], index: 6, kind: input, shape index: {}]
  %s7 = inlined_call_operand.hbm [shape: bf16[2,256,256], index: 7, kind: input, shape index: {}]
  %s8 = inlined_call_operand.vmem [shape: f32[2,1,256], index: 8, kind: input, shape index: {}]
  %s9 = inlined_call_operand.hbm [shape: f32[2,1,256], index: 9, kind: input, shape index: {}]
  %s10 = inlined_call_operand.hbm [shape: f32[2,1,256], index: 10, kind: input, shape index: {}]
  %s11 = inlined_call_operand.hbm [shape: bf16[2,256,256], index: 11, kind: input, shape index: {}]
  %s12 = inlined_call_operand.hbm [shape: f32[2,1,256], index: 12, kind: input, shape index: {}]
  %s13 = inlined_call_operand.hbm [shape: bf16[2,256,512], index: 13, kind: input, shape index: {}]
  %s14 = inlined_call_operand.hbm [shape: f32[2,1,512], index: 14, kind: input, shape index: {}]
  %s15 = inlined_call_operand.hbm [shape: bf16[2,256,256], index: 15, kind: input, shape index: {}]
  %s16 = inlined_call_operand.hbm [shape: f32[2,1,256], index: 16, kind: input, shape index: {}]
  %s17 = inlined_call_operand.hbm [shape: f32[2,1,256], index: 17, kind: input, shape index: {}]
  %s18 = inlined_call_operand.hbm [shape: f32[2,1,256], index: 18, kind: input, shape index: {}]
  %s19 = inlined_call_operand.hbm [shape: bf16[2,256,512], index: 19, kind: input, shape index: {}]
  %s20 = inlined_call_operand.vmem [shape: f32[2,1,512], index: 20, kind: input, shape index: {}]
  %s21 = inlined_call_operand.hbm [shape: bf16[2,512,256], index: 21, kind: input, shape index: {}]
  %s22 = inlined_call_operand.hbm [shape: f32[2,1,256], index: 22, kind: input, shape index: {}]
  %s23 = inlined_call_operand.hbm [shape: f32[1,256], index: 23, kind: input, shape index: {}]
  %s24 = inlined_call_operand.hbm [shape: f32[1,256], index: 24, kind: input, shape index: {}]
  %s25 = inlined_call_operand.hbm [shape: f32[2,8,256], index: 25, kind: output, shape index: {}, may-alias: {0,25}]
  %s26 = sld [smem:[#allocation0]]
  $region205: #{decoder_forward.1} parent=0
    _
  %s28 = ssub.s32 1, %s26
  %s29 = scalar_select 0, %s28, %s26
  $region1: #{decoder_forward.1} parent=0
    #allocation2 [shape = 'u8[16384]{0}', space=vmem, size = 0x4000, scoped, tag = 'input window, operand 0']
    #allocation3 [shape = 's32[2]{0}', space=sflag, size = 0x8, scoped, tag = 'scoped memory for decoder_forward.1']
    #allocation4 [shape = 's32[2]{0}', space=sflag, size = 0x8, scoped, tag = 'scoped memory for decoder_forward.1']
    #allocation5 [shape = 'u8[786432]{0}', space=vmem, size = 0xc0000, scoped, tag = 'input window, operand 5, single buffered']
    #allocation6 [shape = 's32[1]{0}', space=sflag, size = 0x4, scoped, tag = 'scoped memory for decoder_forward.1']
    #allocation7 [shape = 'u8[262144]{0}', space=vmem, size = 0x40000, scoped, tag = 'input window, operand 7, single buffered']
    #allocation8 [shape = 'u8[2048]{0}', space=vmem, size = 0x800, scoped, tag = 'input window, operand 9, single buffered']
    #allocation9 [shape = 's32[1]{0}', space=sflag, size = 0x4, scoped, tag = 'scoped memory for decoder_forward.1']
    #allocation10 [shape = 'u8[2048]{0}', space=vmem, size = 0x800, scoped, tag = 'input window, operand 10, single buffered']
    #allocation11 [shape = 'u8[262144]{0}', space=vmem, size = 0x40000, scoped, tag = 'input window, operand 11, single buffered']
    #allocation12 [shape = 's32[1]{0}', space=sflag, size = 0x4, scoped, tag = 'scoped memory for decoder_forward.1']
    #allocation13 [shape = 'u8[2048]{0}', space=vmem, size = 0x800, scoped, tag = 'input window, operand 12, single buffered']
    #allocation14 [shape = 'u8[524288]{0}', space=vmem, size = 0x80000, scoped, tag = 'input window, operand 13, single buffered']
    #allocation15 [shape = 's32[1]{0}', space=sflag, size = 0x4, scoped, tag = 'scoped memory for decoder_forward.1']
    #allocation16 [shape = 'u8[4096]{0}', space=vmem, size = 0x1000, scoped, tag = 'input window, operand 14, single buffered']
    #allocation17 [shape = 'u8[262144]{0}', space=vmem, size = 0x40000, scoped, tag = 'input window, operand 15, single buffered']
    #allocation18 [shape = 's32[1]{0}', space=sflag, size = 0x4, scoped, tag = 'scoped memory for decoder_forward.1']
    #allocation19 [shape = 'u8[2048]{0}', space=vmem, size = 0x800, scoped, tag = 'input window, operand 16, single buffered']
    #allocation20 [shape = 'u8[2048]{0}', space=vmem, size = 0x800, scoped, tag = 'input window, operand 17, single buffered']
    #allocation21 [shape = 's32[1]{0}', space=sflag, size = 0x4, scoped, tag = 'scoped memory for decoder_forward.1']
    #allocation22 [shape = 'u8[2048]{0}', space=vmem, size = 0x800, scoped, tag = 'input window, operand 18, single buffered']
    #allocation23 [shape = 'u8[524288]{0}', space=vmem, size = 0x80000, scoped, tag = 'input window, operand 19, single buffered']
    #allocation24 [shape = 's32[1]{0}', space=sflag, size = 0x4, scoped, tag = 'scoped memory for decoder_forward.1']
    #allocation25 [shape = 'u8[524288]{0}', space=vmem, size = 0x80000, scoped, tag = 'input window, operand 21, single buffered']
    #allocation26 [shape = 'u8[2048]{0}', space=vmem, size = 0x800, scoped, tag = 'input window, operand 22, single buffered']
    #allocation27 [shape = 's32[1]{0}', space=sflag, size = 0x4, scoped, tag = 'scoped memory for decoder_forward.1']
    #allocation28 [shape = 'u8[1024]{0}', space=vmem, size = 0x400, scoped, tag = 'input window, operand 23, single buffered']
    #allocation29 [shape = 'u8[1024]{0}', space=vmem, size = 0x400, scoped, tag = 'input window, operand 24, single buffered']
    #allocation30 [shape = 's32[1]{0}', space=sflag, size = 0x4, scoped, tag = 'scoped memory for decoder_forward.1']
    #allocation31 [shape = 'u8[16384]{0}', space=vmem, size = 0x4000, scoped, tag = 'output window, operand 0']
    %30 = vsyncpa [#allocation3], 0
    %s31 = scalar_lea.sflag [#allocation3], 1
    %32 = vsyncpa %s31, 0
    %33 = vsyncpa [#allocation6], 0
    %34 = vsyncpa [#allocation9], 0
    %35 = vsyncpa [#allocation12], 0
    %36 = vsyncpa [#allocation15], 0
    %37 = vsyncpa [#allocation18], 0
    %38 = vsyncpa [#allocation21], 0
    %39 = vsyncpa [#allocation24], 0
    %40 = vsyncpa [#allocation27], 0
    %41 = vsyncpa [#allocation30], 0
    %42 = vsyncpa [#allocation4], 0
    %s43 = scalar_lea.sflag [#allocation4], 1
    %44 = vsyncpa %s43, 0
    loop: start=0, step=1, limit=4
    $region2: #{decoder_forward.1} parent=1 // loop_pre_header
      _
    $region3: #{decoder_forward.1} parent=1 // loop_header
      %s46 = sphi 0, %s50
      %p47 = scmp.ge.s32.totalorder %s46, 4
      %s56 = sphi 0, %s58
      %s59 = sphi 0, %s56
      %s60 = sphi 0, %s59
      %s76 = sphi 0, %s60
      %s82 = sphi 0, %s84
      %s85 = sphi 0, %s82
      %s86 = sphi 0, %s85
      %s102 = sphi 0, %s86
      %s106 = sphi 0, %s106
      %s108 = sphi 0, %s106
      %s109 = sphi 0, %s108
      %s123 = sphi 0, %s109
      %s127 = sphi 0, %s127
      %s129 = sphi 0, %s127
      %s130 = sphi 0, %s129
      %s144 = sphi 0, %s130
      %s148 = sphi 0, %s148
      %s150 = sphi 0, %s148
      %s151 = sphi 0, %s150
      %s165 = sphi 0, %s151
      %s169 = sphi 0, %s169
      %s171 = sphi 0, %s169
      %s172 = sphi 0, %s171
      %s186 = sphi 0, %s172
      %s190 = sphi 0, %s190
      %s192 = sphi 0, %s190
      %s193 = sphi 0, %s192
      %s207 = sphi 0, %s193
      %s211 = sphi 0, %s211
      %s213 = sphi 0, %s211
      %s214 = sphi 0, %s213
      %s228 = sphi 0, %s214
      %s232 = sphi 0, %s232
      %s234 = sphi 0, %s232
      %s235 = sphi 0, %s234
      %s249 = sphi 0, %s235
      %s253 = sphi 0, %s253
      %s255 = sphi 0, %s253
      %s256 = sphi 0, %s255
      %s270 = sphi 0, %s256
      %s274 = sphi 0, %s274
      %s276 = sphi 0, %s274
      %s277 = sphi 0, %s276
      %s291 = sphi 0, %s277
      %s295 = sphi 0, %s295
      %s297 = sphi 0, %s295
      %s298 = sphi 0, %s297
      %s312 = sphi 0, %s298
      %s316 = sphi 0, %s316
      %s318 = sphi 0, %s316
      %s319 = sphi 0, %s318
      %s333 = sphi 0, %s319
      %s337 = sphi 0, %s337
      %s339 = sphi 0, %s337
      %s340 = sphi 0, %s339
      %s354 = sphi 0, %s340
      %s358 = sphi 0, %s358
      %s360 = sphi 0, %s358
      %s361 = sphi 0, %s360
      %s375 = sphi 0, %s361
      %s379 = sphi 0, %s379
      %s381 = sphi 0, %s379
      %s382 = sphi 0, %s381
      %s396 = sphi 0, %s382
      %s400 = sphi 0, %s400
      %s402 = sphi 0, %s400
      %s403 = sphi 0, %s402
      %s417 = sphi 0, %s403
      %s421 = sphi 0, %s421
      %s423 = sphi 0, %s421
      %s424 = sphi 0, %s423
      %s438 = sphi 0, %s424
      %s442 = sphi 0, %s442
      %s444 = sphi 0, %s442
      %s445 = sphi 0, %s444
      %s459 = sphi 0, %s445
      %s463 = sphi 0, %s463
      %s465 = sphi 0, %s463
      %s466 = sphi 0, %s465
      %s480 = sphi 0, %s466
      %s484 = sphi 0, %s484
      %s486 = sphi 0, %s484
      %s487 = sphi 0, %s486
      %s501 = sphi 0, %s487
      %s505 = sphi 0, %s505
      %s507 = sphi 0, %s505
      %s508 = sphi 0, %s507
      %s522 = sphi 0, %s508
      %s526 = sphi 0, %s526
      %s528 = sphi 0, %s526
      %s529 = sphi 0, %s528
      %s543 = sphi 0, %s529
      %s547 = sphi 0, %s547
      %s549 = sphi 0, %s547
      %s550 = sphi 0, %s549
      %s564 = sphi 0, %s550
      %s568 = sphi 0, %s568
      %s570 = sphi 0, %s568
      %s571 = sphi 0, %s570
      %s585 = sphi 0, %s571
      %s591 = sphi 0, %s593
      %s594 = sphi 0, %s591
      %s595 = sphi 0, %s594
      %s611 = sphi 0, %s595
    $region4: #{decoder_forward.1} parent=1 // loop_header_branch
      %49 = sbr.rel (%p47) target = $region8
    $region5: #{decoder_forward.1} parent=1 // loop_body
      %s51 = ssub.s32 %s46, 1
      %s52 = ssub.s32 %s46, 2
      %s53 = sadd.s32 %s46, 1
      %s54 = ssub.s32 %s46, %s53
      %p55 = scmp.eq.s32.totalorder %s54, 0
      %s57 = sadd.s32 %s56, 1
      %s58 = scalar_select %p55, %s56, %s57
      %p61 = pneg %p55
      %p62 = scmp.eq.s32.totalorder %s46, 1
      %p63 = por %p61, %p62
      %p64 = scmp.ne.s32.totalorder %s56, %s59
      %p65 = scmp.eq.s32.totalorder %s46, 0
      %p66 = por %p64, %p65
      %p67 = scmp.ne.s32.totalorder %s56, %s59
      %p68 = scmp.eq.s32.totalorder %s51, 1
      %p69 = por %p67, %p68
      %p70 = scmp.ne.s32.totalorder %s59, %s60
      %p71 = scmp.eq.s32.totalorder %s51, 0
      %p72 = por %p70, %p71
      %p73 = scmp.ne.s32.totalorder %s59, %s60
      %p74 = scmp.eq.s32.totalorder %s52, 1
      %p75 = por %p73, %p74
      %p77 = scmp.ne.s32.totalorder %s60, %s76
      %p78 = scmp.eq.s32.totalorder %s52, 0
      %p79 = por %p77, %p78
      %s80 = ssub.s32 %s46, %s53
      %p81 = scmp.eq.s32.totalorder %s80, 0
      %s83 = sadd.s32 %s82, 1
      %s84 = scalar_select %p81, %s82, %s83
      %p87 = pneg %p81
      %p88 = scmp.eq.s32.totalorder %s46, 1
      %p89 = por %p87, %p88
      %p90 = scmp.ne.s32.totalorder %s82, %s85
      %p91 = scmp.eq.s32.totalorder %s46, 0
      %p92 = por %p90, %p91
      %p93 = scmp.ne.s32.totalorder %s82, %s85
      %p94 = scmp.eq.s32.totalorder %s51, 1
      %p95 = por %p93, %p94
      %p96 = scmp.ne.s32.totalorder %s85, %s86
      %p97 = scmp.eq.s32.totalorder %s51, 0
      %p98 = por %p96, %p97
      %p99 = scmp.ne.s32.totalorder %s85, %s86
      %p100 = scmp.eq.s32.totalorder %s52, 1
      %p101 = por %p99, %p100
      %p103 = scmp.ne.s32.totalorder %s86, %s102
      %p104 = scmp.eq.s32.totalorder %s52, 0
      %p105 = por %p103, %p104
      %s107 = sadd.s32 %s106, 1
      %p110 = scmp.eq.s32.totalorder %s46, 1
      %p111 = scmp.ne.s32.totalorder %s106, %s108
      %p112 = scmp.eq.s32.totalorder %s46, 0
      %p113 = por %p111, %p112
      %p114 = scmp.ne.s32.totalorder %s106, %s108
      %p115 = scmp.eq.s32.totalorder %s51, 1
      %p116 = por %p114, %p115
      %p117 = scmp.ne.s32.totalorder %s108, %s109
      %p118 = scmp.eq.s32.totalorder %s51, 0
      %p119 = por %p117, %p118
      %p120 = scmp.ne.s32.totalorder %s108, %s109
      %p121 = scmp.eq.s32.totalorder %s52, 1
      %p122 = por %p120, %p121
      %p124 = scmp.ne.s32.totalorder %s109, %s123
      %p125 = scmp.eq.s32.totalorder %s52, 0
      %p126 = por %p124, %p125
      %s128 = sadd.s32 %s127, 1
      %p131 = scmp.eq.s32.totalorder %s46, 1
      %p132 = scmp.ne.s32.totalorder %s127, %s129
      %p133 = scmp.eq.s32.totalorder %s46, 0
      %p134 = por %p132, %p133
      %p135 = scmp.ne.s32.totalorder %s127, %s129
      %p136 = scmp.eq.s32.totalorder %s51, 1
      %p137 = por %p135, %p136
      %p138 = scmp.ne.s32.totalorder %s129, %s130
      %p139 = scmp.eq.s32.totalorder %s51, 0
      %p140 = por %p138, %p139
      %p141 = scmp.ne.s32.totalorder %s129, %s130
      %p142 = scmp.eq.s32.totalorder %s52, 1
      %p143 = por %p141, %p142
      %p145 = scmp.ne.s32.totalorder %s130, %s144
      %p146 = scmp.eq.s32.totalorder %s52, 0
      %p147 = por %p145, %p146
      %s149 = sadd.s32 %s148, 1
      %p152 = scmp.eq.s32.totalorder %s46, 1
      %p153 = scmp.ne.s32.totalorder %s148, %s150
      %p154 = scmp.eq.s32.totalorder %s46, 0
      %p155 = por %p153, %p154
      %p156 = scmp.ne.s32.totalorder %s148, %s150
      %p157 = scmp.eq.s32.totalorder %s51, 1
      %p158 = por %p156, %p157
      %p159 = scmp.ne.s32.totalorder %s150, %s151
      %p160 = scmp.eq.s32.totalorder %s51, 0
      %p161 = por %p159, %p160
      %p162 = scmp.ne.s32.totalorder %s150, %s151
      %p163 = scmp.eq.s32.totalorder %s52, 1
      %p164 = por %p162, %p163
      %p166 = scmp.ne.s32.totalorder %s151, %s165
      %p167 = scmp.eq.s32.totalorder %s52, 0
      %p168 = por %p166, %p167
      %s170 = sadd.s32 %s169, 1
      %p173 = scmp.eq.s32.totalorder %s46, 1
      %p174 = scmp.ne.s32.totalorder %s169, %s171
      %p175 = scmp.eq.s32.totalorder %s46, 0
      %p176 = por %p174, %p175
      %p177 = scmp.ne.s32.totalorder %s169, %s171
      %p178 = scmp.eq.s32.totalorder %s51, 1
      %p179 = por %p177, %p178
      %p180 = scmp.ne.s32.totalorder %s171, %s172
      %p181 = scmp.eq.s32.totalorder %s51, 0
      %p182 = por %p180, %p181
      %p183 = scmp.ne.s32.totalorder %s171, %s172
      %p184 = scmp.eq.s32.totalorder %s52, 1
      %p185 = por %p183, %p184
      %p187 = scmp.ne.s32.totalorder %s172, %s186
      %p188 = scmp.eq.s32.totalorder %s52, 0
      %p189 = por %p187, %p188
      %s191 = sadd.s32 %s190, 1
      %p194 = scmp.eq.s32.totalorder %s46, 1
      %p195 = scmp.ne.s32.totalorder %s190, %s192
      %p196 = scmp.eq.s32.totalorder %s46, 0
      %p197 = por %p195, %p196
      %p198 = scmp.ne.s32.totalorder %s190, %s192
      %p199 = scmp.eq.s32.totalorder %s51, 1
      %p200 = por %p198, %p199
      %p201 = scmp.ne.s32.totalorder %s192, %s193
      %p202 = scmp.eq.s32.totalorder %s51, 0
      %p203 = por %p201, %p202
      %p204 = scmp.ne.s32.totalorder %s192, %s193
      %p205 = scmp.eq.s32.totalorder %s52, 1
      %p206 = por %p204, %p205
      %p208 = scmp.ne.s32.totalorder %s193, %s207
      %p209 = scmp.eq.s32.totalorder %s52, 0
      %p210 = por %p208, %p209
      %s212 = sadd.s32 %s211, 1
      %p215 = scmp.eq.s32.totalorder %s46, 1
      %p216 = scmp.ne.s32.totalorder %s211, %s213
      %p217 = scmp.eq.s32.totalorder %s46, 0
      %p218 = por %p216, %p217
      %p219 = scmp.ne.s32.totalorder %s211, %s213
      %p220 = scmp.eq.s32.totalorder %s51, 1
      %p221 = por %p219, %p220
      %p222 = scmp.ne.s32.totalorder %s213, %s214
      %p223 = scmp.eq.s32.totalorder %s51, 0
      %p224 = por %p222, %p223
      %p225 = scmp.ne.s32.totalorder %s213, %s214
      %p226 = scmp.eq.s32.totalorder %s52, 1
      %p227 = por %p225, %p226
      %p229 = scmp.ne.s32.totalorder %s214, %s228
      %p230 = scmp.eq.s32.totalorder %s52, 0
      %p231 = por %p229, %p230
      %s233 = sadd.s32 %s232, 1
      %p236 = scmp.eq.s32.totalorder %s46, 1
      %p237 = scmp.ne.s32.totalorder %s232, %s234
      %p238 = scmp.eq.s32.totalorder %s46, 0
      %p239 = por %p237, %p238
      %p240 = scmp.ne.s32.totalorder %s232, %s234
      %p241 = scmp.eq.s32.totalorder %s51, 1
      %p242 = por %p240, %p241
      %p243 = scmp.ne.s32.totalorder %s234, %s235
      %p244 = scmp.eq.s32.totalorder %s51, 0
      %p245 = por %p243, %p244
      %p246 = scmp.ne.s32.totalorder %s234, %s235
      %p247 = scmp.eq.s32.totalorder %s52, 1
      %p248 = por %p246, %p247
      %p250 = scmp.ne.s32.totalorder %s235, %s249
      %p251 = scmp.eq.s32.totalorder %s52, 0
      %p252 = por %p250, %p251
      %s254 = sadd.s32 %s253, 1
      %p257 = scmp.eq.s32.totalorder %s46, 1
      %p258 = scmp.ne.s32.totalorder %s253, %s255
      %p259 = scmp.eq.s32.totalorder %s46, 0
      %p260 = por %p258, %p259
      %p261 = scmp.ne.s32.totalorder %s253, %s255
      %p262 = scmp.eq.s32.totalorder %s51, 1
      %p263 = por %p261, %p262
      %p264 = scmp.ne.s32.totalorder %s255, %s256
      %p265 = scmp.eq.s32.totalorder %s51, 0
      %p266 = por %p264, %p265
      %p267 = scmp.ne.s32.totalorder %s255, %s256
      %p268 = scmp.eq.s32.totalorder %s52, 1
      %p269 = por %p267, %p268
      %p271 = scmp.ne.s32.totalorder %s256, %s270
      %p272 = scmp.eq.s32.totalorder %s52, 0
      %p273 = por %p271, %p272
      %s275 = sadd.s32 %s274, 1
      %p278 = scmp.eq.s32.totalorder %s46, 1
      %p279 = scmp.ne.s32.totalorder %s274, %s276
      %p280 = scmp.eq.s32.totalorder %s46, 0
      %p281 = por %p279, %p280
      %p282 = scmp.ne.s32.totalorder %s274, %s276
      %p283 = scmp.eq.s32.totalorder %s51, 1
      %p284 = por %p282, %p283
      %p285 = scmp.ne.s32.totalorder %s276, %s277
      %p286 = scmp.eq.s32.totalorder %s51, 0
      %p287 = por %p285, %p286
      %p288 = scmp.ne.s32.totalorder %s276, %s277
      %p289 = scmp.eq.s32.totalorder %s52, 1
      %p290 = por %p288, %p289
      %p292 = scmp.ne.s32.totalorder %s277, %s291
      %p293 = scmp.eq.s32.totalorder %s52, 0
      %p294 = por %p292, %p293
      %s296 = sadd.s32 %s295, 1
      %p299 = scmp.eq.s32.totalorder %s46, 1
      %p300 = scmp.ne.s32.totalorder %s295, %s297
      %p301 = scmp.eq.s32.totalorder %s46, 0
      %p302 = por %p300, %p301
      %p303 = scmp.ne.s32.totalorder %s295, %s297
      %p304 = scmp.eq.s32.totalorder %s51, 1
      %p305 = por %p303, %p304
      %p306 = scmp.ne.s32.totalorder %s297, %s298
      %p307 = scmp.eq.s32.totalorder %s51, 0
      %p308 = por %p306, %p307
      %p309 = scmp.ne.s32.totalorder %s297, %s298
      %p310 = scmp.eq.s32.totalorder %s52, 1
      %p311 = por %p309, %p310
      %p313 = scmp.ne.s32.totalorder %s298, %s312
      %p314 = scmp.eq.s32.totalorder %s52, 0
      %p315 = por %p313, %p314
      %s317 = sadd.s32 %s316, 1
      %p320 = scmp.eq.s32.totalorder %s46, 1
      %p321 = scmp.ne.s32.totalorder %s316, %s318
      %p322 = scmp.eq.s32.totalorder %s46, 0
      %p323 = por %p321, %p322
      %p324 = scmp.ne.s32.totalorder %s316, %s318
      %p325 = scmp.eq.s32.totalorder %s51, 1
      %p326 = por %p324, %p325
      %p327 = scmp.ne.s32.totalorder %s318, %s319
      %p328 = scmp.eq.s32.totalorder %s51, 0
      %p329 = por %p327, %p328
      %p330 = scmp.ne.s32.totalorder %s318, %s319
      %p331 = scmp.eq.s32.totalorder %s52, 1
      %p332 = por %p330, %p331
      %p334 = scmp.ne.s32.totalorder %s319, %s333
      %p335 = scmp.eq.s32.totalorder %s52, 0
      %p336 = por %p334, %p335
      %s338 = sadd.s32 %s337, 1
      %p341 = scmp.eq.s32.totalorder %s46, 1
      %p342 = scmp.ne.s32.totalorder %s337, %s339
      %p343 = scmp.eq.s32.totalorder %s46, 0
      %p344 = por %p342, %p343
      %p345 = scmp.ne.s32.totalorder %s337, %s339
      %p346 = scmp.eq.s32.totalorder %s51, 1
      %p347 = por %p345, %p346
      %p348 = scmp.ne.s32.totalorder %s339, %s340
      %p349 = scmp.eq.s32.totalorder %s51, 0
      %p350 = por %p348, %p349
      %p351 = scmp.ne.s32.totalorder %s339, %s340
      %p352 = scmp.eq.s32.totalorder %s52, 1
      %p353 = por %p351, %p352
      %p355 = scmp.ne.s32.totalorder %s340, %s354
      %p356 = scmp.eq.s32.totalorder %s52, 0
      %p357 = por %p355, %p356
      %s359 = sadd.s32 %s358, 1
      %p362 = scmp.eq.s32.totalorder %s46, 1
      %p363 = scmp.ne.s32.totalorder %s358, %s360
      %p364 = scmp.eq.s32.totalorder %s46, 0
      %p365 = por %p363, %p364
      %p366 = scmp.ne.s32.totalorder %s358, %s360
      %p367 = scmp.eq.s32.totalorder %s51, 1
      %p368 = por %p366, %p367
      %p369 = scmp.ne.s32.totalorder %s360, %s361
      %p370 = scmp.eq.s32.totalorder %s51, 0
      %p371 = por %p369, %p370
      %p372 = scmp.ne.s32.totalorder %s360, %s361
      %p373 = scmp.eq.s32.totalorder %s52, 1
      %p374 = por %p372, %p373
      %p376 = scmp.ne.s32.totalorder %s361, %s375
      %p377 = scmp.eq.s32.totalorder %s52, 0
      %p378 = por %p376, %p377
      %s380 = sadd.s32 %s379, 1
      %p383 = scmp.eq.s32.totalorder %s46, 1
      %p384 = scmp.ne.s32.totalorder %s379, %s381
      %p385 = scmp.eq.s32.totalorder %s46, 0
      %p386 = por %p384, %p385
      %p387 = scmp.ne.s32.totalorder %s379, %s381
      %p388 = scmp.eq.s32.totalorder %s51, 1
      %p389 = por %p387, %p388
      %p390 = scmp.ne.s32.totalorder %s381, %s382
      %p391 = scmp.eq.s32.totalorder %s51, 0
      %p392 = por %p390, %p391
      %p393 = scmp.ne.s32.totalorder %s381, %s382
      %p394 = scmp.eq.s32.totalorder %s52, 1
      %p395 = por %p393, %p394
      %p397 = scmp.ne.s32.totalorder %s382, %s396
      %p398 = scmp.eq.s32.totalorder %s52, 0
      %p399 = por %p397, %p398
      %s401 = sadd.s32 %s400, 1
      %p404 = scmp.eq.s32.totalorder %s46, 1
      %p405 = scmp.ne.s32.totalorder %s400, %s402
      %p406 = scmp.eq.s32.totalorder %s46, 0
      %p407 = por %p405, %p406
      %p408 = scmp.ne.s32.totalorder %s400, %s402
      %p409 = scmp.eq.s32.totalorder %s51, 1
      %p410 = por %p408, %p409
      %p411 = scmp.ne.s32.totalorder %s402, %s403
      %p412 = scmp.eq.s32.totalorder %s51, 0
      %p413 = por %p411, %p412
      %p414 = scmp.ne.s32.totalorder %s402, %s403
      %p415 = scmp.eq.s32.totalorder %s52, 1
      %p416 = por %p414, %p415
      %p418 = scmp.ne.s32.totalorder %s403, %s417
      %p419 = scmp.eq.s32.totalorder %s52, 0
      %p420 = por %p418, %p419
      %s422 = sadd.s32 %s421, 1
      %p425 = scmp.eq.s32.totalorder %s46, 1
      %p426 = scmp.ne.s32.totalorder %s421, %s423
      %p427 = scmp.eq.s32.totalorder %s46, 0
      %p428 = por %p426, %p427
      %p429 = scmp.ne.s32.totalorder %s421, %s423
      %p430 = scmp.eq.s32.totalorder %s51, 1
      %p431 = por %p429, %p430
      %p432 = scmp.ne.s32.totalorder %s423, %s424
      %p433 = scmp.eq.s32.totalorder %s51, 0
      %p434 = por %p432, %p433
      %p435 = scmp.ne.s32.totalorder %s423, %s424
      %p436 = scmp.eq.s32.totalorder %s52, 1
      %p437 = por %p435, %p436
      %p439 = scmp.ne.s32.totalorder %s424, %s438
      %p440 = scmp.eq.s32.totalorder %s52, 0
      %p441 = por %p439, %p440
      %s443 = sadd.s32 %s442, 1
      %p446 = scmp.eq.s32.totalorder %s46, 1
      %p447 = scmp.ne.s32.totalorder %s442, %s444
      %p448 = scmp.eq.s32.totalorder %s46, 0
      %p449 = por %p447, %p448
      %p450 = scmp.ne.s32.totalorder %s442, %s444
      %p451 = scmp.eq.s32.totalorder %s51, 1
      %p452 = por %p450, %p451
      %p453 = scmp.ne.s32.totalorder %s444, %s445
      %p454 = scmp.eq.s32.totalorder %s51, 0
      %p455 = por %p453, %p454
      %p456 = scmp.ne.s32.totalorder %s444, %s445
      %p457 = scmp.eq.s32.totalorder %s52, 1
      %p458 = por %p456, %p457
      %p460 = scmp.ne.s32.totalorder %s445, %s459
      %p461 = scmp.eq.s32.totalorder %s52, 0
      %p462 = por %p460, %p461
      %s464 = sadd.s32 %s463, 1
      %p467 = scmp.eq.s32.totalorder %s46, 1
      %p468 = scmp.ne.s32.totalorder %s463, %s465
      %p469 = scmp.eq.s32.totalorder %s46, 0
      %p470 = por %p468, %p469
      %p471 = scmp.ne.s32.totalorder %s463, %s465
      %p472 = scmp.eq.s32.totalorder %s51, 1
      %p473 = por %p471, %p472
      %p474 = scmp.ne.s32.totalorder %s465, %s466
      %p475 = scmp.eq.s32.totalorder %s51, 0
      %p476 = por %p474, %p475
      %p477 = scmp.ne.s32.totalorder %s465, %s466
      %p478 = scmp.eq.s32.totalorder %s52, 1
      %p479 = por %p477, %p478
      %p481 = scmp.ne.s32.totalorder %s466, %s480
      %p482 = scmp.eq.s32.totalorder %s52, 0
      %p483 = por %p481, %p482
      %s485 = sadd.s32 %s484, 1
      %p488 = scmp.eq.s32.totalorder %s46, 1
      %p489 = scmp.ne.s32.totalorder %s484, %s486
      %p490 = scmp.eq.s32.totalorder %s46, 0
      %p491 = por %p489, %p490
      %p492 = scmp.ne.s32.totalorder %s484, %s486
      %p493 = scmp.eq.s32.totalorder %s51, 1
      %p494 = por %p492, %p493
      %p495 = scmp.ne.s32.totalorder %s486, %s487
      %p496 = scmp.eq.s32.totalorder %s51, 0
      %p497 = por %p495, %p496
      %p498 = scmp.ne.s32.totalorder %s486, %s487
      %p499 = scmp.eq.s32.totalorder %s52, 1
      %p500 = por %p498, %p499
      %p502 = scmp.ne.s32.totalorder %s487, %s501
      %p503 = scmp.eq.s32.totalorder %s52, 0
      %p504 = por %p502, %p503
      %s506 = sadd.s32 %s505, 1
      %p509 = scmp.eq.s32.totalorder %s46, 1
      %p510 = scmp.ne.s32.totalorder %s505, %s507
      %p511 = scmp.eq.s32.totalorder %s46, 0
      %p512 = por %p510, %p511
      %p513 = scmp.ne.s32.totalorder %s505, %s507
      %p514 = scmp.eq.s32.totalorder %s51, 1
      %p515 = por %p513, %p514
      %p516 = scmp.ne.s32.totalorder %s507, %s508
      %p517 = scmp.eq.s32.totalorder %s51, 0
      %p518 = por %p516, %p517
      %p519 = scmp.ne.s32.totalorder %s507, %s508
      %p520 = scmp.eq.s32.totalorder %s52, 1
      %p521 = por %p519, %p520
      %p523 = scmp.ne.s32.totalorder %s508, %s522
      %p524 = scmp.eq.s32.totalorder %s52, 0
      %p525 = por %p523, %p524
      %s527 = sadd.s32 %s526, 1
      %p530 = scmp.eq.s32.totalorder %s46, 1
      %p531 = scmp.ne.s32.totalorder %s526, %s528
      %p532 = scmp.eq.s32.totalorder %s46, 0
      %p533 = por %p531, %p532
      %p534 = scmp.ne.s32.totalorder %s526, %s528
      %p535 = scmp.eq.s32.totalorder %s51, 1
      %p536 = por %p534, %p535
      %p537 = scmp.ne.s32.totalorder %s528, %s529
      %p538 = scmp.eq.s32.totalorder %s51, 0
      %p539 = por %p537, %p538
      %p540 = scmp.ne.s32.totalorder %s528, %s529
      %p541 = scmp.eq.s32.totalorder %s52, 1
      %p542 = por %p540, %p541
      %p544 = scmp.ne.s32.totalorder %s529, %s543
      %p545 = scmp.eq.s32.totalorder %s52, 0
      %p546 = por %p544, %p545
      %s548 = sadd.s32 %s547, 1
      %p551 = scmp.eq.s32.totalorder %s46, 1
      %p552 = scmp.ne.s32.totalorder %s547, %s549
      %p553 = scmp.eq.s32.totalorder %s46, 0
      %p554 = por %p552, %p553
      %p555 = scmp.ne.s32.totalorder %s547, %s549
      %p556 = scmp.eq.s32.totalorder %s51, 1
      %p557 = por %p555, %p556
      %p558 = scmp.ne.s32.totalorder %s549, %s550
      %p559 = scmp.eq.s32.totalorder %s51, 0
      %p560 = por %p558, %p559
      %p561 = scmp.ne.s32.totalorder %s549, %s550
      %p562 = scmp.eq.s32.totalorder %s52, 1
      %p563 = por %p561, %p562
      %p565 = scmp.ne.s32.totalorder %s550, %s564
      %p566 = scmp.eq.s32.totalorder %s52, 0
      %p567 = por %p565, %p566
      %s569 = sadd.s32 %s568, 1
      %p572 = scmp.eq.s32.totalorder %s46, 1
      %p573 = scmp.ne.s32.totalorder %s568, %s570
      %p574 = scmp.eq.s32.totalorder %s46, 0
      %p575 = por %p573, %p574
      %p576 = scmp.ne.s32.totalorder %s568, %s570
      %p577 = scmp.eq.s32.totalorder %s51, 1
      %p578 = por %p576, %p577
      %p579 = scmp.ne.s32.totalorder %s570, %s571
      %p580 = scmp.eq.s32.totalorder %s51, 0
      %p581 = por %p579, %p580
      %p582 = scmp.ne.s32.totalorder %s570, %s571
      %p583 = scmp.eq.s32.totalorder %s52, 1
      %p584 = por %p582, %p583
      %p586 = scmp.ne.s32.totalorder %s571, %s585
      %p587 = scmp.eq.s32.totalorder %s52, 0
      %p588 = por %p586, %p587
      %s589 = ssub.s32 %s46, %s53
      %p590 = scmp.eq.s32.totalorder %s589, 0
      %s592 = sadd.s32 %s591, 1
      %s593 = scalar_select %p590, %s591, %s592
      %p596 = pneg %p590
      %p597 = scmp.eq.s32.totalorder %s46, 1
      %p598 = por %p596, %p597
      %p599 = scmp.ne.s32.totalorder %s591, %s594
      %p600 = scmp.eq.s32.totalorder %s46, 0
      %p601 = por %p599, %p600
      %p602 = scmp.ne.s32.totalorder %s591, %s594
      %p603 = scmp.eq.s32.totalorder %s51, 1
      %p604 = por %p602, %p603
      %p605 = scmp.ne.s32.totalorder %s594, %s595
      %p606 = scmp.eq.s32.totalorder %s51, 0
      %p607 = por %p605, %p606
      %p608 = scmp.ne.s32.totalorder %s594, %s595
      %p609 = scmp.eq.s32.totalorder %s52, 1
      %p610 = por %p608, %p609
      %p612 = scmp.ne.s32.totalorder %s595, %s611
      %p613 = scmp.eq.s32.totalorder %s52, 0
      %p614 = por %p612, %p613
      %p615 = scmp.le.s32.totalorder 1, %s46
      %p616 = scmp.lt.s32.totalorder %s46, 3
      %p617 = pnand %p615, %p616
      %p618 = pneg %p617
      // Predicated region
      $region9: #{decoder_forward.1} parent=5 // pred_check
        _
      $region10: #{decoder_forward.1} parent=5 // pred_check_branch
        %620 = sbr.rel (%p617) target = $region12
      $region11: #{decoder_forward.1} parent=5 // pred_region
        %s621 = ssub.s32 %s46, 1
        // Predicated region
        $region13: #{decoder_forward.1} parent=11 // pred_check
          %p622 = pneg %p119
        $region14: #{decoder_forward.1} parent=11 // pred_check_branch
          %624 = sbr.rel (%p622) target = $region16
        $region15: #{decoder_forward.1} parent=11 // pred_region
          _
        $region16: #{decoder_forward.1} parent=11 // pred_fallthru
          _
        // Predicated region
        $region17: #{decoder_forward.1} parent=11 // pred_check
          %p625 = pneg %p140
        $region18: #{decoder_forward.1} parent=11 // pred_check_branch
          %627 = sbr.rel (%p625) target = $region20
        $region19: #{decoder_forward.1} parent=11 // pred_region
          _
        $region20: #{decoder_forward.1} parent=11 // pred_fallthru
          _
        // Predicated region
        $region21: #{decoder_forward.1} parent=11 // pred_check
          %p628 = pneg %p161
        $region22: #{decoder_forward.1} parent=11 // pred_check_branch
          %630 = sbr.rel (%p628) target = $region24
        $region23: #{decoder_forward.1} parent=11 // pred_region
          _
        $region24: #{decoder_forward.1} parent=11 // pred_fallthru
          _
        // Predicated region
        $region25: #{decoder_forward.1} parent=11 // pred_check
          %p631 = pneg %p182
        $region26: #{decoder_forward.1} parent=11 // pred_check_branch
          %633 = sbr.rel (%p631) target = $region28
        $region27: #{decoder_forward.1} parent=11 // pred_region
          %635 = vsyncadd [#allocation6], 0
          %s636 = sshll.u32 %s5, 4
          %s637 = int_to_ptr.hbm [resolvable:$true] %s636
          %s638 = sshll.u32 [#allocation5], 4
          %s639 = int_to_ptr.vmem [resolvable:$true] %s638
          %644 = dma.hbm_to_vmem [thread:$0]  %s637, 24576, %s639, [#allocation6], 384, 384, 24
        $region28: #{decoder_forward.1} parent=11 // pred_fallthru
          _
        // Predicated region
        $region29: #{decoder_forward.1} parent=11 // pred_check
          %p645 = pneg %p203
        $region30: #{decoder_forward.1} parent=11 // pred_check_branch
          %647 = sbr.rel (%p645) target = $region32
        $region31: #{decoder_forward.1} parent=11 // pred_region
          _
        $region32: #{decoder_forward.1} parent=11 // pred_fallthru
          _
        // Predicated region
        $region33: #{decoder_forward.1} parent=11 // pred_check
          %p648 = pneg %p224
        $region34: #{decoder_forward.1} parent=11 // pred_check_branch
          %650 = sbr.rel (%p648) target = $region36
        $region35: #{decoder_forward.1} parent=11 // pred_region
          %652 = vsyncadd [#allocation6], 0
          %s653 = sshll.u32 %s7, 4
          %s654 = int_to_ptr.hbm [resolvable:$true] %s653
          %s655 = sshll.u32 [#allocation7], 4
          %s656 = int_to_ptr.vmem [resolvable:$true] %s655
          %661 = dma.hbm_to_vmem [thread:$0]  %s654, 8192, %s656, [#allocation6], 128, 128, 8
        $region36: #{decoder_forward.1} parent=11 // pred_fallthru
          _
        // Predicated region
        $region37: #{decoder_forward.1} parent=11 // pred_check
          %p662 = pneg %p245
        $region38: #{decoder_forward.1} parent=11 // pred_check_branch
          %664 = sbr.rel (%p662) target = $region40
        $region39: #{decoder_forward.1} parent=11 // pred_region
          _
        $region40: #{decoder_forward.1} parent=11 // pred_fallthru
          _
        // Predicated region
        $region41: #{decoder_forward.1} parent=11 // pred_check
          %p665 = pneg %p266
        $region42: #{decoder_forward.1} parent=11 // pred_check_branch
          %667 = sbr.rel (%p665) target = $region44
        $region43: #{decoder_forward.1} parent=11 // pred_region
          %669 = vsyncadd [#allocation9], 0
          %s670 = sshll.u32 %s9, 4
          %s671 = int_to_ptr.hbm [resolvable:$true] %s670
          %s672 = sshll.u32 [#allocation8], 4
          %s673 = int_to_ptr.vmem [resolvable:$true] %s672
          %678 = dma.hbm_to_vmem [thread:$0]  %s671, 64, %s673, [#allocation9], 32, 32, 2
        $region44: #{decoder_forward.1} parent=11 // pred_fallthru
          _
        // Predicated region
        $region45: #{decoder_forward.1} parent=11 // pred_check
          %p679 = pneg %p287
        $region46: #{decoder_forward.1} parent=11 // pred_check_branch
          %681 = sbr.rel (%p679) target = $region48
        $region47: #{decoder_forward.1} parent=11 // pred_region
          %683 = vsyncadd [#allocation9], 0
          %s684 = sshll.u32 %s10, 4
          %s685 = int_to_ptr.hbm [resolvable:$true] %s684
          %s686 = sshll.u32 [#allocation10], 4
          %s687 = int_to_ptr.vmem [resolvable:$true] %s686
          %692 = dma.hbm_to_vmem [thread:$0]  %s685, 64, %s687, [#allocation9], 32, 32, 2
        $region48: #{decoder_forward.1} parent=11 // pred_fallthru
          _
        // Predicated region
        $region49: #{decoder_forward.1} parent=11 // pred_check
          %p693 = pneg %p308
        $region50: #{decoder_forward.1} parent=11 // pred_check_branch
          %695 = sbr.rel (%p693) target = $region52
        $region51: #{decoder_forward.1} parent=11 // pred_region
          %697 = vsyncadd [#allocation12], 0
          %s698 = sshll.u32 %s11, 4
          %s699 = int_to_ptr.hbm [resolvable:$true] %s698
          %s700 = sshll.u32 [#allocation11], 4
          %s701 = int_to_ptr.vmem [resolvable:$true] %s700
          %706 = dma.hbm_to_vmem [thread:$0]  %s699, 8192, %s701, [#allocation12], 128, 128, 8
        $region52: #{decoder_forward.1} parent=11 // pred_fallthru
          _
        // Predicated region
        $region53: #{decoder_forward.1} parent=11 // pred_check
          %p707 = pneg %p329
        $region54: #{decoder_forward.1} parent=11 // pred_check_branch
          %709 = sbr.rel (%p707) target = $region56
        $region55: #{decoder_forward.1} parent=11 // pred_region
          %711 = vsyncadd [#allocation12], 0
          %s712 = sshll.u32 %s12, 4
          %s713 = int_to_ptr.hbm [resolvable:$true] %s712
          %s714 = sshll.u32 [#allocation13], 4
          %s715 = int_to_ptr.vmem [resolvable:$true] %s714
          %720 = dma.hbm_to_vmem [thread:$0]  %s713, 64, %s715, [#allocation12], 32, 32, 2
        $region56: #{decoder_forward.1} parent=11 // pred_fallthru
          _
        // Predicated region
        $region57: #{decoder_forward.1} parent=11 // pred_check
          %p721 = pneg %p350
        $region58: #{decoder_forward.1} parent=11 // pred_check_branch
          %723 = sbr.rel (%p721) target = $region60
        $region59: #{decoder_forward.1} parent=11 // pred_region
          %725 = vsyncadd [#allocation15], 0
          %s726 = sshll.u32 %s13, 4
          %s727 = int_to_ptr.hbm [resolvable:$true] %s726
          %s728 = sshll.u32 [#allocation14], 4
          %s729 = int_to_ptr.vmem [resolvable:$true] %s728
          %734 = dma.hbm_to_vmem [thread:$0]  %s727, 16384, %s729, [#allocation15], 256, 256, 16
        $region60: #{decoder_forward.1} parent=11 // pred_fallthru
          _
        // Predicated region
        $region61: #{decoder_forward.1} parent=11 // pred_check
          %p735 = pneg %p371
        $region62: #{decoder_forward.1} parent=11 // pred_check_branch
          %737 = sbr.rel (%p735) target = $region64
        $region63: #{decoder_forward.1} parent=11 // pred_region
          %739 = vsyncadd [#allocation15], 0
          %s740 = sshll.u32 %s14, 4
          %s741 = int_to_ptr.hbm [resolvable:$true] %s740
          %s742 = sshll.u32 [#allocation16], 4
          %s743 = int_to_ptr.vmem [resolvable:$true] %s742
          %748 = dma.hbm_to_vmem [thread:$0]  %s741, 128, %s743, [#allocation15], 64, 64, 4
        $region64: #{decoder_forward.1} parent=11 // pred_fallthru
          _
        // Predicated region
        $region65: #{decoder_forward.1} parent=11 // pred_check
          %p749 = pneg %p392
        $region66: #{decoder_forward.1} parent=11 // pred_check_branch
          %751 = sbr.rel (%p749) target = $region68
        $region67: #{decoder_forward.1} parent=11 // pred_region
          %753 = vsyncadd [#allocation18], 0
          %s754 = sshll.u32 %s15, 4
          %s755 = int_to_ptr.hbm [resolvable:$true] %s754
          %s756 = sshll.u32 [#allocation17], 4
          %s757 = int_to_ptr.vmem [resolvable:$true] %s756
          %762 = dma.hbm_to_vmem [thread:$0]  %s755, 8192, %s757, [#allocation18], 128, 128, 8
        $region68: #{decoder_forward.1} parent=11 // pred_fallthru
          _
        // Predicated region
        $region69: #{decoder_forward.1} parent=11 // pred_check
          %p763 = pneg %p413
        $region70: #{decoder_forward.1} parent=11 // pred_check_branch
          %765 = sbr.rel (%p763) target = $region72
        $region71: #{decoder_forward.1} parent=11 // pred_region
          %767 = vsyncadd [#allocation18], 0
          %s768 = sshll.u32 %s16, 4
          %s769 = int_to_ptr.hbm [resolvable:$true] %s768
          %s770 = sshll.u32 [#allocation19], 4
          %s771 = int_to_ptr.vmem [resolvable:$true] %s770
          %776 = dma.hbm_to_vmem [thread:$0]  %s769, 64, %s771, [#allocation18], 32, 32, 2
        $region72: #{decoder_forward.1} parent=11 // pred_fallthru
          _
        // Predicated region
        $region73: #{decoder_forward.1} parent=11 // pred_check
          %p777 = pneg %p434
        $region74: #{decoder_forward.1} parent=11 // pred_check_branch
          %779 = sbr.rel (%p777) target = $region76
        $region75: #{decoder_forward.1} parent=11 // pred_region
          %781 = vsyncadd [#allocation21], 0
          %s782 = sshll.u32 %s17, 4
          %s783 = int_to_ptr.hbm [resolvable:$true] %s782
          %s784 = sshll.u32 [#allocation20], 4
          %s785 = int_to_ptr.vmem [resolvable:$true] %s784
          %790 = dma.hbm_to_vmem [thread:$0]  %s783, 64, %s785, [#allocation21], 32, 32, 2
        $region76: #{decoder_forward.1} parent=11 // pred_fallthru
          _
        // Predicated region
        $region77: #{decoder_forward.1} parent=11 // pred_check
          %p791 = pneg %p455
        $region78: #{decoder_forward.1} parent=11 // pred_check_branch
          %793 = sbr.rel (%p791) target = $region80
        $region79: #{decoder_forward.1} parent=11 // pred_region
          %795 = vsyncadd [#allocation21], 0
          %s796 = sshll.u32 %s18, 4
          %s797 = int_to_ptr.hbm [resolvable:$true] %s796
          %s798 = sshll.u32 [#allocation22], 4
          %s799 = int_to_ptr.vmem [resolvable:$true] %s798
          %804 = dma.hbm_to_vmem [thread:$0]  %s797, 64, %s799, [#allocation21], 32, 32, 2
        $region80: #{decoder_forward.1} parent=11 // pred_fallthru
          _
        // Predicated region
        $region81: #{decoder_forward.1} parent=11 // pred_check
          %p805 = pneg %p476
        $region82: #{decoder_forward.1} parent=11 // pred_check_branch
          %807 = sbr.rel (%p805) target = $region84
        $region83: #{decoder_forward.1} parent=11 // pred_region
          %809 = vsyncadd [#allocation24], 0
          %s810 = sshll.u32 %s19, 4
          %s811 = int_to_ptr.hbm [resolvable:$true] %s810
          %s812 = sshll.u32 [#allocation23], 4
          %s813 = int_to_ptr.vmem [resolvable:$true] %s812
          %818 = dma.hbm_to_vmem [thread:$0]  %s811, 16384, %s813, [#allocation24], 256, 256, 16
        $region84: #{decoder_forward.1} parent=11 // pred_fallthru
          _
        // Predicated region
        $region85: #{decoder_forward.1} parent=11 // pred_check
          %p819 = pneg %p497
        $region86: #{decoder_forward.1} parent=11 // pred_check_branch
          %821 = sbr.rel (%p819) target = $region88
        $region87: #{decoder_forward.1} parent=11 // pred_region
          _
        $region88: #{decoder_forward.1} parent=11 // pred_fallthru
          _
        // Predicated region
        $region89: #{decoder_forward.1} parent=11 // pred_check
          %p822 = pneg %p518
        $region90: #{decoder_forward.1} parent=11 // pred_check_branch
          %824 = sbr.rel (%p822) target = $region92
        $region91: #{decoder_forward.1} parent=11 // pred_region
          %826 = vsyncadd [#allocation24], 0
          %s827 = sshll.u32 %s21, 4
          %s828 = int_to_ptr.hbm [resolvable:$true] %s827
          %s829 = sshll.u32 [#allocation25], 4
          %s830 = int_to_ptr.vmem [resolvable:$true] %s829
          %835 = dma.hbm_to_vmem [thread:$0]  %s828, 16384, %s830, [#allocation24], 128, 128, 8
        $region92: #{decoder_forward.1} parent=11 // pred_fallthru
          _
        // Predicated region
        $region93: #{decoder_forward.1} parent=11 // pred_check
          %p836 = pneg %p539
        $region94: #{decoder_forward.1} parent=11 // pred_check_branch
          %838 = sbr.rel (%p836) target = $region96
        $region95: #{decoder_forward.1} parent=11 // pred_region
          %840 = vsyncadd [#allocation27], 0
          %s841 = sshll.u32 %s22, 4
          %s842 = int_to_ptr.hbm [resolvable:$true] %s841
          %s843 = sshll.u32 [#allocation26], 4
          %s844 = int_to_ptr.vmem [resolvable:$true] %s843
          %849 = dma.hbm_to_vmem [thread:$0]  %s842, 64, %s844, [#allocation27], 32, 32, 2
        $region96: #{decoder_forward.1} parent=11 // pred_fallthru
          _
        // Predicated region
        $region97: #{decoder_forward.1} parent=11 // pred_check
          %p850 = pneg %p560
        $region98: #{decoder_forward.1} parent=11 // pred_check_branch
          %852 = sbr.rel (%p850) target = $region100
        $region99: #{decoder_forward.1} parent=11 // pred_region
          %854 = vsyncadd [#allocation27], 0
          %s856 = sshll.u32 %s23, 4
          %s857 = int_to_ptr.hbm [resolvable:$true] %s856
          %s858 = sshll.u32 [#allocation28], 4
          %s859 = int_to_ptr.vmem [resolvable:$true] %s858
          %861 = dma.hbm_to_vmem [thread:$0]  %s857, 32, %s859, [#allocation27]
        $region100: #{decoder_forward.1} parent=11 // pred_fallthru
          _
        // Predicated region
        $region101: #{decoder_forward.1} parent=11 // pred_check
          %p862 = pneg %p581
        $region102: #{decoder_forward.1} parent=11 // pred_check_branch
          %864 = sbr.rel (%p862) target = $region104
        $region103: #{decoder_forward.1} parent=11 // pred_region
          %866 = vsyncadd [#allocation30], 0
          %s868 = sshll.u32 %s24, 4
          %s869 = int_to_ptr.hbm [resolvable:$true] %s868
          %s870 = sshll.u32 [#allocation29], 4
          %s871 = int_to_ptr.vmem [resolvable:$true] %s870
          %873 = dma.hbm_to_vmem [thread:$0]  %s869, 32, %s871, [#allocation30]
        $region104: #{decoder_forward.1} parent=11 // pred_fallthru
          _
      $region12: #{decoder_forward.1} parent=5 // pred_fallthru
        _
      %p874 = scmp.lt.s32.totalorder %s46, 2
      // Predicated region
      $region105: #{decoder_forward.1} parent=5 // pred_check
        %p875 = pneg %p874
      $region106: #{decoder_forward.1} parent=5 // pred_check_branch
        %877 = sbr.rel (%p875) target = $region108
      $region107: #{decoder_forward.1} parent=5 // pred_region
        // Predicated region
        $region109: #{decoder_forward.1} parent=107 // pred_check
          %p878 = pneg %p66
        $region110: #{decoder_forward.1} parent=107 // pred_check_branch
          %880 = sbr.rel (%p878) target = $region112
        $region111: #{decoder_forward.1} parent=107 // pred_region
          %s881 = sand.u32 %s56, 1
          %s882 = scalar_lea.sflag [#allocation3], %s881
          %s883 = sand.u32 %s56, 1
          %s884 = smul.addr %s883, 16
          %s885 = scalar_lea.vmem [#allocation2], %s884
          %887 = vsyncadd %s882, 0
          %s888 = smul.addr %s46, 2
          %s889 = smul.addr %s888, 8
          %s890 = scalar_lea.hbm %s0, %s889
          %s892 = sshll.u32 %s890, 4
          %s893 = int_to_ptr.hbm [resolvable:$true] %s892
          %s894 = sshll.u32 %s885, 4
          %s895 = int_to_ptr.vmem [resolvable:$true] %s894
          %897 = dma.hbm_to_vmem [thread:$0]  %s893, 256, %s895, %s882
        $region112: #{decoder_forward.1} parent=107 // pred_fallthru
          _
        // Predicated region
        $region113: #{decoder_forward.1} parent=107 // pred_check
          %p898 = pneg %p92
        $region114: #{decoder_forward.1} parent=107 // pred_check_branch
          %900 = sbr.rel (%p898) target = $region116
        $region115: #{decoder_forward.1} parent=107 // pred_region
          %p901 = scmp.lt.s32.totalorder %s46, 1
          %s902 = scalar_select %p901, %s46, 1
          %s903 = smul.addr %s902, 4
          %s904 = smul.addr %s903, 8
          %s905 = scalar_lea.vmem %s1, %s904
        $region116: #{decoder_forward.1} parent=107 // pred_fallthru
          _
      $region108: #{decoder_forward.1} parent=5 // pred_fallthru
        _
      %p906 = scmp.le.s32.totalorder 1, %s46
      %p907 = scmp.lt.s32.totalorder %s46, 3
      %p908 = pnand %p906, %p907
      %p909 = pneg %p908
      // Predicated region
      $region117: #{decoder_forward.1} parent=5 // pred_check
        _
      $region118: #{decoder_forward.1} parent=5 // pred_check_branch
        %911 = sbr.rel (%p908) target = $region120
      $region119: #{decoder_forward.1} parent=5 // pred_region
        %s912 = ssub.s32 %s46, 1
        %s913 = sand.u32 %s59, 1
        %s914 = scalar_lea.sflag [#allocation3], %s913
        %s915 = sand.u32 %s59, 1
        %s916 = smul.addr %s915, 16
        %s917 = scalar_lea.vmem [#allocation2], %s916
        // Predicated region
        $region121: #{decoder_forward.1} parent=119 // pred_check
          %p918 = pneg %p72
        $region122: #{decoder_forward.1} parent=119 // pred_check_branch
          %920 = sbr.rel (%p918) target = $region124
        $region123: #{decoder_forward.1} parent=119 // pred_region
          %922 = dma.done %s914, 256
        $region124: #{decoder_forward.1} parent=119 // pred_fallthru
          _
        // Predicated region
        $region125: #{decoder_forward.1} parent=119 // pred_check
          %p923 = pneg %p182
        $region126: #{decoder_forward.1} parent=119 // pred_check_branch
          %925 = sbr.rel (%p923) target = $region128
        $region127: #{decoder_forward.1} parent=119 // pred_region
          %927 = dma.done [#allocation6], 24576
        $region128: #{decoder_forward.1} parent=119 // pred_fallthru
          _
        // Predicated region
        $region129: #{decoder_forward.1} parent=119 // pred_check
          %p928 = pneg %p224
        $region130: #{decoder_forward.1} parent=119 // pred_check_branch
          %930 = sbr.rel (%p928) target = $region132
        $region131: #{decoder_forward.1} parent=119 // pred_region
          %932 = dma.done [#allocation6], 8192
        $region132: #{decoder_forward.1} parent=119 // pred_fallthru
          _
        // Predicated region
        $region133: #{decoder_forward.1} parent=119 // pred_check
          %p933 = pneg %p266
        $region134: #{decoder_forward.1} parent=119 // pred_check_branch
          %935 = sbr.rel (%p933) target = $region136
        $region135: #{decoder_forward.1} parent=119 // pred_region
          %937 = dma.done [#allocation9], 64
        $region136: #{decoder_forward.1} parent=119 // pred_fallthru
          _
        // Predicated region
        $region137: #{decoder_forward.1} parent=119 // pred_check
          %p938 = pneg %p287
        $region138: #{decoder_forward.1} parent=119 // pred_check_branch
          %940 = sbr.rel (%p938) target = $region140
        $region139: #{decoder_forward.1} parent=119 // pred_region
          %942 = dma.done [#allocation9], 64
        $region140: #{decoder_forward.1} parent=119 // pred_fallthru
          _
        // Predicated region
        $region141: #{decoder_forward.1} parent=119 // pred_check
          %p943 = pneg %p308
        $region142: #{decoder_forward.1} parent=119 // pred_check_branch
          %945 = sbr.rel (%p943) target = $region144
        $region143: #{decoder_forward.1} parent=119 // pred_region
          %947 = dma.done [#allocation12], 8192
        $region144: #{decoder_forward.1} parent=119 // pred_fallthru
          _
        // Predicated region
        $region145: #{decoder_forward.1} parent=119 // pred_check
          %p948 = pneg %p329
        $region146: #{decoder_forward.1} parent=119 // pred_check_branch
          %950 = sbr.rel (%p948) target = $region148
        $region147: #{decoder_forward.1} parent=119 // pred_region
          %952 = dma.done [#allocation12], 64
        $region148: #{decoder_forward.1} parent=119 // pred_fallthru
          _
        // Predicated region
        $region149: #{decoder_forward.1} parent=119 // pred_check
          %p953 = pneg %p350
        $region150: #{decoder_forward.1} parent=119 // pred_check_branch
          %955 = sbr.rel (%p953) target = $region152
        $region151: #{decoder_forward.1} parent=119 // pred_region
          %957 = dma.done [#allocation15], 16384
        $region152: #{decoder_forward.1} parent=119 // pred_fallthru
          _
        // Predicated region
        $region153: #{decoder_forward.1} parent=119 // pred_check
          %p958 = pneg %p371
        $region154: #{decoder_forward.1} parent=119 // pred_check_branch
          %960 = sbr.rel (%p958) target = $region156
        $region155: #{decoder_forward.1} parent=119 // pred_region
          %962 = dma.done [#allocation15], 128
        $region156: #{decoder_forward.1} parent=119 // pred_fallthru
          _
        // Predicated region
        $region157: #{decoder_forward.1} parent=119 // pred_check
          %p963 = pneg %p392
        $region158: #{decoder_forward.1} parent=119 // pred_check_branch
          %965 = sbr.rel (%p963) target = $region160
        $region159: #{decoder_forward.1} parent=119 // pred_region
          %967 = dma.done [#allocation18], 8192
        $region160: #{decoder_forward.1} parent=119 // pred_fallthru
          _
        // Predicated region
        $region161: #{decoder_forward.1} parent=119 // pred_check
          %p968 = pneg %p413
        $region162: #{decoder_forward.1} parent=119 // pred_check_branch
          %970 = sbr.rel (%p968) target = $region164
        $region163: #{decoder_forward.1} parent=119 // pred_region
          %972 = dma.done [#allocation18], 64
        $region164: #{decoder_forward.1} parent=119 // pred_fallthru
          _
        // Predicated region
        $region165: #{decoder_forward.1} parent=119 // pred_check
          %p973 = pneg %p434
        $region166: #{decoder_forward.1} parent=119 // pred_check_branch
          %975 = sbr.rel (%p973) target = $region168
        $region167: #{decoder_forward.1} parent=119 // pred_region
          %977 = dma.done [#allocation21], 64
        $region168: #{decoder_forward.1} parent=119 // pred_fallthru
          _
        // Predicated region
        $region169: #{decoder_forward.1} parent=119 // pred_check
          %p978 = pneg %p455
        $region170: #{decoder_forward.1} parent=119 // pred_check_branch
          %980 = sbr.rel (%p978) target = $region172
        $region171: #{decoder_forward.1} parent=119 // pred_region
          %982 = dma.done [#allocation21], 64
        $region172: #{decoder_forward.1} parent=119 // pred_fallthru
          _
        // Predicated region
        $region173: #{decoder_forward.1} parent=119 // pred_check
          %p983 = pneg %p476
        $region174: #{decoder_forward.1} parent=119 // pred_check_branch
          %985 = sbr.rel (%p983) target = $region176
        $region175: #{decoder_forward.1} parent=119 // pred_region
          %987 = dma.done [#allocation24], 16384
        $region176: #{decoder_forward.1} parent=119 // pred_fallthru
          _
        // Predicated region
        $region177: #{decoder_forward.1} parent=119 // pred_check
          %p988 = pneg %p518
        $region178: #{decoder_forward.1} parent=119 // pred_check_branch
          %990 = sbr.rel (%p988) target = $region180
        $region179: #{decoder_forward.1} parent=119 // pred_region
          %992 = dma.done [#allocation24], 16384
        $region180: #{decoder_forward.1} parent=119 // pred_fallthru
          _
        // Predicated region
        $region181: #{decoder_forward.1} parent=119 // pred_check
          %p993 = pneg %p539
        $region182: #{decoder_forward.1} parent=119 // pred_check_branch
          %995 = sbr.rel (%p993) target = $region184
        $region183: #{decoder_forward.1} parent=119 // pred_region
          %997 = dma.done [#allocation27], 64
        $region184: #{decoder_forward.1} parent=119 // pred_fallthru
          _
        // Predicated region
        $region185: #{decoder_forward.1} parent=119 // pred_check
          %p998 = pneg %p560
        $region186: #{decoder_forward.1} parent=119 // pred_check_branch
          %1000 = sbr.rel (%p998) target = $region188
        $region187: #{decoder_forward.1} parent=119 // pred_region
          %1002 = dma.done [#allocation27], 32
        $region188: #{decoder_forward.1} parent=119 // pred_fallthru
          _
        // Predicated region
        $region189: #{decoder_forward.1} parent=119 // pred_check
          %p1003 = pneg %p581
        $region190: #{decoder_forward.1} parent=119 // pred_check_branch
          %1005 = sbr.rel (%p1003) target = $region192
        $region191: #{decoder_forward.1} parent=119 // pred_region
          %1007 = dma.done [#allocation30], 32
        $region192: #{decoder_forward.1} parent=119 // pred_fallthru
          _
        %s1008 = sand.u32 %s59, 1
        %s1009 = scalar_lea.sflag [#allocation3], %s1008
        %s1010 = sand.u32 %s59, 1
        %s1011 = smul.addr %s1010, 16
        %s1012 = scalar_lea.vmem [#allocation2], %s1011
        %p1013 = pneg %p72
        %p1014 = pneg %p69
        %p1015 = scmp.lt.s32.totalorder %s51, 1
        %s1016 = scalar_select %p1015, %s51, 1
        %s1017 = smul.addr %s1016, 4
        %s1018 = smul.addr %s1017, 8
        %s1019 = scalar_lea.vmem %s1, %s1018
        %p1020 = pneg %p98
        %p1021 = pneg %p95
        %p1022 = pneg %p119
        %p1023 = pneg %p116
        %p1024 = pneg %p140
        %p1025 = pneg %p137
        %p1026 = pneg %p161
        %p1027 = pneg %p158
        %p1028 = pneg %p182
        %p1029 = pneg %p179
        %p1030 = pneg %p203
        %p1031 = pneg %p200
        %p1032 = pneg %p224
        %p1033 = pneg %p221
        %p1034 = pneg %p245
        %p1035 = pneg %p242
        %p1036 = pneg %p266
        %p1037 = pneg %p263
        %p1038 = pneg %p287
        %p1039 = pneg %p284
        %p1040 = pneg %p308
        %p1041 = pneg %p305
        %p1042 = pneg %p329
        %p1043 = pneg %p326
        %p1044 = pneg %p350
        %p1045 = pneg %p347
        %p1046 = pneg %p371
        %p1047 = pneg %p368
        %p1048 = pneg %p392
        %p1049 = pneg %p389
        %p1050 = pneg %p413
        %p1051 = pneg %p410
        %p1052 = pneg %p434
        %p1053 = pneg %p431
        %p1054 = pneg %p455
        %p1055 = pneg %p452
        %p1056 = pneg %p476
        %p1057 = pneg %p473
        %p1058 = pneg %p497
        %p1059 = pneg %p494
        %p1060 = pneg %p518
        %p1061 = pneg %p515
        %p1062 = pneg %p539
        %p1063 = pneg %p536
        %p1064 = pneg %p560
        %p1065 = pneg %p557
        %p1066 = pneg %p581
        %p1067 = pneg %p578
        %p1068 = pneg %p607
        %p1069 = pneg %p604
        %s1070 = sand.u32 %s594, 1
        %s1071 = scalar_lea.sflag [#allocation4], %s1070
        %s1072 = sand.u32 %s594, 1
        %s1073 = smul.addr %s1072, 16
        %s1074 = scalar_lea.vmem [#allocation31], %s1073
        %p1075 = scmp.lt.s32.totalorder %s51, 1
        %s1076 = scalar_select %p1075, %s51, 1
        %s1077 = smul.addr %s1076, 4
        %s1078 = smul.addr %s1077, 8
        %s1079 = scalar_lea.vmem %s1, %s1078
        %v1080 = vld [vmem:[%s917] sm:$0xff]
        %v1081 = vld [vmem:[%s917 + $0x8] sm:$0xff]
        %v1082 = vld [vmem:[%s2] sm:$0xff]
        %v1083 = vld [vmem:[%s2 + $0x8] sm:$0xff]
        %v1084 = vadd.f32 %v1080, %v1082
        %v1085 = vadd.f32 %v1081, %v1083
        %v1086 = vld [vmem:[%s1079] sm:$0xff]
        %v1087 = vld [vmem:[%s1079 + $0x8] sm:$0xff]
        %v1088 = vld [vmem:[%s1079 + $0x10] sm:$0xff]
        %v1089 = vld [vmem:[%s1079 + $0x18] sm:$0xff]
        %v1090 = vpack.c.bf16 %v1088, %v1086
        %v1091 = vpack.c.bf16 %v1089, %v1087
        %v1092 = vlaneseq
        %v1093 = vshrl.u32 %v1092, 7
        %v1094 = vlaneseq
        %v1095 = vand.u32 %v1094, 127
        %vm1096 = vcmp.ge.s32.totalorder %v1093, %v1095
        %v1097 = vld [vmem:[%s3] sm:$0x3]
        %v1098 = vld [vmem:[%s4] sm:$0x3]
        %v1099 = vadd.f32 %v1084, %v1085
        %1100 = vadd.xlane.f32.xlu0 %v1099
        %v1101 = vpop.xlane.xlu0 %1100
        %v1102 = vrcp.pop 256.0
        %v1103 = vmul.f32 256.0, %v1102
        %v1104 = vsub.f32 1.0, %v1103
        %v1105 = vmul.f32 %v1102, %v1104
        %v1106 = vadd.f32 %v1102, %v1105
        %vm1107 = vweird.f32 %v1102
        %v1108 = vsel %vm1107, %v1102, %v1106
        %v1109 = vmul.f32 %v1101, %v1108
        %v1110 = vsub.f32 %v1084, %v1109
        %v1111 = vsub.f32 %v1085, %v1109
        %v1112 = vmul.f32 %v1110, %v1110
        %v1113 = vmul.f32 %v1111, %v1111
        %v1114 = vadd.f32 %v1112, %v1113
        %1115 = vadd.xlane.f32.xlu0 %v1114
        %v1116 = vpop.xlane.xlu0 %1115
        %v1117 = vmul.f32 %v1116, %v1108
        %v1118 = vadd.f32 %v1117, 1e-05
        %v1119 = vrsqrt.pop %v1118
        %v1120 = vmul.f32 %v1119, %v1118
        %v1121 = vmul.f32 %v1120, %v1119
        %v1122 = vmul.f32 0.5, %v1121
        %v1123 = vsub.f32 1.5, %v1122
        %v1124 = vmul.f32 %v1119, %v1123
        %vm1125 = vweird.f32 %v1118
        %vm1126 = vweird.f32 %v1119
        %vm1127 = vmor %vm1125, %vm1126
        %v1128 = vsel %vm1127, %v1119, %v1124
        %v1129 = vmul.f32 %v1110, %v1128
        %v1130 = vmul.f32 %v1111, %v1128
        %v1132 = vperm.slane %v1097, 0
        %v1133 = vperm.slane %v1097, 1
        %v1136 = vmul.f32 %v1129, %v1132
        %v1137 = vmul.f32 %v1130, %v1133
        %v1139 = vperm.slane %v1098, 0
        %v1140 = vperm.slane %v1098, 1
        %v1143 = vadd.f32 %v1136, %v1139
        %v1144 = vadd.f32 %v1137, %v1140
        %v1145 = vpack.c.bf16 %v1143, %v1143
        %v1146 = vpack.c.bf16 %v1144, %v1144
        %v1147 = vld [vmem:[#allocation5] sm:$0xff]
        %v1148 = vld [vmem:[#allocation5 + $0x8] sm:$0xff]
        %v1149 = vld [vmem:[#allocation5 + $0x10] sm:$0xff]
        %v1150 = vld [vmem:[#allocation5 + $0x18] sm:$0xff]
        %v1151 = vld [vmem:[#allocation5 + $0x20] sm:$0xff]
        %v1152 = vld [vmem:[#allocation5 + $0x28] sm:$0xff]
        %v1153 = vld [vmem:[#allocation5 + $0x30] sm:$0xff]
        %v1154 = vld [vmem:[#allocation5 + $0x38] sm:$0xff]
        %v1155 = vld [vmem:[#allocation5 + $0x40] sm:$0xff]
        %v1156 = vld [vmem:[#allocation5 + $0x48] sm:$0xff]
        %v1157 = vld [vmem:[#allocation5 + $0x50] sm:$0xff]
        %v1158 = vld [vmem:[#allocation5 + $0x58] sm:$0xff]
        %v1159 = vld [vmem:[#allocation5 + $0x60] sm:$0xff]
        %v1160 = vld [vmem:[#allocation5 + $0x68] sm:$0xff]
        %v1161 = vld [vmem:[#allocation5 + $0x70] sm:$0xff]
        %v1162 = vld [vmem:[#allocation5 + $0x78] sm:$0xff]
        %v1163 = vld [vmem:[#allocation5 + $0x80] sm:$0xff]
        %v1164 = vld [vmem:[#allocation5 + $0x88] sm:$0xff]
        %v1165 = vld [vmem:[#allocation5 + $0x90] sm:$0xff]
        %v1166 = vld [vmem:[#allocation5 + $0x98] sm:$0xff]
        %v1167 = vld [vmem:[#allocation5 + $0xa0] sm:$0xff]
        %v1168 = vld [vmem:[#allocation5 + $0xa8] sm:$0xff]
        %v1169 = vld [vmem:[#allocation5 + $0xb0] sm:$0xff]
        %v1170 = vld [vmem:[#allocation5 + $0xb8] sm:$0xff]
        %v1171 = vld [vmem:[#allocation5 + $0xc0] sm:$0xff]
        %v1172 = vld [vmem:[#allocation5 + $0xc8] sm:$0xff]
        %v1173 = vld [vmem:[#allocation5 + $0xd0] sm:$0xff]
        %v1174 = vld [vmem:[#allocation5 + $0xd8] sm:$0xff]
        %v1175 = vld [vmem:[#allocation5 + $0xe0] sm:$0xff]
        %v1176 = vld [vmem:[#allocation5 + $0xe8] sm:$0xff]
        %v1177 = vld [vmem:[#allocation5 + $0xf0] sm:$0xff]
        %v1178 = vld [vmem:[#allocation5 + $0xf8] sm:$0xff]
        %v1179 = vld [vmem:[#allocation5 + $0x100] sm:$0xff]
        %v1180 = vld [vmem:[#allocation5 + $0x108] sm:$0xff]
        %v1181 = vld [vmem:[#allocation5 + $0x110] sm:$0xff]
        %v1182 = vld [vmem:[#allocation5 + $0x118] sm:$0xff]
        %v1183 = vld [vmem:[#allocation5 + $0x120] sm:$0xff]
        %v1184 = vld [vmem:[#allocation5 + $0x128] sm:$0xff]
        %v1185 = vld [vmem:[#allocation5 + $0x130] sm:$0xff]
        %v1186 = vld [vmem:[#allocation5 + $0x138] sm:$0xff]
        %v1187 = vld [vmem:[#allocation5 + $0x140] sm:$0xff]
        %v1188 = vld [vmem:[#allocation5 + $0x148] sm:$0xff]
        %v1189 = vld [vmem:[#allocation5 + $0x150] sm:$0xff]
        %v1190 = vld [vmem:[#allocation5 + $0x158] sm:$0xff]
        %v1191 = vld [vmem:[#allocation5 + $0x160] sm:$0xff]
        %v1192 = vld [vmem:[#allocation5 + $0x168] sm:$0xff]
        %v1193 = vld [vmem:[#allocation5 + $0x170] sm:$0xff]
        %v1194 = vld [vmem:[#allocation5 + $0x178] sm:$0xff]
        %v1195 = vld [vmem:[#allocation5 + $0x180] sm:$0xff]
        %v1196 = vld [vmem:[#allocation5 + $0x188] sm:$0xff]
        %v1197 = vld [vmem:[#allocation5 + $0x190] sm:$0xff]
        %v1198 = vld [vmem:[#allocation5 + $0x198] sm:$0xff]
        %v1199 = vld [vmem:[#allocation5 + $0x1a0] sm:$0xff]
        %v1200 = vld [vmem:[#allocation5 + $0x1a8] sm:$0xff]
        %v1201 = vld [vmem:[#allocation5 + $0x1b0] sm:$0xff]
        %v1202 = vld [vmem:[#allocation5 + $0x1b8] sm:$0xff]
        %v1203 = vld [vmem:[#allocation5 + $0x1c0] sm:$0xff]
        %v1204 = vld [vmem:[#allocation5 + $0x1c8] sm:$0xff]
        %v1205 = vld [vmem:[#allocation5 + $0x1d0] sm:$0xff]
        %v1206 = vld [vmem:[#allocation5 + $0x1d8] sm:$0xff]
        %v1207 = vld [vmem:[#allocation5 + $0x1e0] sm:$0xff]
        %v1208 = vld [vmem:[#allocation5 + $0x1e8] sm:$0xff]
        %v1209 = vld [vmem:[#allocation5 + $0x1f0] sm:$0xff]
        %v1210 = vld [vmem:[#allocation5 + $0x1f8] sm:$0xff]
        %v1211 = vld [vmem:[#allocation5 + $0x200] sm:$0xff]
        %v1212 = vld [vmem:[#allocation5 + $0x208] sm:$0xff]
        %v1213 = vld [vmem:[#allocation5 + $0x210] sm:$0xff]
        %v1214 = vld [vmem:[#allocation5 + $0x218] sm:$0xff]
        %v1215 = vld [vmem:[#allocation5 + $0x220] sm:$0xff]
        %v1216 = vld [vmem:[#allocation5 + $0x228] sm:$0xff]
        %v1217 = vld [vmem:[#allocation5 + $0x230] sm:$0xff]
        %v1218 = vld [vmem:[#allocation5 + $0x238] sm:$0xff]
        %v1219 = vld [vmem:[#allocation5 + $0x240] sm:$0xff]
        %v1220 = vld [vmem:[#allocation5 + $0x248] sm:$0xff]
        %v1221 = vld [vmem:[#allocation5 + $0x250] sm:$0xff]
        %v1222 = vld [vmem:[#allocation5 + $0x258] sm:$0xff]
        %v1223 = vld [vmem:[#allocation5 + $0x260] sm:$0xff]
        %v1224 = vld [vmem:[#allocation5 + $0x268] sm:$0xff]
        %v1225 = vld [vmem:[#allocation5 + $0x270] sm:$0xff]
        %v1226 = vld [vmem:[#allocation5 + $0x278] sm:$0xff]
        %v1227 = vld [vmem:[#allocation5 + $0x280] sm:$0xff]
        %v1228 = vld [vmem:[#allocation5 + $0x288] sm:$0xff]
        %v1229 = vld [vmem:[#allocation5 + $0x290] sm:$0xff]
        %v1230 = vld [vmem:[#allocation5 + $0x298] sm:$0xff]
        %v1231 = vld [vmem:[#allocation5 + $0x2a0] sm:$0xff]
        %v1232 = vld [vmem:[#allocation5 + $0x2a8] sm:$0xff]
        %v1233 = vld [vmem:[#allocation5 + $0x2b0] sm:$0xff]
        %v1234 = vld [vmem:[#allocation5 + $0x2b8] sm:$0xff]
        %v1235 = vld [vmem:[#allocation5 + $0x2c0] sm:$0xff]
        %v1236 = vld [vmem:[#allocation5 + $0x2c8] sm:$0xff]
        %v1237 = vld [vmem:[#allocation5 + $0x2d0] sm:$0xff]
        %v1238 = vld [vmem:[#allocation5 + $0x2d8] sm:$0xff]
        %v1239 = vld [vmem:[#allocation5 + $0x2e0] sm:$0xff]
        %v1240 = vld [vmem:[#allocation5 + $0x2e8] sm:$0xff]
        %v1241 = vld [vmem:[#allocation5 + $0x2f0] sm:$0xff]
        %v1242 = vld [vmem:[#allocation5 + $0x2f8] sm:$0xff]
        %v1243 = vld [vmem:[%s6] sm:$0x3f]
        %v1245 = vperm.slane %v1243, 0
        %v1246 = vperm.slane %v1243, 1
        %v1247 = vperm.slane %v1243, 2
        %v1248 = vperm.slane %v1243, 3
        %v1249 = vperm.slane %v1243, 4
        %v1250 = vperm.slane %v1243, 5
        %v1353 = vunpack.c.l.b16 %v1147
        %v1354 = vunpack.c.h.b16 %v1147
        %v1355 = vunpack.c.l.b16 %v1148
        %v1356 = vunpack.c.h.b16 %v1148
        %v1357 = vunpack.c.l.b16 %v1149
        %v1358 = vunpack.c.h.b16 %v1149
        %v1359 = vunpack.c.l.b16 %v1150
        %v1360 = vunpack.c.h.b16 %v1150
        %v1361 = vunpack.c.l.b16 %v1151
        %v1362 = vunpack.c.h.b16 %v1151
        %v1363 = vunpack.c.l.b16 %v1152
        %v1364 = vunpack.c.h.b16 %v1152
        %v1365 = vunpack.c.l.b16 %v1153
        %v1366 = vunpack.c.h.b16 %v1153
        %v1367 = vunpack.c.l.b16 %v1154
        %v1368 = vunpack.c.h.b16 %v1154
        %v1369 = vunpack.c.l.b16 %v1155
        %v1370 = vunpack.c.h.b16 %v1155
        %v1371 = vunpack.c.l.b16 %v1156
        %v1372 = vunpack.c.h.b16 %v1156
        %v1373 = vunpack.c.l.b16 %v1157
        %v1374 = vunpack.c.h.b16 %v1157
        %v1375 = vunpack.c.l.b16 %v1158
        %v1376 = vunpack.c.h.b16 %v1158
        %v1377 = vunpack.c.l.b16 %v1159
        %v1378 = vunpack.c.h.b16 %v1159
        %v1379 = vunpack.c.l.b16 %v1160
        %v1380 = vunpack.c.h.b16 %v1160
        %v1381 = vunpack.c.l.b16 %v1161
        %v1382 = vunpack.c.h.b16 %v1161
        %v1383 = vunpack.c.l.b16 %v1162
        %v1384 = vunpack.c.h.b16 %v1162
        %v1385 = vunpack.c.l.b16 %v1163
        %v1386 = vunpack.c.h.b16 %v1163
        %v1387 = vunpack.c.l.b16 %v1164
        %v1388 = vunpack.c.h.b16 %v1164
        %v1389 = vunpack.c.l.b16 %v1165
        %v1390 = vunpack.c.h.b16 %v1165
        %v1391 = vunpack.c.l.b16 %v1166
        %v1392 = vunpack.c.h.b16 %v1166
        %v1393 = vunpack.c.l.b16 %v1167
        %v1394 = vunpack.c.h.b16 %v1167
        %v1395 = vunpack.c.l.b16 %v1168
        %v1396 = vunpack.c.h.b16 %v1168
        %v1397 = vunpack.c.l.b16 %v1169
        %v1398 = vunpack.c.h.b16 %v1169
        %v1399 = vunpack.c.l.b16 %v1170
        %v1400 = vunpack.c.h.b16 %v1170
        %v1401 = vunpack.c.l.b16 %v1171
        %v1402 = vunpack.c.h.b16 %v1171
        %v1403 = vunpack.c.l.b16 %v1172
        %v1404 = vunpack.c.h.b16 %v1172
        %v1405 = vunpack.c.l.b16 %v1173
        %v1406 = vunpack.c.h.b16 %v1173
        %v1407 = vunpack.c.l.b16 %v1174
        %v1408 = vunpack.c.h.b16 %v1174
        %v1409 = vunpack.c.l.b16 %v1175
        %v1410 = vunpack.c.h.b16 %v1175
        %v1411 = vunpack.c.l.b16 %v1176
        %v1412 = vunpack.c.h.b16 %v1176
        %v1413 = vunpack.c.l.b16 %v1177
        %v1414 = vunpack.c.h.b16 %v1177
        %v1415 = vunpack.c.l.b16 %v1178
        %v1416 = vunpack.c.h.b16 %v1178
        %v1417 = vunpack.c.l.b16 %v1179
        %v1418 = vunpack.c.h.b16 %v1179
        %v1419 = vunpack.c.l.b16 %v1180
        %v1420 = vunpack.c.h.b16 %v1180
        %v1421 = vunpack.c.l.b16 %v1181
        %v1422 = vunpack.c.h.b16 %v1181
        %v1423 = vunpack.c.l.b16 %v1182
        %v1424 = vunpack.c.h.b16 %v1182
        %v1425 = vunpack.c.l.b16 %v1183
        %v1426 = vunpack.c.h.b16 %v1183
        %v1427 = vunpack.c.l.b16 %v1184
        %v1428 = vunpack.c.h.b16 %v1184
        %v1429 = vunpack.c.l.b16 %v1185
        %v1430 = vunpack.c.h.b16 %v1185
        %v1431 = vunpack.c.l.b16 %v1186
        %v1432 = vunpack.c.h.b16 %v1186
        %v1433 = vunpack.c.l.b16 %v1187
        %v1434 = vunpack.c.h.b16 %v1187
        %v1435 = vunpack.c.l.b16 %v1188
        %v1436 = vunpack.c.h.b16 %v1188
        %v1437 = vunpack.c.l.b16 %v1189
        %v1438 = vunpack.c.h.b16 %v1189
        %v1439 = vunpack.c.l.b16 %v1190
        %v1440 = vunpack.c.h.b16 %v1190
        %v1441 = vunpack.c.l.b16 %v1191
        %v1442 = vunpack.c.h.b16 %v1191
        %v1443 = vunpack.c.l.b16 %v1192
        %v1444 = vunpack.c.h.b16 %v1192
        %v1445 = vunpack.c.l.b16 %v1193
        %v1446 = vunpack.c.h.b16 %v1193
        %v1447 = vunpack.c.l.b16 %v1194
        %v1448 = vunpack.c.h.b16 %v1194
        %v1449 = vunpack.c.l.b16 %v1195
        %v1450 = vunpack.c.h.b16 %v1195
        %v1451 = vunpack.c.l.b16 %v1196
        %v1452 = vunpack.c.h.b16 %v1196
        %v1453 = vunpack.c.l.b16 %v1197
        %v1454 = vunpack.c.h.b16 %v1197
        %v1455 = vunpack.c.l.b16 %v1198
        %v1456 = vunpack.c.h.b16 %v1198
        %v1457 = vunpack.c.l.b16 %v1199
        %v1458 = vunpack.c.h.b16 %v1199
        %v1459 = vunpack.c.l.b16 %v1200
        %v1460 = vunpack.c.h.b16 %v1200
        %v1461 = vunpack.c.l.b16 %v1201
        %v1462 = vunpack.c.h.b16 %v1201
        %v1463 = vunpack.c.l.b16 %v1202
        %v1464 = vunpack.c.h.b16 %v1202
        %v1465 = vunpack.c.l.b16 %v1203
        %v1466 = vunpack.c.h.b16 %v1203
        %v1467 = vunpack.c.l.b16 %v1204
        %v1468 = vunpack.c.h.b16 %v1204
        %v1469 = vunpack.c.l.b16 %v1205
        %v1470 = vunpack.c.h.b16 %v1205
        %v1471 = vunpack.c.l.b16 %v1206
        %v1472 = vunpack.c.h.b16 %v1206
        %v1473 = vunpack.c.l.b16 %v1207
        %v1474 = vunpack.c.h.b16 %v1207
        %v1475 = vunpack.c.l.b16 %v1208
        %v1476 = vunpack.c.h.b16 %v1208
        %v1477 = vunpack.c.l.b16 %v1209
        %v1478 = vunpack.c.h.b16 %v1209
        %v1479 = vunpack.c.l.b16 %v1210
        %v1480 = vunpack.c.h.b16 %v1210
        %v1481 = vunpack.c.l.b16 %v1211
        %v1482 = vunpack.c.h.b16 %v1211
        %v1483 = vunpack.c.l.b16 %v1212
        %v1484 = vunpack.c.h.b16 %v1212
        %v1485 = vunpack.c.l.b16 %v1213
        %v1486 = vunpack.c.h.b16 %v1213
        %v1487 = vunpack.c.l.b16 %v1214
        %v1488 = vunpack.c.h.b16 %v1214
        %v1489 = vunpack.c.l.b16 %v1215
        %v1490 = vunpack.c.h.b16 %v1215
        %v1491 = vunpack.c.l.b16 %v1216
        %v1492 = vunpack.c.h.b16 %v1216
        %v1493 = vunpack.c.l.b16 %v1217
        %v1494 = vunpack.c.h.b16 %v1217
        %v1495 = vunpack.c.l.b16 %v1218
        %v1496 = vunpack.c.h.b16 %v1218
        %v1497 = vunpack.c.l.b16 %v1219
        %v1498 = vunpack.c.h.b16 %v1219
        %v1499 = vunpack.c.l.b16 %v1220
        %v1500 = vunpack.c.h.b16 %v1220
        %v1501 = vunpack.c.l.b16 %v1221
        %v1502 = vunpack.c.h.b16 %v1221
        %v1503 = vunpack.c.l.b16 %v1222
        %v1504 = vunpack.c.h.b16 %v1222
        %v1505 = vunpack.c.l.b16 %v1223
        %v1506 = vunpack.c.h.b16 %v1223
        %v1507 = vunpack.c.l.b16 %v1224
        %v1508 = vunpack.c.h.b16 %v1224
        %v1509 = vunpack.c.l.b16 %v1225
        %v1510 = vunpack.c.h.b16 %v1225
        %v1511 = vunpack.c.l.b16 %v1226
        %v1512 = vunpack.c.h.b16 %v1226
        %v1513 = vunpack.c.l.b16 %v1227
        %v1514 = vunpack.c.h.b16 %v1227
        %v1515 = vunpack.c.l.b16 %v1228
        %v1516 = vunpack.c.h.b16 %v1228
        %v1517 = vunpack.c.l.b16 %v1229
        %v1518 = vunpack.c.h.b16 %v1229
        %v1519 = vunpack.c.l.b16 %v1230
        %v1520 = vunpack.c.h.b16 %v1230
        %v1521 = vunpack.c.l.b16 %v1231
        %v1522 = vunpack.c.h.b16 %v1231
        %v1523 = vunpack.c.l.b16 %v1232
        %v1524 = vunpack.c.h.b16 %v1232
        %v1525 = vunpack.c.l.b16 %v1233
        %v1526 = vunpack.c.h.b16 %v1233
        %v1527 = vunpack.c.l.b16 %v1234
        %v1528 = vunpack.c.h.b16 %v1234
        %v1529 = vunpack.c.l.b16 %v1235
        %v1530 = vunpack.c.h.b16 %v1235
        %v1531 = vunpack.c.l.b16 %v1236
        %v1532 = vunpack.c.h.b16 %v1236
        %v1533 = vunpack.c.l.b16 %v1237
        %v1534 = vunpack.c.h.b16 %v1237
        %v1535 = vunpack.c.l.b16 %v1238
        %v1536 = vunpack.c.h.b16 %v1238
        %v1537 = vunpack.c.l.b16 %v1239
        %v1538 = vunpack.c.h.b16 %v1239
        %v1539 = vunpack.c.l.b16 %v1240
        %v1540 = vunpack.c.h.b16 %v1240
        %v1541 = vunpack.c.l.b16 %v1241
        %v1542 = vunpack.c.h.b16 %v1241
        %v1543 = vunpack.c.l.b16 %v1242
        %v1544 = vunpack.c.h.b16 %v1242
        %v1545 = vpack.c.b16 %v1359, %v1353
        %v1546 = vpack.c.b16 %v1360, %v1354
        %v1547 = vpack.c.b16 %v1361, %v1355
        %v1548 = vpack.c.b16 %v1362, %v1356
        %v1549 = vpack.c.b16 %v1363, %v1357
        %v1550 = vpack.c.b16 %v1364, %v1358
        %v1551 = vpack.c.b16 %v1371, %v1365
        %v1552 = vpack.c.b16 %v1372, %v1366
        %v1553 = vpack.c.b16 %v1373, %v1367
        %v1554 = vpack.c.b16 %v1374, %v1368
        %v1555 = vpack.c.b16 %v1375, %v1369
        %v1556 = vpack.c.b16 %v1376, %v1370
        %v1557 = vpack.c.b16 %v1383, %v1377
        %v1558 = vpack.c.b16 %v1384, %v1378
        %v1559 = vpack.c.b16 %v1385, %v1379
        %v1560 = vpack.c.b16 %v1386, %v1380
        %v1561 = vpack.c.b16 %v1387, %v1381
        %v1562 = vpack.c.b16 %v1388, %v1382
        %v1563 = vpack.c.b16 %v1395, %v1389
        %v1564 = vpack.c.b16 %v1396, %v1390
        %v1565 = vpack.c.b16 %v1397, %v1391
        %v1566 = vpack.c.b16 %v1398, %v1392
        %v1567 = vpack.c.b16 %v1399, %v1393
        %v1568 = vpack.c.b16 %v1400, %v1394
        %v1569 = vpack.c.b16 %v1407, %v1401
        %v1570 = vpack.c.b16 %v1408, %v1402
        %v1571 = vpack.c.b16 %v1409, %v1403
        %v1572 = vpack.c.b16 %v1410, %v1404
        %v1573 = vpack.c.b16 %v1411, %v1405
        %v1574 = vpack.c.b16 %v1412, %v1406
        %v1575 = vpack.c.b16 %v1419, %v1413
        %v1576 = vpack.c.b16 %v1420, %v1414
        %v1577 = vpack.c.b16 %v1421, %v1415
        %v1578 = vpack.c.b16 %v1422, %v1416
        %v1579 = vpack.c.b16 %v1423, %v1417
        %v1580 = vpack.c.b16 %v1424, %v1418
        %v1581 = vpack.c.b16 %v1431, %v1425
        %v1582 = vpack.c.b16 %v1432, %v1426
        %v1583 = vpack.c.b16 %v1433, %v1427
        %v1584 = vpack.c.b16 %v1434, %v1428
        %v1585 = vpack.c.b16 %v1435, %v1429
        %v1586 = vpack.c.b16 %v1436, %v1430
        %v1587 = vpack.c.b16 %v1443, %v1437
        %v1588 = vpack.c.b16 %v1444, %v1438
        %v1589 = vpack.c.b16 %v1445, %v1439
        %v1590 = vpack.c.b16 %v1446, %v1440
        %v1591 = vpack.c.b16 %v1447, %v1441
        %v1592 = vpack.c.b16 %v1448, %v1442
        %v1593 = vpack.c.b16 %v1455, %v1449
        %v1594 = vpack.c.b16 %v1456, %v1450
        %v1595 = vpack.c.b16 %v1457, %v1451
        %v1596 = vpack.c.b16 %v1458, %v1452
        %v1597 = vpack.c.b16 %v1459, %v1453
        %v1598 = vpack.c.b16 %v1460, %v1454
        %v1599 = vpack.c.b16 %v1467, %v1461
        %v1600 = vpack.c.b16 %v1468, %v1462
        %v1601 = vpack.c.b16 %v1469, %v1463
        %v1602 = vpack.c.b16 %v1470, %v1464
        %v1603 = vpack.c.b16 %v1471, %v1465
        %v1604 = vpack.c.b16 %v1472, %v1466
        %v1605 = vpack.c.b16 %v1479, %v1473
        %v1606 = vpack.c.b16 %v1480, %v1474
        %v1607 = vpack.c.b16 %v1481, %v1475
        %v1608 = vpack.c.b16 %v1482, %v1476
        %v1609 = vpack.c.b16 %v1483, %v1477
        %v1610 = vpack.c.b16 %v1484, %v1478
        %v1611 = vpack.c.b16 %v1491, %v1485
        %v1612 = vpack.c.b16 %v1492, %v1486
        %v1613 = vpack.c.b16 %v1493, %v1487
        %v1614 = vpack.c.b16 %v1494, %v1488
        %v1615 = vpack.c.b16 %v1495, %v1489
        %v1616 = vpack.c.b16 %v1496, %v1490
        %v1617 = vpack.c.b16 %v1503, %v1497
        %v1618 = vpack.c.b16 %v1504, %v1498
        %v1619 = vpack.c.b16 %v1505, %v1499
        %v1620 = vpack.c.b16 %v1506, %v1500
        %v1621 = vpack.c.b16 %v1507, %v1501
        %v1622 = vpack.c.b16 %v1508, %v1502
        %v1623 = vpack.c.b16 %v1515, %v1509
        %v1624 = vpack.c.b16 %v1516, %v1510
        %v1625 = vpack.c.b16 %v1517, %v1511
        %v1626 = vpack.c.b16 %v1518, %v1512
        %v1627 = vpack.c.b16 %v1519, %v1513
        %v1628 = vpack.c.b16 %v1520, %v1514
        %v1629 = vpack.c.b16 %v1527, %v1521
        %v1630 = vpack.c.b16 %v1528, %v1522
        %v1631 = vpack.c.b16 %v1529, %v1523
        %v1632 = vpack.c.b16 %v1530, %v1524
        %v1633 = vpack.c.b16 %v1531, %v1525
        %v1634 = vpack.c.b16 %v1532, %v1526
        %v1635 = vpack.c.b16 %v1539, %v1533
        %v1636 = vpack.c.b16 %v1540, %v1534
        %v1637 = vpack.c.b16 %v1541, %v1535
        %v1638 = vpack.c.b16 %v1542, %v1536
        %v1639 = vpack.c.b16 %v1543, %v1537
        %v1640 = vpack.c.b16 %v1544, %v1538
        %1737 = vmatpush.bf16.msra.mxu0 %v1587
        %1738 = vmatpush.bf16.msra.mxu0 %v1581
        %1739 = vmatpush.bf16.msra.mxu0 %v1575
        %1740 = vmatpush.bf16.msra.mxu0 %v1569
        %1741 = vmatpush.bf16.msra.mxu0 %v1563
        %1742 = vmatpush.bf16.msra.mxu0 %v1557
        %1743 = vmatpush.bf16.msra.mxu0 %v1551
        %1744 = vmatpush.bf16.msra.mxu0 %v1545
        %1745 = vmatmul.bf16.gmra.mxu0 %v1145
        %v1746 = vpop.f32.mrf.mxu0
        %v1747 = vadd.f32 %v1245, %v1746
        %v1748 = vpop.f32.mrf.mxu0
        %1749 = vdwg.mxu0
        %1750 = vmatpush.bf16.msra.mxu0 %v1635
        %1751 = vmatpush.bf16.msra.mxu0 %v1629
        %1752 = vmatpush.bf16.msra.mxu0 %v1623
        %1753 = vmatpush.bf16.msra.mxu0 %v1617
        %1754 = vmatpush.bf16.msra.mxu0 %v1611
        %1755 = vmatpush.bf16.msra.mxu0 %v1605
        %1756 = vmatpush.bf16.msra.mxu0 %v1599
        %1757 = vmatpush.bf16.msra.mxu0 %v1593
        %1758 = vmatmul.bf16.gmra.mxu0 %v1146
        %v1759 = vpop.f32.mrf.mxu0
        %v1760 = vadd.f32 %v1747, %v1759
        %v1761 = vpop.f32.mrf.mxu0
        %1762 = vdwg.mxu0
        %1763 = vmatpush.bf16.msra.mxu0 %v1588
        %1764 = vmatpush.bf16.msra.mxu0 %v1582
        %1765 = vmatpush.bf16.msra.mxu0 %v1576
        %1766 = vmatpush.bf16.msra.mxu0 %v1570
        %1767 = vmatpush.bf16.msra.mxu0 %v1564
        %1768 = vmatpush.bf16.msra.mxu0 %v1558
        %1769 = vmatpush.bf16.msra.mxu0 %v1552
        %1770 = vmatpush.bf16.msra.mxu0 %v1546
        %1771 = vmatmul.bf16.gmra.mxu0 %v1145
        %v1772 = vpop.f32.mrf.mxu0
        %v1773 = vadd.f32 %v1246, %v1772
        %v1774 = vpop.f32.mrf.mxu0
        %1775 = vdwg.mxu0
        %1776 = vmatpush.bf16.msra.mxu0 %v1636
        %1777 = vmatpush.bf16.msra.mxu0 %v1630
        %1778 = vmatpush.bf16.msra.mxu0 %v1624
        %1779 = vmatpush.bf16.msra.mxu0 %v1618
        %1780 = vmatpush.bf16.msra.mxu0 %v1612
        %1781 = vmatpush.bf16.msra.mxu0 %v1606
        %1782 = vmatpush.bf16.msra.mxu0 %v1600
        %1783 = vmatpush.bf16.msra.mxu0 %v1594
        %1784 = vmatmul.bf16.gmra.mxu0 %v1146
        %v1785 = vpop.f32.mrf.mxu0
        %v1786 = vadd.f32 %v1773, %v1785
        %v1787 = vpop.f32.mrf.mxu0
        %1788 = vdwg.mxu0
        %1789 = vmatpush.bf16.msra.mxu0 %v1589
        %1790 = vmatpush.bf16.msra.mxu0 %v1583
        %1791 = vmatpush.bf16.msra.mxu0 %v1577
        %1792 = vmatpush.bf16.msra.mxu0 %v1571
        %1793 = vmatpush.bf16.msra.mxu0 %v1565
        %1794 = vmatpush.bf16.msra.mxu0 %v1559
        %1795 = vmatpush.bf16.msra.mxu0 %v1553
        %1796 = vmatpush.bf16.msra.mxu0 %v1547
        %1797 = vmatmul.bf16.gmra.mxu0 %v1145
        %v1798 = vpop.f32.mrf.mxu0
        %v1799 = vadd.f32 %v1247, %v1798
        %v1800 = vpop.f32.mrf.mxu0
        %1801 = vdwg.mxu0
        %1802 = vmatpush.bf16.msra.mxu0 %v1637
        %1803 = vmatpush.bf16.msra.mxu0 %v1631
        %1804 = vmatpush.bf16.msra.mxu0 %v1625
        %1805 = vmatpush.bf16.msra.mxu0 %v1619
        %1806 = vmatpush.bf16.msra.mxu0 %v1613
        %1807 = vmatpush.bf16.msra.mxu0 %v1607
        %1808 = vmatpush.bf16.msra.mxu0 %v1601
        %1809 = vmatpush.bf16.msra.mxu0 %v1595
        %1810 = vmatmul.bf16.gmra.mxu0 %v1146
        %v1811 = vpop.f32.mrf.mxu0
        %v1812 = vadd.f32 %v1799, %v1811
        %v1813 = vpop.f32.mrf.mxu0
        %1814 = vdwg.mxu0
        %1815 = vmatpush.bf16.msra.mxu0 %v1590
        %1816 = vmatpush.bf16.msra.mxu0 %v1584
        %1817 = vmatpush.bf16.msra.mxu0 %v1578
        %1818 = vmatpush.bf16.msra.mxu0 %v1572
        %1819 = vmatpush.bf16.msra.mxu0 %v1566
        %1820 = vmatpush.bf16.msra.mxu0 %v1560
        %1821 = vmatpush.bf16.msra.mxu0 %v1554
        %1822 = vmatpush.bf16.msra.mxu0 %v1548
        %1823 = vmatmul.bf16.gmra.mxu0 %v1145
        %v1824 = vpop.f32.mrf.mxu0
        %v1825 = vadd.f32 %v1248, %v1824
        %v1826 = vpop.f32.mrf.mxu0
        %1827 = vdwg.mxu0
        %1828 = vmatpush.bf16.msra.mxu0 %v1638
        %1829 = vmatpush.bf16.msra.mxu0 %v1632
        %1830 = vmatpush.bf16.msra.mxu0 %v1626
        %1831 = vmatpush.bf16.msra.mxu0 %v1620
        %1832 = vmatpush.bf16.msra.mxu0 %v1614
        %1833 = vmatpush.bf16.msra.mxu0 %v1608
        %1834 = vmatpush.bf16.msra.mxu0 %v1602
        %1835 = vmatpush.bf16.msra.mxu0 %v1596
        %1836 = vmatmul.bf16.gmra.mxu0 %v1146
        %v1837 = vpop.f32.mrf.mxu0
        %v1838 = vadd.f32 %v1825, %v1837
        %v1839 = vpop.f32.mrf.mxu0
        %1840 = vdwg.mxu0
        %1841 = vmatpush.bf16.msra.mxu0 %v1591
        %1842 = vmatpush.bf16.msra.mxu0 %v1585
        %1843 = vmatpush.bf16.msra.mxu0 %v1579
        %1844 = vmatpush.bf16.msra.mxu0 %v1573
        %1845 = vmatpush.bf16.msra.mxu0 %v1567
        %1846 = vmatpush.bf16.msra.mxu0 %v1561
        %1847 = vmatpush.bf16.msra.mxu0 %v1555
        %1848 = vmatpush.bf16.msra.mxu0 %v1549
        %1849 = vmatmul.bf16.gmra.mxu0 %v1145
        %v1850 = vpop.f32.mrf.mxu0
        %v1851 = vadd.f32 %v1249, %v1850
        %v1852 = vpop.f32.mrf.mxu0
        %1853 = vdwg.mxu0
        %1854 = vmatpush.bf16.msra.mxu0 %v1639
        %1855 = vmatpush.bf16.msra.mxu0 %v1633
        %1856 = vmatpush.bf16.msra.mxu0 %v1627
        %1857 = vmatpush.bf16.msra.mxu0 %v1621
        %1858 = vmatpush.bf16.msra.mxu0 %v1615
        %1859 = vmatpush.bf16.msra.mxu0 %v1609
        %1860 = vmatpush.bf16.msra.mxu0 %v1603
        %1861 = vmatpush.bf16.msra.mxu0 %v1597
        %1862 = vmatmul.bf16.gmra.mxu0 %v1146
        %v1863 = vpop.f32.mrf.mxu0
        %v1864 = vadd.f32 %v1851, %v1863
        %v1865 = vpop.f32.mrf.mxu0
        %1866 = vdwg.mxu0
        %1867 = vmatpush.bf16.msra.mxu0 %v1592
        %1868 = vmatpush.bf16.msra.mxu0 %v1586
        %1869 = vmatpush.bf16.msra.mxu0 %v1580
        %1870 = vmatpush.bf16.msra.mxu0 %v1574
        %1871 = vmatpush.bf16.msra.mxu0 %v1568
        %1872 = vmatpush.bf16.msra.mxu0 %v1562
        %1873 = vmatpush.bf16.msra.mxu0 %v1556
        %1874 = vmatpush.bf16.msra.mxu0 %v1550
        %1875 = vmatmul.bf16.gmra.mxu0 %v1145
        %v1876 = vpop.f32.mrf.mxu0
        %v1877 = vadd.f32 %v1250, %v1876
        %v1878 = vpop.f32.mrf.mxu0
        %1879 = vdwg.mxu0
        %1880 = vmatpush.bf16.msra.mxu0 %v1640
        %1881 = vmatpush.bf16.msra.mxu0 %v1634
        %1882 = vmatpush.bf16.msra.mxu0 %v1628
        %1883 = vmatpush.bf16.msra.mxu0 %v1622
        %1884 = vmatpush.bf16.msra.mxu0 %v1616
        %1885 = vmatpush.bf16.msra.mxu0 %v1610
        %1886 = vmatpush.bf16.msra.mxu0 %v1604
        %1887 = vmatpush.bf16.msra.mxu0 %v1598
        %1888 = vmatmul.bf16.gmra.mxu0 %v1146
        %v1889 = vpop.f32.mrf.mxu0
        %v1890 = vadd.f32 %v1877, %v1889
        %v1891 = vpop.f32.mrf.mxu0
        %1892 = vdwg.mxu0
        %v1893 = vld [vmem:[#allocation7] sm:$0xff]
        %v1894 = vld [vmem:[#allocation7 + $0x8] sm:$0xff]
        %v1895 = vld [vmem:[#allocation7 + $0x10] sm:$0xff]
        %v1896 = vld [vmem:[#allocation7 + $0x18] sm:$0xff]
        %v1897 = vld [vmem:[#allocation7 + $0x20] sm:$0xff]
        %v1898 = vld [vmem:[#allocation7 + $0x28] sm:$0xff]
        %v1899 = vld [vmem:[#allocation7 + $0x30] sm:$0xff]
        %v1900 = vld [vmem:[#allocation7 + $0x38] sm:$0xff]
        %v1901 = vld [vmem:[#allocation7 + $0x40] sm:$0xff]
        %v1902 = vld [vmem:[#allocation7 + $0x48] sm:$0xff]
        %v1903 = vld [vmem:[#allocation7 + $0x50] sm:$0xff]
        %v1904 = vld [vmem:[#allocation7 + $0x58] sm:$0xff]
        %v1905 = vld [vmem:[#allocation7 + $0x60] sm:$0xff]
        %v1906 = vld [vmem:[#allocation7 + $0x68] sm:$0xff]
        %v1907 = vld [vmem:[#allocation7 + $0x70] sm:$0xff]
        %v1908 = vld [vmem:[#allocation7 + $0x78] sm:$0xff]
        %v1909 = vld [vmem:[#allocation7 + $0x80] sm:$0xff]
        %v1910 = vld [vmem:[#allocation7 + $0x88] sm:$0xff]
        %v1911 = vld [vmem:[#allocation7 + $0x90] sm:$0xff]
        %v1912 = vld [vmem:[#allocation7 + $0x98] sm:$0xff]
        %v1913 = vld [vmem:[#allocation7 + $0xa0] sm:$0xff]
        %v1914 = vld [vmem:[#allocation7 + $0xa8] sm:$0xff]
        %v1915 = vld [vmem:[#allocation7 + $0xb0] sm:$0xff]
        %v1916 = vld [vmem:[#allocation7 + $0xb8] sm:$0xff]
        %v1917 = vld [vmem:[#allocation7 + $0xc0] sm:$0xff]
        %v1918 = vld [vmem:[#allocation7 + $0xc8] sm:$0xff]
        %v1919 = vld [vmem:[#allocation7 + $0xd0] sm:$0xff]
        %v1920 = vld [vmem:[#allocation7 + $0xd8] sm:$0xff]
        %v1921 = vld [vmem:[#allocation7 + $0xe0] sm:$0xff]
        %v1922 = vld [vmem:[#allocation7 + $0xe8] sm:$0xff]
        %v1923 = vld [vmem:[#allocation7 + $0xf0] sm:$0xff]
        %v1924 = vld [vmem:[#allocation7 + $0xf8] sm:$0xff]
        %v1925 = vld [vmem:[%s8] sm:$0x3]
        %1927 = vrot.lane.b32.xlu0 %v1760, 96
        %v1928 = vpop.permute.xlu0 %1927
        %1929 = vrot.lane.b32.xlu0 %v1760, 64
        %v1930 = vpop.permute.xlu0 %1929
        %1931 = vrot.lane.b32.xlu0 %v1760, 32
        %v1932 = vpop.permute.xlu0 %1931
        %1934 = vrot.lane.b32.xlu0 %v1786, 96
        %v1935 = vpop.permute.xlu0 %1934
        %1936 = vrot.lane.b32.xlu0 %v1786, 64
        %v1937 = vpop.permute.xlu0 %1936
        %1938 = vrot.lane.b32.xlu0 %v1786, 32
        %v1939 = vpop.permute.xlu0 %1938
        %1941 = vrot.lane.b32.xlu0 %v1812, 96
        %v1942 = vpop.permute.xlu0 %1941
        %1943 = vrot.lane.b32.xlu0 %v1812, 64
        %v1944 = vpop.permute.xlu0 %1943
        %1945 = vrot.lane.b32.xlu0 %v1812, 32
        %v1946 = vpop.permute.xlu0 %1945
        %1948 = vrot.lane.b32.xlu0 %v1838, 96
        %v1949 = vpop.permute.xlu0 %1948
        %1950 = vrot.lane.b32.xlu0 %v1838, 64
        %v1951 = vpop.permute.xlu0 %1950
        %1952 = vrot.lane.b32.xlu0 %v1838, 32
        %v1953 = vpop.permute.xlu0 %1952
        %1955 = vrot.lane.b32.xlu0 %v1864, 96
        %v1956 = vpop.permute.xlu0 %1955
        %1958 = vrot.lane.b32.xlu0 %v1864, 64
        %v1959 = vpop.permute.xlu0 %1958
        %1961 = vrot.lane.b32.xlu0 %v1864, 32
        %v1962 = vpop.permute.xlu0 %1961
        %1965 = vrot.lane.b32.xlu0 %v1890, 96
        %v1966 = vpop.permute.xlu0 %1965
        %1968 = vrot.lane.b32.xlu0 %v1890, 64
        %v1969 = vpop.permute.xlu0 %1968
        %1971 = vrot.lane.b32.xlu0 %v1890, 32
        %v1972 = vpop.permute.xlu0 %1971
        %vm1974 = vcmask 261120
        %v1975 = vsel %vm1974, %v1760, 0
        %v1977 = vsel %vm1974, %v1812, 0
        %1979 = vmatpush.xpose.msra.mxu0 0.0
        %1980 = vmatpush.xpose.msra.mxu0 0.0
        %1981 = vmatpush.xpose.msra.mxu0 0.0
        %1982 = vmatpush.xpose.msra.mxu0 0.0
        %1983 = vmatpush.xpose.msra.mxu0 0.0
        %1984 = vmatpush.xpose.msra.mxu0 0.0
        %1985 = vmatpush.xpose.msra.mxu0 0.0
        %1986 = vmatpush.xpose.msra.mxu0 0.0
        %1987 = vmatpush.xpose.msra.mxu0 0.0
        %1988 = vmatpush.xpose.msra.mxu0 0.0
        %1989 = vmatpush.xpose.msra.mxu0 0.0
        %1990 = vmatpush.xpose.msra.mxu0 0.0
        %1991 = vmatpush.xpose.msra.mxu0 0.0
        %1992 = vmatpush.xpose.msra.mxu0 0.0
        %1993 = vmatpush.xpose.msra.mxu0 0.0
        %1994 = vmatpush.xpose.msra.mxu0 %v1977
        %1995 = vmatmul.f32.gmra.mxu0 %v1975
        %v1996 = vpop.f32.mrf.mxu0
        %v1997 = vadd.f32 0.0, %v1996
        %1998 = vdwg.mxu0
        %v1999 = vsel %vm1974, %v1928, 0
        %v2001 = vsel %vm1974, %v1942, 0
        %2003 = vmatpush.xpose.msra.mxu0 0.0
        %2004 = vmatpush.xpose.msra.mxu0 0.0
        %2005 = vmatpush.xpose.msra.mxu0 0.0
        %2006 = vmatpush.xpose.msra.mxu0 0.0
        %2007 = vmatpush.xpose.msra.mxu0 0.0
        %2008 = vmatpush.xpose.msra.mxu0 0.0
        %2009 = vmatpush.xpose.msra.mxu0 0.0
        %2010 = vmatpush.xpose.msra.mxu0 0.0
        %2011 = vmatpush.xpose.msra.mxu0 0.0
        %2012 = vmatpush.xpose.msra.mxu0 0.0
        %2013 = vmatpush.xpose.msra.mxu0 0.0
        %2014 = vmatpush.xpose.msra.mxu0 0.0
        %2015 = vmatpush.xpose.msra.mxu0 0.0
        %2016 = vmatpush.xpose.msra.mxu0 0.0
        %2017 = vmatpush.xpose.msra.mxu0 0.0
        %2018 = vmatpush.xpose.msra.mxu0 %v2001
        %2019 = vmatmul.f32.gmra.mxu0 %v1999
        %v2020 = vpop.f32.mrf.mxu0
        %v2021 = vadd.f32 0.0, %v2020
        %2022 = vdwg.mxu0
        %v2023 = vsel %vm1974, %v1930, 0
        %v2025 = vsel %vm1974, %v1944, 0
        %2027 = vmatpush.xpose.msra.mxu0 0.0
        %2028 = vmatpush.xpose.msra.mxu0 0.0
        %2029 = vmatpush.xpose.msra.mxu0 0.0
        %2030 = vmatpush.xpose.msra.mxu0 0.0
        %2031 = vmatpush.xpose.msra.mxu0 0.0
        %2032 = vmatpush.xpose.msra.mxu0 0.0
        %2033 = vmatpush.xpose.msra.mxu0 0.0
        %2034 = vmatpush.xpose.msra.mxu0 0.0
        %2035 = vmatpush.xpose.msra.mxu0 0.0
        %2036 = vmatpush.xpose.msra.mxu0 0.0
        %2037 = vmatpush.xpose.msra.mxu0 0.0
        %2038 = vmatpush.xpose.msra.mxu0 0.0
        %2039 = vmatpush.xpose.msra.mxu0 0.0
        %2040 = vmatpush.xpose.msra.mxu0 0.0
        %2041 = vmatpush.xpose.msra.mxu0 0.0
        %2042 = vmatpush.xpose.msra.mxu0 %v2025
        %2043 = vmatmul.f32.gmra.mxu0 %v2023
        %v2044 = vpop.f32.mrf.mxu0
        %v2045 = vadd.f32 0.0, %v2044
        %2046 = vdwg.mxu0
        %v2047 = vsel %vm1974, %v1932, 0
        %v2049 = vsel %vm1974, %v1946, 0
        %2051 = vmatpush.xpose.msra.mxu0 0.0
        %2052 = vmatpush.xpose.msra.mxu0 0.0
        %2053 = vmatpush.xpose.msra.mxu0 0.0
        %2054 = vmatpush.xpose.msra.mxu0 0.0
        %2055 = vmatpush.xpose.msra.mxu0 0.0
        %2056 = vmatpush.xpose.msra.mxu0 0.0
        %2057 = vmatpush.xpose.msra.mxu0 0.0
        %2058 = vmatpush.xpose.msra.mxu0 0.0
        %2059 = vmatpush.xpose.msra.mxu0 0.0
        %2060 = vmatpush.xpose.msra.mxu0 0.0
        %2061 = vmatpush.xpose.msra.mxu0 0.0
        %2062 = vmatpush.xpose.msra.mxu0 0.0
        %2063 = vmatpush.xpose.msra.mxu0 0.0
        %2064 = vmatpush.xpose.msra.mxu0 0.0
        %2065 = vmatpush.xpose.msra.mxu0 0.0
        %2066 = vmatpush.xpose.msra.mxu0 %v2049
        %2067 = vmatmul.f32.gmra.mxu0 %v2047
        %v2068 = vpop.f32.mrf.mxu0
        %v2069 = vadd.f32 0.0, %v2068
        %2070 = vdwg.mxu0
        %v2071 = vsel %vm1974, %v1786, 0
        %v2073 = vsel %vm1974, %v1838, 0
        %2075 = vmatpush.xpose.msra.mxu0 0.0
        %2076 = vmatpush.xpose.msra.mxu0 0.0
        %2077 = vmatpush.xpose.msra.mxu0 0.0
        %2078 = vmatpush.xpose.msra.mxu0 0.0
        %2079 = vmatpush.xpose.msra.mxu0 0.0
        %2080 = vmatpush.xpose.msra.mxu0 0.0
        %2081 = vmatpush.xpose.msra.mxu0 0.0
        %2082 = vmatpush.xpose.msra.mxu0 0.0
        %2083 = vmatpush.xpose.msra.mxu0 0.0
        %2084 = vmatpush.xpose.msra.mxu0 0.0
        %2085 = vmatpush.xpose.msra.mxu0 0.0
        %2086 = vmatpush.xpose.msra.mxu0 0.0
        %2087 = vmatpush.xpose.msra.mxu0 0.0
        %2088 = vmatpush.xpose.msra.mxu0 0.0
        %2089 = vmatpush.xpose.msra.mxu0 0.0
        %2090 = vmatpush.xpose.msra.mxu0 %v2073
        %2091 = vmatmul.f32.gmra.mxu0 %v2071
        %v2092 = vpop.f32.mrf.mxu0
        %v2093 = vadd.f32 0.0, %v2092
        %2094 = vdwg.mxu0
        %v2095 = vsel %vm1974, %v1935, 0
        %v2097 = vsel %vm1974, %v1949, 0
        %2099 = vmatpush.xpose.msra.mxu0 0.0
        %2100 = vmatpush.xpose.msra.mxu0 0.0
        %2101 = vmatpush.xpose.msra.mxu0 0.0
        %2102 = vmatpush.xpose.msra.mxu0 0.0
        %2103 = vmatpush.xpose.msra.mxu0 0.0
        %2104 = vmatpush.xpose.msra.mxu0 0.0
        %2105 = vmatpush.xpose.msra.mxu0 0.0
        %2106 = vmatpush.xpose.msra.mxu0 0.0
        %2107 = vmatpush.xpose.msra.mxu0 0.0
        %2108 = vmatpush.xpose.msra.mxu0 0.0
        %2109 = vmatpush.xpose.msra.mxu0 0.0
        %2110 = vmatpush.xpose.msra.mxu0 0.0
        %2111 = vmatpush.xpose.msra.mxu0 0.0
        %2112 = vmatpush.xpose.msra.mxu0 0.0
        %2113 = vmatpush.xpose.msra.mxu0 0.0
        %2114 = vmatpush.xpose.msra.mxu0 %v2097
        %2115 = vmatmul.f32.gmra.mxu0 %v2095
        %v2116 = vpop.f32.mrf.mxu0
        %v2117 = vadd.f32 0.0, %v2116
        %2118 = vdwg.mxu0
        %v2119 = vsel %vm1974, %v1937, 0
        %v2121 = vsel %vm1974, %v1951, 0
        %2123 = vmatpush.xpose.msra.mxu0 0.0
        %2124 = vmatpush.xpose.msra.mxu0 0.0
        %2125 = vmatpush.xpose.msra.mxu0 0.0
        %2126 = vmatpush.xpose.msra.mxu0 0.0
        %2127 = vmatpush.xpose.msra.mxu0 0.0
        %2128 = vmatpush.xpose.msra.mxu0 0.0
        %2129 = vmatpush.xpose.msra.mxu0 0.0
        %2130 = vmatpush.xpose.msra.mxu0 0.0
        %2131 = vmatpush.xpose.msra.mxu0 0.0
        %2132 = vmatpush.xpose.msra.mxu0 0.0
        %2133 = vmatpush.xpose.msra.mxu0 0.0
        %2134 = vmatpush.xpose.msra.mxu0 0.0
        %2135 = vmatpush.xpose.msra.mxu0 0.0
        %2136 = vmatpush.xpose.msra.mxu0 0.0
        %2137 = vmatpush.xpose.msra.mxu0 0.0
        %2138 = vmatpush.xpose.msra.mxu0 %v2121
        %2139 = vmatmul.f32.gmra.mxu0 %v2119
        %v2140 = vpop.f32.mrf.mxu0
        %v2141 = vadd.f32 0.0, %v2140
        %2142 = vdwg.mxu0
        %v2143 = vsel %vm1974, %v1939, 0
        %v2145 = vsel %vm1974, %v1953, 0
        %2147 = vmatpush.xpose.msra.mxu0 0.0
        %2148 = vmatpush.xpose.msra.mxu0 0.0
        %2149 = vmatpush.xpose.msra.mxu0 0.0
        %2150 = vmatpush.xpose.msra.mxu0 0.0
        %2151 = vmatpush.xpose.msra.mxu0 0.0
        %2152 = vmatpush.xpose.msra.mxu0 0.0
        %2153 = vmatpush.xpose.msra.mxu0 0.0
        %2154 = vmatpush.xpose.msra.mxu0 0.0
        %2155 = vmatpush.xpose.msra.mxu0 0.0
        %2156 = vmatpush.xpose.msra.mxu0 0.0
        %2157 = vmatpush.xpose.msra.mxu0 0.0
        %2158 = vmatpush.xpose.msra.mxu0 0.0
        %2159 = vmatpush.xpose.msra.mxu0 0.0
        %2160 = vmatpush.xpose.msra.mxu0 0.0
        %2161 = vmatpush.xpose.msra.mxu0 0.0
        %2162 = vmatpush.xpose.msra.mxu0 %v2145
        %2163 = vmatmul.f32.gmra.mxu0 %v2143
        %v2164 = vpop.f32.mrf.mxu0
        %v2165 = vadd.f32 0.0, %v2164
        %2166 = vdwg.mxu0
        %v2167 = vmul.f32 %v1997, 0.17677669
        %v2168 = vmul.f32 %v2021, 0.17677669
        %v2169 = vmul.f32 %v2045, 0.17677669
        %v2170 = vmul.f32 %v2069, 0.17677669
        %v2171 = vmul.f32 %v2093, 0.17677669
        %v2172 = vmul.f32 %v2117, 0.17677669
        %v2173 = vmul.f32 %v2141, 0.17677669
        %v2174 = vmul.f32 %v2165, 0.17677669
        %v2175 = vsel %vm1096, 1, 0
        %vm2176 = vcmp.eq.s32.totalorder %v2175, 1
        %v2177 = vsel %vm2176, %v2167, -1e+09
        %v2178 = vsel %vm2176, %v2168, -1e+09
        %v2179 = vsel %vm2176, %v2169, -1e+09
        %v2180 = vsel %vm2176, %v2170, -1e+09
        %v2181 = vsel %vm2176, %v2171, -1e+09
        %v2182 = vsel %vm2176, %v2172, -1e+09
        %v2183 = vsel %vm2176, %v2173, -1e+09
        %v2184 = vsel %vm2176, %v2174, -1e+09
        %vm2185 = vcmask 64512
        %v2186 = vsel %vm2185, %v2177, -inf
        %2187 = vmax.xlane.f32.xlu0 %v2186
        %v2188 = vpop.xlane.xlu0 %2187
        %v2189 = vsel %vm2185, %v2178, -inf
        %2190 = vmax.xlane.f32.xlu0 %v2189
        %v2191 = vpop.xlane.xlu0 %2190
        %v2192 = vsel %vm2185, %v2179, -inf
        %2193 = vmax.xlane.f32.xlu0 %v2192
        %v2194 = vpop.xlane.xlu0 %2193
        %v2195 = vsel %vm2185, %v2180, -inf
        %2196 = vmax.xlane.f32.xlu0 %v2195
        %v2197 = vpop.xlane.xlu0 %2196
        %v2198 = vsel %vm2185, %v2181, -inf
        %2199 = vmax.xlane.f32.xlu0 %v2198
        %v2200 = vpop.xlane.xlu0 %2199
        %v2201 = vsel %vm2185, %v2182, -inf
        %2202 = vmax.xlane.f32.xlu0 %v2201
        %v2203 = vpop.xlane.xlu0 %2202
        %v2204 = vsel %vm2185, %v2183, -inf
        %2205 = vmax.xlane.f32.xlu0 %v2204
        %v2206 = vpop.xlane.xlu0 %2205
        %v2207 = vsel %vm2185, %v2184, -inf
        %2208 = vmax.xlane.f32.xlu0 %v2207
        %v2209 = vpop.xlane.xlu0 %2208
        %v2210 = vsub.f32 %v2177, %v2188
        %v2211 = vsub.f32 %v2178, %v2191
        %v2212 = vsub.f32 %v2179, %v2194
        %v2213 = vsub.f32 %v2180, %v2197
        %v2214 = vsub.f32 %v2181, %v2200
        %v2215 = vsub.f32 %v2182, %v2203
        %v2216 = vsub.f32 %v2183, %v2206
        %v2217 = vsub.f32 %v2184, %v2209
        %v2218 = vmul.f32 %v2210, 1.442695
        %v2219 = vpow.pop %v2218
        %v2220 = vmul.f32 %v2211, 1.442695
        %v2221 = vpow.pop %v2220
        %v2222 = vmul.f32 %v2212, 1.442695
        %v2223 = vpow.pop %v2222
        %v2224 = vmul.f32 %v2213, 1.442695
        %v2225 = vpow.pop %v2224
        %v2226 = vmul.f32 %v2214, 1.442695
        %v2227 = vpow.pop %v2226
        %v2228 = vmul.f32 %v2215, 1.442695
        %v2229 = vpow.pop %v2228
        %v2230 = vmul.f32 %v2216, 1.442695
        %v2231 = vpow.pop %v2230
        %v2232 = vmul.f32 %v2217, 1.442695
        %v2233 = vpow.pop %v2232
        %v2234 = vsel %vm2185, %v2219, 0.0
        %2235 = vadd.xlane.f32.xlu0 %v2234
        %v2236 = vpop.xlane.xlu0 %2235
        %v2237 = vsel %vm2185, %v2221, 0.0
        %2238 = vadd.xlane.f32.xlu0 %v2237
        %v2239 = vpop.xlane.xlu0 %2238
        %v2240 = vsel %vm2185, %v2223, 0.0
        %2241 = vadd.xlane.f32.xlu0 %v2240
        %v2242 = vpop.xlane.xlu0 %2241
        %v2243 = vsel %vm2185, %v2225, 0.0
        %2244 = vadd.xlane.f32.xlu0 %v2243
        %v2245 = vpop.xlane.xlu0 %2244
        %v2246 = vsel %vm2185, %v2227, 0.0
        %2247 = vadd.xlane.f32.xlu0 %v2246
        %v2248 = vpop.xlane.xlu0 %2247
        %v2249 = vsel %vm2185, %v2229, 0.0
        %2250 = vadd.xlane.f32.xlu0 %v2249
        %v2251 = vpop.xlane.xlu0 %2250
        %v2252 = vsel %vm2185, %v2231, 0.0
        %2253 = vadd.xlane.f32.xlu0 %v2252
        %v2254 = vpop.xlane.xlu0 %2253
        %v2255 = vsel %vm2185, %v2233, 0.0
        %2256 = vadd.xlane.f32.xlu0 %v2255
        %v2257 = vpop.xlane.xlu0 %2256
        %v2258 = vrcp.pop %v2236
        %v2259 = vrcp.pop %v2239
        %v2260 = vrcp.pop %v2242
        %v2261 = vrcp.pop %v2245
        %v2262 = vrcp.pop %v2248
        %v2263 = vrcp.pop %v2251
        %v2264 = vrcp.pop %v2254
        %v2265 = vrcp.pop %v2257
        %v2266 = vmul.f32 %v2219, %v2258
        %v2267 = vmul.f32 %v2221, %v2259
        %v2268 = vmul.f32 %v2223, %v2260
        %v2269 = vmul.f32 %v2225, %v2261
        %v2270 = vmul.f32 %v2227, %v2262
        %v2271 = vmul.f32 %v2229, %v2263
        %v2272 = vmul.f32 %v2231, %v2264
        %v2273 = vmul.f32 %v2233, %v2265
        %v2275 = vsel %vm2185, %v2266, 0
        %2277 = vmatpush.msra.mxu0 0.0
        %2278 = vmatpush.msra.mxu0 0.0
        %2279 = vmatpush.msra.mxu0 0.0
        %2280 = vmatpush.msra.mxu0 0.0
        %2281 = vmatpush.msra.mxu0 0.0
        %2282 = vmatpush.msra.mxu0 0.0
        %2283 = vmatpush.msra.mxu0 0.0
        %2284 = vmatpush.msra.mxu0 0.0
        %2285 = vmatpush.msra.mxu0 0.0
        %2286 = vmatpush.msra.mxu0 0.0
        %2287 = vmatpush.msra.mxu0 0.0
        %2288 = vmatpush.msra.mxu0 0.0
        %2289 = vmatpush.msra.mxu0 0.0
        %2290 = vmatpush.msra.mxu0 0.0
        %2291 = vmatpush.msra.mxu0 0.0
        %2292 = vmatpush.msra.mxu0 %v1864
        %2293 = vmatmul.f32.gmra.mxu0 %v2275
        %v2294 = vpop.f32.mrf.mxu0
        %v2295 = vadd.f32 0.0, %v2294
        %2296 = vdwg.mxu0
        %v2298 = vsel %vm2185, %v2267, 0
        %2300 = vmatpush.msra.mxu0 0.0
        %2301 = vmatpush.msra.mxu0 0.0
        %2302 = vmatpush.msra.mxu0 0.0
        %2303 = vmatpush.msra.mxu0 0.0
        %2304 = vmatpush.msra.mxu0 0.0
        %2305 = vmatpush.msra.mxu0 0.0
        %2306 = vmatpush.msra.mxu0 0.0
        %2307 = vmatpush.msra.mxu0 0.0
        %2308 = vmatpush.msra.mxu0 0.0
        %2309 = vmatpush.msra.mxu0 0.0
        %2310 = vmatpush.msra.mxu0 0.0
        %2311 = vmatpush.msra.mxu0 0.0
        %2312 = vmatpush.msra.mxu0 0.0
        %2313 = vmatpush.msra.mxu0 0.0
        %2314 = vmatpush.msra.mxu0 0.0
        %2315 = vmatpush.msra.mxu0 %v1956
        %2316 = vmatmul.f32.gmra.mxu0 %v2298
        %v2317 = vpop.f32.mrf.mxu0
        %v2318 = vadd.f32 0.0, %v2317
        %2319 = vdwg.mxu0
        %v2321 = vsel %vm2185, %v2268, 0
        %2323 = vmatpush.msra.mxu0 0.0
        %2324 = vmatpush.msra.mxu0 0.0
        %2325 = vmatpush.msra.mxu0 0.0
        %2326 = vmatpush.msra.mxu0 0.0
        %2327 = vmatpush.msra.mxu0 0.0
        %2328 = vmatpush.msra.mxu0 0.0
        %2329 = vmatpush.msra.mxu0 0.0
        %2330 = vmatpush.msra.mxu0 0.0
        %2331 = vmatpush.msra.mxu0 0.0
        %2332 = vmatpush.msra.mxu0 0.0
        %2333 = vmatpush.msra.mxu0 0.0
        %2334 = vmatpush.msra.mxu0 0.0
        %2335 = vmatpush.msra.mxu0 0.0
        %2336 = vmatpush.msra.mxu0 0.0
        %2337 = vmatpush.msra.mxu0 0.0
        %2338 = vmatpush.msra.mxu0 %v1959
        %2339 = vmatmul.f32.gmra.mxu0 %v2321
        %v2340 = vpop.f32.mrf.mxu0
        %v2341 = vadd.f32 0.0, %v2340
        %2342 = vdwg.mxu0
        %v2344 = vsel %vm2185, %v2269, 0
        %2346 = vmatpush.msra.mxu0 0.0
        %2347 = vmatpush.msra.mxu0 0.0
        %2348 = vmatpush.msra.mxu0 0.0
        %2349 = vmatpush.msra.mxu0 0.0
        %2350 = vmatpush.msra.mxu0 0.0
        %2351 = vmatpush.msra.mxu0 0.0
        %2352 = vmatpush.msra.mxu0 0.0
        %2353 = vmatpush.msra.mxu0 0.0
        %2354 = vmatpush.msra.mxu0 0.0
        %2355 = vmatpush.msra.mxu0 0.0
        %2356 = vmatpush.msra.mxu0 0.0
        %2357 = vmatpush.msra.mxu0 0.0
        %2358 = vmatpush.msra.mxu0 0.0
        %2359 = vmatpush.msra.mxu0 0.0
        %2360 = vmatpush.msra.mxu0 0.0
        %2361 = vmatpush.msra.mxu0 %v1962
        %2362 = vmatmul.f32.gmra.mxu0 %v2344
        %v2363 = vpop.f32.mrf.mxu0
        %v2364 = vadd.f32 0.0, %v2363
        %2365 = vdwg.mxu0
        %v2367 = vsel %vm2185, %v2270, 0
        %2369 = vmatpush.msra.mxu0 0.0
        %2370 = vmatpush.msra.mxu0 0.0
        %2371 = vmatpush.msra.mxu0 0.0
        %2372 = vmatpush.msra.mxu0 0.0
        %2373 = vmatpush.msra.mxu0 0.0
        %2374 = vmatpush.msra.mxu0 0.0
        %2375 = vmatpush.msra.mxu0 0.0
        %2376 = vmatpush.msra.mxu0 0.0
        %2377 = vmatpush.msra.mxu0 0.0
        %2378 = vmatpush.msra.mxu0 0.0
        %2379 = vmatpush.msra.mxu0 0.0
        %2380 = vmatpush.msra.mxu0 0.0
        %2381 = vmatpush.msra.mxu0 0.0
        %2382 = vmatpush.msra.mxu0 0.0
        %2383 = vmatpush.msra.mxu0 0.0
        %2384 = vmatpush.msra.mxu0 %v1890
        %2385 = vmatmul.f32.gmra.mxu0 %v2367
        %v2386 = vpop.f32.mrf.mxu0
        %v2387 = vadd.f32 0.0, %v2386
        %2388 = vdwg.mxu0
        %v2390 = vsel %vm2185, %v2271, 0
        %2392 = vmatpush.msra.mxu0 0.0
        %2393 = vmatpush.msra.mxu0 0.0
        %2394 = vmatpush.msra.mxu0 0.0
        %2395 = vmatpush.msra.mxu0 0.0
        %2396 = vmatpush.msra.mxu0 0.0
        %2397 = vmatpush.msra.mxu0 0.0
        %2398 = vmatpush.msra.mxu0 0.0
        %2399 = vmatpush.msra.mxu0 0.0
        %2400 = vmatpush.msra.mxu0 0.0
        %2401 = vmatpush.msra.mxu0 0.0
        %2402 = vmatpush.msra.mxu0 0.0
        %2403 = vmatpush.msra.mxu0 0.0
        %2404 = vmatpush.msra.mxu0 0.0
        %2405 = vmatpush.msra.mxu0 0.0
        %2406 = vmatpush.msra.mxu0 0.0
        %2407 = vmatpush.msra.mxu0 %v1966
        %2408 = vmatmul.f32.gmra.mxu0 %v2390
        %v2409 = vpop.f32.mrf.mxu0
        %v2410 = vadd.f32 0.0, %v2409
        %2411 = vdwg.mxu0
        %v2413 = vsel %vm2185, %v2272, 0
        %2415 = vmatpush.msra.mxu0 0.0
        %2416 = vmatpush.msra.mxu0 0.0
        %2417 = vmatpush.msra.mxu0 0.0
        %2418 = vmatpush.msra.mxu0 0.0
        %2419 = vmatpush.msra.mxu0 0.0
        %2420 = vmatpush.msra.mxu0 0.0
        %2421 = vmatpush.msra.mxu0 0.0
        %2422 = vmatpush.msra.mxu0 0.0
        %2423 = vmatpush.msra.mxu0 0.0
        %2424 = vmatpush.msra.mxu0 0.0
        %2425 = vmatpush.msra.mxu0 0.0
        %2426 = vmatpush.msra.mxu0 0.0
        %2427 = vmatpush.msra.mxu0 0.0
        %2428 = vmatpush.msra.mxu0 0.0
        %2429 = vmatpush.msra.mxu0 0.0
        %2430 = vmatpush.msra.mxu0 %v1969
        %2431 = vmatmul.f32.gmra.mxu0 %v2413
        %v2432 = vpop.f32.mrf.mxu0
        %v2433 = vadd.f32 0.0, %v2432
        %2434 = vdwg.mxu0
        %v2436 = vsel %vm2185, %v2273, 0
        %2438 = vmatpush.msra.mxu0 0.0
        %2439 = vmatpush.msra.mxu0 0.0
        %2440 = vmatpush.msra.mxu0 0.0
        %2441 = vmatpush.msra.mxu0 0.0
        %2442 = vmatpush.msra.mxu0 0.0
        %2443 = vmatpush.msra.mxu0 0.0
        %2444 = vmatpush.msra.mxu0 0.0
        %2445 = vmatpush.msra.mxu0 0.0
        %2446 = vmatpush.msra.mxu0 0.0
        %2447 = vmatpush.msra.mxu0 0.0
        %2448 = vmatpush.msra.mxu0 0.0
        %2449 = vmatpush.msra.mxu0 0.0
        %2450 = vmatpush.msra.mxu0 0.0
        %2451 = vmatpush.msra.mxu0 0.0
        %2452 = vmatpush.msra.mxu0 0.0
        %2453 = vmatpush.msra.mxu0 %v1972
        %2454 = vmatmul.f32.gmra.mxu0 %v2436
        %v2455 = vpop.f32.mrf.mxu0
        %v2456 = vadd.f32 0.0, %v2455
        %2457 = vdwg.mxu0
        %2459 = vrot.lane.b32.xlu0 %v2318, 32
        %v2460 = vpop.permute.xlu0 %2459
        %2463 = vrot.lane.b32.xlu0 %v2341, 64
        %v2464 = vpop.permute.xlu0 %2463
        %2467 = vrot.lane.b32.xlu0 %v2364, 96
        %v2468 = vpop.permute.xlu0 %2467
        %2471 = vrot.lane.b32.xlu0 %v2410, 32
        %v2472 = vpop.permute.xlu0 %2471
        %2475 = vrot.lane.b32.xlu0 %v2433, 64
        %v2476 = vpop.permute.xlu0 %2475
        %2479 = vrot.lane.b32.xlu0 %v2456, 96
        %v2480 = vpop.permute.xlu0 %2479
        %v2482 = vsel %vm1974, %v2295, %v2460
        %vm2483 = vcmask 523264
        %v2484 = vsel %vm2483, %v2482, %v2464
        %vm2485 = vcmask 785408
        %v2486 = vsel %vm2485, %v2484, %v2468
        %v2487 = vsel %vm1974, %v2387, %v2472
        %v2488 = vsel %vm2483, %v2487, %v2476
        %v2489 = vsel %vm2485, %v2488, %v2480
        %v2490 = vpack.c.bf16 %v2486, %v2486
        %v2491 = vpack.c.bf16 %v2489, %v2489
        %v2493 = vperm.slane %v1925, 0
        %v2494 = vperm.slane %v1925, 1
        %v2529 = vunpack.c.l.b16 %v1893
        %v2530 = vunpack.c.h.b16 %v1893
        %v2531 = vunpack.c.l.b16 %v1894
        %v2532 = vunpack.c.h.b16 %v1894
        %v2533 = vunpack.c.l.b16 %v1895
        %v2534 = vunpack.c.h.b16 %v1895
        %v2535 = vunpack.c.l.b16 %v1896
        %v2536 = vunpack.c.h.b16 %v1896
        %v2537 = vunpack.c.l.b16 %v1897
        %v2538 = vunpack.c.h.b16 %v1897
        %v2539 = vunpack.c.l.b16 %v1898
        %v2540 = vunpack.c.h.b16 %v1898
        %v2541 = vunpack.c.l.b16 %v1899
        %v2542 = vunpack.c.h.b16 %v1899
        %v2543 = vunpack.c.l.b16 %v1900
        %v2544 = vunpack.c.h.b16 %v1900
        %v2545 = vunpack.c.l.b16 %v1901
        %v2546 = vunpack.c.h.b16 %v1901
        %v2547 = vunpack.c.l.b16 %v1902
        %v2548 = vunpack.c.h.b16 %v1902
        %v2549 = vunpack.c.l.b16 %v1903
        %v2550 = vunpack.c.h.b16 %v1903
        %v2551 = vunpack.c.l.b16 %v1904
        %v2552 = vunpack.c.h.b16 %v1904
        %v2553 = vunpack.c.l.b16 %v1905
        %v2554 = vunpack.c.h.b16 %v1905
        %v2555 = vunpack.c.l.b16 %v1906
        %v2556 = vunpack.c.h.b16 %v1906
        %v2557 = vunpack.c.l.b16 %v1907
        %v2558 = vunpack.c.h.b16 %v1907
        %v2559 = vunpack.c.l.b16 %v1908
        %v2560 = vunpack.c.h.b16 %v1908
        %v2561 = vunpack.c.l.b16 %v1909
        %v2562 = vunpack.c.h.b16 %v1909
        %v2563 = vunpack.c.l.b16 %v1910
        %v2564 = vunpack.c.h.b16 %v1910
        %v2565 = vunpack.c.l.b16 %v1911
        %v2566 = vunpack.c.h.b16 %v1911
        %v2567 = vunpack.c.l.b16 %v1912
        %v2568 = vunpack.c.h.b16 %v1912
        %v2569 = vunpack.c.l.b16 %v1913
        %v2570 = vunpack.c.h.b16 %v1913
        %v2571 = vunpack.c.l.b16 %v1914
        %v2572 = vunpack.c.h.b16 %v1914
        %v2573 = vunpack.c.l.b16 %v1915
        %v2574 = vunpack.c.h.b16 %v1915
        %v2575 = vunpack.c.l.b16 %v1916
        %v2576 = vunpack.c.h.b16 %v1916
        %v2577 = vunpack.c.l.b16 %v1917
        %v2578 = vunpack.c.h.b16 %v1917
        %v2579 = vunpack.c.l.b16 %v1918
        %v2580 = vunpack.c.h.b16 %v1918
        %v2581 = vunpack.c.l.b16 %v1919
        %v2582 = vunpack.c.h.b16 %v1919
        %v2583 = vunpack.c.l.b16 %v1920
        %v2584 = vunpack.c.h.b16 %v1920
        %v2585 = vunpack.c.l.b16 %v1921
        %v2586 = vunpack.c.h.b16 %v1921
        %v2587 = vunpack.c.l.b16 %v1922
        %v2588 = vunpack.c.h.b16 %v1922
        %v2589 = vunpack.c.l.b16 %v1923
        %v2590 = vunpack.c.h.b16 %v1923
        %v2591 = vunpack.c.l.b16 %v1924
        %v2592 = vunpack.c.h.b16 %v1924
        %v2593 = vpack.c.b16 %v2531, %v2529
        %v2594 = vpack.c.b16 %v2532, %v2530
        %v2595 = vpack.c.b16 %v2535, %v2533
        %v2596 = vpack.c.b16 %v2536, %v2534
        %v2597 = vpack.c.b16 %v2539, %v2537
        %v2598 = vpack.c.b16 %v2540, %v2538
        %v2599 = vpack.c.b16 %v2543, %v2541
        %v2600 = vpack.c.b16 %v2544, %v2542
        %v2601 = vpack.c.b16 %v2547, %v2545
        %v2602 = vpack.c.b16 %v2548, %v2546
        %v2603 = vpack.c.b16 %v2551, %v2549
        %v2604 = vpack.c.b16 %v2552, %v2550
        %v2605 = vpack.c.b16 %v2555, %v2553
        %v2606 = vpack.c.b16 %v2556, %v2554
        %v2607 = vpack.c.b16 %v2559, %v2557
        %v2608 = vpack.c.b16 %v2560, %v2558
        %v2609 = vpack.c.b16 %v2563, %v2561
        %v2610 = vpack.c.b16 %v2564, %v2562
        %v2611 = vpack.c.b16 %v2567, %v2565
        %v2612 = vpack.c.b16 %v2568, %v2566
        %v2613 = vpack.c.b16 %v2571, %v2569
        %v2614 = vpack.c.b16 %v2572, %v2570
        %v2615 = vpack.c.b16 %v2575, %v2573
        %v2616 = vpack.c.b16 %v2576, %v2574
        %v2617 = vpack.c.b16 %v2579, %v2577
        %v2618 = vpack.c.b16 %v2580, %v2578
        %v2619 = vpack.c.b16 %v2583, %v2581
        %v2620 = vpack.c.b16 %v2584, %v2582
        %v2621 = vpack.c.b16 %v2587, %v2585
        %v2622 = vpack.c.b16 %v2588, %v2586
        %v2623 = vpack.c.b16 %v2591, %v2589
        %v2624 = vpack.c.b16 %v2592, %v2590
        %2657 = vmatpush.bf16.msra.mxu0 %v2607
        %2658 = vmatpush.bf16.msra.mxu0 %v2605
        %2659 = vmatpush.bf16.msra.mxu0 %v2603
        %2660 = vmatpush.bf16.msra.mxu0 %v2601
        %2661 = vmatpush.bf16.msra.mxu0 %v2599
        %2662 = vmatpush.bf16.msra.mxu0 %v2597
        %2663 = vmatpush.bf16.msra.mxu0 %v2595
        %2664 = vmatpush.bf16.msra.mxu0 %v2593
        %2665 = vmatmul.bf16.gmra.mxu0 %v2490
        %v2666 = vpop.f32.mrf.mxu0
        %v2667 = vadd.f32 %v2493, %v2666
        %v2668 = vpop.f32.mrf.mxu0
        %2669 = vdwg.mxu0
        %2670 = vmatpush.bf16.msra.mxu0 %v2623
        %2671 = vmatpush.bf16.msra.mxu0 %v2621
        %2672 = vmatpush.bf16.msra.mxu0 %v2619
        %2673 = vmatpush.bf16.msra.mxu0 %v2617
        %2674 = vmatpush.bf16.msra.mxu0 %v2615
        %2675 = vmatpush.bf16.msra.mxu0 %v2613
        %2676 = vmatpush.bf16.msra.mxu0 %v2611
        %2677 = vmatpush.bf16.msra.mxu0 %v2609
        %2678 = vmatmul.bf16.gmra.mxu0 %v2491
        %v2679 = vpop.f32.mrf.mxu0
        %v2680 = vadd.f32 %v2667, %v2679
        %v2681 = vpop.f32.mrf.mxu0
        %2682 = vdwg.mxu0
        %2683 = vmatpush.bf16.msra.mxu0 %v2608
        %2684 = vmatpush.bf16.msra.mxu0 %v2606
        %2685 = vmatpush.bf16.msra.mxu0 %v2604
        %2686 = vmatpush.bf16.msra.mxu0 %v2602
        %2687 = vmatpush.bf16.msra.mxu0 %v2600
        %2688 = vmatpush.bf16.msra.mxu0 %v2598
        %2689 = vmatpush.bf16.msra.mxu0 %v2596
        %2690 = vmatpush.bf16.msra.mxu0 %v2594
        %2691 = vmatmul.bf16.gmra.mxu0 %v2490
        %v2692 = vpop.f32.mrf.mxu0
        %v2693 = vadd.f32 %v2494, %v2692
        %v2694 = vpop.f32.mrf.mxu0
        %2695 = vdwg.mxu0
        %2696 = vmatpush.bf16.msra.mxu0 %v2624
        %2697 = vmatpush.bf16.msra.mxu0 %v2622
        %2698 = vmatpush.bf16.msra.mxu0 %v2620
        %2699 = vmatpush.bf16.msra.mxu0 %v2618
        %2700 = vmatpush.bf16.msra.mxu0 %v2616
        %2701 = vmatpush.bf16.msra.mxu0 %v2614
        %2702 = vmatpush.bf16.msra.mxu0 %v2612
        %2703 = vmatpush.bf16.msra.mxu0 %v2610
        %2704 = vmatmul.bf16.gmra.mxu0 %v2491
        %v2705 = vpop.f32.mrf.mxu0
        %v2706 = vadd.f32 %v2693, %v2705
        %v2707 = vpop.f32.mrf.mxu0
        %2708 = vdwg.mxu0
        %v2709 = vadd.f32 %v1084, %v2680
        %v2710 = vadd.f32 %v1085, %v2706
        %v2711 = vld [vmem:[#allocation8] sm:$0x3]
        %v2712 = vld [vmem:[#allocation10] sm:$0x3]
        %v2713 = vadd.f32 %v2709, %v2710
        %2714 = vadd.xlane.f32.xlu0 %v2713
        %v2715 = vpop.xlane.xlu0 %2714
        %v2716 = vmul.f32 %v2715, %v1108
        %v2717 = vsub.f32 %v2709, %v2716
        %v2718 = vsub.f32 %v2710, %v2716
        %v2719 = vmul.f32 %v2717, %v2717
        %v2720 = vmul.f32 %v2718, %v2718
        %v2721 = vadd.f32 %v2719, %v2720
        %2722 = vadd.xlane.f32.xlu0 %v2721
        %v2723 = vpop.xlane.xlu0 %2722
        %v2724 = vmul.f32 %v2723, %v1108
        %v2725 = vadd.f32 %v2724, 1e-05
        %v2726 = vrsqrt.pop %v2725
        %v2727 = vmul.f32 %v2726, %v2725
        %v2728 = vmul.f32 %v2727, %v2726
        %v2729 = vmul.f32 0.5, %v2728
        %v2730 = vsub.f32 1.5, %v2729
        %v2731 = vmul.f32 %v2726, %v2730
        %vm2732 = vweird.f32 %v2725
        %vm2733 = vweird.f32 %v2726
        %vm2734 = vmor %vm2732, %vm2733
        %v2735 = vsel %vm2734, %v2726, %v2731
        %v2736 = vmul.f32 %v2717, %v2735
        %v2737 = vmul.f32 %v2718, %v2735
        %v2739 = vperm.slane %v2711, 0
        %v2740 = vperm.slane %v2711, 1
        %v2743 = vmul.f32 %v2736, %v2739
        %v2744 = vmul.f32 %v2737, %v2740
        %v2746 = vperm.slane %v2712, 0
        %v2747 = vperm.slane %v2712, 1
        %v2750 = vadd.f32 %v2743, %v2746
        %v2751 = vadd.f32 %v2744, %v2747
        %v2752 = vpack.c.bf16 %v2750, %v2750
        %v2753 = vpack.c.bf16 %v2751, %v2751
        %v2754 = vld [vmem:[#allocation11] sm:$0xff]
        %v2755 = vld [vmem:[#allocation11 + $0x8] sm:$0xff]
        %v2756 = vld [vmem:[#allocation11 + $0x10] sm:$0xff]
        %v2757 = vld [vmem:[#allocation11 + $0x18] sm:$0xff]
        %v2758 = vld [vmem:[#allocation11 + $0x20] sm:$0xff]
        %v2759 = vld [vmem:[#allocation11 + $0x28] sm:$0xff]
        %v2760 = vld [vmem:[#allocation11 + $0x30] sm:$0xff]
        %v2761 = vld [vmem:[#allocation11 + $0x38] sm:$0xff]
        %v2762 = vld [vmem:[#allocation11 + $0x40] sm:$0xff]
        %v2763 = vld [vmem:[#allocation11 + $0x48] sm:$0xff]
        %v2764 = vld [vmem:[#allocation11 + $0x50] sm:$0xff]
        %v2765 = vld [vmem:[#allocation11 + $0x58] sm:$0xff]
        %v2766 = vld [vmem:[#allocation11 + $0x60] sm:$0xff]
        %v2767 = vld [vmem:[#allocation11 + $0x68] sm:$0xff]
        %v2768 = vld [vmem:[#allocation11 + $0x70] sm:$0xff]
        %v2769 = vld [vmem:[#allocation11 + $0x78] sm:$0xff]
        %v2770 = vld [vmem:[#allocation11 + $0x80] sm:$0xff]
        %v2771 = vld [vmem:[#allocation11 + $0x88] sm:$0xff]
        %v2772 = vld [vmem:[#allocation11 + $0x90] sm:$0xff]
        %v2773 = vld [vmem:[#allocation11 + $0x98] sm:$0xff]
        %v2774 = vld [vmem:[#allocation11 + $0xa0] sm:$0xff]
        %v2775 = vld [vmem:[#allocation11 + $0xa8] sm:$0xff]
        %v2776 = vld [vmem:[#allocation11 + $0xb0] sm:$0xff]
        %v2777 = vld [vmem:[#allocation11 + $0xb8] sm:$0xff]
        %v2778 = vld [vmem:[#allocation11 + $0xc0] sm:$0xff]
        %v2779 = vld [vmem:[#allocation11 + $0xc8] sm:$0xff]
        %v2780 = vld [vmem:[#allocation11 + $0xd0] sm:$0xff]
        %v2781 = vld [vmem:[#allocation11 + $0xd8] sm:$0xff]
        %v2782 = vld [vmem:[#allocation11 + $0xe0] sm:$0xff]
        %v2783 = vld [vmem:[#allocation11 + $0xe8] sm:$0xff]
        %v2784 = vld [vmem:[#allocation11 + $0xf0] sm:$0xff]
        %v2785 = vld [vmem:[#allocation11 + $0xf8] sm:$0xff]
        %v2786 = vld [vmem:[#allocation13] sm:$0x3]
        %v2788 = vperm.slane %v2786, 0
        %v2789 = vperm.slane %v2786, 1
        %v2824 = vunpack.c.l.b16 %v2754
        %v2825 = vunpack.c.h.b16 %v2754
        %v2826 = vunpack.c.l.b16 %v2755
        %v2827 = vunpack.c.h.b16 %v2755
        %v2828 = vunpack.c.l.b16 %v2756
        %v2829 = vunpack.c.h.b16 %v2756
        %v2830 = vunpack.c.l.b16 %v2757
        %v2831 = vunpack.c.h.b16 %v2757
        %v2832 = vunpack.c.l.b16 %v2758
        %v2833 = vunpack.c.h.b16 %v2758
        %v2834 = vunpack.c.l.b16 %v2759
        %v2835 = vunpack.c.h.b16 %v2759
        %v2836 = vunpack.c.l.b16 %v2760
        %v2837 = vunpack.c.h.b16 %v2760
        %v2838 = vunpack.c.l.b16 %v2761
        %v2839 = vunpack.c.h.b16 %v2761
        %v2840 = vunpack.c.l.b16 %v2762
        %v2841 = vunpack.c.h.b16 %v2762
        %v2842 = vunpack.c.l.b16 %v2763
        %v2843 = vunpack.c.h.b16 %v2763
        %v2844 = vunpack.c.l.b16 %v2764
        %v2845 = vunpack.c.h.b16 %v2764
        %v2846 = vunpack.c.l.b16 %v2765
        %v2847 = vunpack.c.h.b16 %v2765
        %v2848 = vunpack.c.l.b16 %v2766
        %v2849 = vunpack.c.h.b16 %v2766
        %v2850 = vunpack.c.l.b16 %v2767
        %v2851 = vunpack.c.h.b16 %v2767
        %v2852 = vunpack.c.l.b16 %v2768
        %v2853 = vunpack.c.h.b16 %v2768
        %v2854 = vunpack.c.l.b16 %v2769
        %v2855 = vunpack.c.h.b16 %v2769
        %v2856 = vunpack.c.l.b16 %v2770
        %v2857 = vunpack.c.h.b16 %v2770
        %v2858 = vunpack.c.l.b16 %v2771
        %v2859 = vunpack.c.h.b16 %v2771
        %v2860 = vunpack.c.l.b16 %v2772
        %v2861 = vunpack.c.h.b16 %v2772
        %v2862 = vunpack.c.l.b16 %v2773
        %v2863 = vunpack.c.h.b16 %v2773
        %v2864 = vunpack.c.l.b16 %v2774
        %v2865 = vunpack.c.h.b16 %v2774
        %v2866 = vunpack.c.l.b16 %v2775
        %v2867 = vunpack.c.h.b16 %v2775
        %v2868 = vunpack.c.l.b16 %v2776
        %v2869 = vunpack.c.h.b16 %v2776
        %v2870 = vunpack.c.l.b16 %v2777
        %v2871 = vunpack.c.h.b16 %v2777
        %v2872 = vunpack.c.l.b16 %v2778
        %v2873 = vunpack.c.h.b16 %v2778
        %v2874 = vunpack.c.l.b16 %v2779
        %v2875 = vunpack.c.h.b16 %v2779
        %v2876 = vunpack.c.l.b16 %v2780
        %v2877 = vunpack.c.h.b16 %v2780
        %v2878 = vunpack.c.l.b16 %v2781
        %v2879 = vunpack.c.h.b16 %v2781
        %v2880 = vunpack.c.l.b16 %v2782
        %v2881 = vunpack.c.h.b16 %v2782
        %v2882 = vunpack.c.l.b16 %v2783
        %v2883 = vunpack.c.h.b16 %v2783
        %v2884 = vunpack.c.l.b16 %v2784
        %v2885 = vunpack.c.h.b16 %v2784
        %v2886 = vunpack.c.l.b16 %v2785
        %v2887 = vunpack.c.h.b16 %v2785
        %v2888 = vpack.c.b16 %v2826, %v2824
        %v2889 = vpack.c.b16 %v2827, %v2825
        %v2890 = vpack.c.b16 %v2830, %v2828
        %v2891 = vpack.c.b16 %v2831, %v2829
        %v2892 = vpack.c.b16 %v2834, %v2832
        %v2893 = vpack.c.b16 %v2835, %v2833
        %v2894 = vpack.c.b16 %v2838, %v2836
        %v2895 = vpack.c.b16 %v2839, %v2837
        %v2896 = vpack.c.b16 %v2842, %v2840
        %v2897 = vpack.c.b16 %v2843, %v2841
        %v2898 = vpack.c.b16 %v2846, %v2844
        %v2899 = vpack.c.b16 %v2847, %v2845
        %v2900 = vpack.c.b16 %v2850, %v2848
        %v2901 = vpack.c.b16 %v2851, %v2849
        %v2902 = vpack.c.b16 %v2854, %v2852
        %v2903 = vpack.c.b16 %v2855, %v2853
        %v2904 = vpack.c.b16 %v2858, %v2856
        %v2905 = vpack.c.b16 %v2859, %v2857
        %v2906 = vpack.c.b16 %v2862, %v2860
        %v2907 = vpack.c.b16 %v2863, %v2861
        %v2908 = vpack.c.b16 %v2866, %v2864
        %v2909 = vpack.c.b16 %v2867, %v2865
        %v2910 = vpack.c.b16 %v2870, %v2868
        %v2911 = vpack.c.b16 %v2871, %v2869
        %v2912 = vpack.c.b16 %v2874, %v2872
        %v2913 = vpack.c.b16 %v2875, %v2873
        %v2914 = vpack.c.b16 %v2878, %v2876
        %v2915 = vpack.c.b16 %v2879, %v2877
        %v2916 = vpack.c.b16 %v2882, %v2880
        %v2917 = vpack.c.b16 %v2883, %v2881
        %v2918 = vpack.c.b16 %v2886, %v2884
        %v2919 = vpack.c.b16 %v2887, %v2885
        %2952 = vmatpush.bf16.msra.mxu0 %v2902
        %2953 = vmatpush.bf16.msra.mxu0 %v2900
        %2954 = vmatpush.bf16.msra.mxu0 %v2898
        %2955 = vmatpush.bf16.msra.mxu0 %v2896
        %2956 = vmatpush.bf16.msra.mxu0 %v2894
        %2957 = vmatpush.bf16.msra.mxu0 %v2892
        %2958 = vmatpush.bf16.msra.mxu0 %v2890
        %2959 = vmatpush.bf16.msra.mxu0 %v2888
        %2960 = vmatmul.bf16.gmra.mxu0 %v2752
        %v2961 = vpop.f32.mrf.mxu0
        %v2962 = vadd.f32 %v2788, %v2961
        %v2963 = vpop.f32.mrf.mxu0
        %2964 = vdwg.mxu0
        %2965 = vmatpush.bf16.msra.mxu0 %v2918
        %2966 = vmatpush.bf16.msra.mxu0 %v2916
        %2967 = vmatpush.bf16.msra.mxu0 %v2914
        %2968 = vmatpush.bf16.msra.mxu0 %v2912
        %2969 = vmatpush.bf16.msra.mxu0 %v2910
        %2970 = vmatpush.bf16.msra.mxu0 %v2908
        %2971 = vmatpush.bf16.msra.mxu0 %v2906
        %2972 = vmatpush.bf16.msra.mxu0 %v2904
        %2973 = vmatmul.bf16.gmra.mxu0 %v2753
        %v2974 = vpop.f32.mrf.mxu0
        %v2975 = vadd.f32 %v2962, %v2974
        %v2976 = vpop.f32.mrf.mxu0
        %2977 = vdwg.mxu0
        %2978 = vmatpush.bf16.msra.mxu0 %v2903
        %2979 = vmatpush.bf16.msra.mxu0 %v2901
        %2980 = vmatpush.bf16.msra.mxu0 %v2899
        %2981 = vmatpush.bf16.msra.mxu0 %v2897
        %2982 = vmatpush.bf16.msra.mxu0 %v2895
        %2983 = vmatpush.bf16.msra.mxu0 %v2893
        %2984 = vmatpush.bf16.msra.mxu0 %v2891
        %2985 = vmatpush.bf16.msra.mxu0 %v2889
        %2986 = vmatmul.bf16.gmra.mxu0 %v2752
        %v2987 = vpop.f32.mrf.mxu0
        %v2988 = vadd.f32 %v2789, %v2987
        %v2989 = vpop.f32.mrf.mxu0
        %2990 = vdwg.mxu0
        %2991 = vmatpush.bf16.msra.mxu0 %v2919
        %2992 = vmatpush.bf16.msra.mxu0 %v2917
        %2993 = vmatpush.bf16.msra.mxu0 %v2915
        %2994 = vmatpush.bf16.msra.mxu0 %v2913
        %2995 = vmatpush.bf16.msra.mxu0 %v2911
        %2996 = vmatpush.bf16.msra.mxu0 %v2909
        %2997 = vmatpush.bf16.msra.mxu0 %v2907
        %2998 = vmatpush.bf16.msra.mxu0 %v2905
        %2999 = vmatmul.bf16.gmra.mxu0 %v2753
        %v3000 = vpop.f32.mrf.mxu0
        %v3001 = vadd.f32 %v2988, %v3000
        %v3002 = vpop.f32.mrf.mxu0
        %3003 = vdwg.mxu0
        %v3004 = vld [vmem:[#allocation14] sm:$0xff]
        %v3005 = vld [vmem:[#allocation14 + $0x8] sm:$0xff]
        %v3006 = vld [vmem:[#allocation14 + $0x10] sm:$0xff]
        %v3007 = vld [vmem:[#allocation14 + $0x18] sm:$0xff]
        %v3008 = vld [vmem:[#allocation14 + $0x20] sm:$0xff]
        %v3009 = vld [vmem:[#allocation14 + $0x28] sm:$0xff]
        %v3010 = vld [vmem:[#allocation14 + $0x30] sm:$0xff]
        %v3011 = vld [vmem:[#allocation14 + $0x38] sm:$0xff]
        %v3012 = vld [vmem:[#allocation14 + $0x40] sm:$0xff]
        %v3013 = vld [vmem:[#allocation14 + $0x48] sm:$0xff]
        %v3014 = vld [vmem:[#allocation14 + $0x50] sm:$0xff]
        %v3015 = vld [vmem:[#allocation14 + $0x58] sm:$0xff]
        %v3016 = vld [vmem:[#allocation14 + $0x60] sm:$0xff]
        %v3017 = vld [vmem:[#allocation14 + $0x68] sm:$0xff]
        %v3018 = vld [vmem:[#allocation14 + $0x70] sm:$0xff]
        %v3019 = vld [vmem:[#allocation14 + $0x78] sm:$0xff]
        %v3020 = vld [vmem:[#allocation14 + $0x80] sm:$0xff]
        %v3021 = vld [vmem:[#allocation14 + $0x88] sm:$0xff]
        %v3022 = vld [vmem:[#allocation14 + $0x90] sm:$0xff]
        %v3023 = vld [vmem:[#allocation14 + $0x98] sm:$0xff]
        %v3024 = vld [vmem:[#allocation14 + $0xa0] sm:$0xff]
        %v3025 = vld [vmem:[#allocation14 + $0xa8] sm:$0xff]
        %v3026 = vld [vmem:[#allocation14 + $0xb0] sm:$0xff]
        %v3027 = vld [vmem:[#allocation14 + $0xb8] sm:$0xff]
        %v3028 = vld [vmem:[#allocation14 + $0xc0] sm:$0xff]
        %v3029 = vld [vmem:[#allocation14 + $0xc8] sm:$0xff]
        %v3030 = vld [vmem:[#allocation14 + $0xd0] sm:$0xff]
        %v3031 = vld [vmem:[#allocation14 + $0xd8] sm:$0xff]
        %v3032 = vld [vmem:[#allocation14 + $0xe0] sm:$0xff]
        %v3033 = vld [vmem:[#allocation14 + $0xe8] sm:$0xff]
        %v3034 = vld [vmem:[#allocation14 + $0xf0] sm:$0xff]
        %v3035 = vld [vmem:[#allocation14 + $0xf8] sm:$0xff]
        %v3036 = vld [vmem:[#allocation14 + $0x100] sm:$0xff]
        %v3037 = vld [vmem:[#allocation14 + $0x108] sm:$0xff]
        %v3038 = vld [vmem:[#allocation14 + $0x110] sm:$0xff]
        %v3039 = vld [vmem:[#allocation14 + $0x118] sm:$0xff]
        %v3040 = vld [vmem:[#allocation14 + $0x120] sm:$0xff]
        %v3041 = vld [vmem:[#allocation14 + $0x128] sm:$0xff]
        %v3042 = vld [vmem:[#allocation14 + $0x130] sm:$0xff]
        %v3043 = vld [vmem:[#allocation14 + $0x138] sm:$0xff]
        %v3044 = vld [vmem:[#allocation14 + $0x140] sm:$0xff]
        %v3045 = vld [vmem:[#allocation14 + $0x148] sm:$0xff]
        %v3046 = vld [vmem:[#allocation14 + $0x150] sm:$0xff]
        %v3047 = vld [vmem:[#allocation14 + $0x158] sm:$0xff]
        %v3048 = vld [vmem:[#allocation14 + $0x160] sm:$0xff]
        %v3049 = vld [vmem:[#allocation14 + $0x168] sm:$0xff]
        %v3050 = vld [vmem:[#allocation14 + $0x170] sm:$0xff]
        %v3051 = vld [vmem:[#allocation14 + $0x178] sm:$0xff]
        %v3052 = vld [vmem:[#allocation14 + $0x180] sm:$0xff]
        %v3053 = vld [vmem:[#allocation14 + $0x188] sm:$0xff]
        %v3054 = vld [vmem:[#allocation14 + $0x190] sm:$0xff]
        %v3055 = vld [vmem:[#allocation14 + $0x198] sm:$0xff]
        %v3056 = vld [vmem:[#allocation14 + $0x1a0] sm:$0xff]
        %v3057 = vld [vmem:[#allocation14 + $0x1a8] sm:$0xff]
        %v3058 = vld [vmem:[#allocation14 + $0x1b0] sm:$0xff]
        %v3059 = vld [vmem:[#allocation14 + $0x1b8] sm:$0xff]
        %v3060 = vld [vmem:[#allocation14 + $0x1c0] sm:$0xff]
        %v3061 = vld [vmem:[#allocation14 + $0x1c8] sm:$0xff]
        %v3062 = vld [vmem:[#allocation14 + $0x1d0] sm:$0xff]
        %v3063 = vld [vmem:[#allocation14 + $0x1d8] sm:$0xff]
        %v3064 = vld [vmem:[#allocation14 + $0x1e0] sm:$0xff]
        %v3065 = vld [vmem:[#allocation14 + $0x1e8] sm:$0xff]
        %v3066 = vld [vmem:[#allocation14 + $0x1f0] sm:$0xff]
        %v3067 = vld [vmem:[#allocation14 + $0x1f8] sm:$0xff]
        %v3068 = vld [vmem:[#allocation16] sm:$0xf]
        %v3070 = vperm.slane %v3068, 0
        %v3071 = vperm.slane %v3068, 1
        %v3072 = vperm.slane %v3068, 2
        %v3073 = vperm.slane %v3068, 3
        %v3142 = vunpack.c.l.b16 %v3004
        %v3143 = vunpack.c.h.b16 %v3004
        %v3144 = vunpack.c.l.b16 %v3005
        %v3145 = vunpack.c.h.b16 %v3005
        %v3146 = vunpack.c.l.b16 %v3006
        %v3147 = vunpack.c.h.b16 %v3006
        %v3148 = vunpack.c.l.b16 %v3007
        %v3149 = vunpack.c.h.b16 %v3007
        %v3150 = vunpack.c.l.b16 %v3008
        %v3151 = vunpack.c.h.b16 %v3008
        %v3152 = vunpack.c.l.b16 %v3009
        %v3153 = vunpack.c.h.b16 %v3009
        %v3154 = vunpack.c.l.b16 %v3010
        %v3155 = vunpack.c.h.b16 %v3010
        %v3156 = vunpack.c.l.b16 %v3011
        %v3157 = vunpack.c.h.b16 %v3011
        %v3158 = vunpack.c.l.b16 %v3012
        %v3159 = vunpack.c.h.b16 %v3012
        %v3160 = vunpack.c.l.b16 %v3013
        %v3161 = vunpack.c.h.b16 %v3013
        %v3162 = vunpack.c.l.b16 %v3014
        %v3163 = vunpack.c.h.b16 %v3014
        %v3164 = vunpack.c.l.b16 %v3015
        %v3165 = vunpack.c.h.b16 %v3015
        %v3166 = vunpack.c.l.b16 %v3016
        %v3167 = vunpack.c.h.b16 %v3016
        %v3168 = vunpack.c.l.b16 %v3017
        %v3169 = vunpack.c.h.b16 %v3017
        %v3170 = vunpack.c.l.b16 %v3018
        %v3171 = vunpack.c.h.b16 %v3018
        %v3172 = vunpack.c.l.b16 %v3019
        %v3173 = vunpack.c.h.b16 %v3019
        %v3174 = vunpack.c.l.b16 %v3020
        %v3175 = vunpack.c.h.b16 %v3020
        %v3176 = vunpack.c.l.b16 %v3021
        %v3177 = vunpack.c.h.b16 %v3021
        %v3178 = vunpack.c.l.b16 %v3022
        %v3179 = vunpack.c.h.b16 %v3022
        %v3180 = vunpack.c.l.b16 %v3023
        %v3181 = vunpack.c.h.b16 %v3023
        %v3182 = vunpack.c.l.b16 %v3024
        %v3183 = vunpack.c.h.b16 %v3024
        %v3184 = vunpack.c.l.b16 %v3025
        %v3185 = vunpack.c.h.b16 %v3025
        %v3186 = vunpack.c.l.b16 %v3026
        %v3187 = vunpack.c.h.b16 %v3026
        %v3188 = vunpack.c.l.b16 %v3027
        %v3189 = vunpack.c.h.b16 %v3027
        %v3190 = vunpack.c.l.b16 %v3028
        %v3191 = vunpack.c.h.b16 %v3028
        %v3192 = vunpack.c.l.b16 %v3029
        %v3193 = vunpack.c.h.b16 %v3029
        %v3194 = vunpack.c.l.b16 %v3030
        %v3195 = vunpack.c.h.b16 %v3030
        %v3196 = vunpack.c.l.b16 %v3031
        %v3197 = vunpack.c.h.b16 %v3031
        %v3198 = vunpack.c.l.b16 %v3032
        %v3199 = vunpack.c.h.b16 %v3032
        %v3200 = vunpack.c.l.b16 %v3033
        %v3201 = vunpack.c.h.b16 %v3033
        %v3202 = vunpack.c.l.b16 %v3034
        %v3203 = vunpack.c.h.b16 %v3034
        %v3204 = vunpack.c.l.b16 %v3035
        %v3205 = vunpack.c.h.b16 %v3035
        %v3206 = vunpack.c.l.b16 %v3036
        %v3207 = vunpack.c.h.b16 %v3036
        %v3208 = vunpack.c.l.b16 %v3037
        %v3209 = vunpack.c.h.b16 %v3037
        %v3210 = vunpack.c.l.b16 %v3038
        %v3211 = vunpack.c.h.b16 %v3038
        %v3212 = vunpack.c.l.b16 %v3039
        %v3213 = vunpack.c.h.b16 %v3039
        %v3214 = vunpack.c.l.b16 %v3040
        %v3215 = vunpack.c.h.b16 %v3040
        %v3216 = vunpack.c.l.b16 %v3041
        %v3217 = vunpack.c.h.b16 %v3041
        %v3218 = vunpack.c.l.b16 %v3042
        %v3219 = vunpack.c.h.b16 %v3042
        %v3220 = vunpack.c.l.b16 %v3043
        %v3221 = vunpack.c.h.b16 %v3043
        %v3222 = vunpack.c.l.b16 %v3044
        %v3223 = vunpack.c.h.b16 %v3044
        %v3224 = vunpack.c.l.b16 %v3045
        %v3225 = vunpack.c.h.b16 %v3045
        %v3226 = vunpack.c.l.b16 %v3046
        %v3227 = vunpack.c.h.b16 %v3046
        %v3228 = vunpack.c.l.b16 %v3047
        %v3229 = vunpack.c.h.b16 %v3047
        %v3230 = vunpack.c.l.b16 %v3048
        %v3231 = vunpack.c.h.b16 %v3048
        %v3232 = vunpack.c.l.b16 %v3049
        %v3233 = vunpack.c.h.b16 %v3049
        %v3234 = vunpack.c.l.b16 %v3050
        %v3235 = vunpack.c.h.b16 %v3050
        %v3236 = vunpack.c.l.b16 %v3051
        %v3237 = vunpack.c.h.b16 %v3051
        %v3238 = vunpack.c.l.b16 %v3052
        %v3239 = vunpack.c.h.b16 %v3052
        %v3240 = vunpack.c.l.b16 %v3053
        %v3241 = vunpack.c.h.b16 %v3053
        %v3242 = vunpack.c.l.b16 %v3054
        %v3243 = vunpack.c.h.b16 %v3054
        %v3244 = vunpack.c.l.b16 %v3055
        %v3245 = vunpack.c.h.b16 %v3055
        %v3246 = vunpack.c.l.b16 %v3056
        %v3247 = vunpack.c.h.b16 %v3056
        %v3248 = vunpack.c.l.b16 %v3057
        %v3249 = vunpack.c.h.b16 %v3057
        %v3250 = vunpack.c.l.b16 %v3058
        %v3251 = vunpack.c.h.b16 %v3058
        %v3252 = vunpack.c.l.b16 %v3059
        %v3253 = vunpack.c.h.b16 %v3059
        %v3254 = vunpack.c.l.b16 %v3060
        %v3255 = vunpack.c.h.b16 %v3060
        %v3256 = vunpack.c.l.b16 %v3061
        %v3257 = vunpack.c.h.b16 %v3061
        %v3258 = vunpack.c.l.b16 %v3062
        %v3259 = vunpack.c.h.b16 %v3062
        %v3260 = vunpack.c.l.b16 %v3063
        %v3261 = vunpack.c.h.b16 %v3063
        %v3262 = vunpack.c.l.b16 %v3064
        %v3263 = vunpack.c.h.b16 %v3064
        %v3264 = vunpack.c.l.b16 %v3065
        %v3265 = vunpack.c.h.b16 %v3065
        %v3266 = vunpack.c.l.b16 %v3066
        %v3267 = vunpack.c.h.b16 %v3066
        %v3268 = vunpack.c.l.b16 %v3067
        %v3269 = vunpack.c.h.b16 %v3067
        %v3270 = vpack.c.b16 %v3146, %v3142
        %v3271 = vpack.c.b16 %v3147, %v3143
        %v3272 = vpack.c.b16 %v3148, %v3144
        %v3273 = vpack.c.b16 %v3149, %v3145
        %v3274 = vpack.c.b16 %v3154, %v3150
        %v3275 = vpack.c.b16 %v3155, %v3151
        %v3276 = vpack.c.b16 %v3156, %v3152
        %v3277 = vpack.c.b16 %v3157, %v3153
        %v3278 = vpack.c.b16 %v3162, %v3158
        %v3279 = vpack.c.b16 %v3163, %v3159
        %v3280 = vpack.c.b16 %v3164, %v3160
        %v3281 = vpack.c.b16 %v3165, %v3161
        %v3282 = vpack.c.b16 %v3170, %v3166
        %v3283 = vpack.c.b16 %v3171, %v3167
        %v3284 = vpack.c.b16 %v3172, %v3168
        %v3285 = vpack.c.b16 %v3173, %v3169
        %v3286 = vpack.c.b16 %v3178, %v3174
        %v3287 = vpack.c.b16 %v3179, %v3175
        %v3288 = vpack.c.b16 %v3180, %v3176
        %v3289 = vpack.c.b16 %v3181, %v3177
        %v3290 = vpack.c.b16 %v3186, %v3182
        %v3291 = vpack.c.b16 %v3187, %v3183
        %v3292 = vpack.c.b16 %v3188, %v3184
        %v3293 = vpack.c.b16 %v3189, %v3185
        %v3294 = vpack.c.b16 %v3194, %v3190
        %v3295 = vpack.c.b16 %v3195, %v3191
        %v3296 = vpack.c.b16 %v3196, %v3192
        %v3297 = vpack.c.b16 %v3197, %v3193
        %v3298 = vpack.c.b16 %v3202, %v3198
        %v3299 = vpack.c.b16 %v3203, %v3199
        %v3300 = vpack.c.b16 %v3204, %v3200
        %v3301 = vpack.c.b16 %v3205, %v3201
        %v3302 = vpack.c.b16 %v3210, %v3206
        %v3303 = vpack.c.b16 %v3211, %v3207
        %v3304 = vpack.c.b16 %v3212, %v3208
        %v3305 = vpack.c.b16 %v3213, %v3209
        %v3306 = vpack.c.b16 %v3218, %v3214
        %v3307 = vpack.c.b16 %v3219, %v3215
        %v3308 = vpack.c.b16 %v3220, %v3216
        %v3309 = vpack.c.b16 %v3221, %v3217
        %v3310 = vpack.c.b16 %v3226, %v3222
        %v3311 = vpack.c.b16 %v3227, %v3223
        %v3312 = vpack.c.b16 %v3228, %v3224
        %v3313 = vpack.c.b16 %v3229, %v3225
        %v3314 = vpack.c.b16 %v3234, %v3230
        %v3315 = vpack.c.b16 %v3235, %v3231
        %v3316 = vpack.c.b16 %v3236, %v3232
        %v3317 = vpack.c.b16 %v3237, %v3233
        %v3318 = vpack.c.b16 %v3242, %v3238
        %v3319 = vpack.c.b16 %v3243, %v3239
        %v3320 = vpack.c.b16 %v3244, %v3240
        %v3321 = vpack.c.b16 %v3245, %v3241
        %v3322 = vpack.c.b16 %v3250, %v3246
        %v3323 = vpack.c.b16 %v3251, %v3247
        %v3324 = vpack.c.b16 %v3252, %v3248
        %v3325 = vpack.c.b16 %v3253, %v3249
        %v3326 = vpack.c.b16 %v3258, %v3254
        %v3327 = vpack.c.b16 %v3259, %v3255
        %v3328 = vpack.c.b16 %v3260, %v3256
        %v3329 = vpack.c.b16 %v3261, %v3257
        %v3330 = vpack.c.b16 %v3266, %v3262
        %v3331 = vpack.c.b16 %v3267, %v3263
        %v3332 = vpack.c.b16 %v3268, %v3264
        %v3333 = vpack.c.b16 %v3269, %v3265
        %3398 = vmatpush.bf16.msra.mxu0 %v3298
        %3399 = vmatpush.bf16.msra.mxu0 %v3294
        %3400 = vmatpush.bf16.msra.mxu0 %v3290
        %3401 = vmatpush.bf16.msra.mxu0 %v3286
        %3402 = vmatpush.bf16.msra.mxu0 %v3282
        %3403 = vmatpush.bf16.msra.mxu0 %v3278
        %3404 = vmatpush.bf16.msra.mxu0 %v3274
        %3405 = vmatpush.bf16.msra.mxu0 %v3270
        %3406 = vmatmul.bf16.gmra.mxu0 %v1090
        %v3407 = vpop.f32.mrf.mxu0
        %v3408 = vadd.f32 %v3070, %v3407
        %v3409 = vpop.f32.mrf.mxu0
        %v3410 = vadd.f32 %v3070, %v3409
        %3411 = vdwg.mxu0
        %3412 = vmatpush.bf16.msra.mxu0 %v3330
        %3413 = vmatpush.bf16.msra.mxu0 %v3326
        %3414 = vmatpush.bf16.msra.mxu0 %v3322
        %3415 = vmatpush.bf16.msra.mxu0 %v3318
        %3416 = vmatpush.bf16.msra.mxu0 %v3314
        %3417 = vmatpush.bf16.msra.mxu0 %v3310
        %3418 = vmatpush.bf16.msra.mxu0 %v3306
        %3419 = vmatpush.bf16.msra.mxu0 %v3302
        %3420 = vmatmul.bf16.gmra.mxu0 %v1091
        %v3421 = vpop.f32.mrf.mxu0
        %v3422 = vadd.f32 %v3408, %v3421
        %v3423 = vpop.f32.mrf.mxu0
        %v3424 = vadd.f32 %v3410, %v3423
        %3425 = vdwg.mxu0
        %3426 = vmatpush.bf16.msra.mxu0 %v3299
        %3427 = vmatpush.bf16.msra.mxu0 %v3295
        %3428 = vmatpush.bf16.msra.mxu0 %v3291
        %3429 = vmatpush.bf16.msra.mxu0 %v3287
        %3430 = vmatpush.bf16.msra.mxu0 %v3283
        %3431 = vmatpush.bf16.msra.mxu0 %v3279
        %3432 = vmatpush.bf16.msra.mxu0 %v3275
        %3433 = vmatpush.bf16.msra.mxu0 %v3271
        %3434 = vmatmul.bf16.gmra.mxu0 %v1090
        %v3435 = vpop.f32.mrf.mxu0
        %v3436 = vadd.f32 %v3071, %v3435
        %v3437 = vpop.f32.mrf.mxu0
        %v3438 = vadd.f32 %v3071, %v3437
        %3439 = vdwg.mxu0
        %3440 = vmatpush.bf16.msra.mxu0 %v3331
        %3441 = vmatpush.bf16.msra.mxu0 %v3327
        %3442 = vmatpush.bf16.msra.mxu0 %v3323
        %3443 = vmatpush.bf16.msra.mxu0 %v3319
        %3444 = vmatpush.bf16.msra.mxu0 %v3315
        %3445 = vmatpush.bf16.msra.mxu0 %v3311
        %3446 = vmatpush.bf16.msra.mxu0 %v3307
        %3447 = vmatpush.bf16.msra.mxu0 %v3303
        %3448 = vmatmul.bf16.gmra.mxu0 %v1091
        %v3449 = vpop.f32.mrf.mxu0
        %v3450 = vadd.f32 %v3436, %v3449
        %v3451 = vpop.f32.mrf.mxu0
        %v3452 = vadd.f32 %v3438, %v3451
        %3453 = vdwg.mxu0
        %3454 = vmatpush.bf16.msra.mxu0 %v3300
        %3455 = vmatpush.bf16.msra.mxu0 %v3296
        %3456 = vmatpush.bf16.msra.mxu0 %v3292
        %3457 = vmatpush.bf16.msra.mxu0 %v3288
        %3458 = vmatpush.bf16.msra.mxu0 %v3284
        %3459 = vmatpush.bf16.msra.mxu0 %v3280
        %3460 = vmatpush.bf16.msra.mxu0 %v3276
        %3461 = vmatpush.bf16.msra.mxu0 %v3272
        %3462 = vmatmul.bf16.gmra.mxu0 %v1090
        %v3463 = vpop.f32.mrf.mxu0
        %v3464 = vadd.f32 %v3072, %v3463
        %v3465 = vpop.f32.mrf.mxu0
        %v3466 = vadd.f32 %v3072, %v3465
        %3467 = vdwg.mxu0
        %3468 = vmatpush.bf16.msra.mxu0 %v3332
        %3469 = vmatpush.bf16.msra.mxu0 %v3328
        %3470 = vmatpush.bf16.msra.mxu0 %v3324
        %3471 = vmatpush.bf16.msra.mxu0 %v3320
        %3472 = vmatpush.bf16.msra.mxu0 %v3316
        %3473 = vmatpush.bf16.msra.mxu0 %v3312
        %3474 = vmatpush.bf16.msra.mxu0 %v3308
        %3475 = vmatpush.bf16.msra.mxu0 %v3304
        %3476 = vmatmul.bf16.gmra.mxu0 %v1091
        %v3477 = vpop.f32.mrf.mxu0
        %v3478 = vadd.f32 %v3464, %v3477
        %v3479 = vpop.f32.mrf.mxu0
        %v3480 = vadd.f32 %v3466, %v3479
        %3481 = vdwg.mxu0
        %3482 = vmatpush.bf16.msra.mxu0 %v3301
        %3483 = vmatpush.bf16.msra.mxu0 %v3297
        %3484 = vmatpush.bf16.msra.mxu0 %v3293
        %3485 = vmatpush.bf16.msra.mxu0 %v3289
        %3486 = vmatpush.bf16.msra.mxu0 %v3285
        %3487 = vmatpush.bf16.msra.mxu0 %v3281
        %3488 = vmatpush.bf16.msra.mxu0 %v3277
        %3489 = vmatpush.bf16.msra.mxu0 %v3273
        %3490 = vmatmul.bf16.gmra.mxu0 %v1090
        %v3491 = vpop.f32.mrf.mxu0
        %v3492 = vadd.f32 %v3073, %v3491
        %v3493 = vpop.f32.mrf.mxu0
        %v3494 = vadd.f32 %v3073, %v3493
        %3495 = vdwg.mxu0
        %3496 = vmatpush.bf16.msra.mxu0 %v3333
        %3497 = vmatpush.bf16.msra.mxu0 %v3329
        %3498 = vmatpush.bf16.msra.mxu0 %v3325
        %3499 = vmatpush.bf16.msra.mxu0 %v3321
        %3500 = vmatpush.bf16.msra.mxu0 %v3317
        %3501 = vmatpush.bf16.msra.mxu0 %v3313
        %3502 = vmatpush.bf16.msra.mxu0 %v3309
        %3503 = vmatpush.bf16.msra.mxu0 %v3305
        %3504 = vmatmul.bf16.gmra.mxu0 %v1091
        %v3505 = vpop.f32.mrf.mxu0
        %v3506 = vadd.f32 %v3492, %v3505
        %v3507 = vpop.f32.mrf.mxu0
        %v3508 = vadd.f32 %v3494, %v3507
        %3509 = vdwg.mxu0
        %v3510 = vld [vmem:[#allocation17] sm:$0xff]
        %v3511 = vld [vmem:[#allocation17 + $0x8] sm:$0xff]
        %v3512 = vld [vmem:[#allocation17 + $0x10] sm:$0xff]
        %v3513 = vld [vmem:[#allocation17 + $0x18] sm:$0xff]
        %v3514 = vld [vmem:[#allocation17 + $0x20] sm:$0xff]
        %v3515 = vld [vmem:[#allocation17 + $0x28] sm:$0xff]
        %v3516 = vld [vmem:[#allocation17 + $0x30] sm:$0xff]
        %v3517 = vld [vmem:[#allocation17 + $0x38] sm:$0xff]
        %v3518 = vld [vmem:[#allocation17 + $0x40] sm:$0xff]
        %v3519 = vld [vmem:[#allocation17 + $0x48] sm:$0xff]
        %v3520 = vld [vmem:[#allocation17 + $0x50] sm:$0xff]
        %v3521 = vld [vmem:[#allocation17 + $0x58] sm:$0xff]
        %v3522 = vld [vmem:[#allocation17 + $0x60] sm:$0xff]
        %v3523 = vld [vmem:[#allocation17 + $0x68] sm:$0xff]
        %v3524 = vld [vmem:[#allocation17 + $0x70] sm:$0xff]
        %v3525 = vld [vmem:[#allocation17 + $0x78] sm:$0xff]
        %v3526 = vld [vmem:[#allocation17 + $0x80] sm:$0xff]
        %v3527 = vld [vmem:[#allocation17 + $0x88] sm:$0xff]
        %v3528 = vld [vmem:[#allocation17 + $0x90] sm:$0xff]
        %v3529 = vld [vmem:[#allocation17 + $0x98] sm:$0xff]
        %v3530 = vld [vmem:[#allocation17 + $0xa0] sm:$0xff]
        %v3531 = vld [vmem:[#allocation17 + $0xa8] sm:$0xff]
        %v3532 = vld [vmem:[#allocation17 + $0xb0] sm:$0xff]
        %v3533 = vld [vmem:[#allocation17 + $0xb8] sm:$0xff]
        %v3534 = vld [vmem:[#allocation17 + $0xc0] sm:$0xff]
        %v3535 = vld [vmem:[#allocation17 + $0xc8] sm:$0xff]
        %v3536 = vld [vmem:[#allocation17 + $0xd0] sm:$0xff]
        %v3537 = vld [vmem:[#allocation17 + $0xd8] sm:$0xff]
        %v3538 = vld [vmem:[#allocation17 + $0xe0] sm:$0xff]
        %v3539 = vld [vmem:[#allocation17 + $0xe8] sm:$0xff]
        %v3540 = vld [vmem:[#allocation17 + $0xf0] sm:$0xff]
        %v3541 = vld [vmem:[#allocation17 + $0xf8] sm:$0xff]
        %v3542 = vld [vmem:[#allocation19] sm:$0x3]
        %3544 = vrot.lane.b32.xlu0 %v2975, 96
        %v3545 = vpop.permute.xlu0 %3544
        %3546 = vrot.lane.b32.xlu0 %v2975, 64
        %v3547 = vpop.permute.xlu0 %3546
        %3548 = vrot.lane.b32.xlu0 %v2975, 32
        %v3549 = vpop.permute.xlu0 %3548
        %3551 = vrot.lane.b32.xlu0 %v3001, 96
        %v3552 = vpop.permute.xlu0 %3551
        %3553 = vrot.lane.b32.xlu0 %v3001, 64
        %v3554 = vpop.permute.xlu0 %3553
        %3555 = vrot.lane.b32.xlu0 %v3001, 32
        %v3556 = vpop.permute.xlu0 %3555
        %3559 = vrot.lane.b32.xlu0 %v3422, 96
        %v3560 = vpop.permute.xlu0 %3559
        %3561 = vrot.lane.b32.xlu0 %v3424, 96
        %v3562 = vpop.permute.xlu0 %3561
        %3563 = vrot.lane.b32.xlu0 %v3422, 64
        %v3564 = vpop.permute.xlu0 %3563
        %3565 = vrot.lane.b32.xlu0 %v3424, 64
        %v3566 = vpop.permute.xlu0 %3565
        %3567 = vrot.lane.b32.xlu0 %v3422, 32
        %v3568 = vpop.permute.xlu0 %3567
        %3569 = vrot.lane.b32.xlu0 %v3424, 32
        %v3570 = vpop.permute.xlu0 %3569
        %3573 = vrot.lane.b32.xlu0 %v3450, 96
        %v3574 = vpop.permute.xlu0 %3573
        %3575 = vrot.lane.b32.xlu0 %v3452, 96
        %v3576 = vpop.permute.xlu0 %3575
        %3577 = vrot.lane.b32.xlu0 %v3450, 64
        %v3578 = vpop.permute.xlu0 %3577
        %3579 = vrot.lane.b32.xlu0 %v3452, 64
        %v3580 = vpop.permute.xlu0 %3579
        %3581 = vrot.lane.b32.xlu0 %v3450, 32
        %v3582 = vpop.permute.xlu0 %3581
        %3583 = vrot.lane.b32.xlu0 %v3452, 32
        %v3584 = vpop.permute.xlu0 %3583
        %3587 = vrot.lane.b32.xlu0 %v3478, 96
        %v3588 = vpop.permute.xlu0 %3587
        %3589 = vrot.lane.b32.xlu0 %v3480, 96
        %v3590 = vpop.permute.xlu0 %3589
        %3593 = vrot.lane.b32.xlu0 %v3478, 64
        %v3594 = vpop.permute.xlu0 %3593
        %3595 = vrot.lane.b32.xlu0 %v3480, 64
        %v3596 = vpop.permute.xlu0 %3595
        %3599 = vrot.lane.b32.xlu0 %v3478, 32
        %v3600 = vpop.permute.xlu0 %3599
        %3601 = vrot.lane.b32.xlu0 %v3480, 32
        %v3602 = vpop.permute.xlu0 %3601
        %3607 = vrot.lane.b32.xlu0 %v3506, 96
        %v3608 = vpop.permute.xlu0 %3607
        %3609 = vrot.lane.b32.xlu0 %v3508, 96
        %v3610 = vpop.permute.xlu0 %3609
        %3613 = vrot.lane.b32.xlu0 %v3506, 64
        %v3614 = vpop.permute.xlu0 %3613
        %3615 = vrot.lane.b32.xlu0 %v3508, 64
        %v3616 = vpop.permute.xlu0 %3615
        %3619 = vrot.lane.b32.xlu0 %v3506, 32
        %v3620 = vpop.permute.xlu0 %3619
        %3621 = vrot.lane.b32.xlu0 %v3508, 32
        %v3622 = vpop.permute.xlu0 %3621
        %v3625 = vsel %vm1974, %v2975, 0
        %v3627 = vsel %vm1974, %v3422, 0
        %v3629 = vsel %vm1974, %v3424, 0
        %3631 = vmatpush.xpose.msra.mxu0 0.0
        %3632 = vmatpush.xpose.msra.mxu0 0.0
        %3633 = vmatpush.xpose.msra.mxu0 0.0
        %3634 = vmatpush.xpose.msra.mxu0 0.0
        %3635 = vmatpush.xpose.msra.mxu0 0.0
        %3636 = vmatpush.xpose.msra.mxu0 0.0
        %3637 = vmatpush.xpose.msra.mxu0 0.0
        %3638 = vmatpush.xpose.msra.mxu0 0.0
        %3639 = vmatpush.xpose.msra.mxu0 0.0
        %3640 = vmatpush.xpose.msra.mxu0 0.0
        %3641 = vmatpush.xpose.msra.mxu0 0.0
        %3642 = vmatpush.xpose.msra.mxu0 0.0
        %3643 = vmatpush.xpose.msra.mxu0 0.0
        %3644 = vmatpush.xpose.msra.mxu0 0.0
        %3645 = vmatpush.xpose.msra.mxu0 %v3629
        %3646 = vmatpush.xpose.msra.mxu0 %v3627
        %3647 = vmatmul.f32.gmra.mxu0 %v3625
        %v3648 = vpop.f32.mrf.mxu0
        %v3649 = vadd.f32 0.0, %v3648
        %3650 = vdwg.mxu0
        %v3651 = vsel %vm1974, %v3545, 0
        %v3653 = vsel %vm1974, %v3560, 0
        %v3655 = vsel %vm1974, %v3562, 0
        %3657 = vmatpush.xpose.msra.mxu0 0.0
        %3658 = vmatpush.xpose.msra.mxu0 0.0
        %3659 = vmatpush.xpose.msra.mxu0 0.0
        %3660 = vmatpush.xpose.msra.mxu0 0.0
        %3661 = vmatpush.xpose.msra.mxu0 0.0
        %3662 = vmatpush.xpose.msra.mxu0 0.0
        %3663 = vmatpush.xpose.msra.mxu0 0.0
        %3664 = vmatpush.xpose.msra.mxu0 0.0
        %3665 = vmatpush.xpose.msra.mxu0 0.0
        %3666 = vmatpush.xpose.msra.mxu0 0.0
        %3667 = vmatpush.xpose.msra.mxu0 0.0
        %3668 = vmatpush.xpose.msra.mxu0 0.0
        %3669 = vmatpush.xpose.msra.mxu0 0.0
        %3670 = vmatpush.xpose.msra.mxu0 0.0
        %3671 = vmatpush.xpose.msra.mxu0 %v3655
        %3672 = vmatpush.xpose.msra.mxu0 %v3653
        %3673 = vmatmul.f32.gmra.mxu0 %v3651
        %v3674 = vpop.f32.mrf.mxu0
        %v3675 = vadd.f32 0.0, %v3674
        %3676 = vdwg.mxu0
        %v3677 = vsel %vm1974, %v3547, 0
        %v3679 = vsel %vm1974, %v3564, 0
        %v3681 = vsel %vm1974, %v3566, 0
        %3683 = vmatpush.xpose.msra.mxu0 0.0
        %3684 = vmatpush.xpose.msra.mxu0 0.0
        %3685 = vmatpush.xpose.msra.mxu0 0.0
        %3686 = vmatpush.xpose.msra.mxu0 0.0
        %3687 = vmatpush.xpose.msra.mxu0 0.0
        %3688 = vmatpush.xpose.msra.mxu0 0.0
        %3689 = vmatpush.xpose.msra.mxu0 0.0
        %3690 = vmatpush.xpose.msra.mxu0 0.0
        %3691 = vmatpush.xpose.msra.mxu0 0.0
        %3692 = vmatpush.xpose.msra.mxu0 0.0
        %3693 = vmatpush.xpose.msra.mxu0 0.0
        %3694 = vmatpush.xpose.msra.mxu0 0.0
        %3695 = vmatpush.xpose.msra.mxu0 0.0
        %3696 = vmatpush.xpose.msra.mxu0 0.0
        %3697 = vmatpush.xpose.msra.mxu0 %v3681
        %3698 = vmatpush.xpose.msra.mxu0 %v3679
        %3699 = vmatmul.f32.gmra.mxu0 %v3677
        %v3700 = vpop.f32.mrf.mxu0
        %v3701 = vadd.f32 0.0, %v3700
        %3702 = vdwg.mxu0
        %v3703 = vsel %vm1974, %v3549, 0
        %v3705 = vsel %vm1974, %v3568, 0
        %v3707 = vsel %vm1974, %v3570, 0
        %3709 = vmatpush.xpose.msra.mxu0 0.0
        %3710 = vmatpush.xpose.msra.mxu0 0.0
        %3711 = vmatpush.xpose.msra.mxu0 0.0
        %3712 = vmatpush.xpose.msra.mxu0 0.0
        %3713 = vmatpush.xpose.msra.mxu0 0.0
        %3714 = vmatpush.xpose.msra.mxu0 0.0
        %3715 = vmatpush.xpose.msra.mxu0 0.0
        %3716 = vmatpush.xpose.msra.mxu0 0.0
        %3717 = vmatpush.xpose.msra.mxu0 0.0
        %3718 = vmatpush.xpose.msra.mxu0 0.0
        %3719 = vmatpush.xpose.msra.mxu0 0.0
        %3720 = vmatpush.xpose.msra.mxu0 0.0
        %3721 = vmatpush.xpose.msra.mxu0 0.0
        %3722 = vmatpush.xpose.msra.mxu0 0.0
        %3723 = vmatpush.xpose.msra.mxu0 %v3707
        %3724 = vmatpush.xpose.msra.mxu0 %v3705
        %3725 = vmatmul.f32.gmra.mxu0 %v3703
        %v3726 = vpop.f32.mrf.mxu0
        %v3727 = vadd.f32 0.0, %v3726
        %3728 = vdwg.mxu0
        %v3729 = vsel %vm1974, %v3001, 0
        %v3731 = vsel %vm1974, %v3450, 0
        %v3733 = vsel %vm1974, %v3452, 0
        %3735 = vmatpush.xpose.msra.mxu0 0.0
        %3736 = vmatpush.xpose.msra.mxu0 0.0
        %3737 = vmatpush.xpose.msra.mxu0 0.0
        %3738 = vmatpush.xpose.msra.mxu0 0.0
        %3739 = vmatpush.xpose.msra.mxu0 0.0
        %3740 = vmatpush.xpose.msra.mxu0 0.0
        %3741 = vmatpush.xpose.msra.mxu0 0.0
        %3742 = vmatpush.xpose.msra.mxu0 0.0
        %3743 = vmatpush.xpose.msra.mxu0 0.0
        %3744 = vmatpush.xpose.msra.mxu0 0.0
        %3745 = vmatpush.xpose.msra.mxu0 0.0
        %3746 = vmatpush.xpose.msra.mxu0 0.0
        %3747 = vmatpush.xpose.msra.mxu0 0.0
        %3748 = vmatpush.xpose.msra.mxu0 0.0
        %3749 = vmatpush.xpose.msra.mxu0 %v3733
        %3750 = vmatpush.xpose.msra.mxu0 %v3731
        %3751 = vmatmul.f32.gmra.mxu0 %v3729
        %v3752 = vpop.f32.mrf.mxu0
        %v3753 = vadd.f32 0.0, %v3752
        %3754 = vdwg.mxu0
        %v3755 = vsel %vm1974, %v3552, 0
        %v3757 = vsel %vm1974, %v3574, 0
        %v3759 = vsel %vm1974, %v3576, 0
        %3761 = vmatpush.xpose.msra.mxu0 0.0
        %3762 = vmatpush.xpose.msra.mxu0 0.0
        %3763 = vmatpush.xpose.msra.mxu0 0.0
        %3764 = vmatpush.xpose.msra.mxu0 0.0
        %3765 = vmatpush.xpose.msra.mxu0 0.0
        %3766 = vmatpush.xpose.msra.mxu0 0.0
        %3767 = vmatpush.xpose.msra.mxu0 0.0
        %3768 = vmatpush.xpose.msra.mxu0 0.0
        %3769 = vmatpush.xpose.msra.mxu0 0.0
        %3770 = vmatpush.xpose.msra.mxu0 0.0
        %3771 = vmatpush.xpose.msra.mxu0 0.0
        %3772 = vmatpush.xpose.msra.mxu0 0.0
        %3773 = vmatpush.xpose.msra.mxu0 0.0
        %3774 = vmatpush.xpose.msra.mxu0 0.0
        %3775 = vmatpush.xpose.msra.mxu0 %v3759
        %3776 = vmatpush.xpose.msra.mxu0 %v3757
        %3777 = vmatmul.f32.gmra.mxu0 %v3755
        %v3778 = vpop.f32.mrf.mxu0
        %v3779 = vadd.f32 0.0, %v3778
        %3780 = vdwg.mxu0
        %v3781 = vsel %vm1974, %v3554, 0
        %v3783 = vsel %vm1974, %v3578, 0
        %v3785 = vsel %vm1974, %v3580, 0
        %3787 = vmatpush.xpose.msra.mxu0 0.0
        %3788 = vmatpush.xpose.msra.mxu0 0.0
        %3789 = vmatpush.xpose.msra.mxu0 0.0
        %3790 = vmatpush.xpose.msra.mxu0 0.0
        %3791 = vmatpush.xpose.msra.mxu0 0.0
        %3792 = vmatpush.xpose.msra.mxu0 0.0
        %3793 = vmatpush.xpose.msra.mxu0 0.0
        %3794 = vmatpush.xpose.msra.mxu0 0.0
        %3795 = vmatpush.xpose.msra.mxu0 0.0
        %3796 = vmatpush.xpose.msra.mxu0 0.0
        %3797 = vmatpush.xpose.msra.mxu0 0.0
        %3798 = vmatpush.xpose.msra.mxu0 0.0
        %3799 = vmatpush.xpose.msra.mxu0 0.0
        %3800 = vmatpush.xpose.msra.mxu0 0.0
        %3801 = vmatpush.xpose.msra.mxu0 %v3785
        %3802 = vmatpush.xpose.msra.mxu0 %v3783
        %3803 = vmatmul.f32.gmra.mxu0 %v3781
        %v3804 = vpop.f32.mrf.mxu0
        %v3805 = vadd.f32 0.0, %v3804
        %3806 = vdwg.mxu0
        %v3807 = vsel %vm1974, %v3556, 0
        %v3809 = vsel %vm1974, %v3582, 0
        %v3811 = vsel %vm1974, %v3584, 0
        %3813 = vmatpush.xpose.msra.mxu0 0.0
        %3814 = vmatpush.xpose.msra.mxu0 0.0
        %3815 = vmatpush.xpose.msra.mxu0 0.0
        %3816 = vmatpush.xpose.msra.mxu0 0.0
        %3817 = vmatpush.xpose.msra.mxu0 0.0
        %3818 = vmatpush.xpose.msra.mxu0 0.0
        %3819 = vmatpush.xpose.msra.mxu0 0.0
        %3820 = vmatpush.xpose.msra.mxu0 0.0
        %3821 = vmatpush.xpose.msra.mxu0 0.0
        %3822 = vmatpush.xpose.msra.mxu0 0.0
        %3823 = vmatpush.xpose.msra.mxu0 0.0
        %3824 = vmatpush.xpose.msra.mxu0 0.0
        %3825 = vmatpush.xpose.msra.mxu0 0.0
        %3826 = vmatpush.xpose.msra.mxu0 0.0
        %3827 = vmatpush.xpose.msra.mxu0 %v3811
        %3828 = vmatpush.xpose.msra.mxu0 %v3809
        %3829 = vmatmul.f32.gmra.mxu0 %v3807
        %v3830 = vpop.f32.mrf.mxu0
        %v3831 = vadd.f32 0.0, %v3830
        %3832 = vdwg.mxu0
        %v3833 = vmul.f32 %v3649, 0.17677669
        %v3834 = vmul.f32 %v3675, 0.17677669
        %v3835 = vmul.f32 %v3701, 0.17677669
        %v3836 = vmul.f32 %v3727, 0.17677669
        %v3837 = vmul.f32 %v3753, 0.17677669
        %v3838 = vmul.f32 %v3779, 0.17677669
        %v3839 = vmul.f32 %v3805, 0.17677669
        %v3840 = vmul.f32 %v3831, 0.17677669
        %vm3841 = vcmask 130048
        %v3842 = vsel %vm3841, %v3833, -inf
        %3843 = vmax.xlane.f32.xlu0 %v3842
        %v3844 = vpop.xlane.xlu0 %3843
        %v3845 = vsel %vm3841, %v3834, -inf
        %3846 = vmax.xlane.f32.xlu0 %v3845
        %v3847 = vpop.xlane.xlu0 %3846
        %v3848 = vsel %vm3841, %v3835, -inf
        %3849 = vmax.xlane.f32.xlu0 %v3848
        %v3850 = vpop.xlane.xlu0 %3849
        %v3851 = vsel %vm3841, %v3836, -inf
        %3852 = vmax.xlane.f32.xlu0 %v3851
        %v3853 = vpop.xlane.xlu0 %3852
        %v3854 = vsel %vm3841, %v3837, -inf
        %3855 = vmax.xlane.f32.xlu0 %v3854
        %v3856 = vpop.xlane.xlu0 %3855
        %v3857 = vsel %vm3841, %v3838, -inf
        %3858 = vmax.xlane.f32.xlu0 %v3857
        %v3859 = vpop.xlane.xlu0 %3858
        %v3860 = vsel %vm3841, %v3839, -inf
        %3861 = vmax.xlane.f32.xlu0 %v3860
        %v3862 = vpop.xlane.xlu0 %3861
        %v3863 = vsel %vm3841, %v3840, -inf
        %3864 = vmax.xlane.f32.xlu0 %v3863
        %v3865 = vpop.xlane.xlu0 %3864
        %v3866 = vsub.f32 %v3833, %v3844
        %v3867 = vsub.f32 %v3834, %v3847
        %v3868 = vsub.f32 %v3835, %v3850
        %v3869 = vsub.f32 %v3836, %v3853
        %v3870 = vsub.f32 %v3837, %v3856
        %v3871 = vsub.f32 %v3838, %v3859
        %v3872 = vsub.f32 %v3839, %v3862
        %v3873 = vsub.f32 %v3840, %v3865
        %v3874 = vmul.f32 %v3866, 1.442695
        %v3875 = vpow.pop %v3874
        %v3876 = vmul.f32 %v3867, 1.442695
        %v3877 = vpow.pop %v3876
        %v3878 = vmul.f32 %v3868, 1.442695
        %v3879 = vpow.pop %v3878
        %v3880 = vmul.f32 %v3869, 1.442695
        %v3881 = vpow.pop %v3880
        %v3882 = vmul.f32 %v3870, 1.442695
        %v3883 = vpow.pop %v3882
        %v3884 = vmul.f32 %v3871, 1.442695
        %v3885 = vpow.pop %v3884
        %v3886 = vmul.f32 %v3872, 1.442695
        %v3887 = vpow.pop %v3886
        %v3888 = vmul.f32 %v3873, 1.442695
        %v3889 = vpow.pop %v3888
        %v3890 = vsel %vm3841, %v3875, 0.0
        %3891 = vadd.xlane.f32.xlu0 %v3890
        %v3892 = vpop.xlane.xlu0 %3891
        %v3893 = vsel %vm3841, %v3877, 0.0
        %3894 = vadd.xlane.f32.xlu0 %v3893
        %v3895 = vpop.xlane.xlu0 %3894
        %v3896 = vsel %vm3841, %v3879, 0.0
        %3897 = vadd.xlane.f32.xlu0 %v3896
        %v3898 = vpop.xlane.xlu0 %3897
        %v3899 = vsel %vm3841, %v3881, 0.0
        %3900 = vadd.xlane.f32.xlu0 %v3899
        %v3901 = vpop.xlane.xlu0 %3900
        %v3902 = vsel %vm3841, %v3883, 0.0
        %3903 = vadd.xlane.f32.xlu0 %v3902
        %v3904 = vpop.xlane.xlu0 %3903
        %v3905 = vsel %vm3841, %v3885, 0.0
        %3906 = vadd.xlane.f32.xlu0 %v3905
        %v3907 = vpop.xlane.xlu0 %3906
        %v3908 = vsel %vm3841, %v3887, 0.0
        %3909 = vadd.xlane.f32.xlu0 %v3908
        %v3910 = vpop.xlane.xlu0 %3909
        %v3911 = vsel %vm3841, %v3889, 0.0
        %3912 = vadd.xlane.f32.xlu0 %v3911
        %v3913 = vpop.xlane.xlu0 %3912
        %v3914 = vrcp.pop %v3892
        %v3915 = vrcp.pop %v3895
        %v3916 = vrcp.pop %v3898
        %v3917 = vrcp.pop %v3901
        %v3918 = vrcp.pop %v3904
        %v3919 = vrcp.pop %v3907
        %v3920 = vrcp.pop %v3910
        %v3921 = vrcp.pop %v3913
        %v3922 = vmul.f32 %v3875, %v3914
        %v3923 = vmul.f32 %v3877, %v3915
        %v3924 = vmul.f32 %v3879, %v3916
        %v3925 = vmul.f32 %v3881, %v3917
        %v3926 = vmul.f32 %v3883, %v3918
        %v3927 = vmul.f32 %v3885, %v3919
        %v3928 = vmul.f32 %v3887, %v3920
        %v3929 = vmul.f32 %v3889, %v3921
        %v3931 = vsel %vm3841, %v3922, 0
        %3933 = vmatpush.msra.mxu0 0.0
        %3934 = vmatpush.msra.mxu0 0.0
        %3935 = vmatpush.msra.mxu0 0.0
        %3936 = vmatpush.msra.mxu0 0.0
        %3937 = vmatpush.msra.mxu0 0.0
        %3938 = vmatpush.msra.mxu0 0.0
        %3939 = vmatpush.msra.mxu0 0.0
        %3940 = vmatpush.msra.mxu0 0.0
        %3941 = vmatpush.msra.mxu0 0.0
        %3942 = vmatpush.msra.mxu0 0.0
        %3943 = vmatpush.msra.mxu0 0.0
        %3944 = vmatpush.msra.mxu0 0.0
        %3945 = vmatpush.msra.mxu0 0.0
        %3946 = vmatpush.msra.mxu0 0.0
        %3947 = vmatpush.msra.mxu0 %v3480
        %3948 = vmatpush.msra.mxu0 %v3478
        %3949 = vmatmul.f32.gmra.mxu0 %v3931
        %v3950 = vpop.f32.mrf.mxu0
        %v3951 = vadd.f32 0.0, %v3950
        %3952 = vdwg.mxu0
        %v3954 = vsel %vm3841, %v3923, 0
        %3956 = vmatpush.msra.mxu0 0.0
        %3957 = vmatpush.msra.mxu0 0.0
        %3958 = vmatpush.msra.mxu0 0.0
        %3959 = vmatpush.msra.mxu0 0.0
        %3960 = vmatpush.msra.mxu0 0.0
        %3961 = vmatpush.msra.mxu0 0.0
        %3962 = vmatpush.msra.mxu0 0.0
        %3963 = vmatpush.msra.mxu0 0.0
        %3964 = vmatpush.msra.mxu0 0.0
        %3965 = vmatpush.msra.mxu0 0.0
        %3966 = vmatpush.msra.mxu0 0.0
        %3967 = vmatpush.msra.mxu0 0.0
        %3968 = vmatpush.msra.mxu0 0.0
        %3969 = vmatpush.msra.mxu0 0.0
        %3970 = vmatpush.msra.mxu0 %v3590
        %3971 = vmatpush.msra.mxu0 %v3588
        %3972 = vmatmul.f32.gmra.mxu0 %v3954
        %v3973 = vpop.f32.mrf.mxu0
        %v3974 = vadd.f32 0.0, %v3973
        %3975 = vdwg.mxu0
        %v3977 = vsel %vm3841, %v3924, 0
        %3979 = vmatpush.msra.mxu0 0.0
        %3980 = vmatpush.msra.mxu0 0.0
        %3981 = vmatpush.msra.mxu0 0.0
        %3982 = vmatpush.msra.mxu0 0.0
        %3983 = vmatpush.msra.mxu0 0.0
        %3984 = vmatpush.msra.mxu0 0.0
        %3985 = vmatpush.msra.mxu0 0.0
        %3986 = vmatpush.msra.mxu0 0.0
        %3987 = vmatpush.msra.mxu0 0.0
        %3988 = vmatpush.msra.mxu0 0.0
        %3989 = vmatpush.msra.mxu0 0.0
        %3990 = vmatpush.msra.mxu0 0.0
        %3991 = vmatpush.msra.mxu0 0.0
        %3992 = vmatpush.msra.mxu0 0.0
        %3993 = vmatpush.msra.mxu0 %v3596
        %3994 = vmatpush.msra.mxu0 %v3594
        %3995 = vmatmul.f32.gmra.mxu0 %v3977
        %v3996 = vpop.f32.mrf.mxu0
        %v3997 = vadd.f32 0.0, %v3996
        %3998 = vdwg.mxu0
        %v4000 = vsel %vm3841, %v3925, 0
        %4002 = vmatpush.msra.mxu0 0.0
        %4003 = vmatpush.msra.mxu0 0.0
        %4004 = vmatpush.msra.mxu0 0.0
        %4005 = vmatpush.msra.mxu0 0.0
        %4006 = vmatpush.msra.mxu0 0.0
        %4007 = vmatpush.msra.mxu0 0.0
        %4008 = vmatpush.msra.mxu0 0.0
        %4009 = vmatpush.msra.mxu0 0.0
        %4010 = vmatpush.msra.mxu0 0.0
        %4011 = vmatpush.msra.mxu0 0.0
        %4012 = vmatpush.msra.mxu0 0.0
        %4013 = vmatpush.msra.mxu0 0.0
        %4014 = vmatpush.msra.mxu0 0.0
        %4015 = vmatpush.msra.mxu0 0.0
        %4016 = vmatpush.msra.mxu0 %v3602
        %4017 = vmatpush.msra.mxu0 %v3600
        %4018 = vmatmul.f32.gmra.mxu0 %v4000
        %v4019 = vpop.f32.mrf.mxu0
        %v4020 = vadd.f32 0.0, %v4019
        %4021 = vdwg.mxu0
        %v4023 = vsel %vm3841, %v3926, 0
        %4025 = vmatpush.msra.mxu0 0.0
        %4026 = vmatpush.msra.mxu0 0.0
        %4027 = vmatpush.msra.mxu0 0.0
        %4028 = vmatpush.msra.mxu0 0.0
        %4029 = vmatpush.msra.mxu0 0.0
        %4030 = vmatpush.msra.mxu0 0.0
        %4031 = vmatpush.msra.mxu0 0.0
        %4032 = vmatpush.msra.mxu0 0.0
        %4033 = vmatpush.msra.mxu0 0.0
        %4034 = vmatpush.msra.mxu0 0.0
        %4035 = vmatpush.msra.mxu0 0.0
        %4036 = vmatpush.msra.mxu0 0.0
        %4037 = vmatpush.msra.mxu0 0.0
        %4038 = vmatpush.msra.mxu0 0.0
        %4039 = vmatpush.msra.mxu0 %v3508
        %4040 = vmatpush.msra.mxu0 %v3506
        %4041 = vmatmul.f32.gmra.mxu0 %v4023
        %v4042 = vpop.f32.mrf.mxu0
        %v4043 = vadd.f32 0.0, %v4042
        %4044 = vdwg.mxu0
        %v4046 = vsel %vm3841, %v3927, 0
        %4048 = vmatpush.msra.mxu0 0.0
        %4049 = vmatpush.msra.mxu0 0.0
        %4050 = vmatpush.msra.mxu0 0.0
        %4051 = vmatpush.msra.mxu0 0.0
        %4052 = vmatpush.msra.mxu0 0.0
        %4053 = vmatpush.msra.mxu0 0.0
        %4054 = vmatpush.msra.mxu0 0.0
        %4055 = vmatpush.msra.mxu0 0.0
        %4056 = vmatpush.msra.mxu0 0.0
        %4057 = vmatpush.msra.mxu0 0.0
        %4058 = vmatpush.msra.mxu0 0.0
        %4059 = vmatpush.msra.mxu0 0.0
        %4060 = vmatpush.msra.mxu0 0.0
        %4061 = vmatpush.msra.mxu0 0.0
        %4062 = vmatpush.msra.mxu0 %v3610
        %4063 = vmatpush.msra.mxu0 %v3608
        %4064 = vmatmul.f32.gmra.mxu0 %v4046
        %v4065 = vpop.f32.mrf.mxu0
        %v4066 = vadd.f32 0.0, %v4065
        %4067 = vdwg.mxu0
        %v4069 = vsel %vm3841, %v3928, 0
        %4071 = vmatpush.msra.mxu0 0.0
        %4072 = vmatpush.msra.mxu0 0.0
        %4073 = vmatpush.msra.mxu0 0.0
        %4074 = vmatpush.msra.mxu0 0.0
        %4075 = vmatpush.msra.mxu0 0.0
        %4076 = vmatpush.msra.mxu0 0.0
        %4077 = vmatpush.msra.mxu0 0.0
        %4078 = vmatpush.msra.mxu0 0.0
        %4079 = vmatpush.msra.mxu0 0.0
        %4080 = vmatpush.msra.mxu0 0.0
        %4081 = vmatpush.msra.mxu0 0.0
        %4082 = vmatpush.msra.mxu0 0.0
        %4083 = vmatpush.msra.mxu0 0.0
        %4084 = vmatpush.msra.mxu0 0.0
        %4085 = vmatpush.msra.mxu0 %v3616
        %4086 = vmatpush.msra.mxu0 %v3614
        %4087 = vmatmul.f32.gmra.mxu0 %v4069
        %v4088 = vpop.f32.mrf.mxu0
        %v4089 = vadd.f32 0.0, %v4088
        %4090 = vdwg.mxu0
        %v4092 = vsel %vm3841, %v3929, 0
        %4094 = vmatpush.msra.mxu0 0.0
        %4095 = vmatpush.msra.mxu0 0.0
        %4096 = vmatpush.msra.mxu0 0.0
        %4097 = vmatpush.msra.mxu0 0.0
        %4098 = vmatpush.msra.mxu0 0.0
        %4099 = vmatpush.msra.mxu0 0.0
        %4100 = vmatpush.msra.mxu0 0.0
        %4101 = vmatpush.msra.mxu0 0.0
        %4102 = vmatpush.msra.mxu0 0.0
        %4103 = vmatpush.msra.mxu0 0.0
        %4104 = vmatpush.msra.mxu0 0.0
        %4105 = vmatpush.msra.mxu0 0.0
        %4106 = vmatpush.msra.mxu0 0.0
        %4107 = vmatpush.msra.mxu0 0.0
        %4108 = vmatpush.msra.mxu0 %v3622
        %4109 = vmatpush.msra.mxu0 %v3620
        %4110 = vmatmul.f32.gmra.mxu0 %v4092
        %v4111 = vpop.f32.mrf.mxu0
        %v4112 = vadd.f32 0.0, %v4111
        %4113 = vdwg.mxu0
        %4115 = vrot.lane.b32.xlu0 %v3974, 32
        %v4116 = vpop.permute.xlu0 %4115
        %4119 = vrot.lane.b32.xlu0 %v3997, 64
        %v4120 = vpop.permute.xlu0 %4119
        %4123 = vrot.lane.b32.xlu0 %v4020, 96
        %v4124 = vpop.permute.xlu0 %4123
        %4127 = vrot.lane.b32.xlu0 %v4066, 32
        %v4128 = vpop.permute.xlu0 %4127
        %4131 = vrot.lane.b32.xlu0 %v4089, 64
        %v4132 = vpop.permute.xlu0 %4131
        %4135 = vrot.lane.b32.xlu0 %v4112, 96
        %v4136 = vpop.permute.xlu0 %4135
        %v4138 = vsel %vm1974, %v3951, %v4116
        %v4139 = vsel %vm2483, %v4138, %v4120
        %v4140 = vsel %vm2485, %v4139, %v4124
        %v4141 = vsel %vm1974, %v4043, %v4128
        %v4142 = vsel %vm2483, %v4141, %v4132
        %v4143 = vsel %vm2485, %v4142, %v4136
        %v4144 = vpack.c.bf16 %v4140, %v4140
        %v4145 = vpack.c.bf16 %v4143, %v4143
        %v4147 = vperm.slane %v3542, 0
        %v4148 = vperm.slane %v3542, 1
        %v4183 = vunpack.c.l.b16 %v3510
        %v4184 = vunpack.c.h.b16 %v3510
        %v4185 = vunpack.c.l.b16 %v3511
        %v4186 = vunpack.c.h.b16 %v3511
        %v4187 = vunpack.c.l.b16 %v3512
        %v4188 = vunpack.c.h.b16 %v3512
        %v4189 = vunpack.c.l.b16 %v3513
        %v4190 = vunpack.c.h.b16 %v3513
        %v4191 = vunpack.c.l.b16 %v3514
        %v4192 = vunpack.c.h.b16 %v3514
        %v4193 = vunpack.c.l.b16 %v3515
        %v4194 = vunpack.c.h.b16 %v3515
        %v4195 = vunpack.c.l.b16 %v3516
        %v4196 = vunpack.c.h.b16 %v3516
        %v4197 = vunpack.c.l.b16 %v3517
        %v4198 = vunpack.c.h.b16 %v3517
        %v4199 = vunpack.c.l.b16 %v3518
        %v4200 = vunpack.c.h.b16 %v3518
        %v4201 = vunpack.c.l.b16 %v3519
        %v4202 = vunpack.c.h.b16 %v3519
        %v4203 = vunpack.c.l.b16 %v3520
        %v4204 = vunpack.c.h.b16 %v3520
        %v4205 = vunpack.c.l.b16 %v3521
        %v4206 = vunpack.c.h.b16 %v3521
        %v4207 = vunpack.c.l.b16 %v3522
        %v4208 = vunpack.c.h.b16 %v3522
        %v4209 = vunpack.c.l.b16 %v3523
        %v4210 = vunpack.c.h.b16 %v3523
        %v4211 = vunpack.c.l.b16 %v3524
        %v4212 = vunpack.c.h.b16 %v3524
        %v4213 = vunpack.c.l.b16 %v3525
        %v4214 = vunpack.c.h.b16 %v3525
        %v4215 = vunpack.c.l.b16 %v3526
        %v4216 = vunpack.c.h.b16 %v3526
        %v4217 = vunpack.c.l.b16 %v3527
        %v4218 = vunpack.c.h.b16 %v3527
        %v4219 = vunpack.c.l.b16 %v3528
        %v4220 = vunpack.c.h.b16 %v3528
        %v4221 = vunpack.c.l.b16 %v3529
        %v4222 = vunpack.c.h.b16 %v3529
        %v4223 = vunpack.c.l.b16 %v3530
        %v4224 = vunpack.c.h.b16 %v3530
        %v4225 = vunpack.c.l.b16 %v3531
        %v4226 = vunpack.c.h.b16 %v3531
        %v4227 = vunpack.c.l.b16 %v3532
        %v4228 = vunpack.c.h.b16 %v3532
        %v4229 = vunpack.c.l.b16 %v3533
        %v4230 = vunpack.c.h.b16 %v3533
        %v4231 = vunpack.c.l.b16 %v3534
        %v4232 = vunpack.c.h.b16 %v3534
        %v4233 = vunpack.c.l.b16 %v3535
        %v4234 = vunpack.c.h.b16 %v3535
        %v4235 = vunpack.c.l.b16 %v3536
        %v4236 = vunpack.c.h.b16 %v3536
        %v4237 = vunpack.c.l.b16 %v3537
        %v4238 = vunpack.c.h.b16 %v3537
        %v4239 = vunpack.c.l.b16 %v3538
        %v4240 = vunpack.c.h.b16 %v3538
        %v4241 = vunpack.c.l.b16 %v3539
        %v4242 = vunpack.c.h.b16 %v3539
        %v4243 = vunpack.c.l.b16 %v3540
        %v4244 = vunpack.c.h.b16 %v3540
        %v4245 = vunpack.c.l.b16 %v3541
        %v4246 = vunpack.c.h.b16 %v3541
        %v4247 = vpack.c.b16 %v4185, %v4183
        %v4248 = vpack.c.b16 %v4186, %v4184
        %v4249 = vpack.c.b16 %v4189, %v4187
        %v4250 = vpack.c.b16 %v4190, %v4188
        %v4251 = vpack.c.b16 %v4193, %v4191
        %v4252 = vpack.c.b16 %v4194, %v4192
        %v4253 = vpack.c.b16 %v4197, %v4195
        %v4254 = vpack.c.b16 %v4198, %v4196
        %v4255 = vpack.c.b16 %v4201, %v4199
        %v4256 = vpack.c.b16 %v4202, %v4200
        %v4257 = vpack.c.b16 %v4205, %v4203
        %v4258 = vpack.c.b16 %v4206, %v4204
        %v4259 = vpack.c.b16 %v4209, %v4207
        %v4260 = vpack.c.b16 %v4210, %v4208
        %v4261 = vpack.c.b16 %v4213, %v4211
        %v4262 = vpack.c.b16 %v4214, %v4212
        %v4263 = vpack.c.b16 %v4217, %v4215
        %v4264 = vpack.c.b16 %v4218, %v4216
        %v4265 = vpack.c.b16 %v4221, %v4219
        %v4266 = vpack.c.b16 %v4222, %v4220
        %v4267 = vpack.c.b16 %v4225, %v4223
        %v4268 = vpack.c.b16 %v4226, %v4224
        %v4269 = vpack.c.b16 %v4229, %v4227
        %v4270 = vpack.c.b16 %v4230, %v4228
        %v4271 = vpack.c.b16 %v4233, %v4231
        %v4272 = vpack.c.b16 %v4234, %v4232
        %v4273 = vpack.c.b16 %v4237, %v4235
        %v4274 = vpack.c.b16 %v4238, %v4236
        %v4275 = vpack.c.b16 %v4241, %v4239
        %v4276 = vpack.c.b16 %v4242, %v4240
        %v4277 = vpack.c.b16 %v4245, %v4243
        %v4278 = vpack.c.b16 %v4246, %v4244
        %4311 = vmatpush.bf16.msra.mxu0 %v4261
        %4312 = vmatpush.bf16.msra.mxu0 %v4259
        %4313 = vmatpush.bf16.msra.mxu0 %v4257
        %4314 = vmatpush.bf16.msra.mxu0 %v4255
        %4315 = vmatpush.bf16.msra.mxu0 %v4253
        %4316 = vmatpush.bf16.msra.mxu0 %v4251
        %4317 = vmatpush.bf16.msra.mxu0 %v4249
        %4318 = vmatpush.bf16.msra.mxu0 %v4247
        %4319 = vmatmul.bf16.gmra.mxu0 %v4144
        %v4320 = vpop.f32.mrf.mxu0
        %v4321 = vadd.f32 %v4147, %v4320
        %v4322 = vpop.f32.mrf.mxu0
        %4323 = vdwg.mxu0
        %4324 = vmatpush.bf16.msra.mxu0 %v4277
        %4325 = vmatpush.bf16.msra.mxu0 %v4275
        %4326 = vmatpush.bf16.msra.mxu0 %v4273
        %4327 = vmatpush.bf16.msra.mxu0 %v4271
        %4328 = vmatpush.bf16.msra.mxu0 %v4269
        %4329 = vmatpush.bf16.msra.mxu0 %v4267
        %4330 = vmatpush.bf16.msra.mxu0 %v4265
        %4331 = vmatpush.bf16.msra.mxu0 %v4263
        %4332 = vmatmul.bf16.gmra.mxu0 %v4145
        %v4333 = vpop.f32.mrf.mxu0
        %v4334 = vadd.f32 %v4321, %v4333
        %v4335 = vpop.f32.mrf.mxu0
        %4336 = vdwg.mxu0
        %4337 = vmatpush.bf16.msra.mxu0 %v4262
        %4338 = vmatpush.bf16.msra.mxu0 %v4260
        %4339 = vmatpush.bf16.msra.mxu0 %v4258
        %4340 = vmatpush.bf16.msra.mxu0 %v4256
        %4341 = vmatpush.bf16.msra.mxu0 %v4254
        %4342 = vmatpush.bf16.msra.mxu0 %v4252
        %4343 = vmatpush.bf16.msra.mxu0 %v4250
        %4344 = vmatpush.bf16.msra.mxu0 %v4248
        %4345 = vmatmul.bf16.gmra.mxu0 %v4144
        %v4346 = vpop.f32.mrf.mxu0
        %v4347 = vadd.f32 %v4148, %v4346
        %v4348 = vpop.f32.mrf.mxu0
        %4349 = vdwg.mxu0
        %4350 = vmatpush.bf16.msra.mxu0 %v4278
        %4351 = vmatpush.bf16.msra.mxu0 %v4276
        %4352 = vmatpush.bf16.msra.mxu0 %v4274
        %4353 = vmatpush.bf16.msra.mxu0 %v4272
        %4354 = vmatpush.bf16.msra.mxu0 %v4270
        %4355 = vmatpush.bf16.msra.mxu0 %v4268
        %4356 = vmatpush.bf16.msra.mxu0 %v4266
        %4357 = vmatpush.bf16.msra.mxu0 %v4264
        %4358 = vmatmul.bf16.gmra.mxu0 %v4145
        %v4359 = vpop.f32.mrf.mxu0
        %v4360 = vadd.f32 %v4347, %v4359
        %v4361 = vpop.f32.mrf.mxu0
        %4362 = vdwg.mxu0
        %v4363 = vadd.f32 %v2709, %v4334
        %v4364 = vadd.f32 %v2710, %v4360
        %v4365 = vld [vmem:[#allocation20] sm:$0x3]
        %v4366 = vld [vmem:[#allocation22] sm:$0x3]
        %v4367 = vadd.f32 %v4363, %v4364
        %4368 = vadd.xlane.f32.xlu0 %v4367
        %v4369 = vpop.xlane.xlu0 %4368
        %v4370 = vmul.f32 %v4369, %v1108
        %v4371 = vsub.f32 %v4363, %v4370
        %v4372 = vsub.f32 %v4364, %v4370
        %v4373 = vmul.f32 %v4371, %v4371
        %v4374 = vmul.f32 %v4372, %v4372
        %v4375 = vadd.f32 %v4373, %v4374
        %4376 = vadd.xlane.f32.xlu0 %v4375
        %v4377 = vpop.xlane.xlu0 %4376
        %v4378 = vmul.f32 %v4377, %v1108
        %v4379 = vadd.f32 %v4378, 1e-05
        %v4380 = vrsqrt.pop %v4379
        %v4381 = vmul.f32 %v4380, %v4379
        %v4382 = vmul.f32 %v4381, %v4380
        %v4383 = vmul.f32 0.5, %v4382
        %v4384 = vsub.f32 1.5, %v4383
        %v4385 = vmul.f32 %v4380, %v4384
        %vm4386 = vweird.f32 %v4379
        %vm4387 = vweird.f32 %v4380
        %vm4388 = vmor %vm4386, %vm4387
        %v4389 = vsel %vm4388, %v4380, %v4385
        %v4390 = vmul.f32 %v4371, %v4389
        %v4391 = vmul.f32 %v4372, %v4389
        %v4393 = vperm.slane %v4365, 0
        %v4394 = vperm.slane %v4365, 1
        %v4397 = vmul.f32 %v4390, %v4393
        %v4398 = vmul.f32 %v4391, %v4394
        %v4400 = vperm.slane %v4366, 0
        %v4401 = vperm.slane %v4366, 1
        %v4404 = vadd.f32 %v4397, %v4400
        %v4405 = vadd.f32 %v4398, %v4401
        %v4406 = vpack.c.bf16 %v4404, %v4404
        %v4407 = vpack.c.bf16 %v4405, %v4405
        %v4408 = vld [vmem:[#allocation23] sm:$0xff]
        %v4409 = vld [vmem:[#allocation23 + $0x8] sm:$0xff]
        %v4410 = vld [vmem:[#allocation23 + $0x10] sm:$0xff]
        %v4411 = vld [vmem:[#allocation23 + $0x18] sm:$0xff]
        %v4412 = vld [vmem:[#allocation23 + $0x20] sm:$0xff]
        %v4413 = vld [vmem:[#allocation23 + $0x28] sm:$0xff]
        %v4414 = vld [vmem:[#allocation23 + $0x30] sm:$0xff]
        %v4415 = vld [vmem:[#allocation23 + $0x38] sm:$0xff]
        %v4416 = vld [vmem:[#allocation23 + $0x40] sm:$0xff]
        %v4417 = vld [vmem:[#allocation23 + $0x48] sm:$0xff]
        %v4418 = vld [vmem:[#allocation23 + $0x50] sm:$0xff]
        %v4419 = vld [vmem:[#allocation23 + $0x58] sm:$0xff]
        %v4420 = vld [vmem:[#allocation23 + $0x60] sm:$0xff]
        %v4421 = vld [vmem:[#allocation23 + $0x68] sm:$0xff]
        %v4422 = vld [vmem:[#allocation23 + $0x70] sm:$0xff]
        %v4423 = vld [vmem:[#allocation23 + $0x78] sm:$0xff]
        %v4424 = vld [vmem:[#allocation23 + $0x80] sm:$0xff]
        %v4425 = vld [vmem:[#allocation23 + $0x88] sm:$0xff]
        %v4426 = vld [vmem:[#allocation23 + $0x90] sm:$0xff]
        %v4427 = vld [vmem:[#allocation23 + $0x98] sm:$0xff]
        %v4428 = vld [vmem:[#allocation23 + $0xa0] sm:$0xff]
        %v4429 = vld [vmem:[#allocation23 + $0xa8] sm:$0xff]
        %v4430 = vld [vmem:[#allocation23 + $0xb0] sm:$0xff]
        %v4431 = vld [vmem:[#allocation23 + $0xb8] sm:$0xff]
        %v4432 = vld [vmem:[#allocation23 + $0xc0] sm:$0xff]
        %v4433 = vld [vmem:[#allocation23 + $0xc8] sm:$0xff]
        %v4434 = vld [vmem:[#allocation23 + $0xd0] sm:$0xff]
        %v4435 = vld [vmem:[#allocation23 + $0xd8] sm:$0xff]
        %v4436 = vld [vmem:[#allocation23 + $0xe0] sm:$0xff]
        %v4437 = vld [vmem:[#allocation23 + $0xe8] sm:$0xff]
        %v4438 = vld [vmem:[#allocation23 + $0xf0] sm:$0xff]
        %v4439 = vld [vmem:[#allocation23 + $0xf8] sm:$0xff]
        %v4440 = vld [vmem:[#allocation23 + $0x100] sm:$0xff]
        %v4441 = vld [vmem:[#allocation23 + $0x108] sm:$0xff]
        %v4442 = vld [vmem:[#allocation23 + $0x110] sm:$0xff]
        %v4443 = vld [vmem:[#allocation23 + $0x118] sm:$0xff]
        %v4444 = vld [vmem:[#allocation23 + $0x120] sm:$0xff]
        %v4445 = vld [vmem:[#allocation23 + $0x128] sm:$0xff]
        %v4446 = vld [vmem:[#allocation23 + $0x130] sm:$0xff]
        %v4447 = vld [vmem:[#allocation23 + $0x138] sm:$0xff]
        %v4448 = vld [vmem:[#allocation23 + $0x140] sm:$0xff]
        %v4449 = vld [vmem:[#allocation23 + $0x148] sm:$0xff]
        %v4450 = vld [vmem:[#allocation23 + $0x150] sm:$0xff]
        %v4451 = vld [vmem:[#allocation23 + $0x158] sm:$0xff]
        %v4452 = vld [vmem:[#allocation23 + $0x160] sm:$0xff]
        %v4453 = vld [vmem:[#allocation23 + $0x168] sm:$0xff]
        %v4454 = vld [vmem:[#allocation23 + $0x170] sm:$0xff]
        %v4455 = vld [vmem:[#allocation23 + $0x178] sm:$0xff]
        %v4456 = vld [vmem:[#allocation23 + $0x180] sm:$0xff]
        %v4457 = vld [vmem:[#allocation23 + $0x188] sm:$0xff]
        %v4458 = vld [vmem:[#allocation23 + $0x190] sm:$0xff]
        %v4459 = vld [vmem:[#allocation23 + $0x198] sm:$0xff]
        %v4460 = vld [vmem:[#allocation23 + $0x1a0] sm:$0xff]
        %v4461 = vld [vmem:[#allocation23 + $0x1a8] sm:$0xff]
        %v4462 = vld [vmem:[#allocation23 + $0x1b0] sm:$0xff]
        %v4463 = vld [vmem:[#allocation23 + $0x1b8] sm:$0xff]
        %v4464 = vld [vmem:[#allocation23 + $0x1c0] sm:$0xff]
        %v4465 = vld [vmem:[#allocation23 + $0x1c8] sm:$0xff]
        %v4466 = vld [vmem:[#allocation23 + $0x1d0] sm:$0xff]
        %v4467 = vld [vmem:[#allocation23 + $0x1d8] sm:$0xff]
        %v4468 = vld [vmem:[#allocation23 + $0x1e0] sm:$0xff]
        %v4469 = vld [vmem:[#allocation23 + $0x1e8] sm:$0xff]
        %v4470 = vld [vmem:[#allocation23 + $0x1f0] sm:$0xff]
        %v4471 = vld [vmem:[#allocation23 + $0x1f8] sm:$0xff]
        %v4472 = vld [vmem:[%s20] sm:$0xf]
        %v4474 = vperm.slane %v4472, 0
        %v4475 = vperm.slane %v4472, 1
        %v4476 = vperm.slane %v4472, 2
        %v4477 = vperm.slane %v4472, 3
        %v4546 = vunpack.c.l.b16 %v4408
        %v4547 = vunpack.c.h.b16 %v4408
        %v4548 = vunpack.c.l.b16 %v4409
        %v4549 = vunpack.c.h.b16 %v4409
        %v4550 = vunpack.c.l.b16 %v4410
        %v4551 = vunpack.c.h.b16 %v4410
        %v4552 = vunpack.c.l.b16 %v4411
        %v4553 = vunpack.c.h.b16 %v4411
        %v4554 = vunpack.c.l.b16 %v4412
        %v4555 = vunpack.c.h.b16 %v4412
        %v4556 = vunpack.c.l.b16 %v4413
        %v4557 = vunpack.c.h.b16 %v4413
        %v4558 = vunpack.c.l.b16 %v4414
        %v4559 = vunpack.c.h.b16 %v4414
        %v4560 = vunpack.c.l.b16 %v4415
        %v4561 = vunpack.c.h.b16 %v4415
        %v4562 = vunpack.c.l.b16 %v4416
        %v4563 = vunpack.c.h.b16 %v4416
        %v4564 = vunpack.c.l.b16 %v4417
        %v4565 = vunpack.c.h.b16 %v4417
        %v4566 = vunpack.c.l.b16 %v4418
        %v4567 = vunpack.c.h.b16 %v4418
        %v4568 = vunpack.c.l.b16 %v4419
        %v4569 = vunpack.c.h.b16 %v4419
        %v4570 = vunpack.c.l.b16 %v4420
        %v4571 = vunpack.c.h.b16 %v4420
        %v4572 = vunpack.c.l.b16 %v4421
        %v4573 = vunpack.c.h.b16 %v4421
        %v4574 = vunpack.c.l.b16 %v4422
        %v4575 = vunpack.c.h.b16 %v4422
        %v4576 = vunpack.c.l.b16 %v4423
        %v4577 = vunpack.c.h.b16 %v4423
        %v4578 = vunpack.c.l.b16 %v4424
        %v4579 = vunpack.c.h.b16 %v4424
        %v4580 = vunpack.c.l.b16 %v4425
        %v4581 = vunpack.c.h.b16 %v4425
        %v4582 = vunpack.c.l.b16 %v4426
        %v4583 = vunpack.c.h.b16 %v4426
        %v4584 = vunpack.c.l.b16 %v4427
        %v4585 = vunpack.c.h.b16 %v4427
        %v4586 = vunpack.c.l.b16 %v4428
        %v4587 = vunpack.c.h.b16 %v4428
        %v4588 = vunpack.c.l.b16 %v4429
        %v4589 = vunpack.c.h.b16 %v4429
        %v4590 = vunpack.c.l.b16 %v4430
        %v4591 = vunpack.c.h.b16 %v4430
        %v4592 = vunpack.c.l.b16 %v4431
        %v4593 = vunpack.c.h.b16 %v4431
        %v4594 = vunpack.c.l.b16 %v4432
        %v4595 = vunpack.c.h.b16 %v4432
        %v4596 = vunpack.c.l.b16 %v4433
        %v4597 = vunpack.c.h.b16 %v4433
        %v4598 = vunpack.c.l.b16 %v4434
        %v4599 = vunpack.c.h.b16 %v4434
        %v4600 = vunpack.c.l.b16 %v4435
        %v4601 = vunpack.c.h.b16 %v4435
        %v4602 = vunpack.c.l.b16 %v4436
        %v4603 = vunpack.c.h.b16 %v4436
        %v4604 = vunpack.c.l.b16 %v4437
        %v4605 = vunpack.c.h.b16 %v4437
        %v4606 = vunpack.c.l.b16 %v4438
        %v4607 = vunpack.c.h.b16 %v4438
        %v4608 = vunpack.c.l.b16 %v4439
        %v4609 = vunpack.c.h.b16 %v4439
        %v4610 = vunpack.c.l.b16 %v4440
        %v4611 = vunpack.c.h.b16 %v4440
        %v4612 = vunpack.c.l.b16 %v4441
        %v4613 = vunpack.c.h.b16 %v4441
        %v4614 = vunpack.c.l.b16 %v4442
        %v4615 = vunpack.c.h.b16 %v4442
        %v4616 = vunpack.c.l.b16 %v4443
        %v4617 = vunpack.c.h.b16 %v4443
        %v4618 = vunpack.c.l.b16 %v4444
        %v4619 = vunpack.c.h.b16 %v4444
        %v4620 = vunpack.c.l.b16 %v4445
        %v4621 = vunpack.c.h.b16 %v4445
        %v4622 = vunpack.c.l.b16 %v4446
        %v4623 = vunpack.c.h.b16 %v4446
        %v4624 = vunpack.c.l.b16 %v4447
        %v4625 = vunpack.c.h.b16 %v4447
        %v4626 = vunpack.c.l.b16 %v4448
        %v4627 = vunpack.c.h.b16 %v4448
        %v4628 = vunpack.c.l.b16 %v4449
        %v4629 = vunpack.c.h.b16 %v4449
        %v4630 = vunpack.c.l.b16 %v4450
        %v4631 = vunpack.c.h.b16 %v4450
        %v4632 = vunpack.c.l.b16 %v4451
        %v4633 = vunpack.c.h.b16 %v4451
        %v4634 = vunpack.c.l.b16 %v4452
        %v4635 = vunpack.c.h.b16 %v4452
        %v4636 = vunpack.c.l.b16 %v4453
        %v4637 = vunpack.c.h.b16 %v4453
        %v4638 = vunpack.c.l.b16 %v4454
        %v4639 = vunpack.c.h.b16 %v4454
        %v4640 = vunpack.c.l.b16 %v4455
        %v4641 = vunpack.c.h.b16 %v4455
        %v4642 = vunpack.c.l.b16 %v4456
        %v4643 = vunpack.c.h.b16 %v4456
        %v4644 = vunpack.c.l.b16 %v4457
        %v4645 = vunpack.c.h.b16 %v4457
        %v4646 = vunpack.c.l.b16 %v4458
        %v4647 = vunpack.c.h.b16 %v4458
        %v4648 = vunpack.c.l.b16 %v4459
        %v4649 = vunpack.c.h.b16 %v4459
        %v4650 = vunpack.c.l.b16 %v4460
        %v4651 = vunpack.c.h.b16 %v4460
        %v4652 = vunpack.c.l.b16 %v4461
        %v4653 = vunpack.c.h.b16 %v4461
        %v4654 = vunpack.c.l.b16 %v4462
        %v4655 = vunpack.c.h.b16 %v4462
        %v4656 = vunpack.c.l.b16 %v4463
        %v4657 = vunpack.c.h.b16 %v4463
        %v4658 = vunpack.c.l.b16 %v4464
        %v4659 = vunpack.c.h.b16 %v4464
        %v4660 = vunpack.c.l.b16 %v4465
        %v4661 = vunpack.c.h.b16 %v4465
        %v4662 = vunpack.c.l.b16 %v4466
        %v4663 = vunpack.c.h.b16 %v4466
        %v4664 = vunpack.c.l.b16 %v4467
        %v4665 = vunpack.c.h.b16 %v4467
        %v4666 = vunpack.c.l.b16 %v4468
        %v4667 = vunpack.c.h.b16 %v4468
        %v4668 = vunpack.c.l.b16 %v4469
        %v4669 = vunpack.c.h.b16 %v4469
        %v4670 = vunpack.c.l.b16 %v4470
        %v4671 = vunpack.c.h.b16 %v4470
        %v4672 = vunpack.c.l.b16 %v4471
        %v4673 = vunpack.c.h.b16 %v4471
        %v4674 = vpack.c.b16 %v4550, %v4546
        %v4675 = vpack.c.b16 %v4551, %v4547
        %v4676 = vpack.c.b16 %v4552, %v4548
        %v4677 = vpack.c.b16 %v4553, %v4549
        %v4678 = vpack.c.b16 %v4558, %v4554
        %v4679 = vpack.c.b16 %v4559, %v4555
        %v4680 = vpack.c.b16 %v4560, %v4556
        %v4681 = vpack.c.b16 %v4561, %v4557
        %v4682 = vpack.c.b16 %v4566, %v4562
        %v4683 = vpack.c.b16 %v4567, %v4563
        %v4684 = vpack.c.b16 %v4568, %v4564
        %v4685 = vpack.c.b16 %v4569, %v4565
        %v4686 = vpack.c.b16 %v4574, %v4570
        %v4687 = vpack.c.b16 %v4575, %v4571
        %v4688 = vpack.c.b16 %v4576, %v4572
        %v4689 = vpack.c.b16 %v4577, %v4573
        %v4690 = vpack.c.b16 %v4582, %v4578
        %v4691 = vpack.c.b16 %v4583, %v4579
        %v4692 = vpack.c.b16 %v4584, %v4580
        %v4693 = vpack.c.b16 %v4585, %v4581
        %v4694 = vpack.c.b16 %v4590, %v4586
        %v4695 = vpack.c.b16 %v4591, %v4587
        %v4696 = vpack.c.b16 %v4592, %v4588
        %v4697 = vpack.c.b16 %v4593, %v4589
        %v4698 = vpack.c.b16 %v4598, %v4594
        %v4699 = vpack.c.b16 %v4599, %v4595
        %v4700 = vpack.c.b16 %v4600, %v4596
        %v4701 = vpack.c.b16 %v4601, %v4597
        %v4702 = vpack.c.b16 %v4606, %v4602
        %v4703 = vpack.c.b16 %v4607, %v4603
        %v4704 = vpack.c.b16 %v4608, %v4604
        %v4705 = vpack.c.b16 %v4609, %v4605
        %v4706 = vpack.c.b16 %v4614, %v4610
        %v4707 = vpack.c.b16 %v4615, %v4611
        %v4708 = vpack.c.b16 %v4616, %v4612
        %v4709 = vpack.c.b16 %v4617, %v4613
        %v4710 = vpack.c.b16 %v4622, %v4618
        %v4711 = vpack.c.b16 %v4623, %v4619
        %v4712 = vpack.c.b16 %v4624, %v4620
        %v4713 = vpack.c.b16 %v4625, %v4621
        %v4714 = vpack.c.b16 %v4630, %v4626
        %v4715 = vpack.c.b16 %v4631, %v4627
        %v4716 = vpack.c.b16 %v4632, %v4628
        %v4717 = vpack.c.b16 %v4633, %v4629
        %v4718 = vpack.c.b16 %v4638, %v4634
        %v4719 = vpack.c.b16 %v4639, %v4635
        %v4720 = vpack.c.b16 %v4640, %v4636
        %v4721 = vpack.c.b16 %v4641, %v4637
        %v4722 = vpack.c.b16 %v4646, %v4642
        %v4723 = vpack.c.b16 %v4647, %v4643
        %v4724 = vpack.c.b16 %v4648, %v4644
        %v4725 = vpack.c.b16 %v4649, %v4645
        %v4726 = vpack.c.b16 %v4654, %v4650
        %v4727 = vpack.c.b16 %v4655, %v4651
        %v4728 = vpack.c.b16 %v4656, %v4652
        %v4729 = vpack.c.b16 %v4657, %v4653
        %v4730 = vpack.c.b16 %v4662, %v4658
        %v4731 = vpack.c.b16 %v4663, %v4659
        %v4732 = vpack.c.b16 %v4664, %v4660
        %v4733 = vpack.c.b16 %v4665, %v4661
        %v4734 = vpack.c.b16 %v4670, %v4666
        %v4735 = vpack.c.b16 %v4671, %v4667
        %v4736 = vpack.c.b16 %v4672, %v4668
        %v4737 = vpack.c.b16 %v4673, %v4669
        %4802 = vmatpush.bf16.msra.mxu0 %v4702
        %4803 = vmatpush.bf16.msra.mxu0 %v4698
        %4804 = vmatpush.bf16.msra.mxu0 %v4694
        %4805 = vmatpush.bf16.msra.mxu0 %v4690
        %4806 = vmatpush.bf16.msra.mxu0 %v4686
        %4807 = vmatpush.bf16.msra.mxu0 %v4682
        %4808 = vmatpush.bf16.msra.mxu0 %v4678
        %4809 = vmatpush.bf16.msra.mxu0 %v4674
        %4810 = vmatmul.bf16.gmra.mxu0 %v4406
        %v4811 = vpop.f32.mrf.mxu0
        %v4812 = vadd.f32 %v4474, %v4811
        %v4813 = vpop.f32.mrf.mxu0
        %4814 = vdwg.mxu0
        %4815 = vmatpush.bf16.msra.mxu0 %v4734
        %4816 = vmatpush.bf16.msra.mxu0 %v4730
        %4817 = vmatpush.bf16.msra.mxu0 %v4726
        %4818 = vmatpush.bf16.msra.mxu0 %v4722
        %4819 = vmatpush.bf16.msra.mxu0 %v4718
        %4820 = vmatpush.bf16.msra.mxu0 %v4714
        %4821 = vmatpush.bf16.msra.mxu0 %v4710
        %4822 = vmatpush.bf16.msra.mxu0 %v4706
        %4823 = vmatmul.bf16.gmra.mxu0 %v4407
        %v4824 = vpop.f32.mrf.mxu0
        %v4825 = vadd.f32 %v4812, %v4824
        %v4826 = vpop.f32.mrf.mxu0
        %4827 = vdwg.mxu0
        %4828 = vmatpush.bf16.msra.mxu0 %v4703
        %4829 = vmatpush.bf16.msra.mxu0 %v4699
        %4830 = vmatpush.bf16.msra.mxu0 %v4695
        %4831 = vmatpush.bf16.msra.mxu0 %v4691
        %4832 = vmatpush.bf16.msra.mxu0 %v4687
        %4833 = vmatpush.bf16.msra.mxu0 %v4683
        %4834 = vmatpush.bf16.msra.mxu0 %v4679
        %4835 = vmatpush.bf16.msra.mxu0 %v4675
        %4836 = vmatmul.bf16.gmra.mxu0 %v4406
        %v4837 = vpop.f32.mrf.mxu0
        %v4838 = vadd.f32 %v4475, %v4837
        %v4839 = vpop.f32.mrf.mxu0
        %4840 = vdwg.mxu0
        %4841 = vmatpush.bf16.msra.mxu0 %v4735
        %4842 = vmatpush.bf16.msra.mxu0 %v4731
        %4843 = vmatpush.bf16.msra.mxu0 %v4727
        %4844 = vmatpush.bf16.msra.mxu0 %v4723
        %4845 = vmatpush.bf16.msra.mxu0 %v4719
        %4846 = vmatpush.bf16.msra.mxu0 %v4715
        %4847 = vmatpush.bf16.msra.mxu0 %v4711
        %4848 = vmatpush.bf16.msra.mxu0 %v4707
        %4849 = vmatmul.bf16.gmra.mxu0 %v4407
        %v4850 = vpop.f32.mrf.mxu0
        %v4851 = vadd.f32 %v4838, %v4850
        %v4852 = vpop.f32.mrf.mxu0
        %4853 = vdwg.mxu0
        %4854 = vmatpush.bf16.msra.mxu0 %v4704
        %4855 = vmatpush.bf16.msra.mxu0 %v4700
        %4856 = vmatpush.bf16.msra.mxu0 %v4696
        %4857 = vmatpush.bf16.msra.mxu0 %v4692
        %4858 = vmatpush.bf16.msra.mxu0 %v4688
        %4859 = vmatpush.bf16.msra.mxu0 %v4684
        %4860 = vmatpush.bf16.msra.mxu0 %v4680
        %4861 = vmatpush.bf16.msra.mxu0 %v4676
        %4862 = vmatmul.bf16.gmra.mxu0 %v4406
        %v4863 = vpop.f32.mrf.mxu0
        %v4864 = vadd.f32 %v4476, %v4863
        %v4865 = vpop.f32.mrf.mxu0
        %4866 = vdwg.mxu0
        %4867 = vmatpush.bf16.msra.mxu0 %v4736
        %4868 = vmatpush.bf16.msra.mxu0 %v4732
        %4869 = vmatpush.bf16.msra.mxu0 %v4728
        %4870 = vmatpush.bf16.msra.mxu0 %v4724
        %4871 = vmatpush.bf16.msra.mxu0 %v4720
        %4872 = vmatpush.bf16.msra.mxu0 %v4716
        %4873 = vmatpush.bf16.msra.mxu0 %v4712
        %4874 = vmatpush.bf16.msra.mxu0 %v4708
        %4875 = vmatmul.bf16.gmra.mxu0 %v4407
        %v4876 = vpop.f32.mrf.mxu0
        %v4877 = vadd.f32 %v4864, %v4876
        %v4878 = vpop.f32.mrf.mxu0
        %4879 = vdwg.mxu0
        %4880 = vmatpush.bf16.msra.mxu0 %v4705
        %4881 = vmatpush.bf16.msra.mxu0 %v4701
        %4882 = vmatpush.bf16.msra.mxu0 %v4697
        %4883 = vmatpush.bf16.msra.mxu0 %v4693
        %4884 = vmatpush.bf16.msra.mxu0 %v4689
        %4885 = vmatpush.bf16.msra.mxu0 %v4685
        %4886 = vmatpush.bf16.msra.mxu0 %v4681
        %4887 = vmatpush.bf16.msra.mxu0 %v4677
        %4888 = vmatmul.bf16.gmra.mxu0 %v4406
        %v4889 = vpop.f32.mrf.mxu0
        %v4890 = vadd.f32 %v4477, %v4889
        %v4891 = vpop.f32.mrf.mxu0
        %4892 = vdwg.mxu0
        %4893 = vmatpush.bf16.msra.mxu0 %v4737
        %4894 = vmatpush.bf16.msra.mxu0 %v4733
        %4895 = vmatpush.bf16.msra.mxu0 %v4729
        %4896 = vmatpush.bf16.msra.mxu0 %v4725
        %4897 = vmatpush.bf16.msra.mxu0 %v4721
        %4898 = vmatpush.bf16.msra.mxu0 %v4717
        %4899 = vmatpush.bf16.msra.mxu0 %v4713
        %4900 = vmatpush.bf16.msra.mxu0 %v4709
        %4901 = vmatmul.bf16.gmra.mxu0 %v4407
        %v4902 = vpop.f32.mrf.mxu0
        %v4903 = vadd.f32 %v4890, %v4902
        %v4904 = vpop.f32.mrf.mxu0
        %4905 = vdwg.mxu0
        %v4906 = vmax.f32 %v4825, 0.0
        %v4907 = vmax.f32 %v4851, 0.0
        %v4908 = vmax.f32 %v4877, 0.0
        %v4909 = vmax.f32 %v4903, 0.0
        %v4910 = vpack.c.bf16 %v4906, %v4906
        %v4911 = vpack.c.bf16 %v4907, %v4907
        %v4912 = vpack.c.bf16 %v4908, %v4908
        %v4913 = vpack.c.bf16 %v4909, %v4909
        %v4914 = vld [vmem:[#allocation25] sm:$0xff]
        %v4915 = vld [vmem:[#allocation25 + $0x8] sm:$0xff]
        %v4916 = vld [vmem:[#allocation25 + $0x10] sm:$0xff]
        %v4917 = vld [vmem:[#allocation25 + $0x18] sm:$0xff]
        %v4918 = vld [vmem:[#allocation25 + $0x20] sm:$0xff]
        %v4919 = vld [vmem:[#allocation25 + $0x28] sm:$0xff]
        %v4920 = vld [vmem:[#allocation25 + $0x30] sm:$0xff]
        %v4921 = vld [vmem:[#allocation25 + $0x38] sm:$0xff]
        %v4922 = vld [vmem:[#allocation25 + $0x40] sm:$0xff]
        %v4923 = vld [vmem:[#allocation25 + $0x48] sm:$0xff]
        %v4924 = vld [vmem:[#allocation25 + $0x50] sm:$0xff]
        %v4925 = vld [vmem:[#allocation25 + $0x58] sm:$0xff]
        %v4926 = vld [vmem:[#allocation25 + $0x60] sm:$0xff]
        %v4927 = vld [vmem:[#allocation25 + $0x68] sm:$0xff]
        %v4928 = vld [vmem:[#allocation25 + $0x70] sm:$0xff]
        %v4929 = vld [vmem:[#allocation25 + $0x78] sm:$0xff]
        %v4930 = vld [vmem:[#allocation25 + $0x80] sm:$0xff]
        %v4931 = vld [vmem:[#allocation25 + $0x88] sm:$0xff]
        %v4932 = vld [vmem:[#allocation25 + $0x90] sm:$0xff]
        %v4933 = vld [vmem:[#allocation25 + $0x98] sm:$0xff]
        %v4934 = vld [vmem:[#allocation25 + $0xa0] sm:$0xff]
        %v4935 = vld [vmem:[#allocation25 + $0xa8] sm:$0xff]
        %v4936 = vld [vmem:[#allocation25 + $0xb0] sm:$0xff]
        %v4937 = vld [vmem:[#allocation25 + $0xb8] sm:$0xff]
        %v4938 = vld [vmem:[#allocation25 + $0xc0] sm:$0xff]
        %v4939 = vld [vmem:[#allocation25 + $0xc8] sm:$0xff]
        %v4940 = vld [vmem:[#allocation25 + $0xd0] sm:$0xff]
        %v4941 = vld [vmem:[#allocation25 + $0xd8] sm:$0xff]
        %v4942 = vld [vmem:[#allocation25 + $0xe0] sm:$0xff]
        %v4943 = vld [vmem:[#allocation25 + $0xe8] sm:$0xff]
        %v4944 = vld [vmem:[#allocation25 + $0xf0] sm:$0xff]
        %v4945 = vld [vmem:[#allocation25 + $0xf8] sm:$0xff]
        %v4946 = vld [vmem:[#allocation25 + $0x100] sm:$0xff]
        %v4947 = vld [vmem:[#allocation25 + $0x108] sm:$0xff]
        %v4948 = vld [vmem:[#allocation25 + $0x110] sm:$0xff]
        %v4949 = vld [vmem:[#allocation25 + $0x118] sm:$0xff]
        %v4950 = vld [vmem:[#allocation25 + $0x120] sm:$0xff]
        %v4951 = vld [vmem:[#allocation25 + $0x128] sm:$0xff]
        %v4952 = vld [vmem:[#allocation25 + $0x130] sm:$0xff]
        %v4953 = vld [vmem:[#allocation25 + $0x138] sm:$0xff]
        %v4954 = vld [vmem:[#allocation25 + $0x140] sm:$0xff]
        %v4955 = vld [vmem:[#allocation25 + $0x148] sm:$0xff]
        %v4956 = vld [vmem:[#allocation25 + $0x150] sm:$0xff]
        %v4957 = vld [vmem:[#allocation25 + $0x158] sm:$0xff]
        %v4958 = vld [vmem:[#allocation25 + $0x160] sm:$0xff]
        %v4959 = vld [vmem:[#allocation25 + $0x168] sm:$0xff]
        %v4960 = vld [vmem:[#allocation25 + $0x170] sm:$0xff]
        %v4961 = vld [vmem:[#allocation25 + $0x178] sm:$0xff]
        %v4962 = vld [vmem:[#allocation25 + $0x180] sm:$0xff]
        %v4963 = vld [vmem:[#allocation25 + $0x188] sm:$0xff]
        %v4964 = vld [vmem:[#allocation25 + $0x190] sm:$0xff]
        %v4965 = vld [vmem:[#allocation25 + $0x198] sm:$0xff]
        %v4966 = vld [vmem:[#allocation25 + $0x1a0] sm:$0xff]
        %v4967 = vld [vmem:[#allocation25 + $0x1a8] sm:$0xff]
        %v4968 = vld [vmem:[#allocation25 + $0x1b0] sm:$0xff]
        %v4969 = vld [vmem:[#allocation25 + $0x1b8] sm:$0xff]
        %v4970 = vld [vmem:[#allocation25 + $0x1c0] sm:$0xff]
        %v4971 = vld [vmem:[#allocation25 + $0x1c8] sm:$0xff]
        %v4972 = vld [vmem:[#allocation25 + $0x1d0] sm:$0xff]
        %v4973 = vld [vmem:[#allocation25 + $0x1d8] sm:$0xff]
        %v4974 = vld [vmem:[#allocation25 + $0x1e0] sm:$0xff]
        %v4975 = vld [vmem:[#allocation25 + $0x1e8] sm:$0xff]
        %v4976 = vld [vmem:[#allocation25 + $0x1f0] sm:$0xff]
        %v4977 = vld [vmem:[#allocation25 + $0x1f8] sm:$0xff]
        %v4978 = vld [vmem:[#allocation26] sm:$0x3]
        %v4980 = vperm.slane %v4978, 0
        %v4981 = vperm.slane %v4978, 1
        %v5048 = vunpack.c.l.b16 %v4914
        %v5049 = vunpack.c.h.b16 %v4914
        %v5050 = vunpack.c.l.b16 %v4915
        %v5051 = vunpack.c.h.b16 %v4915
        %v5052 = vunpack.c.l.b16 %v4916
        %v5053 = vunpack.c.h.b16 %v4916
        %v5054 = vunpack.c.l.b16 %v4917
        %v5055 = vunpack.c.h.b16 %v4917
        %v5056 = vunpack.c.l.b16 %v4918
        %v5057 = vunpack.c.h.b16 %v4918
        %v5058 = vunpack.c.l.b16 %v4919
        %v5059 = vunpack.c.h.b16 %v4919
        %v5060 = vunpack.c.l.b16 %v4920
        %v5061 = vunpack.c.h.b16 %v4920
        %v5062 = vunpack.c.l.b16 %v4921
        %v5063 = vunpack.c.h.b16 %v4921
        %v5064 = vunpack.c.l.b16 %v4922
        %v5065 = vunpack.c.h.b16 %v4922
        %v5066 = vunpack.c.l.b16 %v4923
        %v5067 = vunpack.c.h.b16 %v4923
        %v5068 = vunpack.c.l.b16 %v4924
        %v5069 = vunpack.c.h.b16 %v4924
        %v5070 = vunpack.c.l.b16 %v4925
        %v5071 = vunpack.c.h.b16 %v4925
        %v5072 = vunpack.c.l.b16 %v4926
        %v5073 = vunpack.c.h.b16 %v4926
        %v5074 = vunpack.c.l.b16 %v4927
        %v5075 = vunpack.c.h.b16 %v4927
        %v5076 = vunpack.c.l.b16 %v4928
        %v5077 = vunpack.c.h.b16 %v4928
        %v5078 = vunpack.c.l.b16 %v4929
        %v5079 = vunpack.c.h.b16 %v4929
        %v5080 = vunpack.c.l.b16 %v4930
        %v5081 = vunpack.c.h.b16 %v4930
        %v5082 = vunpack.c.l.b16 %v4931
        %v5083 = vunpack.c.h.b16 %v4931
        %v5084 = vunpack.c.l.b16 %v4932
        %v5085 = vunpack.c.h.b16 %v4932
        %v5086 = vunpack.c.l.b16 %v4933
        %v5087 = vunpack.c.h.b16 %v4933
        %v5088 = vunpack.c.l.b16 %v4934
        %v5089 = vunpack.c.h.b16 %v4934
        %v5090 = vunpack.c.l.b16 %v4935
        %v5091 = vunpack.c.h.b16 %v4935
        %v5092 = vunpack.c.l.b16 %v4936
        %v5093 = vunpack.c.h.b16 %v4936
        %v5094 = vunpack.c.l.b16 %v4937
        %v5095 = vunpack.c.h.b16 %v4937
        %v5096 = vunpack.c.l.b16 %v4938
        %v5097 = vunpack.c.h.b16 %v4938
        %v5098 = vunpack.c.l.b16 %v4939
        %v5099 = vunpack.c.h.b16 %v4939
        %v5100 = vunpack.c.l.b16 %v4940
        %v5101 = vunpack.c.h.b16 %v4940
        %v5102 = vunpack.c.l.b16 %v4941
        %v5103 = vunpack.c.h.b16 %v4941
        %v5104 = vunpack.c.l.b16 %v4942
        %v5105 = vunpack.c.h.b16 %v4942
        %v5106 = vunpack.c.l.b16 %v4943
        %v5107 = vunpack.c.h.b16 %v4943
        %v5108 = vunpack.c.l.b16 %v4944
        %v5109 = vunpack.c.h.b16 %v4944
        %v5110 = vunpack.c.l.b16 %v4945
        %v5111 = vunpack.c.h.b16 %v4945
        %v5112 = vunpack.c.l.b16 %v4946
        %v5113 = vunpack.c.h.b16 %v4946
        %v5114 = vunpack.c.l.b16 %v4947
        %v5115 = vunpack.c.h.b16 %v4947
        %v5116 = vunpack.c.l.b16 %v4948
        %v5117 = vunpack.c.h.b16 %v4948
        %v5118 = vunpack.c.l.b16 %v4949
        %v5119 = vunpack.c.h.b16 %v4949
        %v5120 = vunpack.c.l.b16 %v4950
        %v5121 = vunpack.c.h.b16 %v4950
        %v5122 = vunpack.c.l.b16 %v4951
        %v5123 = vunpack.c.h.b16 %v4951
        %v5124 = vunpack.c.l.b16 %v4952
        %v5125 = vunpack.c.h.b16 %v4952
        %v5126 = vunpack.c.l.b16 %v4953
        %v5127 = vunpack.c.h.b16 %v4953
        %v5128 = vunpack.c.l.b16 %v4954
        %v5129 = vunpack.c.h.b16 %v4954
        %v5130 = vunpack.c.l.b16 %v4955
        %v5131 = vunpack.c.h.b16 %v4955
        %v5132 = vunpack.c.l.b16 %v4956
        %v5133 = vunpack.c.h.b16 %v4956
        %v5134 = vunpack.c.l.b16 %v4957
        %v5135 = vunpack.c.h.b16 %v4957
        %v5136 = vunpack.c.l.b16 %v4958
        %v5137 = vunpack.c.h.b16 %v4958
        %v5138 = vunpack.c.l.b16 %v4959
        %v5139 = vunpack.c.h.b16 %v4959
        %v5140 = vunpack.c.l.b16 %v4960
        %v5141 = vunpack.c.h.b16 %v4960
        %v5142 = vunpack.c.l.b16 %v4961
        %v5143 = vunpack.c.h.b16 %v4961
        %v5144 = vunpack.c.l.b16 %v4962
        %v5145 = vunpack.c.h.b16 %v4962
        %v5146 = vunpack.c.l.b16 %v4963
        %v5147 = vunpack.c.h.b16 %v4963
        %v5148 = vunpack.c.l.b16 %v4964
        %v5149 = vunpack.c.h.b16 %v4964
        %v5150 = vunpack.c.l.b16 %v4965
        %v5151 = vunpack.c.h.b16 %v4965
        %v5152 = vunpack.c.l.b16 %v4966
        %v5153 = vunpack.c.h.b16 %v4966
        %v5154 = vunpack.c.l.b16 %v4967
        %v5155 = vunpack.c.h.b16 %v4967
        %v5156 = vunpack.c.l.b16 %v4968
        %v5157 = vunpack.c.h.b16 %v4968
        %v5158 = vunpack.c.l.b16 %v4969
        %v5159 = vunpack.c.h.b16 %v4969
        %v5160 = vunpack.c.l.b16 %v4970
        %v5161 = vunpack.c.h.b16 %v4970
        %v5162 = vunpack.c.l.b16 %v4971
        %v5163 = vunpack.c.h.b16 %v4971
        %v5164 = vunpack.c.l.b16 %v4972
        %v5165 = vunpack.c.h.b16 %v4972
        %v5166 = vunpack.c.l.b16 %v4973
        %v5167 = vunpack.c.h.b16 %v4973
        %v5168 = vunpack.c.l.b16 %v4974
        %v5169 = vunpack.c.h.b16 %v4974
        %v5170 = vunpack.c.l.b16 %v4975
        %v5171 = vunpack.c.h.b16 %v4975
        %v5172 = vunpack.c.l.b16 %v4976
        %v5173 = vunpack.c.h.b16 %v4976
        %v5174 = vunpack.c.l.b16 %v4977
        %v5175 = vunpack.c.h.b16 %v4977
        %v5176 = vpack.c.b16 %v5050, %v5048
        %v5177 = vpack.c.b16 %v5051, %v5049
        %v5178 = vpack.c.b16 %v5054, %v5052
        %v5179 = vpack.c.b16 %v5055, %v5053
        %v5180 = vpack.c.b16 %v5058, %v5056
        %v5181 = vpack.c.b16 %v5059, %v5057
        %v5182 = vpack.c.b16 %v5062, %v5060
        %v5183 = vpack.c.b16 %v5063, %v5061
        %v5184 = vpack.c.b16 %v5066, %v5064
        %v5185 = vpack.c.b16 %v5067, %v5065
        %v5186 = vpack.c.b16 %v5070, %v5068
        %v5187 = vpack.c.b16 %v5071, %v5069
        %v5188 = vpack.c.b16 %v5074, %v5072
        %v5189 = vpack.c.b16 %v5075, %v5073
        %v5190 = vpack.c.b16 %v5078, %v5076
        %v5191 = vpack.c.b16 %v5079, %v5077
        %v5192 = vpack.c.b16 %v5082, %v5080
        %v5193 = vpack.c.b16 %v5083, %v5081
        %v5194 = vpack.c.b16 %v5086, %v5084
        %v5195 = vpack.c.b16 %v5087, %v5085
        %v5196 = vpack.c.b16 %v5090, %v5088
        %v5197 = vpack.c.b16 %v5091, %v5089
        %v5198 = vpack.c.b16 %v5094, %v5092
        %v5199 = vpack.c.b16 %v5095, %v5093
        %v5200 = vpack.c.b16 %v5098, %v5096
        %v5201 = vpack.c.b16 %v5099, %v5097
        %v5202 = vpack.c.b16 %v5102, %v5100
        %v5203 = vpack.c.b16 %v5103, %v5101
        %v5204 = vpack.c.b16 %v5106, %v5104
        %v5205 = vpack.c.b16 %v5107, %v5105
        %v5206 = vpack.c.b16 %v5110, %v5108
        %v5207 = vpack.c.b16 %v5111, %v5109
        %v5208 = vpack.c.b16 %v5114, %v5112
        %v5209 = vpack.c.b16 %v5115, %v5113
        %v5210 = vpack.c.b16 %v5118, %v5116
        %v5211 = vpack.c.b16 %v5119, %v5117
        %v5212 = vpack.c.b16 %v5122, %v5120
        %v5213 = vpack.c.b16 %v5123, %v5121
        %v5214 = vpack.c.b16 %v5126, %v5124
        %v5215 = vpack.c.b16 %v5127, %v5125
        %v5216 = vpack.c.b16 %v5130, %v5128
        %v5217 = vpack.c.b16 %v5131, %v5129
        %v5218 = vpack.c.b16 %v5134, %v5132
        %v5219 = vpack.c.b16 %v5135, %v5133
        %v5220 = vpack.c.b16 %v5138, %v5136
        %v5221 = vpack.c.b16 %v5139, %v5137
        %v5222 = vpack.c.b16 %v5142, %v5140
        %v5223 = vpack.c.b16 %v5143, %v5141
        %v5224 = vpack.c.b16 %v5146, %v5144
        %v5225 = vpack.c.b16 %v5147, %v5145
        %v5226 = vpack.c.b16 %v5150, %v5148
        %v5227 = vpack.c.b16 %v5151, %v5149
        %v5228 = vpack.c.b16 %v5154, %v5152
        %v5229 = vpack.c.b16 %v5155, %v5153
        %v5230 = vpack.c.b16 %v5158, %v5156
        %v5231 = vpack.c.b16 %v5159, %v5157
        %v5232 = vpack.c.b16 %v5162, %v5160
        %v5233 = vpack.c.b16 %v5163, %v5161
        %v5234 = vpack.c.b16 %v5166, %v5164
        %v5235 = vpack.c.b16 %v5167, %v5165
        %v5236 = vpack.c.b16 %v5170, %v5168
        %v5237 = vpack.c.b16 %v5171, %v5169
        %v5238 = vpack.c.b16 %v5174, %v5172
        %v5239 = vpack.c.b16 %v5175, %v5173
        %5304 = vmatpush.bf16.msra.mxu0 %v5190
        %5305 = vmatpush.bf16.msra.mxu0 %v5188
        %5306 = vmatpush.bf16.msra.mxu0 %v5186
        %5307 = vmatpush.bf16.msra.mxu0 %v5184
        %5308 = vmatpush.bf16.msra.mxu0 %v5182
        %5309 = vmatpush.bf16.msra.mxu0 %v5180
        %5310 = vmatpush.bf16.msra.mxu0 %v5178
        %5311 = vmatpush.bf16.msra.mxu0 %v5176
        %5312 = vmatmul.bf16.gmra.mxu0 %v4910
        %v5313 = vpop.f32.mrf.mxu0
        %v5314 = vadd.f32 %v4980, %v5313
        %v5315 = vpop.f32.mrf.mxu0
        %5316 = vdwg.mxu0
        %5317 = vmatpush.bf16.msra.mxu0 %v5206
        %5318 = vmatpush.bf16.msra.mxu0 %v5204
        %5319 = vmatpush.bf16.msra.mxu0 %v5202
        %5320 = vmatpush.bf16.msra.mxu0 %v5200
        %5321 = vmatpush.bf16.msra.mxu0 %v5198
        %5322 = vmatpush.bf16.msra.mxu0 %v5196
        %5323 = vmatpush.bf16.msra.mxu0 %v5194
        %5324 = vmatpush.bf16.msra.mxu0 %v5192
        %5325 = vmatmul.bf16.gmra.mxu0 %v4911
        %v5326 = vpop.f32.mrf.mxu0
        %v5327 = vadd.f32 %v5314, %v5326
        %v5328 = vpop.f32.mrf.mxu0
        %5329 = vdwg.mxu0
        %5330 = vmatpush.bf16.msra.mxu0 %v5222
        %5331 = vmatpush.bf16.msra.mxu0 %v5220
        %5332 = vmatpush.bf16.msra.mxu0 %v5218
        %5333 = vmatpush.bf16.msra.mxu0 %v5216
        %5334 = vmatpush.bf16.msra.mxu0 %v5214
        %5335 = vmatpush.bf16.msra.mxu0 %v5212
        %5336 = vmatpush.bf16.msra.mxu0 %v5210
        %5337 = vmatpush.bf16.msra.mxu0 %v5208
        %5338 = vmatmul.bf16.gmra.mxu0 %v4912
        %v5339 = vpop.f32.mrf.mxu0
        %v5340 = vadd.f32 %v5327, %v5339
        %v5341 = vpop.f32.mrf.mxu0
        %5342 = vdwg.mxu0
        %5343 = vmatpush.bf16.msra.mxu0 %v5238
        %5344 = vmatpush.bf16.msra.mxu0 %v5236
        %5345 = vmatpush.bf16.msra.mxu0 %v5234
        %5346 = vmatpush.bf16.msra.mxu0 %v5232
        %5347 = vmatpush.bf16.msra.mxu0 %v5230
        %5348 = vmatpush.bf16.msra.mxu0 %v5228
        %5349 = vmatpush.bf16.msra.mxu0 %v5226
        %5350 = vmatpush.bf16.msra.mxu0 %v5224
        %5351 = vmatmul.bf16.gmra.mxu0 %v4913
        %v5352 = vpop.f32.mrf.mxu0
        %v5353 = vadd.f32 %v5340, %v5352
        %v5354 = vpop.f32.mrf.mxu0
        %5355 = vdwg.mxu0
        %5356 = vmatpush.bf16.msra.mxu0 %v5191
        %5357 = vmatpush.bf16.msra.mxu0 %v5189
        %5358 = vmatpush.bf16.msra.mxu0 %v5187
        %5359 = vmatpush.bf16.msra.mxu0 %v5185
        %5360 = vmatpush.bf16.msra.mxu0 %v5183
        %5361 = vmatpush.bf16.msra.mxu0 %v5181
        %5362 = vmatpush.bf16.msra.mxu0 %v5179
        %5363 = vmatpush.bf16.msra.mxu0 %v5177
        %5364 = vmatmul.bf16.gmra.mxu0 %v4910
        %v5365 = vpop.f32.mrf.mxu0
        %v5366 = vadd.f32 %v4981, %v5365
        %v5367 = vpop.f32.mrf.mxu0
        %5368 = vdwg.mxu0
        %5369 = vmatpush.bf16.msra.mxu0 %v5207
        %5370 = vmatpush.bf16.msra.mxu0 %v5205
        %5371 = vmatpush.bf16.msra.mxu0 %v5203
        %5372 = vmatpush.bf16.msra.mxu0 %v5201
        %5373 = vmatpush.bf16.msra.mxu0 %v5199
        %5374 = vmatpush.bf16.msra.mxu0 %v5197
        %5375 = vmatpush.bf16.msra.mxu0 %v5195
        %5376 = vmatpush.bf16.msra.mxu0 %v5193
        %5377 = vmatmul.bf16.gmra.mxu0 %v4911
        %v5378 = vpop.f32.mrf.mxu0
        %v5379 = vadd.f32 %v5366, %v5378
        %v5380 = vpop.f32.mrf.mxu0
        %5381 = vdwg.mxu0
        %5382 = vmatpush.bf16.msra.mxu0 %v5223
        %5383 = vmatpush.bf16.msra.mxu0 %v5221
        %5384 = vmatpush.bf16.msra.mxu0 %v5219
        %5385 = vmatpush.bf16.msra.mxu0 %v5217
        %5386 = vmatpush.bf16.msra.mxu0 %v5215
        %5387 = vmatpush.bf16.msra.mxu0 %v5213
        %5388 = vmatpush.bf16.msra.mxu0 %v5211
        %5389 = vmatpush.bf16.msra.mxu0 %v5209
        %5390 = vmatmul.bf16.gmra.mxu0 %v4912
        %v5391 = vpop.f32.mrf.mxu0
        %v5392 = vadd.f32 %v5379, %v5391
        %v5393 = vpop.f32.mrf.mxu0
        %5394 = vdwg.mxu0
        %5395 = vmatpush.bf16.msra.mxu0 %v5239
        %5396 = vmatpush.bf16.msra.mxu0 %v5237
        %5397 = vmatpush.bf16.msra.mxu0 %v5235
        %5398 = vmatpush.bf16.msra.mxu0 %v5233
        %5399 = vmatpush.bf16.msra.mxu0 %v5231
        %5400 = vmatpush.bf16.msra.mxu0 %v5229
        %5401 = vmatpush.bf16.msra.mxu0 %v5227
        %5402 = vmatpush.bf16.msra.mxu0 %v5225
        %5403 = vmatmul.bf16.gmra.mxu0 %v4913
        %v5404 = vpop.f32.mrf.mxu0
        %v5405 = vadd.f32 %v5392, %v5404
        %v5406 = vpop.f32.mrf.mxu0
        %5407 = vdwg.mxu0
        %v5408 = vadd.f32 %v4363, %v5353
        %v5409 = vadd.f32 %v4364, %v5405
        %s5410 = scalar_lea.vmem %s3, 2
        %v5411 = vld [vmem:[%s5410] sm:$0x3]
        %s5412 = scalar_lea.vmem %s4, 2
        %v5413 = vld [vmem:[%s5412] sm:$0x3]
        %v5414 = vadd.f32 %v5408, %v5409
        %5415 = vadd.xlane.f32.xlu0 %v5414
        %v5416 = vpop.xlane.xlu0 %5415
        %v5417 = vmul.f32 %v5416, %v1108
        %v5418 = vsub.f32 %v5408, %v5417
        %v5419 = vsub.f32 %v5409, %v5417
        %v5420 = vmul.f32 %v5418, %v5418
        %v5421 = vmul.f32 %v5419, %v5419
        %v5422 = vadd.f32 %v5420, %v5421
        %5423 = vadd.xlane.f32.xlu0 %v5422
        %v5424 = vpop.xlane.xlu0 %5423
        %v5425 = vmul.f32 %v5424, %v1108
        %v5426 = vadd.f32 %v5425, 1e-05
        %v5427 = vrsqrt.pop %v5426
        %v5428 = vmul.f32 %v5427, %v5426
        %v5429 = vmul.f32 %v5428, %v5427
        %v5430 = vmul.f32 0.5, %v5429
        %v5431 = vsub.f32 1.5, %v5430
        %v5432 = vmul.f32 %v5427, %v5431
        %vm5433 = vweird.f32 %v5426
        %vm5434 = vweird.f32 %v5427
        %vm5435 = vmor %vm5433, %vm5434
        %v5436 = vsel %vm5435, %v5427, %v5432
        %v5437 = vmul.f32 %v5418, %v5436
        %v5438 = vmul.f32 %v5419, %v5436
        %v5440 = vperm.slane %v5411, 0
        %v5441 = vperm.slane %v5411, 1
        %v5444 = vmul.f32 %v5437, %v5440
        %v5445 = vmul.f32 %v5438, %v5441
        %v5447 = vperm.slane %v5413, 0
        %v5448 = vperm.slane %v5413, 1
        %v5451 = vadd.f32 %v5444, %v5447
        %v5452 = vadd.f32 %v5445, %v5448
        %v5453 = vpack.c.bf16 %v5451, %v5451
        %v5454 = vpack.c.bf16 %v5452, %v5452
        %s5455 = scalar_lea.vmem [#allocation5], 768
        %v5456 = vld [vmem:[%s5455] sm:$0xff]
        %v5457 = vld [vmem:[%s5455 + $0x8] sm:$0xff]
        %v5458 = vld [vmem:[%s5455 + $0x10] sm:$0xff]
        %v5459 = vld [vmem:[%s5455 + $0x18] sm:$0xff]
        %v5460 = vld [vmem:[%s5455 + $0x20] sm:$0xff]
        %v5461 = vld [vmem:[%s5455 + $0x28] sm:$0xff]
        %v5462 = vld [vmem:[%s5455 + $0x30] sm:$0xff]
        %v5463 = vld [vmem:[%s5455 + $0x38] sm:$0xff]
        %v5464 = vld [vmem:[%s5455 + $0x40] sm:$0xff]
        %v5465 = vld [vmem:[%s5455 + $0x48] sm:$0xff]
        %v5466 = vld [vmem:[%s5455 + $0x50] sm:$0xff]
        %v5467 = vld [vmem:[%s5455 + $0x58] sm:$0xff]
        %v5468 = vld [vmem:[%s5455 + $0x60] sm:$0xff]
        %v5469 = vld [vmem:[%s5455 + $0x68] sm:$0xff]
        %v5470 = vld [vmem:[%s5455 + $0x70] sm:$0xff]
        %v5471 = vld [vmem:[%s5455 + $0x78] sm:$0xff]
        %v5472 = vld [vmem:[%s5455 + $0x80] sm:$0xff]
        %v5473 = vld [vmem:[%s5455 + $0x88] sm:$0xff]
        %v5474 = vld [vmem:[%s5455 + $0x90] sm:$0xff]
        %v5475 = vld [vmem:[%s5455 + $0x98] sm:$0xff]
        %v5476 = vld [vmem:[%s5455 + $0xa0] sm:$0xff]
        %v5477 = vld [vmem:[%s5455 + $0xa8] sm:$0xff]
        %v5478 = vld [vmem:[%s5455 + $0xb0] sm:$0xff]
        %v5479 = vld [vmem:[%s5455 + $0xb8] sm:$0xff]
        %v5480 = vld [vmem:[%s5455 + $0xc0] sm:$0xff]
        %v5481 = vld [vmem:[%s5455 + $0xc8] sm:$0xff]
        %v5482 = vld [vmem:[%s5455 + $0xd0] sm:$0xff]
        %v5483 = vld [vmem:[%s5455 + $0xd8] sm:$0xff]
        %v5484 = vld [vmem:[%s5455 + $0xe0] sm:$0xff]
        %v5485 = vld [vmem:[%s5455 + $0xe8] sm:$0xff]
        %v5486 = vld [vmem:[%s5455 + $0xf0] sm:$0xff]
        %v5487 = vld [vmem:[%s5455 + $0xf8] sm:$0xff]
        %v5488 = vld [vmem:[%s5455 + $0x100] sm:$0xff]
        %v5489 = vld [vmem:[%s5455 + $0x108] sm:$0xff]
        %v5490 = vld [vmem:[%s5455 + $0x110] sm:$0xff]
        %v5491 = vld [vmem:[%s5455 + $0x118] sm:$0xff]
        %v5492 = vld [vmem:[%s5455 + $0x120] sm:$0xff]
        %v5493 = vld [vmem:[%s5455 + $0x128] sm:$0xff]
        %v5494 = vld [vmem:[%s5455 + $0x130] sm:$0xff]
        %v5495 = vld [vmem:[%s5455 + $0x138] sm:$0xff]
        %v5496 = vld [vmem:[%s5455 + $0x140] sm:$0xff]
        %v5497 = vld [vmem:[%s5455 + $0x148] sm:$0xff]
        %v5498 = vld [vmem:[%s5455 + $0x150] sm:$0xff]
        %v5499 = vld [vmem:[%s5455 + $0x158] sm:$0xff]
        %v5500 = vld [vmem:[%s5455 + $0x160] sm:$0xff]
        %v5501 = vld [vmem:[%s5455 + $0x168] sm:$0xff]
        %v5502 = vld [vmem:[%s5455 + $0x170] sm:$0xff]
        %v5503 = vld [vmem:[%s5455 + $0x178] sm:$0xff]
        %v5504 = vld [vmem:[%s5455 + $0x180] sm:$0xff]
        %v5505 = vld [vmem:[%s5455 + $0x188] sm:$0xff]
        %v5506 = vld [vmem:[%s5455 + $0x190] sm:$0xff]
        %v5507 = vld [vmem:[%s5455 + $0x198] sm:$0xff]
        %v5508 = vld [vmem:[%s5455 + $0x1a0] sm:$0xff]
        %v5509 = vld [vmem:[%s5455 + $0x1a8] sm:$0xff]
        %v5510 = vld [vmem:[%s5455 + $0x1b0] sm:$0xff]
        %v5511 = vld [vmem:[%s5455 + $0x1b8] sm:$0xff]
        %v5512 = vld [vmem:[%s5455 + $0x1c0] sm:$0xff]
        %v5513 = vld [vmem:[%s5455 + $0x1c8] sm:$0xff]
        %v5514 = vld [vmem:[%s5455 + $0x1d0] sm:$0xff]
        %v5515 = vld [vmem:[%s5455 + $0x1d8] sm:$0xff]
        %v5516 = vld [vmem:[%s5455 + $0x1e0] sm:$0xff]
        %v5517 = vld [vmem:[%s5455 + $0x1e8] sm:$0xff]
        %v5518 = vld [vmem:[%s5455 + $0x1f0] sm:$0xff]
        %v5519 = vld [vmem:[%s5455 + $0x1f8] sm:$0xff]
        %v5520 = vld [vmem:[%s5455 + $0x200] sm:$0xff]
        %v5521 = vld [vmem:[%s5455 + $0x208] sm:$0xff]
        %v5522 = vld [vmem:[%s5455 + $0x210] sm:$0xff]
        %v5523 = vld [vmem:[%s5455 + $0x218] sm:$0xff]
        %v5524 = vld [vmem:[%s5455 + $0x220] sm:$0xff]
        %v5525 = vld [vmem:[%s5455 + $0x228] sm:$0xff]
        %v5526 = vld [vmem:[%s5455 + $0x230] sm:$0xff]
        %v5527 = vld [vmem:[%s5455 + $0x238] sm:$0xff]
        %v5528 = vld [vmem:[%s5455 + $0x240] sm:$0xff]
        %v5529 = vld [vmem:[%s5455 + $0x248] sm:$0xff]
        %v5530 = vld [vmem:[%s5455 + $0x250] sm:$0xff]
        %v5531 = vld [vmem:[%s5455 + $0x258] sm:$0xff]
        %v5532 = vld [vmem:[%s5455 + $0x260] sm:$0xff]
        %v5533 = vld [vmem:[%s5455 + $0x268] sm:$0xff]
        %v5534 = vld [vmem:[%s5455 + $0x270] sm:$0xff]
        %v5535 = vld [vmem:[%s5455 + $0x278] sm:$0xff]
        %v5536 = vld [vmem:[%s5455 + $0x280] sm:$0xff]
        %v5537 = vld [vmem:[%s5455 + $0x288] sm:$0xff]
        %v5538 = vld [vmem:[%s5455 + $0x290] sm:$0xff]
        %v5539 = vld [vmem:[%s5455 + $0x298] sm:$0xff]
        %v5540 = vld [vmem:[%s5455 + $0x2a0] sm:$0xff]
        %v5541 = vld [vmem:[%s5455 + $0x2a8] sm:$0xff]
        %v5542 = vld [vmem:[%s5455 + $0x2b0] sm:$0xff]
        %v5543 = vld [vmem:[%s5455 + $0x2b8] sm:$0xff]
        %v5544 = vld [vmem:[%s5455 + $0x2c0] sm:$0xff]
        %v5545 = vld [vmem:[%s5455 + $0x2c8] sm:$0xff]
        %v5546 = vld [vmem:[%s5455 + $0x2d0] sm:$0xff]
        %v5547 = vld [vmem:[%s5455 + $0x2d8] sm:$0xff]
        %v5548 = vld [vmem:[%s5455 + $0x2e0] sm:$0xff]
        %v5549 = vld [vmem:[%s5455 + $0x2e8] sm:$0xff]
        %v5550 = vld [vmem:[%s5455 + $0x2f0] sm:$0xff]
        %v5551 = vld [vmem:[%s5455 + $0x2f8] sm:$0xff]
        %s5552 = scalar_lea.vmem %s6, 6
        %v5553 = vld [vmem:[%s5552] sm:$0x3f]
        %v5555 = vperm.slane %v5553, 0
        %v5556 = vperm.slane %v5553, 1
        %v5557 = vperm.slane %v5553, 2
        %v5558 = vperm.slane %v5553, 3
        %v5559 = vperm.slane %v5553, 4
        %v5560 = vperm.slane %v5553, 5
        %v5663 = vunpack.c.l.b16 %v5456
        %v5664 = vunpack.c.h.b16 %v5456
        %v5665 = vunpack.c.l.b16 %v5457
        %v5666 = vunpack.c.h.b16 %v5457
        %v5667 = vunpack.c.l.b16 %v5458
        %v5668 = vunpack.c.h.b16 %v5458
        %v5669 = vunpack.c.l.b16 %v5459
        %v5670 = vunpack.c.h.b16 %v5459
        %v5671 = vunpack.c.l.b16 %v5460
        %v5672 = vunpack.c.h.b16 %v5460
        %v5673 = vunpack.c.l.b16 %v5461
        %v5674 = vunpack.c.h.b16 %v5461
        %v5675 = vunpack.c.l.b16 %v5462
        %v5676 = vunpack.c.h.b16 %v5462
        %v5677 = vunpack.c.l.b16 %v5463
        %v5678 = vunpack.c.h.b16 %v5463
        %v5679 = vunpack.c.l.b16 %v5464
        %v5680 = vunpack.c.h.b16 %v5464
        %v5681 = vunpack.c.l.b16 %v5465
        %v5682 = vunpack.c.h.b16 %v5465
        %v5683 = vunpack.c.l.b16 %v5466
        %v5684 = vunpack.c.h.b16 %v5466
        %v5685 = vunpack.c.l.b16 %v5467
        %v5686 = vunpack.c.h.b16 %v5467
        %v5687 = vunpack.c.l.b16 %v5468
        %v5688 = vunpack.c.h.b16 %v5468
        %v5689 = vunpack.c.l.b16 %v5469
        %v5690 = vunpack.c.h.b16 %v5469
        %v5691 = vunpack.c.l.b16 %v5470
        %v5692 = vunpack.c.h.b16 %v5470
        %v5693 = vunpack.c.l.b16 %v5471
        %v5694 = vunpack.c.h.b16 %v5471
        %v5695 = vunpack.c.l.b16 %v5472
        %v5696 = vunpack.c.h.b16 %v5472
        %v5697 = vunpack.c.l.b16 %v5473
        %v5698 = vunpack.c.h.b16 %v5473
        %v5699 = vunpack.c.l.b16 %v5474
        %v5700 = vunpack.c.h.b16 %v5474
        %v5701 = vunpack.c.l.b16 %v5475
        %v5702 = vunpack.c.h.b16 %v5475
        %v5703 = vunpack.c.l.b16 %v5476
        %v5704 = vunpack.c.h.b16 %v5476
        %v5705 = vunpack.c.l.b16 %v5477
        %v5706 = vunpack.c.h.b16 %v5477
        %v5707 = vunpack.c.l.b16 %v5478
        %v5708 = vunpack.c.h.b16 %v5478
        %v5709 = vunpack.c.l.b16 %v5479
        %v5710 = vunpack.c.h.b16 %v5479
        %v5711 = vunpack.c.l.b16 %v5480
        %v5712 = vunpack.c.h.b16 %v5480
        %v5713 = vunpack.c.l.b16 %v5481
        %v5714 = vunpack.c.h.b16 %v5481
        %v5715 = vunpack.c.l.b16 %v5482
        %v5716 = vunpack.c.h.b16 %v5482
        %v5717 = vunpack.c.l.b16 %v5483
        %v5718 = vunpack.c.h.b16 %v5483
        %v5719 = vunpack.c.l.b16 %v5484
        %v5720 = vunpack.c.h.b16 %v5484
        %v5721 = vunpack.c.l.b16 %v5485
        %v5722 = vunpack.c.h.b16 %v5485
        %v5723 = vunpack.c.l.b16 %v5486
        %v5724 = vunpack.c.h.b16 %v5486
        %v5725 = vunpack.c.l.b16 %v5487
        %v5726 = vunpack.c.h.b16 %v5487
        %v5727 = vunpack.c.l.b16 %v5488
        %v5728 = vunpack.c.h.b16 %v5488
        %v5729 = vunpack.c.l.b16 %v5489
        %v5730 = vunpack.c.h.b16 %v5489
        %v5731 = vunpack.c.l.b16 %v5490
        %v5732 = vunpack.c.h.b16 %v5490
        %v5733 = vunpack.c.l.b16 %v5491
        %v5734 = vunpack.c.h.b16 %v5491
        %v5735 = vunpack.c.l.b16 %v5492
        %v5736 = vunpack.c.h.b16 %v5492
        %v5737 = vunpack.c.l.b16 %v5493
        %v5738 = vunpack.c.h.b16 %v5493
        %v5739 = vunpack.c.l.b16 %v5494
        %v5740 = vunpack.c.h.b16 %v5494
        %v5741 = vunpack.c.l.b16 %v5495
        %v5742 = vunpack.c.h.b16 %v5495
        %v5743 = vunpack.c.l.b16 %v5496
        %v5744 = vunpack.c.h.b16 %v5496
        %v5745 = vunpack.c.l.b16 %v5497
        %v5746 = vunpack.c.h.b16 %v5497
        %v5747 = vunpack.c.l.b16 %v5498
        %v5748 = vunpack.c.h.b16 %v5498
        %v5749 = vunpack.c.l.b16 %v5499
        %v5750 = vunpack.c.h.b16 %v5499
        %v5751 = vunpack.c.l.b16 %v5500
        %v5752 = vunpack.c.h.b16 %v5500
        %v5753 = vunpack.c.l.b16 %v5501
        %v5754 = vunpack.c.h.b16 %v5501
        %v5755 = vunpack.c.l.b16 %v5502
        %v5756 = vunpack.c.h.b16 %v5502
        %v5757 = vunpack.c.l.b16 %v5503
        %v5758 = vunpack.c.h.b16 %v5503
        %v5759 = vunpack.c.l.b16 %v5504
        %v5760 = vunpack.c.h.b16 %v5504
        %v5761 = vunpack.c.l.b16 %v5505
        %v5762 = vunpack.c.h.b16 %v5505
        %v5763 = vunpack.c.l.b16 %v5506
        %v5764 = vunpack.c.h.b16 %v5506
        %v5765 = vunpack.c.l.b16 %v5507
        %v5766 = vunpack.c.h.b16 %v5507
        %v5767 = vunpack.c.l.b16 %v5508
        %v5768 = vunpack.c.h.b16 %v5508
        %v5769 = vunpack.c.l.b16 %v5509
        %v5770 = vunpack.c.h.b16 %v5509
        %v5771 = vunpack.c.l.b16 %v5510
        %v5772 = vunpack.c.h.b16 %v5510
        %v5773 = vunpack.c.l.b16 %v5511
        %v5774 = vunpack.c.h.b16 %v5511
        %v5775 = vunpack.c.l.b16 %v5512
        %v5776 = vunpack.c.h.b16 %v5512
        %v5777 = vunpack.c.l.b16 %v5513
        %v5778 = vunpack.c.h.b16 %v5513
        %v5779 = vunpack.c.l.b16 %v5514
        %v5780 = vunpack.c.h.b16 %v5514
        %v5781 = vunpack.c.l.b16 %v5515
        %v5782 = vunpack.c.h.b16 %v5515
        %v5783 = vunpack.c.l.b16 %v5516
        %v5784 = vunpack.c.h.b16 %v5516
        %v5785 = vunpack.c.l.b16 %v5517
        %v5786 = vunpack.c.h.b16 %v5517
        %v5787 = vunpack.c.l.b16 %v5518
        %v5788 = vunpack.c.h.b16 %v5518
        %v5789 = vunpack.c.l.b16 %v5519
        %v5790 = vunpack.c.h.b16 %v5519
        %v5791 = vunpack.c.l.b16 %v5520
        %v5792 = vunpack.c.h.b16 %v5520
        %v5793 = vunpack.c.l.b16 %v5521
        %v5794 = vunpack.c.h.b16 %v5521
        %v5795 = vunpack.c.l.b16 %v5522
        %v5796 = vunpack.c.h.b16 %v5522
        %v5797 = vunpack.c.l.b16 %v5523
        %v5798 = vunpack.c.h.b16 %v5523
        %v5799 = vunpack.c.l.b16 %v5524
        %v5800 = vunpack.c.h.b16 %v5524
        %v5801 = vunpack.c.l.b16 %v5525
        %v5802 = vunpack.c.h.b16 %v5525
        %v5803 = vunpack.c.l.b16 %v5526
        %v5804 = vunpack.c.h.b16 %v5526
        %v5805 = vunpack.c.l.b16 %v5527
        %v5806 = vunpack.c.h.b16 %v5527
        %v5807 = vunpack.c.l.b16 %v5528
        %v5808 = vunpack.c.h.b16 %v5528
        %v5809 = vunpack.c.l.b16 %v5529
        %v5810 = vunpack.c.h.b16 %v5529
        %v5811 = vunpack.c.l.b16 %v5530
        %v5812 = vunpack.c.h.b16 %v5530
        %v5813 = vunpack.c.l.b16 %v5531
        %v5814 = vunpack.c.h.b16 %v5531
        %v5815 = vunpack.c.l.b16 %v5532
        %v5816 = vunpack.c.h.b16 %v5532
        %v5817 = vunpack.c.l.b16 %v5533
        %v5818 = vunpack.c.h.b16 %v5533
        %v5819 = vunpack.c.l.b16 %v5534
        %v5820 = vunpack.c.h.b16 %v5534
        %v5821 = vunpack.c.l.b16 %v5535
        %v5822 = vunpack.c.h.b16 %v5535
        %v5823 = vunpack.c.l.b16 %v5536
        %v5824 = vunpack.c.h.b16 %v5536
        %v5825 = vunpack.c.l.b16 %v5537
        %v5826 = vunpack.c.h.b16 %v5537
        %v5827 = vunpack.c.l.b16 %v5538
        %v5828 = vunpack.c.h.b16 %v5538
        %v5829 = vunpack.c.l.b16 %v5539
        %v5830 = vunpack.c.h.b16 %v5539
        %v5831 = vunpack.c.l.b16 %v5540
        %v5832 = vunpack.c.h.b16 %v5540
        %v5833 = vunpack.c.l.b16 %v5541
        %v5834 = vunpack.c.h.b16 %v5541
        %v5835 = vunpack.c.l.b16 %v5542
        %v5836 = vunpack.c.h.b16 %v5542
        %v5837 = vunpack.c.l.b16 %v5543
        %v5838 = vunpack.c.h.b16 %v5543
        %v5839 = vunpack.c.l.b16 %v5544
        %v5840 = vunpack.c.h.b16 %v5544
        %v5841 = vunpack.c.l.b16 %v5545
        %v5842 = vunpack.c.h.b16 %v5545
        %v5843 = vunpack.c.l.b16 %v5546
        %v5844 = vunpack.c.h.b16 %v5546
        %v5845 = vunpack.c.l.b16 %v5547
        %v5846 = vunpack.c.h.b16 %v5547
        %v5847 = vunpack.c.l.b16 %v5548
        %v5848 = vunpack.c.h.b16 %v5548
        %v5849 = vunpack.c.l.b16 %v5549
        %v5850 = vunpack.c.h.b16 %v5549
        %v5851 = vunpack.c.l.b16 %v5550
        %v5852 = vunpack.c.h.b16 %v5550
        %v5853 = vunpack.c.l.b16 %v5551
        %v5854 = vunpack.c.h.b16 %v5551
        %v5855 = vpack.c.b16 %v5669, %v5663
        %v5856 = vpack.c.b16 %v5670, %v5664
        %v5857 = vpack.c.b16 %v5671, %v5665
        %v5858 = vpack.c.b16 %v5672, %v5666
        %v5859 = vpack.c.b16 %v5673, %v5667
        %v5860 = vpack.c.b16 %v5674, %v5668
        %v5861 = vpack.c.b16 %v5681, %v5675
        %v5862 = vpack.c.b16 %v5682, %v5676
        %v5863 = vpack.c.b16 %v5683, %v5677
        %v5864 = vpack.c.b16 %v5684, %v5678
        %v5865 = vpack.c.b16 %v5685, %v5679
        %v5866 = vpack.c.b16 %v5686, %v5680
        %v5867 = vpack.c.b16 %v5693, %v5687
        %v5868 = vpack.c.b16 %v5694, %v5688
        %v5869 = vpack.c.b16 %v5695, %v5689
        %v5870 = vpack.c.b16 %v5696, %v5690
        %v5871 = vpack.c.b16 %v5697, %v5691
        %v5872 = vpack.c.b16 %v5698, %v5692
        %v5873 = vpack.c.b16 %v5705, %v5699
        %v5874 = vpack.c.b16 %v5706, %v5700
        %v5875 = vpack.c.b16 %v5707, %v5701
        %v5876 = vpack.c.b16 %v5708, %v5702
        %v5877 = vpack.c.b16 %v5709, %v5703
        %v5878 = vpack.c.b16 %v5710, %v5704
        %v5879 = vpack.c.b16 %v5717, %v5711
        %v5880 = vpack.c.b16 %v5718, %v5712
        %v5881 = vpack.c.b16 %v5719, %v5713
        %v5882 = vpack.c.b16 %v5720, %v5714
        %v5883 = vpack.c.b16 %v5721, %v5715
        %v5884 = vpack.c.b16 %v5722, %v5716
        %v5885 = vpack.c.b16 %v5729, %v5723
        %v5886 = vpack.c.b16 %v5730, %v5724
        %v5887 = vpack.c.b16 %v5731, %v5725
        %v5888 = vpack.c.b16 %v5732, %v5726
        %v5889 = vpack.c.b16 %v5733, %v5727
        %v5890 = vpack.c.b16 %v5734, %v5728
        %v5891 = vpack.c.b16 %v5741, %v5735
        %v5892 = vpack.c.b16 %v5742, %v5736
        %v5893 = vpack.c.b16 %v5743, %v5737
        %v5894 = vpack.c.b16 %v5744, %v5738
        %v5895 = vpack.c.b16 %v5745, %v5739
        %v5896 = vpack.c.b16 %v5746, %v5740
        %v5897 = vpack.c.b16 %v5753, %v5747
        %v5898 = vpack.c.b16 %v5754, %v5748
        %v5899 = vpack.c.b16 %v5755, %v5749
        %v5900 = vpack.c.b16 %v5756, %v5750
        %v5901 = vpack.c.b16 %v5757, %v5751
        %v5902 = vpack.c.b16 %v5758, %v5752
        %v5903 = vpack.c.b16 %v5765, %v5759
        %v5904 = vpack.c.b16 %v5766, %v5760
        %v5905 = vpack.c.b16 %v5767, %v5761
        %v5906 = vpack.c.b16 %v5768, %v5762
        %v5907 = vpack.c.b16 %v5769, %v5763
        %v5908 = vpack.c.b16 %v5770, %v5764
        %v5909 = vpack.c.b16 %v5777, %v5771
        %v5910 = vpack.c.b16 %v5778, %v5772
        %v5911 = vpack.c.b16 %v5779, %v5773
        %v5912 = vpack.c.b16 %v5780, %v5774
        %v5913 = vpack.c.b16 %v5781, %v5775
        %v5914 = vpack.c.b16 %v5782, %v5776
        %v5915 = vpack.c.b16 %v5789, %v5783
        %v5916 = vpack.c.b16 %v5790, %v5784
        %v5917 = vpack.c.b16 %v5791, %v5785
        %v5918 = vpack.c.b16 %v5792, %v5786
        %v5919 = vpack.c.b16 %v5793, %v5787
        %v5920 = vpack.c.b16 %v5794, %v5788
        %v5921 = vpack.c.b16 %v5801, %v5795
        %v5922 = vpack.c.b16 %v5802, %v5796
        %v5923 = vpack.c.b16 %v5803, %v5797
        %v5924 = vpack.c.b16 %v5804, %v5798
        %v5925 = vpack.c.b16 %v5805, %v5799
        %v5926 = vpack.c.b16 %v5806, %v5800
        %v5927 = vpack.c.b16 %v5813, %v5807
        %v5928 = vpack.c.b16 %v5814, %v5808
        %v5929 = vpack.c.b16 %v5815, %v5809
        %v5930 = vpack.c.b16 %v5816, %v5810
        %v5931 = vpack.c.b16 %v5817, %v5811
        %v5932 = vpack.c.b16 %v5818, %v5812
        %v5933 = vpack.c.b16 %v5825, %v5819
        %v5934 = vpack.c.b16 %v5826, %v5820
        %v5935 = vpack.c.b16 %v5827, %v5821
        %v5936 = vpack.c.b16 %v5828, %v5822
        %v5937 = vpack.c.b16 %v5829, %v5823
        %v5938 = vpack.c.b16 %v5830, %v5824
        %v5939 = vpack.c.b16 %v5837, %v5831
        %v5940 = vpack.c.b16 %v5838, %v5832
        %v5941 = vpack.c.b16 %v5839, %v5833
        %v5942 = vpack.c.b16 %v5840, %v5834
        %v5943 = vpack.c.b16 %v5841, %v5835
        %v5944 = vpack.c.b16 %v5842, %v5836
        %v5945 = vpack.c.b16 %v5849, %v5843
        %v5946 = vpack.c.b16 %v5850, %v5844
        %v5947 = vpack.c.b16 %v5851, %v5845
        %v5948 = vpack.c.b16 %v5852, %v5846
        %v5949 = vpack.c.b16 %v5853, %v5847
        %v5950 = vpack.c.b16 %v5854, %v5848
        %6047 = vmatpush.bf16.msra.mxu0 %v5897
        %6048 = vmatpush.bf16.msra.mxu0 %v5891
        %6049 = vmatpush.bf16.msra.mxu0 %v5885
        %6050 = vmatpush.bf16.msra.mxu0 %v5879
        %6051 = vmatpush.bf16.msra.mxu0 %v5873
        %6052 = vmatpush.bf16.msra.mxu0 %v5867
        %6053 = vmatpush.bf16.msra.mxu0 %v5861
        %6054 = vmatpush.bf16.msra.mxu0 %v5855
        %6055 = vmatmul.bf16.gmra.mxu0 %v5453
        %v6056 = vpop.f32.mrf.mxu0
        %v6057 = vadd.f32 %v5555, %v6056
        %v6058 = vpop.f32.mrf.mxu0
        %6059 = vdwg.mxu0
        %6060 = vmatpush.bf16.msra.mxu0 %v5945
        %6061 = vmatpush.bf16.msra.mxu0 %v5939
        %6062 = vmatpush.bf16.msra.mxu0 %v5933
        %6063 = vmatpush.bf16.msra.mxu0 %v5927
        %6064 = vmatpush.bf16.msra.mxu0 %v5921
        %6065 = vmatpush.bf16.msra.mxu0 %v5915
        %6066 = vmatpush.bf16.msra.mxu0 %v5909
        %6067 = vmatpush.bf16.msra.mxu0 %v5903
        %6068 = vmatmul.bf16.gmra.mxu0 %v5454
        %v6069 = vpop.f32.mrf.mxu0
        %v6070 = vadd.f32 %v6057, %v6069
        %v6071 = vpop.f32.mrf.mxu0
        %6072 = vdwg.mxu0
        %6073 = vmatpush.bf16.msra.mxu0 %v5898
        %6074 = vmatpush.bf16.msra.mxu0 %v5892
        %6075 = vmatpush.bf16.msra.mxu0 %v5886
        %6076 = vmatpush.bf16.msra.mxu0 %v5880
        %6077 = vmatpush.bf16.msra.mxu0 %v5874
        %6078 = vmatpush.bf16.msra.mxu0 %v5868
        %6079 = vmatpush.bf16.msra.mxu0 %v5862
        %6080 = vmatpush.bf16.msra.mxu0 %v5856
        %6081 = vmatmul.bf16.gmra.mxu0 %v5453
        %v6082 = vpop.f32.mrf.mxu0
        %v6083 = vadd.f32 %v5556, %v6082
        %v6084 = vpop.f32.mrf.mxu0
        %6085 = vdwg.mxu0
        %6086 = vmatpush.bf16.msra.mxu0 %v5946
        %6087 = vmatpush.bf16.msra.mxu0 %v5940
        %6088 = vmatpush.bf16.msra.mxu0 %v5934
        %6089 = vmatpush.bf16.msra.mxu0 %v5928
        %6090 = vmatpush.bf16.msra.mxu0 %v5922
        %6091 = vmatpush.bf16.msra.mxu0 %v5916
        %6092 = vmatpush.bf16.msra.mxu0 %v5910
        %6093 = vmatpush.bf16.msra.mxu0 %v5904
        %6094 = vmatmul.bf16.gmra.mxu0 %v5454
        %v6095 = vpop.f32.mrf.mxu0
        %v6096 = vadd.f32 %v6083, %v6095
        %v6097 = vpop.f32.mrf.mxu0
        %6098 = vdwg.mxu0
        %6099 = vmatpush.bf16.msra.mxu0 %v5899
        %6100 = vmatpush.bf16.msra.mxu0 %v5893
        %6101 = vmatpush.bf16.msra.mxu0 %v5887
        %6102 = vmatpush.bf16.msra.mxu0 %v5881
        %6103 = vmatpush.bf16.msra.mxu0 %v5875
        %6104 = vmatpush.bf16.msra.mxu0 %v5869
        %6105 = vmatpush.bf16.msra.mxu0 %v5863
        %6106 = vmatpush.bf16.msra.mxu0 %v5857
        %6107 = vmatmul.bf16.gmra.mxu0 %v5453
        %v6108 = vpop.f32.mrf.mxu0
        %v6109 = vadd.f32 %v5557, %v6108
        %v6110 = vpop.f32.mrf.mxu0
        %6111 = vdwg.mxu0
        %6112 = vmatpush.bf16.msra.mxu0 %v5947
        %6113 = vmatpush.bf16.msra.mxu0 %v5941
        %6114 = vmatpush.bf16.msra.mxu0 %v5935
        %6115 = vmatpush.bf16.msra.mxu0 %v5929
        %6116 = vmatpush.bf16.msra.mxu0 %v5923
        %6117 = vmatpush.bf16.msra.mxu0 %v5917
        %6118 = vmatpush.bf16.msra.mxu0 %v5911
        %6119 = vmatpush.bf16.msra.mxu0 %v5905
        %6120 = vmatmul.bf16.gmra.mxu0 %v5454
        %v6121 = vpop.f32.mrf.mxu0
        %v6122 = vadd.f32 %v6109, %v6121
        %v6123 = vpop.f32.mrf.mxu0
        %6124 = vdwg.mxu0
        %6125 = vmatpush.bf16.msra.mxu0 %v5900
        %6126 = vmatpush.bf16.msra.mxu0 %v5894
        %6127 = vmatpush.bf16.msra.mxu0 %v5888
        %6128 = vmatpush.bf16.msra.mxu0 %v5882
        %6129 = vmatpush.bf16.msra.mxu0 %v5876
        %6130 = vmatpush.bf16.msra.mxu0 %v5870
        %6131 = vmatpush.bf16.msra.mxu0 %v5864
        %6132 = vmatpush.bf16.msra.mxu0 %v5858
        %6133 = vmatmul.bf16.gmra.mxu0 %v5453
        %v6134 = vpop.f32.mrf.mxu0
        %v6135 = vadd.f32 %v5558, %v6134
        %v6136 = vpop.f32.mrf.mxu0
        %6137 = vdwg.mxu0
        %6138 = vmatpush.bf16.msra.mxu0 %v5948
        %6139 = vmatpush.bf16.msra.mxu0 %v5942
        %6140 = vmatpush.bf16.msra.mxu0 %v5936
        %6141 = vmatpush.bf16.msra.mxu0 %v5930
        %6142 = vmatpush.bf16.msra.mxu0 %v5924
        %6143 = vmatpush.bf16.msra.mxu0 %v5918
        %6144 = vmatpush.bf16.msra.mxu0 %v5912
        %6145 = vmatpush.bf16.msra.mxu0 %v5906
        %6146 = vmatmul.bf16.gmra.mxu0 %v5454
        %v6147 = vpop.f32.mrf.mxu0
        %v6148 = vadd.f32 %v6135, %v6147
        %v6149 = vpop.f32.mrf.mxu0
        %6150 = vdwg.mxu0
        %6151 = vmatpush.bf16.msra.mxu0 %v5901
        %6152 = vmatpush.bf16.msra.mxu0 %v5895
        %6153 = vmatpush.bf16.msra.mxu0 %v5889
        %6154 = vmatpush.bf16.msra.mxu0 %v5883
        %6155 = vmatpush.bf16.msra.mxu0 %v5877
        %6156 = vmatpush.bf16.msra.mxu0 %v5871
        %6157 = vmatpush.bf16.msra.mxu0 %v5865
        %6158 = vmatpush.bf16.msra.mxu0 %v5859
        %6159 = vmatmul.bf16.gmra.mxu0 %v5453
        %v6160 = vpop.f32.mrf.mxu0
        %v6161 = vadd.f32 %v5559, %v6160
        %v6162 = vpop.f32.mrf.mxu0
        %6163 = vdwg.mxu0
        %6164 = vmatpush.bf16.msra.mxu0 %v5949
        %6165 = vmatpush.bf16.msra.mxu0 %v5943
        %6166 = vmatpush.bf16.msra.mxu0 %v5937
        %6167 = vmatpush.bf16.msra.mxu0 %v5931
        %6168 = vmatpush.bf16.msra.mxu0 %v5925
        %6169 = vmatpush.bf16.msra.mxu0 %v5919
        %6170 = vmatpush.bf16.msra.mxu0 %v5913
        %6171 = vmatpush.bf16.msra.mxu0 %v5907
        %6172 = vmatmul.bf16.gmra.mxu0 %v5454
        %v6173 = vpop.f32.mrf.mxu0
        %v6174 = vadd.f32 %v6161, %v6173
        %v6175 = vpop.f32.mrf.mxu0
        %6176 = vdwg.mxu0
        %6177 = vmatpush.bf16.msra.mxu0 %v5902
        %6178 = vmatpush.bf16.msra.mxu0 %v5896
        %6179 = vmatpush.bf16.msra.mxu0 %v5890
        %6180 = vmatpush.bf16.msra.mxu0 %v5884
        %6181 = vmatpush.bf16.msra.mxu0 %v5878
        %6182 = vmatpush.bf16.msra.mxu0 %v5872
        %6183 = vmatpush.bf16.msra.mxu0 %v5866
        %6184 = vmatpush.bf16.msra.mxu0 %v5860
        %6185 = vmatmul.bf16.gmra.mxu0 %v5453
        %v6186 = vpop.f32.mrf.mxu0
        %v6187 = vadd.f32 %v5560, %v6186
        %v6188 = vpop.f32.mrf.mxu0
        %6189 = vdwg.mxu0
        %6190 = vmatpush.bf16.msra.mxu0 %v5950
        %6191 = vmatpush.bf16.msra.mxu0 %v5944
        %6192 = vmatpush.bf16.msra.mxu0 %v5938
        %6193 = vmatpush.bf16.msra.mxu0 %v5932
        %6194 = vmatpush.bf16.msra.mxu0 %v5926
        %6195 = vmatpush.bf16.msra.mxu0 %v5920
        %6196 = vmatpush.bf16.msra.mxu0 %v5914
        %6197 = vmatpush.bf16.msra.mxu0 %v5908
        %6198 = vmatmul.bf16.gmra.mxu0 %v5454
        %v6199 = vpop.f32.mrf.mxu0
        %v6200 = vadd.f32 %v6187, %v6199
        %v6201 = vpop.f32.mrf.mxu0
        %6202 = vdwg.mxu0
        %s6203 = scalar_lea.vmem [#allocation7], 256
        %v6204 = vld [vmem:[%s6203] sm:$0xff]
        %v6205 = vld [vmem:[%s6203 + $0x8] sm:$0xff]
        %v6206 = vld [vmem:[%s6203 + $0x10] sm:$0xff]
        %v6207 = vld [vmem:[%s6203 + $0x18] sm:$0xff]
        %v6208 = vld [vmem:[%s6203 + $0x20] sm:$0xff]
        %v6209 = vld [vmem:[%s6203 + $0x28] sm:$0xff]
        %v6210 = vld [vmem:[%s6203 + $0x30] sm:$0xff]
        %v6211 = vld [vmem:[%s6203 + $0x38] sm:$0xff]
        %v6212 = vld [vmem:[%s6203 + $0x40] sm:$0xff]
        %v6213 = vld [vmem:[%s6203 + $0x48] sm:$0xff]
        %v6214 = vld [vmem:[%s6203 + $0x50] sm:$0xff]
        %v6215 = vld [vmem:[%s6203 + $0x58] sm:$0xff]
        %v6216 = vld [vmem:[%s6203 + $0x60] sm:$0xff]
        %v6217 = vld [vmem:[%s6203 + $0x68] sm:$0xff]
        %v6218 = vld [vmem:[%s6203 + $0x70] sm:$0xff]
        %v6219 = vld [vmem:[%s6203 + $0x78] sm:$0xff]
        %v6220 = vld [vmem:[%s6203 + $0x80] sm:$0xff]
        %v6221 = vld [vmem:[%s6203 + $0x88] sm:$0xff]
        %v6222 = vld [vmem:[%s6203 + $0x90] sm:$0xff]
        %v6223 = vld [vmem:[%s6203 + $0x98] sm:$0xff]
        %v6224 = vld [vmem:[%s6203 + $0xa0] sm:$0xff]
        %v6225 = vld [vmem:[%s6203 + $0xa8] sm:$0xff]
        %v6226 = vld [vmem:[%s6203 + $0xb0] sm:$0xff]
        %v6227 = vld [vmem:[%s6203 + $0xb8] sm:$0xff]
        %v6228 = vld [vmem:[%s6203 + $0xc0] sm:$0xff]
        %v6229 = vld [vmem:[%s6203 + $0xc8] sm:$0xff]
        %v6230 = vld [vmem:[%s6203 + $0xd0] sm:$0xff]
        %v6231 = vld [vmem:[%s6203 + $0xd8] sm:$0xff]
        %v6232 = vld [vmem:[%s6203 + $0xe0] sm:$0xff]
        %v6233 = vld [vmem:[%s6203 + $0xe8] sm:$0xff]
        %v6234 = vld [vmem:[%s6203 + $0xf0] sm:$0xff]
        %v6235 = vld [vmem:[%s6203 + $0xf8] sm:$0xff]
        %s6236 = scalar_lea.vmem %s8, 2
        %v6237 = vld [vmem:[%s6236] sm:$0x3]
        %6239 = vrot.lane.b32.xlu0 %v6070, 96
        %v6240 = vpop.permute.xlu0 %6239
        %6241 = vrot.lane.b32.xlu0 %v6070, 64
        %v6242 = vpop.permute.xlu0 %6241
        %6243 = vrot.lane.b32.xlu0 %v6070, 32
        %v6244 = vpop.permute.xlu0 %6243
        %6246 = vrot.lane.b32.xlu0 %v6096, 96
        %v6247 = vpop.permute.xlu0 %6246
        %6248 = vrot.lane.b32.xlu0 %v6096, 64
        %v6249 = vpop.permute.xlu0 %6248
        %6250 = vrot.lane.b32.xlu0 %v6096, 32
        %v6251 = vpop.permute.xlu0 %6250
        %6253 = vrot.lane.b32.xlu0 %v6122, 96
        %v6254 = vpop.permute.xlu0 %6253
        %6255 = vrot.lane.b32.xlu0 %v6122, 64
        %v6256 = vpop.permute.xlu0 %6255
        %6257 = vrot.lane.b32.xlu0 %v6122, 32
        %v6258 = vpop.permute.xlu0 %6257
        %6260 = vrot.lane.b32.xlu0 %v6148, 96
        %v6261 = vpop.permute.xlu0 %6260
        %6262 = vrot.lane.b32.xlu0 %v6148, 64
        %v6263 = vpop.permute.xlu0 %6262
        %6264 = vrot.lane.b32.xlu0 %v6148, 32
        %v6265 = vpop.permute.xlu0 %6264
        %6267 = vrot.lane.b32.xlu0 %v6174, 96
        %v6268 = vpop.permute.xlu0 %6267
        %6270 = vrot.lane.b32.xlu0 %v6174, 64
        %v6271 = vpop.permute.xlu0 %6270
        %6273 = vrot.lane.b32.xlu0 %v6174, 32
        %v6274 = vpop.permute.xlu0 %6273
        %6277 = vrot.lane.b32.xlu0 %v6200, 96
        %v6278 = vpop.permute.xlu0 %6277
        %6280 = vrot.lane.b32.xlu0 %v6200, 64
        %v6281 = vpop.permute.xlu0 %6280
        %6283 = vrot.lane.b32.xlu0 %v6200, 32
        %v6284 = vpop.permute.xlu0 %6283
        %v6286 = vsel %vm1974, %v6070, 0
        %v6288 = vsel %vm1974, %v6122, 0
        %6290 = vmatpush.xpose.msra.mxu0 0.0
        %6291 = vmatpush.xpose.msra.mxu0 0.0
        %6292 = vmatpush.xpose.msra.mxu0 0.0
        %6293 = vmatpush.xpose.msra.mxu0 0.0
        %6294 = vmatpush.xpose.msra.mxu0 0.0
        %6295 = vmatpush.xpose.msra.mxu0 0.0
        %6296 = vmatpush.xpose.msra.mxu0 0.0
        %6297 = vmatpush.xpose.msra.mxu0 0.0
        %6298 = vmatpush.xpose.msra.mxu0 0.0
        %6299 = vmatpush.xpose.msra.mxu0 0.0
        %6300 = vmatpush.xpose.msra.mxu0 0.0
        %6301 = vmatpush.xpose.msra.mxu0 0.0
        %6302 = vmatpush.xpose.msra.mxu0 0.0
        %6303 = vmatpush.xpose.msra.mxu0 0.0
        %6304 = vmatpush.xpose.msra.mxu0 0.0
        %6305 = vmatpush.xpose.msra.mxu0 %v6288
        %6306 = vmatmul.f32.gmra.mxu0 %v6286
        %v6307 = vpop.f32.mrf.mxu0
        %v6308 = vadd.f32 0.0, %v6307
        %6309 = vdwg.mxu0
        %v6310 = vsel %vm1974, %v6240, 0
        %v6312 = vsel %vm1974, %v6254, 0
        %6314 = vmatpush.xpose.msra.mxu0 0.0
        %6315 = vmatpush.xpose.msra.mxu0 0.0
        %6316 = vmatpush.xpose.msra.mxu0 0.0
        %6317 = vmatpush.xpose.msra.mxu0 0.0
        %6318 = vmatpush.xpose.msra.mxu0 0.0
        %6319 = vmatpush.xpose.msra.mxu0 0.0
        %6320 = vmatpush.xpose.msra.mxu0 0.0
        %6321 = vmatpush.xpose.msra.mxu0 0.0
        %6322 = vmatpush.xpose.msra.mxu0 0.0
        %6323 = vmatpush.xpose.msra.mxu0 0.0
        %6324 = vmatpush.xpose.msra.mxu0 0.0
        %6325 = vmatpush.xpose.msra.mxu0 0.0
        %6326 = vmatpush.xpose.msra.mxu0 0.0
        %6327 = vmatpush.xpose.msra.mxu0 0.0
        %6328 = vmatpush.xpose.msra.mxu0 0.0
        %6329 = vmatpush.xpose.msra.mxu0 %v6312
        %6330 = vmatmul.f32.gmra.mxu0 %v6310
        %v6331 = vpop.f32.mrf.mxu0
        %v6332 = vadd.f32 0.0, %v6331
        %6333 = vdwg.mxu0
        %v6334 = vsel %vm1974, %v6242, 0
        %v6336 = vsel %vm1974, %v6256, 0
        %6338 = vmatpush.xpose.msra.mxu0 0.0
        %6339 = vmatpush.xpose.msra.mxu0 0.0
        %6340 = vmatpush.xpose.msra.mxu0 0.0
        %6341 = vmatpush.xpose.msra.mxu0 0.0
        %6342 = vmatpush.xpose.msra.mxu0 0.0
        %6343 = vmatpush.xpose.msra.mxu0 0.0
        %6344 = vmatpush.xpose.msra.mxu0 0.0
        %6345 = vmatpush.xpose.msra.mxu0 0.0
        %6346 = vmatpush.xpose.msra.mxu0 0.0
        %6347 = vmatpush.xpose.msra.mxu0 0.0
        %6348 = vmatpush.xpose.msra.mxu0 0.0
        %6349 = vmatpush.xpose.msra.mxu0 0.0
        %6350 = vmatpush.xpose.msra.mxu0 0.0
        %6351 = vmatpush.xpose.msra.mxu0 0.0
        %6352 = vmatpush.xpose.msra.mxu0 0.0
        %6353 = vmatpush.xpose.msra.mxu0 %v6336
        %6354 = vmatmul.f32.gmra.mxu0 %v6334
        %v6355 = vpop.f32.mrf.mxu0
        %v6356 = vadd.f32 0.0, %v6355
        %6357 = vdwg.mxu0
        %v6358 = vsel %vm1974, %v6244, 0
        %v6360 = vsel %vm1974, %v6258, 0
        %6362 = vmatpush.xpose.msra.mxu0 0.0
        %6363 = vmatpush.xpose.msra.mxu0 0.0
        %6364 = vmatpush.xpose.msra.mxu0 0.0
        %6365 = vmatpush.xpose.msra.mxu0 0.0
        %6366 = vmatpush.xpose.msra.mxu0 0.0
        %6367 = vmatpush.xpose.msra.mxu0 0.0
        %6368 = vmatpush.xpose.msra.mxu0 0.0
        %6369 = vmatpush.xpose.msra.mxu0 0.0
        %6370 = vmatpush.xpose.msra.mxu0 0.0
        %6371 = vmatpush.xpose.msra.mxu0 0.0
        %6372 = vmatpush.xpose.msra.mxu0 0.0
        %6373 = vmatpush.xpose.msra.mxu0 0.0
        %6374 = vmatpush.xpose.msra.mxu0 0.0
        %6375 = vmatpush.xpose.msra.mxu0 0.0
        %6376 = vmatpush.xpose.msra.mxu0 0.0
        %6377 = vmatpush.xpose.msra.mxu0 %v6360
        %6378 = vmatmul.f32.gmra.mxu0 %v6358
        %v6379 = vpop.f32.mrf.mxu0
        %v6380 = vadd.f32 0.0, %v6379
        %6381 = vdwg.mxu0
        %v6382 = vsel %vm1974, %v6096, 0
        %v6384 = vsel %vm1974, %v6148, 0
        %6386 = vmatpush.xpose.msra.mxu0 0.0
        %6387 = vmatpush.xpose.msra.mxu0 0.0
        %6388 = vmatpush.xpose.msra.mxu0 0.0
        %6389 = vmatpush.xpose.msra.mxu0 0.0
        %6390 = vmatpush.xpose.msra.mxu0 0.0
        %6391 = vmatpush.xpose.msra.mxu0 0.0
        %6392 = vmatpush.xpose.msra.mxu0 0.0
        %6393 = vmatpush.xpose.msra.mxu0 0.0
        %6394 = vmatpush.xpose.msra.mxu0 0.0
        %6395 = vmatpush.xpose.msra.mxu0 0.0
        %6396 = vmatpush.xpose.msra.mxu0 0.0
        %6397 = vmatpush.xpose.msra.mxu0 0.0
        %6398 = vmatpush.xpose.msra.mxu0 0.0
        %6399 = vmatpush.xpose.msra.mxu0 0.0
        %6400 = vmatpush.xpose.msra.mxu0 0.0
        %6401 = vmatpush.xpose.msra.mxu0 %v6384
        %6402 = vmatmul.f32.gmra.mxu0 %v6382
        %v6403 = vpop.f32.mrf.mxu0
        %v6404 = vadd.f32 0.0, %v6403
        %6405 = vdwg.mxu0
        %v6406 = vsel %vm1974, %v6247, 0
        %v6408 = vsel %vm1974, %v6261, 0
        %6410 = vmatpush.xpose.msra.mxu0 0.0
        %6411 = vmatpush.xpose.msra.mxu0 0.0
        %6412 = vmatpush.xpose.msra.mxu0 0.0
        %6413 = vmatpush.xpose.msra.mxu0 0.0
        %6414 = vmatpush.xpose.msra.mxu0 0.0
        %6415 = vmatpush.xpose.msra.mxu0 0.0
        %6416 = vmatpush.xpose.msra.mxu0 0.0
        %6417 = vmatpush.xpose.msra.mxu0 0.0
        %6418 = vmatpush.xpose.msra.mxu0 0.0
        %6419 = vmatpush.xpose.msra.mxu0 0.0
        %6420 = vmatpush.xpose.msra.mxu0 0.0
        %6421 = vmatpush.xpose.msra.mxu0 0.0
        %6422 = vmatpush.xpose.msra.mxu0 0.0
        %6423 = vmatpush.xpose.msra.mxu0 0.0
        %6424 = vmatpush.xpose.msra.mxu0 0.0
        %6425 = vmatpush.xpose.msra.mxu0 %v6408
        %6426 = vmatmul.f32.gmra.mxu0 %v6406
        %v6427 = vpop.f32.mrf.mxu0
        %v6428 = vadd.f32 0.0, %v6427
        %6429 = vdwg.mxu0
        %v6430 = vsel %vm1974, %v6249, 0
        %v6432 = vsel %vm1974, %v6263, 0
        %6434 = vmatpush.xpose.msra.mxu0 0.0
        %6435 = vmatpush.xpose.msra.mxu0 0.0
        %6436 = vmatpush.xpose.msra.mxu0 0.0
        %6437 = vmatpush.xpose.msra.mxu0 0.0
        %6438 = vmatpush.xpose.msra.mxu0 0.0
        %6439 = vmatpush.xpose.msra.mxu0 0.0
        %6440 = vmatpush.xpose.msra.mxu0 0.0
        %6441 = vmatpush.xpose.msra.mxu0 0.0
        %6442 = vmatpush.xpose.msra.mxu0 0.0
        %6443 = vmatpush.xpose.msra.mxu0 0.0
        %6444 = vmatpush.xpose.msra.mxu0 0.0
        %6445 = vmatpush.xpose.msra.mxu0 0.0
        %6446 = vmatpush.xpose.msra.mxu0 0.0
        %6447 = vmatpush.xpose.msra.mxu0 0.0
        %6448 = vmatpush.xpose.msra.mxu0 0.0
        %6449 = vmatpush.xpose.msra.mxu0 %v6432
        %6450 = vmatmul.f32.gmra.mxu0 %v6430
        %v6451 = vpop.f32.mrf.mxu0
        %v6452 = vadd.f32 0.0, %v6451
        %6453 = vdwg.mxu0
        %v6454 = vsel %vm1974, %v6251, 0
        %v6456 = vsel %vm1974, %v6265, 0
        %6458 = vmatpush.xpose.msra.mxu0 0.0
        %6459 = vmatpush.xpose.msra.mxu0 0.0
        %6460 = vmatpush.xpose.msra.mxu0 0.0
        %6461 = vmatpush.xpose.msra.mxu0 0.0
        %6462 = vmatpush.xpose.msra.mxu0 0.0
        %6463 = vmatpush.xpose.msra.mxu0 0.0
        %6464 = vmatpush.xpose.msra.mxu0 0.0
        %6465 = vmatpush.xpose.msra.mxu0 0.0
        %6466 = vmatpush.xpose.msra.mxu0 0.0
        %6467 = vmatpush.xpose.msra.mxu0 0.0
        %6468 = vmatpush.xpose.msra.mxu0 0.0
        %6469 = vmatpush.xpose.msra.mxu0 0.0
        %6470 = vmatpush.xpose.msra.mxu0 0.0
        %6471 = vmatpush.xpose.msra.mxu0 0.0
        %6472 = vmatpush.xpose.msra.mxu0 0.0
        %6473 = vmatpush.xpose.msra.mxu0 %v6456
        %6474 = vmatmul.f32.gmra.mxu0 %v6454
        %v6475 = vpop.f32.mrf.mxu0
        %v6476 = vadd.f32 0.0, %v6475
        %6477 = vdwg.mxu0
        %v6478 = vmul.f32 %v6308, 0.17677669
        %v6479 = vmul.f32 %v6332, 0.17677669
        %v6480 = vmul.f32 %v6356, 0.17677669
        %v6481 = vmul.f32 %v6380, 0.17677669
        %v6482 = vmul.f32 %v6404, 0.17677669
        %v6483 = vmul.f32 %v6428, 0.17677669
        %v6484 = vmul.f32 %v6452, 0.17677669
        %v6485 = vmul.f32 %v6476, 0.17677669
        %v6486 = vsel %vm2176, %v6478, -1e+09
        %v6487 = vsel %vm2176, %v6479, -1e+09
        %v6488 = vsel %vm2176, %v6480, -1e+09
        %v6489 = vsel %vm2176, %v6481, -1e+09
        %v6490 = vsel %vm2176, %v6482, -1e+09
        %v6491 = vsel %vm2176, %v6483, -1e+09
        %v6492 = vsel %vm2176, %v6484, -1e+09
        %v6493 = vsel %vm2176, %v6485, -1e+09
        %v6494 = vsel %vm2185, %v6486, -inf
        %6495 = vmax.xlane.f32.xlu0 %v6494
        %v6496 = vpop.xlane.xlu0 %6495
        %v6497 = vsel %vm2185, %v6487, -inf
        %6498 = vmax.xlane.f32.xlu0 %v6497
        %v6499 = vpop.xlane.xlu0 %6498
        %v6500 = vsel %vm2185, %v6488, -inf
        %6501 = vmax.xlane.f32.xlu0 %v6500
        %v6502 = vpop.xlane.xlu0 %6501
        %v6503 = vsel %vm2185, %v6489, -inf
        %6504 = vmax.xlane.f32.xlu0 %v6503
        %v6505 = vpop.xlane.xlu0 %6504
        %v6506 = vsel %vm2185, %v6490, -inf
        %6507 = vmax.xlane.f32.xlu0 %v6506
        %v6508 = vpop.xlane.xlu0 %6507
        %v6509 = vsel %vm2185, %v6491, -inf
        %6510 = vmax.xlane.f32.xlu0 %v6509
        %v6511 = vpop.xlane.xlu0 %6510
        %v6512 = vsel %vm2185, %v6492, -inf
        %6513 = vmax.xlane.f32.xlu0 %v6512
        %v6514 = vpop.xlane.xlu0 %6513
        %v6515 = vsel %vm2185, %v6493, -inf
        %6516 = vmax.xlane.f32.xlu0 %v6515
        %v6517 = vpop.xlane.xlu0 %6516
        %v6518 = vsub.f32 %v6486, %v6496
        %v6519 = vsub.f32 %v6487, %v6499
        %v6520 = vsub.f32 %v6488, %v6502
        %v6521 = vsub.f32 %v6489, %v6505
        %v6522 = vsub.f32 %v6490, %v6508
        %v6523 = vsub.f32 %v6491, %v6511
        %v6524 = vsub.f32 %v6492, %v6514
        %v6525 = vsub.f32 %v6493, %v6517
        %v6526 = vmul.f32 %v6518, 1.442695
        %v6527 = vpow.pop %v6526
        %v6528 = vmul.f32 %v6519, 1.442695
        %v6529 = vpow.pop %v6528
        %v6530 = vmul.f32 %v6520, 1.442695
        %v6531 = vpow.pop %v6530
        %v6532 = vmul.f32 %v6521, 1.442695
        %v6533 = vpow.pop %v6532
        %v6534 = vmul.f32 %v6522, 1.442695
        %v6535 = vpow.pop %v6534
        %v6536 = vmul.f32 %v6523, 1.442695
        %v6537 = vpow.pop %v6536
        %v6538 = vmul.f32 %v6524, 1.442695
        %v6539 = vpow.pop %v6538
        %v6540 = vmul.f32 %v6525, 1.442695
        %v6541 = vpow.pop %v6540
        %v6542 = vsel %vm2185, %v6527, 0.0
        %6543 = vadd.xlane.f32.xlu0 %v6542
        %v6544 = vpop.xlane.xlu0 %6543
        %v6545 = vsel %vm2185, %v6529, 0.0
        %6546 = vadd.xlane.f32.xlu0 %v6545
        %v6547 = vpop.xlane.xlu0 %6546
        %v6548 = vsel %vm2185, %v6531, 0.0
        %6549 = vadd.xlane.f32.xlu0 %v6548
        %v6550 = vpop.xlane.xlu0 %6549
        %v6551 = vsel %vm2185, %v6533, 0.0
        %6552 = vadd.xlane.f32.xlu0 %v6551
        %v6553 = vpop.xlane.xlu0 %6552
        %v6554 = vsel %vm2185, %v6535, 0.0
        %6555 = vadd.xlane.f32.xlu0 %v6554
        %v6556 = vpop.xlane.xlu0 %6555
        %v6557 = vsel %vm2185, %v6537, 0.0
        %6558 = vadd.xlane.f32.xlu0 %v6557
        %v6559 = vpop.xlane.xlu0 %6558
        %v6560 = vsel %vm2185, %v6539, 0.0
        %6561 = vadd.xlane.f32.xlu0 %v6560
        %v6562 = vpop.xlane.xlu0 %6561
        %v6563 = vsel %vm2185, %v6541, 0.0
        %6564 = vadd.xlane.f32.xlu0 %v6563
        %v6565 = vpop.xlane.xlu0 %6564
        %v6566 = vrcp.pop %v6544
        %v6567 = vrcp.pop %v6547
        %v6568 = vrcp.pop %v6550
        %v6569 = vrcp.pop %v6553
        %v6570 = vrcp.pop %v6556
        %v6571 = vrcp.pop %v6559
        %v6572 = vrcp.pop %v6562
        %v6573 = vrcp.pop %v6565
        %v6574 = vmul.f32 %v6527, %v6566
        %v6575 = vmul.f32 %v6529, %v6567
        %v6576 = vmul.f32 %v6531, %v6568
        %v6577 = vmul.f32 %v6533, %v6569
        %v6578 = vmul.f32 %v6535, %v6570
        %v6579 = vmul.f32 %v6537, %v6571
        %v6580 = vmul.f32 %v6539, %v6572
        %v6581 = vmul.f32 %v6541, %v6573
        %v6583 = vsel %vm2185, %v6574, 0
        %6585 = vmatpush.msra.mxu0 0.0
        %6586 = vmatpush.msra.mxu0 0.0
        %6587 = vmatpush.msra.mxu0 0.0
        %6588 = vmatpush.msra.mxu0 0.0
        %6589 = vmatpush.msra.mxu0 0.0
        %6590 = vmatpush.msra.mxu0 0.0
        %6591 = vmatpush.msra.mxu0 0.0
        %6592 = vmatpush.msra.mxu0 0.0
        %6593 = vmatpush.msra.mxu0 0.0
        %6594 = vmatpush.msra.mxu0 0.0
        %6595 = vmatpush.msra.mxu0 0.0
        %6596 = vmatpush.msra.mxu0 0.0
        %6597 = vmatpush.msra.mxu0 0.0
        %6598 = vmatpush.msra.mxu0 0.0
        %6599 = vmatpush.msra.mxu0 0.0
        %6600 = vmatpush.msra.mxu0 %v6174
        %6601 = vmatmul.f32.gmra.mxu0 %v6583
        %v6602 = vpop.f32.mrf.mxu0
        %v6603 = vadd.f32 0.0, %v6602
        %6604 = vdwg.mxu0
        %v6606 = vsel %vm2185, %v6575, 0
        %6608 = vmatpush.msra.mxu0 0.0
        %6609 = vmatpush.msra.mxu0 0.0
        %6610 = vmatpush.msra.mxu0 0.0
        %6611 = vmatpush.msra.mxu0 0.0
        %6612 = vmatpush.msra.mxu0 0.0
        %6613 = vmatpush.msra.mxu0 0.0
        %6614 = vmatpush.msra.mxu0 0.0
        %6615 = vmatpush.msra.mxu0 0.0
        %6616 = vmatpush.msra.mxu0 0.0
        %6617 = vmatpush.msra.mxu0 0.0
        %6618 = vmatpush.msra.mxu0 0.0
        %6619 = vmatpush.msra.mxu0 0.0
        %6620 = vmatpush.msra.mxu0 0.0
        %6621 = vmatpush.msra.mxu0 0.0
        %6622 = vmatpush.msra.mxu0 0.0
        %6623 = vmatpush.msra.mxu0 %v6268
        %6624 = vmatmul.f32.gmra.mxu0 %v6606
        %v6625 = vpop.f32.mrf.mxu0
        %v6626 = vadd.f32 0.0, %v6625
        %6627 = vdwg.mxu0
        %v6629 = vsel %vm2185, %v6576, 0
        %6631 = vmatpush.msra.mxu0 0.0
        %6632 = vmatpush.msra.mxu0 0.0
        %6633 = vmatpush.msra.mxu0 0.0
        %6634 = vmatpush.msra.mxu0 0.0
        %6635 = vmatpush.msra.mxu0 0.0
        %6636 = vmatpush.msra.mxu0 0.0
        %6637 = vmatpush.msra.mxu0 0.0
        %6638 = vmatpush.msra.mxu0 0.0
        %6639 = vmatpush.msra.mxu0 0.0
        %6640 = vmatpush.msra.mxu0 0.0
        %6641 = vmatpush.msra.mxu0 0.0
        %6642 = vmatpush.msra.mxu0 0.0
        %6643 = vmatpush.msra.mxu0 0.0
        %6644 = vmatpush.msra.mxu0 0.0
        %6645 = vmatpush.msra.mxu0 0.0
        %6646 = vmatpush.msra.mxu0 %v6271
        %6647 = vmatmul.f32.gmra.mxu0 %v6629
        %v6648 = vpop.f32.mrf.mxu0
        %v6649 = vadd.f32 0.0, %v6648
        %6650 = vdwg.mxu0
        %v6652 = vsel %vm2185, %v6577, 0
        %6654 = vmatpush.msra.mxu0 0.0
        %6655 = vmatpush.msra.mxu0 0.0
        %6656 = vmatpush.msra.mxu0 0.0
        %6657 = vmatpush.msra.mxu0 0.0
        %6658 = vmatpush.msra.mxu0 0.0
        %6659 = vmatpush.msra.mxu0 0.0
        %6660 = vmatpush.msra.mxu0 0.0
        %6661 = vmatpush.msra.mxu0 0.0
        %6662 = vmatpush.msra.mxu0 0.0
        %6663 = vmatpush.msra.mxu0 0.0
        %6664 = vmatpush.msra.mxu0 0.0
        %6665 = vmatpush.msra.mxu0 0.0
        %6666 = vmatpush.msra.mxu0 0.0
        %6667 = vmatpush.msra.mxu0 0.0
        %6668 = vmatpush.msra.mxu0 0.0
        %6669 = vmatpush.msra.mxu0 %v6274
        %6670 = vmatmul.f32.gmra.mxu0 %v6652
        %v6671 = vpop.f32.mrf.mxu0
        %v6672 = vadd.f32 0.0, %v6671
        %6673 = vdwg.mxu0
        %v6675 = vsel %vm2185, %v6578, 0
        %6677 = vmatpush.msra.mxu0 0.0
        %6678 = vmatpush.msra.mxu0 0.0
        %6679 = vmatpush.msra.mxu0 0.0
        %6680 = vmatpush.msra.mxu0 0.0
        %6681 = vmatpush.msra.mxu0 0.0
        %6682 = vmatpush.msra.mxu0 0.0
        %6683 = vmatpush.msra.mxu0 0.0
        %6684 = vmatpush.msra.mxu0 0.0
        %6685 = vmatpush.msra.mxu0 0.0
        %6686 = vmatpush.msra.mxu0 0.0
        %6687 = vmatpush.msra.mxu0 0.0
        %6688 = vmatpush.msra.mxu0 0.0
        %6689 = vmatpush.msra.mxu0 0.0
        %6690 = vmatpush.msra.mxu0 0.0
        %6691 = vmatpush.msra.mxu0 0.0
        %6692 = vmatpush.msra.mxu0 %v6200
        %6693 = vmatmul.f32.gmra.mxu0 %v6675
        %v6694 = vpop.f32.mrf.mxu0
        %v6695 = vadd.f32 0.0, %v6694
        %6696 = vdwg.mxu0
        %v6698 = vsel %vm2185, %v6579, 0
        %6700 = vmatpush.msra.mxu0 0.0
        %6701 = vmatpush.msra.mxu0 0.0
        %6702 = vmatpush.msra.mxu0 0.0
        %6703 = vmatpush.msra.mxu0 0.0
        %6704 = vmatpush.msra.mxu0 0.0
        %6705 = vmatpush.msra.mxu0 0.0
        %6706 = vmatpush.msra.mxu0 0.0
        %6707 = vmatpush.msra.mxu0 0.0
        %6708 = vmatpush.msra.mxu0 0.0
        %6709 = vmatpush.msra.mxu0 0.0
        %6710 = vmatpush.msra.mxu0 0.0
        %6711 = vmatpush.msra.mxu0 0.0
        %6712 = vmatpush.msra.mxu0 0.0
        %6713 = vmatpush.msra.mxu0 0.0
        %6714 = vmatpush.msra.mxu0 0.0
        %6715 = vmatpush.msra.mxu0 %v6278
        %6716 = vmatmul.f32.gmra.mxu0 %v6698
        %v6717 = vpop.f32.mrf.mxu0
        %v6718 = vadd.f32 0.0, %v6717
        %6719 = vdwg.mxu0
        %v6721 = vsel %vm2185, %v6580, 0
        %6723 = vmatpush.msra.mxu0 0.0
        %6724 = vmatpush.msra.mxu0 0.0
        %6725 = vmatpush.msra.mxu0 0.0
        %6726 = vmatpush.msra.mxu0 0.0
        %6727 = vmatpush.msra.mxu0 0.0
        %6728 = vmatpush.msra.mxu0 0.0
        %6729 = vmatpush.msra.mxu0 0.0
        %6730 = vmatpush.msra.mxu0 0.0
        %6731 = vmatpush.msra.mxu0 0.0
        %6732 = vmatpush.msra.mxu0 0.0
        %6733 = vmatpush.msra.mxu0 0.0
        %6734 = vmatpush.msra.mxu0 0.0
        %6735 = vmatpush.msra.mxu0 0.0
        %6736 = vmatpush.msra.mxu0 0.0
        %6737 = vmatpush.msra.mxu0 0.0
        %6738 = vmatpush.msra.mxu0 %v6281
        %6739 = vmatmul.f32.gmra.mxu0 %v6721
        %v6740 = vpop.f32.mrf.mxu0
        %v6741 = vadd.f32 0.0, %v6740
        %6742 = vdwg.mxu0
        %v6744 = vsel %vm2185, %v6581, 0
        %6746 = vmatpush.msra.mxu0 0.0
        %6747 = vmatpush.msra.mxu0 0.0
        %6748 = vmatpush.msra.mxu0 0.0
        %6749 = vmatpush.msra.mxu0 0.0
        %6750 = vmatpush.msra.mxu0 0.0
        %6751 = vmatpush.msra.mxu0 0.0
        %6752 = vmatpush.msra.mxu0 0.0
        %6753 = vmatpush.msra.mxu0 0.0
        %6754 = vmatpush.msra.mxu0 0.0
        %6755 = vmatpush.msra.mxu0 0.0
        %6756 = vmatpush.msra.mxu0 0.0
        %6757 = vmatpush.msra.mxu0 0.0
        %6758 = vmatpush.msra.mxu0 0.0
        %6759 = vmatpush.msra.mxu0 0.0
        %6760 = vmatpush.msra.mxu0 0.0
        %6761 = vmatpush.msra.mxu0 %v6284
        %6762 = vmatmul.f32.gmra.mxu0 %v6744
        %v6763 = vpop.f32.mrf.mxu0
        %v6764 = vadd.f32 0.0, %v6763
        %6765 = vdwg.mxu0
        %6767 = vrot.lane.b32.xlu0 %v6626, 32
        %v6768 = vpop.permute.xlu0 %6767
        %6771 = vrot.lane.b32.xlu0 %v6649, 64
        %v6772 = vpop.permute.xlu0 %6771
        %6775 = vrot.lane.b32.xlu0 %v6672, 96
        %v6776 = vpop.permute.xlu0 %6775
        %6779 = vrot.lane.b32.xlu0 %v6718, 32
        %v6780 = vpop.permute.xlu0 %6779
        %6783 = vrot.lane.b32.xlu0 %v6741, 64
        %v6784 = vpop.permute.xlu0 %6783
        %6787 = vrot.lane.b32.xlu0 %v6764, 96
        %v6788 = vpop.permute.xlu0 %6787
        %v6790 = vsel %vm1974, %v6603, %v6768
        %v6791 = vsel %vm2483, %v6790, %v6772
        %v6792 = vsel %vm2485, %v6791, %v6776
        %v6793 = vsel %vm1974, %v6695, %v6780
        %v6794 = vsel %vm2483, %v6793, %v6784
        %v6795 = vsel %vm2485, %v6794, %v6788
        %v6796 = vpack.c.bf16 %v6792, %v6792
        %v6797 = vpack.c.bf16 %v6795, %v6795
        %v6799 = vperm.slane %v6237, 0
        %v6800 = vperm.slane %v6237, 1
        %v6835 = vunpack.c.l.b16 %v6204
        %v6836 = vunpack.c.h.b16 %v6204
        %v6837 = vunpack.c.l.b16 %v6205
        %v6838 = vunpack.c.h.b16 %v6205
        %v6839 = vunpack.c.l.b16 %v6206
        %v6840 = vunpack.c.h.b16 %v6206
        %v6841 = vunpack.c.l.b16 %v6207
        %v6842 = vunpack.c.h.b16 %v6207
        %v6843 = vunpack.c.l.b16 %v6208
        %v6844 = vunpack.c.h.b16 %v6208
        %v6845 = vunpack.c.l.b16 %v6209
        %v6846 = vunpack.c.h.b16 %v6209
        %v6847 = vunpack.c.l.b16 %v6210
        %v6848 = vunpack.c.h.b16 %v6210
        %v6849 = vunpack.c.l.b16 %v6211
        %v6850 = vunpack.c.h.b16 %v6211
        %v6851 = vunpack.c.l.b16 %v6212
        %v6852 = vunpack.c.h.b16 %v6212
        %v6853 = vunpack.c.l.b16 %v6213
        %v6854 = vunpack.c.h.b16 %v6213
        %v6855 = vunpack.c.l.b16 %v6214
        %v6856 = vunpack.c.h.b16 %v6214
        %v6857 = vunpack.c.l.b16 %v6215
        %v6858 = vunpack.c.h.b16 %v6215
        %v6859 = vunpack.c.l.b16 %v6216
        %v6860 = vunpack.c.h.b16 %v6216
        %v6861 = vunpack.c.l.b16 %v6217
        %v6862 = vunpack.c.h.b16 %v6217
        %v6863 = vunpack.c.l.b16 %v6218
        %v6864 = vunpack.c.h.b16 %v6218
        %v6865 = vunpack.c.l.b16 %v6219
        %v6866 = vunpack.c.h.b16 %v6219
        %v6867 = vunpack.c.l.b16 %v6220
        %v6868 = vunpack.c.h.b16 %v6220
        %v6869 = vunpack.c.l.b16 %v6221
        %v6870 = vunpack.c.h.b16 %v6221
        %v6871 = vunpack.c.l.b16 %v6222
        %v6872 = vunpack.c.h.b16 %v6222
        %v6873 = vunpack.c.l.b16 %v6223
        %v6874 = vunpack.c.h.b16 %v6223
        %v6875 = vunpack.c.l.b16 %v6224
        %v6876 = vunpack.c.h.b16 %v6224
        %v6877 = vunpack.c.l.b16 %v6225
        %v6878 = vunpack.c.h.b16 %v6225
        %v6879 = vunpack.c.l.b16 %v6226
        %v6880 = vunpack.c.h.b16 %v6226
        %v6881 = vunpack.c.l.b16 %v6227
        %v6882 = vunpack.c.h.b16 %v6227
        %v6883 = vunpack.c.l.b16 %v6228
        %v6884 = vunpack.c.h.b16 %v6228
        %v6885 = vunpack.c.l.b16 %v6229
        %v6886 = vunpack.c.h.b16 %v6229
        %v6887 = vunpack.c.l.b16 %v6230
        %v6888 = vunpack.c.h.b16 %v6230
        %v6889 = vunpack.c.l.b16 %v6231
        %v6890 = vunpack.c.h.b16 %v6231
        %v6891 = vunpack.c.l.b16 %v6232
        %v6892 = vunpack.c.h.b16 %v6232
        %v6893 = vunpack.c.l.b16 %v6233
        %v6894 = vunpack.c.h.b16 %v6233
        %v6895 = vunpack.c.l.b16 %v6234
        %v6896 = vunpack.c.h.b16 %v6234
        %v6897 = vunpack.c.l.b16 %v6235
        %v6898 = vunpack.c.h.b16 %v6235
        %v6899 = vpack.c.b16 %v6837, %v6835
        %v6900 = vpack.c.b16 %v6838, %v6836
        %v6901 = vpack.c.b16 %v6841, %v6839
        %v6902 = vpack.c.b16 %v6842, %v6840
        %v6903 = vpack.c.b16 %v6845, %v6843
        %v6904 = vpack.c.b16 %v6846, %v6844
        %v6905 = vpack.c.b16 %v6849, %v6847
        %v6906 = vpack.c.b16 %v6850, %v6848
        %v6907 = vpack.c.b16 %v6853, %v6851
        %v6908 = vpack.c.b16 %v6854, %v6852
        %v6909 = vpack.c.b16 %v6857, %v6855
        %v6910 = vpack.c.b16 %v6858, %v6856
        %v6911 = vpack.c.b16 %v6861, %v6859
        %v6912 = vpack.c.b16 %v6862, %v6860
        %v6913 = vpack.c.b16 %v6865, %v6863
        %v6914 = vpack.c.b16 %v6866, %v6864
        %v6915 = vpack.c.b16 %v6869, %v6867
        %v6916 = vpack.c.b16 %v6870, %v6868
        %v6917 = vpack.c.b16 %v6873, %v6871
        %v6918 = vpack.c.b16 %v6874, %v6872
        %v6919 = vpack.c.b16 %v6877, %v6875
        %v6920 = vpack.c.b16 %v6878, %v6876
        %v6921 = vpack.c.b16 %v6881, %v6879
        %v6922 = vpack.c.b16 %v6882, %v6880
        %v6923 = vpack.c.b16 %v6885, %v6883
        %v6924 = vpack.c.b16 %v6886, %v6884
        %v6925 = vpack.c.b16 %v6889, %v6887
        %v6926 = vpack.c.b16 %v6890, %v6888
        %v6927 = vpack.c.b16 %v6893, %v6891
        %v6928 = vpack.c.b16 %v6894, %v6892
        %v6929 = vpack.c.b16 %v6897, %v6895
        %v6930 = vpack.c.b16 %v6898, %v6896
        %6963 = vmatpush.bf16.msra.mxu0 %v6913
        %6964 = vmatpush.bf16.msra.mxu0 %v6911
        %6965 = vmatpush.bf16.msra.mxu0 %v6909
        %6966 = vmatpush.bf16.msra.mxu0 %v6907
        %6967 = vmatpush.bf16.msra.mxu0 %v6905
        %6968 = vmatpush.bf16.msra.mxu0 %v6903
        %6969 = vmatpush.bf16.msra.mxu0 %v6901
        %6970 = vmatpush.bf16.msra.mxu0 %v6899
        %6971 = vmatmul.bf16.gmra.mxu0 %v6796
        %v6972 = vpop.f32.mrf.mxu0
        %v6973 = vadd.f32 %v6799, %v6972
        %v6974 = vpop.f32.mrf.mxu0
        %6975 = vdwg.mxu0
        %6976 = vmatpush.bf16.msra.mxu0 %v6929
        %6977 = vmatpush.bf16.msra.mxu0 %v6927
        %6978 = vmatpush.bf16.msra.mxu0 %v6925
        %6979 = vmatpush.bf16.msra.mxu0 %v6923
        %6980 = vmatpush.bf16.msra.mxu0 %v6921
        %6981 = vmatpush.bf16.msra.mxu0 %v6919
        %6982 = vmatpush.bf16.msra.mxu0 %v6917
        %6983 = vmatpush.bf16.msra.mxu0 %v6915
        %6984 = vmatmul.bf16.gmra.mxu0 %v6797
        %v6985 = vpop.f32.mrf.mxu0
        %v6986 = vadd.f32 %v6973, %v6985
        %v6987 = vpop.f32.mrf.mxu0
        %6988 = vdwg.mxu0
        %6989 = vmatpush.bf16.msra.mxu0 %v6914
        %6990 = vmatpush.bf16.msra.mxu0 %v6912
        %6991 = vmatpush.bf16.msra.mxu0 %v6910
        %6992 = vmatpush.bf16.msra.mxu0 %v6908
        %6993 = vmatpush.bf16.msra.mxu0 %v6906
        %6994 = vmatpush.bf16.msra.mxu0 %v6904
        %6995 = vmatpush.bf16.msra.mxu0 %v6902
        %6996 = vmatpush.bf16.msra.mxu0 %v6900
        %6997 = vmatmul.bf16.gmra.mxu0 %v6796
        %v6998 = vpop.f32.mrf.mxu0
        %v6999 = vadd.f32 %v6800, %v6998
        %v7000 = vpop.f32.mrf.mxu0
        %7001 = vdwg.mxu0
        %7002 = vmatpush.bf16.msra.mxu0 %v6930
        %7003 = vmatpush.bf16.msra.mxu0 %v6928
        %7004 = vmatpush.bf16.msra.mxu0 %v6926
        %7005 = vmatpush.bf16.msra.mxu0 %v6924
        %7006 = vmatpush.bf16.msra.mxu0 %v6922
        %7007 = vmatpush.bf16.msra.mxu0 %v6920
        %7008 = vmatpush.bf16.msra.mxu0 %v6918
        %7009 = vmatpush.bf16.msra.mxu0 %v6916
        %7010 = vmatmul.bf16.gmra.mxu0 %v6797
        %v7011 = vpop.f32.mrf.mxu0
        %v7012 = vadd.f32 %v6999, %v7011
        %v7013 = vpop.f32.mrf.mxu0
        %7014 = vdwg.mxu0
        %v7015 = vadd.f32 %v5408, %v6986
        %v7016 = vadd.f32 %v5409, %v7012
        %s7017 = scalar_lea.vmem [#allocation8], 2
        %v7018 = vld [vmem:[%s7017] sm:$0x3]
        %s7019 = scalar_lea.vmem [#allocation10], 2
        %v7020 = vld [vmem:[%s7019] sm:$0x3]
        %v7021 = vadd.f32 %v7015, %v7016
        %7022 = vadd.xlane.f32.xlu0 %v7021
        %v7023 = vpop.xlane.xlu0 %7022
        %v7024 = vmul.f32 %v7023, %v1108
        %v7025 = vsub.f32 %v7015, %v7024
        %v7026 = vsub.f32 %v7016, %v7024
        %v7027 = vmul.f32 %v7025, %v7025
        %v7028 = vmul.f32 %v7026, %v7026
        %v7029 = vadd.f32 %v7027, %v7028
        %7030 = vadd.xlane.f32.xlu0 %v7029
        %v7031 = vpop.xlane.xlu0 %7030
        %v7032 = vmul.f32 %v7031, %v1108
        %v7033 = vadd.f32 %v7032, 1e-05
        %v7034 = vrsqrt.pop %v7033
        %v7035 = vmul.f32 %v7034, %v7033
        %v7036 = vmul.f32 %v7035, %v7034
        %v7037 = vmul.f32 0.5, %v7036
        %v7038 = vsub.f32 1.5, %v7037
        %v7039 = vmul.f32 %v7034, %v7038
        %vm7040 = vweird.f32 %v7033
        %vm7041 = vweird.f32 %v7034
        %vm7042 = vmor %vm7040, %vm7041
        %v7043 = vsel %vm7042, %v7034, %v7039
        %v7044 = vmul.f32 %v7025, %v7043
        %v7045 = vmul.f32 %v7026, %v7043
        %v7047 = vperm.slane %v7018, 0
        %v7048 = vperm.slane %v7018, 1
        %v7051 = vmul.f32 %v7044, %v7047
        %v7052 = vmul.f32 %v7045, %v7048
        %v7054 = vperm.slane %v7020, 0
        %v7055 = vperm.slane %v7020, 1
        %v7058 = vadd.f32 %v7051, %v7054
        %v7059 = vadd.f32 %v7052, %v7055
        %v7060 = vpack.c.bf16 %v7058, %v7058
        %v7061 = vpack.c.bf16 %v7059, %v7059
        %s7062 = scalar_lea.vmem [#allocation11], 256
        %v7063 = vld [vmem:[%s7062] sm:$0xff]
        %v7064 = vld [vmem:[%s7062 + $0x8] sm:$0xff]
        %v7065 = vld [vmem:[%s7062 + $0x10] sm:$0xff]
        %v7066 = vld [vmem:[%s7062 + $0x18] sm:$0xff]
        %v7067 = vld [vmem:[%s7062 + $0x20] sm:$0xff]
        %v7068 = vld [vmem:[%s7062 + $0x28] sm:$0xff]
        %v7069 = vld [vmem:[%s7062 + $0x30] sm:$0xff]
        %v7070 = vld [vmem:[%s7062 + $0x38] sm:$0xff]
        %v7071 = vld [vmem:[%s7062 + $0x40] sm:$0xff]
        %v7072 = vld [vmem:[%s7062 + $0x48] sm:$0xff]
        %v7073 = vld [vmem:[%s7062 + $0x50] sm:$0xff]
        %v7074 = vld [vmem:[%s7062 + $0x58] sm:$0xff]
        %v7075 = vld [vmem:[%s7062 + $0x60] sm:$0xff]
        %v7076 = vld [vmem:[%s7062 + $0x68] sm:$0xff]
        %v7077 = vld [vmem:[%s7062 + $0x70] sm:$0xff]
        %v7078 = vld [vmem:[%s7062 + $0x78] sm:$0xff]
        %v7079 = vld [vmem:[%s7062 + $0x80] sm:$0xff]
        %v7080 = vld [vmem:[%s7062 + $0x88] sm:$0xff]
        %v7081 = vld [vmem:[%s7062 + $0x90] sm:$0xff]
        %v7082 = vld [vmem:[%s7062 + $0x98] sm:$0xff]
        %v7083 = vld [vmem:[%s7062 + $0xa0] sm:$0xff]
        %v7084 = vld [vmem:[%s7062 + $0xa8] sm:$0xff]
        %v7085 = vld [vmem:[%s7062 + $0xb0] sm:$0xff]
        %v7086 = vld [vmem:[%s7062 + $0xb8] sm:$0xff]
        %v7087 = vld [vmem:[%s7062 + $0xc0] sm:$0xff]
        %v7088 = vld [vmem:[%s7062 + $0xc8] sm:$0xff]
        %v7089 = vld [vmem:[%s7062 + $0xd0] sm:$0xff]
        %v7090 = vld [vmem:[%s7062 + $0xd8] sm:$0xff]
        %v7091 = vld [vmem:[%s7062 + $0xe0] sm:$0xff]
        %v7092 = vld [vmem:[%s7062 + $0xe8] sm:$0xff]
        %v7093 = vld [vmem:[%s7062 + $0xf0] sm:$0xff]
        %v7094 = vld [vmem:[%s7062 + $0xf8] sm:$0xff]
        %s7095 = scalar_lea.vmem [#allocation13], 2
        %v7096 = vld [vmem:[%s7095] sm:$0x3]
        %v7098 = vperm.slane %v7096, 0
        %v7099 = vperm.slane %v7096, 1
        %v7134 = vunpack.c.l.b16 %v7063
        %v7135 = vunpack.c.h.b16 %v7063
        %v7136 = vunpack.c.l.b16 %v7064
        %v7137 = vunpack.c.h.b16 %v7064
        %v7138 = vunpack.c.l.b16 %v7065
        %v7139 = vunpack.c.h.b16 %v7065
        %v7140 = vunpack.c.l.b16 %v7066
        %v7141 = vunpack.c.h.b16 %v7066
        %v7142 = vunpack.c.l.b16 %v7067
        %v7143 = vunpack.c.h.b16 %v7067
        %v7144 = vunpack.c.l.b16 %v7068
        %v7145 = vunpack.c.h.b16 %v7068
        %v7146 = vunpack.c.l.b16 %v7069
        %v7147 = vunpack.c.h.b16 %v7069
        %v7148 = vunpack.c.l.b16 %v7070
        %v7149 = vunpack.c.h.b16 %v7070
        %v7150 = vunpack.c.l.b16 %v7071
        %v7151 = vunpack.c.h.b16 %v7071
        %v7152 = vunpack.c.l.b16 %v7072
        %v7153 = vunpack.c.h.b16 %v7072
        %v7154 = vunpack.c.l.b16 %v7073
        %v7155 = vunpack.c.h.b16 %v7073
        %v7156 = vunpack.c.l.b16 %v7074
        %v7157 = vunpack.c.h.b16 %v7074
        %v7158 = vunpack.c.l.b16 %v7075
        %v7159 = vunpack.c.h.b16 %v7075
        %v7160 = vunpack.c.l.b16 %v7076
        %v7161 = vunpack.c.h.b16 %v7076
        %v7162 = vunpack.c.l.b16 %v7077
        %v7163 = vunpack.c.h.b16 %v7077
        %v7164 = vunpack.c.l.b16 %v7078
        %v7165 = vunpack.c.h.b16 %v7078
        %v7166 = vunpack.c.l.b16 %v7079
        %v7167 = vunpack.c.h.b16 %v7079
        %v7168 = vunpack.c.l.b16 %v7080
        %v7169 = vunpack.c.h.b16 %v7080
        %v7170 = vunpack.c.l.b16 %v7081
        %v7171 = vunpack.c.h.b16 %v7081
        %v7172 = vunpack.c.l.b16 %v7082
        %v7173 = vunpack.c.h.b16 %v7082
        %v7174 = vunpack.c.l.b16 %v7083
        %v7175 = vunpack.c.h.b16 %v7083
        %v7176 = vunpack.c.l.b16 %v7084
        %v7177 = vunpack.c.h.b16 %v7084
        %v7178 = vunpack.c.l.b16 %v7085
        %v7179 = vunpack.c.h.b16 %v7085
        %v7180 = vunpack.c.l.b16 %v7086
        %v7181 = vunpack.c.h.b16 %v7086
        %v7182 = vunpack.c.l.b16 %v7087
        %v7183 = vunpack.c.h.b16 %v7087
        %v7184 = vunpack.c.l.b16 %v7088
        %v7185 = vunpack.c.h.b16 %v7088
        %v7186 = vunpack.c.l.b16 %v7089
        %v7187 = vunpack.c.h.b16 %v7089
        %v7188 = vunpack.c.l.b16 %v7090
        %v7189 = vunpack.c.h.b16 %v7090
        %v7190 = vunpack.c.l.b16 %v7091
        %v7191 = vunpack.c.h.b16 %v7091
        %v7192 = vunpack.c.l.b16 %v7092
        %v7193 = vunpack.c.h.b16 %v7092
        %v7194 = vunpack.c.l.b16 %v7093
        %v7195 = vunpack.c.h.b16 %v7093
        %v7196 = vunpack.c.l.b16 %v7094
        %v7197 = vunpack.c.h.b16 %v7094
        %v7198 = vpack.c.b16 %v7136, %v7134
        %v7199 = vpack.c.b16 %v7137, %v7135
        %v7200 = vpack.c.b16 %v7140, %v7138
        %v7201 = vpack.c.b16 %v7141, %v7139
        %v7202 = vpack.c.b16 %v7144, %v7142
        %v7203 = vpack.c.b16 %v7145, %v7143
        %v7204 = vpack.c.b16 %v7148, %v7146
        %v7205 = vpack.c.b16 %v7149, %v7147
        %v7206 = vpack.c.b16 %v7152, %v7150
        %v7207 = vpack.c.b16 %v7153, %v7151
        %v7208 = vpack.c.b16 %v7156, %v7154
        %v7209 = vpack.c.b16 %v7157, %v7155
        %v7210 = vpack.c.b16 %v7160, %v7158
        %v7211 = vpack.c.b16 %v7161, %v7159
        %v7212 = vpack.c.b16 %v7164, %v7162
        %v7213 = vpack.c.b16 %v7165, %v7163
        %v7214 = vpack.c.b16 %v7168, %v7166
        %v7215 = vpack.c.b16 %v7169, %v7167
        %v7216 = vpack.c.b16 %v7172, %v7170
        %v7217 = vpack.c.b16 %v7173, %v7171
        %v7218 = vpack.c.b16 %v7176, %v7174
        %v7219 = vpack.c.b16 %v7177, %v7175
        %v7220 = vpack.c.b16 %v7180, %v7178
        %v7221 = vpack.c.b16 %v7181, %v7179
        %v7222 = vpack.c.b16 %v7184, %v7182
        %v7223 = vpack.c.b16 %v7185, %v7183
        %v7224 = vpack.c.b16 %v7188, %v7186
        %v7225 = vpack.c.b16 %v7189, %v7187
        %v7226 = vpack.c.b16 %v7192, %v7190
        %v7227 = vpack.c.b16 %v7193, %v7191
        %v7228 = vpack.c.b16 %v7196, %v7194
        %v7229 = vpack.c.b16 %v7197, %v7195
        %7262 = vmatpush.bf16.msra.mxu0 %v7212
        %7263 = vmatpush.bf16.msra.mxu0 %v7210
        %7264 = vmatpush.bf16.msra.mxu0 %v7208
        %7265 = vmatpush.bf16.msra.mxu0 %v7206
        %7266 = vmatpush.bf16.msra.mxu0 %v7204
        %7267 = vmatpush.bf16.msra.mxu0 %v7202
        %7268 = vmatpush.bf16.msra.mxu0 %v7200
        %7269 = vmatpush.bf16.msra.mxu0 %v7198
        %7270 = vmatmul.bf16.gmra.mxu0 %v7060
        %v7271 = vpop.f32.mrf.mxu0
        %v7272 = vadd.f32 %v7098, %v7271
        %v7273 = vpop.f32.mrf.mxu0
        %7274 = vdwg.mxu0
        %7275 = vmatpush.bf16.msra.mxu0 %v7228
        %7276 = vmatpush.bf16.msra.mxu0 %v7226
        %7277 = vmatpush.bf16.msra.mxu0 %v7224
        %7278 = vmatpush.bf16.msra.mxu0 %v7222
        %7279 = vmatpush.bf16.msra.mxu0 %v7220
        %7280 = vmatpush.bf16.msra.mxu0 %v7218
        %7281 = vmatpush.bf16.msra.mxu0 %v7216
        %7282 = vmatpush.bf16.msra.mxu0 %v7214
        %7283 = vmatmul.bf16.gmra.mxu0 %v7061
        %v7284 = vpop.f32.mrf.mxu0
        %v7285 = vadd.f32 %v7272, %v7284
        %v7286 = vpop.f32.mrf.mxu0
        %7287 = vdwg.mxu0
        %7288 = vmatpush.bf16.msra.mxu0 %v7213
        %7289 = vmatpush.bf16.msra.mxu0 %v7211
        %7290 = vmatpush.bf16.msra.mxu0 %v7209
        %7291 = vmatpush.bf16.msra.mxu0 %v7207
        %7292 = vmatpush.bf16.msra.mxu0 %v7205
        %7293 = vmatpush.bf16.msra.mxu0 %v7203
        %7294 = vmatpush.bf16.msra.mxu0 %v7201
        %7295 = vmatpush.bf16.msra.mxu0 %v7199
        %7296 = vmatmul.bf16.gmra.mxu0 %v7060
        %v7297 = vpop.f32.mrf.mxu0
        %v7298 = vadd.f32 %v7099, %v7297
        %v7299 = vpop.f32.mrf.mxu0
        %7300 = vdwg.mxu0
        %7301 = vmatpush.bf16.msra.mxu0 %v7229
        %7302 = vmatpush.bf16.msra.mxu0 %v7227
        %7303 = vmatpush.bf16.msra.mxu0 %v7225
        %7304 = vmatpush.bf16.msra.mxu0 %v7223
        %7305 = vmatpush.bf16.msra.mxu0 %v7221
        %7306 = vmatpush.bf16.msra.mxu0 %v7219
        %7307 = vmatpush.bf16.msra.mxu0 %v7217
        %7308 = vmatpush.bf16.msra.mxu0 %v7215
        %7309 = vmatmul.bf16.gmra.mxu0 %v7061
        %v7310 = vpop.f32.mrf.mxu0
        %v7311 = vadd.f32 %v7298, %v7310
        %v7312 = vpop.f32.mrf.mxu0
        %7313 = vdwg.mxu0
        %s7314 = scalar_lea.vmem [#allocation14], 512
        %v7315 = vld [vmem:[%s7314] sm:$0xff]
        %v7316 = vld [vmem:[%s7314 + $0x8] sm:$0xff]
        %v7317 = vld [vmem:[%s7314 + $0x10] sm:$0xff]
        %v7318 = vld [vmem:[%s7314 + $0x18] sm:$0xff]
        %v7319 = vld [vmem:[%s7314 + $0x20] sm:$0xff]
        %v7320 = vld [vmem:[%s7314 + $0x28] sm:$0xff]
        %v7321 = vld [vmem:[%s7314 + $0x30] sm:$0xff]
        %v7322 = vld [vmem:[%s7314 + $0x38] sm:$0xff]
        %v7323 = vld [vmem:[%s7314 + $0x40] sm:$0xff]
        %v7324 = vld [vmem:[%s7314 + $0x48] sm:$0xff]
        %v7325 = vld [vmem:[%s7314 + $0x50] sm:$0xff]
        %v7326 = vld [vmem:[%s7314 + $0x58] sm:$0xff]
        %v7327 = vld [vmem:[%s7314 + $0x60] sm:$0xff]
        %v7328 = vld [vmem:[%s7314 + $0x68] sm:$0xff]
        %v7329 = vld [vmem:[%s7314 + $0x70] sm:$0xff]
        %v7330 = vld [vmem:[%s7314 + $0x78] sm:$0xff]
        %v7331 = vld [vmem:[%s7314 + $0x80] sm:$0xff]
        %v7332 = vld [vmem:[%s7314 + $0x88] sm:$0xff]
        %v7333 = vld [vmem:[%s7314 + $0x90] sm:$0xff]
        %v7334 = vld [vmem:[%s7314 + $0x98] sm:$0xff]
        %v7335 = vld [vmem:[%s7314 + $0xa0] sm:$0xff]
        %v7336 = vld [vmem:[%s7314 + $0xa8] sm:$0xff]
        %v7337 = vld [vmem:[%s7314 + $0xb0] sm:$0xff]
        %v7338 = vld [vmem:[%s7314 + $0xb8] sm:$0xff]
        %v7339 = vld [vmem:[%s7314 + $0xc0] sm:$0xff]
        %v7340 = vld [vmem:[%s7314 + $0xc8] sm:$0xff]
        %v7341 = vld [vmem:[%s7314 + $0xd0] sm:$0xff]
        %v7342 = vld [vmem:[%s7314 + $0xd8] sm:$0xff]
        %v7343 = vld [vmem:[%s7314 + $0xe0] sm:$0xff]
        %v7344 = vld [vmem:[%s7314 + $0xe8] sm:$0xff]
        %v7345 = vld [vmem:[%s7314 + $0xf0] sm:$0xff]
        %v7346 = vld [vmem:[%s7314 + $0xf8] sm:$0xff]
        %v7347 = vld [vmem:[%s7314 + $0x100] sm:$0xff]
        %v7348 = vld [vmem:[%s7314 + $0x108] sm:$0xff]
        %v7349 = vld [vmem:[%s7314 + $0x110] sm:$0xff]
        %v7350 = vld [vmem:[%s7314 + $0x118] sm:$0xff]
        %v7351 = vld [vmem:[%s7314 + $0x120] sm:$0xff]
        %v7352 = vld [vmem:[%s7314 + $0x128] sm:$0xff]
        %v7353 = vld [vmem:[%s7314 + $0x130] sm:$0xff]
        %v7354 = vld [vmem:[%s7314 + $0x138] sm:$0xff]
        %v7355 = vld [vmem:[%s7314 + $0x140] sm:$0xff]
        %v7356 = vld [vmem:[%s7314 + $0x148] sm:$0xff]
        %v7357 = vld [vmem:[%s7314 + $0x150] sm:$0xff]
        %v7358 = vld [vmem:[%s7314 + $0x158] sm:$0xff]
        %v7359 = vld [vmem:[%s7314 + $0x160] sm:$0xff]
        %v7360 = vld [vmem:[%s7314 + $0x168] sm:$0xff]
        %v7361 = vld [vmem:[%s7314 + $0x170] sm:$0xff]
        %v7362 = vld [vmem:[%s7314 + $0x178] sm:$0xff]
        %v7363 = vld [vmem:[%s7314 + $0x180] sm:$0xff]
        %v7364 = vld [vmem:[%s7314 + $0x188] sm:$0xff]
        %v7365 = vld [vmem:[%s7314 + $0x190] sm:$0xff]
        %v7366 = vld [vmem:[%s7314 + $0x198] sm:$0xff]
        %v7367 = vld [vmem:[%s7314 + $0x1a0] sm:$0xff]
        %v7368 = vld [vmem:[%s7314 + $0x1a8] sm:$0xff]
        %v7369 = vld [vmem:[%s7314 + $0x1b0] sm:$0xff]
        %v7370 = vld [vmem:[%s7314 + $0x1b8] sm:$0xff]
        %v7371 = vld [vmem:[%s7314 + $0x1c0] sm:$0xff]
        %v7372 = vld [vmem:[%s7314 + $0x1c8] sm:$0xff]
        %v7373 = vld [vmem:[%s7314 + $0x1d0] sm:$0xff]
        %v7374 = vld [vmem:[%s7314 + $0x1d8] sm:$0xff]
        %v7375 = vld [vmem:[%s7314 + $0x1e0] sm:$0xff]
        %v7376 = vld [vmem:[%s7314 + $0x1e8] sm:$0xff]
        %v7377 = vld [vmem:[%s7314 + $0x1f0] sm:$0xff]
        %v7378 = vld [vmem:[%s7314 + $0x1f8] sm:$0xff]
        %s7379 = scalar_lea.vmem [#allocation16], 4
        %v7380 = vld [vmem:[%s7379] sm:$0xf]
        %v7382 = vperm.slane %v7380, 0
        %v7383 = vperm.slane %v7380, 1
        %v7384 = vperm.slane %v7380, 2
        %v7385 = vperm.slane %v7380, 3
        %v7454 = vunpack.c.l.b16 %v7315
        %v7455 = vunpack.c.h.b16 %v7315
        %v7456 = vunpack.c.l.b16 %v7316
        %v7457 = vunpack.c.h.b16 %v7316
        %v7458 = vunpack.c.l.b16 %v7317
        %v7459 = vunpack.c.h.b16 %v7317
        %v7460 = vunpack.c.l.b16 %v7318
        %v7461 = vunpack.c.h.b16 %v7318
        %v7462 = vunpack.c.l.b16 %v7319
        %v7463 = vunpack.c.h.b16 %v7319
        %v7464 = vunpack.c.l.b16 %v7320
        %v7465 = vunpack.c.h.b16 %v7320
        %v7466 = vunpack.c.l.b16 %v7321
        %v7467 = vunpack.c.h.b16 %v7321
        %v7468 = vunpack.c.l.b16 %v7322
        %v7469 = vunpack.c.h.b16 %v7322
        %v7470 = vunpack.c.l.b16 %v7323
        %v7471 = vunpack.c.h.b16 %v7323
        %v7472 = vunpack.c.l.b16 %v7324
        %v7473 = vunpack.c.h.b16 %v7324
        %v7474 = vunpack.c.l.b16 %v7325
        %v7475 = vunpack.c.h.b16 %v7325
        %v7476 = vunpack.c.l.b16 %v7326
        %v7477 = vunpack.c.h.b16 %v7326
        %v7478 = vunpack.c.l.b16 %v7327
        %v7479 = vunpack.c.h.b16 %v7327
        %v7480 = vunpack.c.l.b16 %v7328
        %v7481 = vunpack.c.h.b16 %v7328
        %v7482 = vunpack.c.l.b16 %v7329
        %v7483 = vunpack.c.h.b16 %v7329
        %v7484 = vunpack.c.l.b16 %v7330
        %v7485 = vunpack.c.h.b16 %v7330
        %v7486 = vunpack.c.l.b16 %v7331
        %v7487 = vunpack.c.h.b16 %v7331
        %v7488 = vunpack.c.l.b16 %v7332
        %v7489 = vunpack.c.h.b16 %v7332
        %v7490 = vunpack.c.l.b16 %v7333
        %v7491 = vunpack.c.h.b16 %v7333
        %v7492 = vunpack.c.l.b16 %v7334
        %v7493 = vunpack.c.h.b16 %v7334
        %v7494 = vunpack.c.l.b16 %v7335
        %v7495 = vunpack.c.h.b16 %v7335
        %v7496 = vunpack.c.l.b16 %v7336
        %v7497 = vunpack.c.h.b16 %v7336
        %v7498 = vunpack.c.l.b16 %v7337
        %v7499 = vunpack.c.h.b16 %v7337
        %v7500 = vunpack.c.l.b16 %v7338
        %v7501 = vunpack.c.h.b16 %v7338
        %v7502 = vunpack.c.l.b16 %v7339
        %v7503 = vunpack.c.h.b16 %v7339
        %v7504 = vunpack.c.l.b16 %v7340
        %v7505 = vunpack.c.h.b16 %v7340
        %v7506 = vunpack.c.l.b16 %v7341
        %v7507 = vunpack.c.h.b16 %v7341
        %v7508 = vunpack.c.l.b16 %v7342
        %v7509 = vunpack.c.h.b16 %v7342
        %v7510 = vunpack.c.l.b16 %v7343
        %v7511 = vunpack.c.h.b16 %v7343
        %v7512 = vunpack.c.l.b16 %v7344
        %v7513 = vunpack.c.h.b16 %v7344
        %v7514 = vunpack.c.l.b16 %v7345
        %v7515 = vunpack.c.h.b16 %v7345
        %v7516 = vunpack.c.l.b16 %v7346
        %v7517 = vunpack.c.h.b16 %v7346
        %v7518 = vunpack.c.l.b16 %v7347
        %v7519 = vunpack.c.h.b16 %v7347
        %v7520 = vunpack.c.l.b16 %v7348
        %v7521 = vunpack.c.h.b16 %v7348
        %v7522 = vunpack.c.l.b16 %v7349
        %v7523 = vunpack.c.h.b16 %v7349
        %v7524 = vunpack.c.l.b16 %v7350
        %v7525 = vunpack.c.h.b16 %v7350
        %v7526 = vunpack.c.l.b16 %v7351
        %v7527 = vunpack.c.h.b16 %v7351
        %v7528 = vunpack.c.l.b16 %v7352
        %v7529 = vunpack.c.h.b16 %v7352
        %v7530 = vunpack.c.l.b16 %v7353
        %v7531 = vunpack.c.h.b16 %v7353
        %v7532 = vunpack.c.l.b16 %v7354
        %v7533 = vunpack.c.h.b16 %v7354
        %v7534 = vunpack.c.l.b16 %v7355
        %v7535 = vunpack.c.h.b16 %v7355
        %v7536 = vunpack.c.l.b16 %v7356
        %v7537 = vunpack.c.h.b16 %v7356
        %v7538 = vunpack.c.l.b16 %v7357
        %v7539 = vunpack.c.h.b16 %v7357
        %v7540 = vunpack.c.l.b16 %v7358
        %v7541 = vunpack.c.h.b16 %v7358
        %v7542 = vunpack.c.l.b16 %v7359
        %v7543 = vunpack.c.h.b16 %v7359
        %v7544 = vunpack.c.l.b16 %v7360
        %v7545 = vunpack.c.h.b16 %v7360
        %v7546 = vunpack.c.l.b16 %v7361
        %v7547 = vunpack.c.h.b16 %v7361
        %v7548 = vunpack.c.l.b16 %v7362
        %v7549 = vunpack.c.h.b16 %v7362
        %v7550 = vunpack.c.l.b16 %v7363
        %v7551 = vunpack.c.h.b16 %v7363
        %v7552 = vunpack.c.l.b16 %v7364
        %v7553 = vunpack.c.h.b16 %v7364
        %v7554 = vunpack.c.l.b16 %v7365
        %v7555 = vunpack.c.h.b16 %v7365
        %v7556 = vunpack.c.l.b16 %v7366
        %v7557 = vunpack.c.h.b16 %v7366
        %v7558 = vunpack.c.l.b16 %v7367
        %v7559 = vunpack.c.h.b16 %v7367
        %v7560 = vunpack.c.l.b16 %v7368
        %v7561 = vunpack.c.h.b16 %v7368
        %v7562 = vunpack.c.l.b16 %v7369
        %v7563 = vunpack.c.h.b16 %v7369
        %v7564 = vunpack.c.l.b16 %v7370
        %v7565 = vunpack.c.h.b16 %v7370
        %v7566 = vunpack.c.l.b16 %v7371
        %v7567 = vunpack.c.h.b16 %v7371
        %v7568 = vunpack.c.l.b16 %v7372
        %v7569 = vunpack.c.h.b16 %v7372
        %v7570 = vunpack.c.l.b16 %v7373
        %v7571 = vunpack.c.h.b16 %v7373
        %v7572 = vunpack.c.l.b16 %v7374
        %v7573 = vunpack.c.h.b16 %v7374
        %v7574 = vunpack.c.l.b16 %v7375
        %v7575 = vunpack.c.h.b16 %v7375
        %v7576 = vunpack.c.l.b16 %v7376
        %v7577 = vunpack.c.h.b16 %v7376
        %v7578 = vunpack.c.l.b16 %v7377
        %v7579 = vunpack.c.h.b16 %v7377
        %v7580 = vunpack.c.l.b16 %v7378
        %v7581 = vunpack.c.h.b16 %v7378
        %v7582 = vpack.c.b16 %v7458, %v7454
        %v7583 = vpack.c.b16 %v7459, %v7455
        %v7584 = vpack.c.b16 %v7460, %v7456
        %v7585 = vpack.c.b16 %v7461, %v7457
        %v7586 = vpack.c.b16 %v7466, %v7462
        %v7587 = vpack.c.b16 %v7467, %v7463
        %v7588 = vpack.c.b16 %v7468, %v7464
        %v7589 = vpack.c.b16 %v7469, %v7465
        %v7590 = vpack.c.b16 %v7474, %v7470
        %v7591 = vpack.c.b16 %v7475, %v7471
        %v7592 = vpack.c.b16 %v7476, %v7472
        %v7593 = vpack.c.b16 %v7477, %v7473
        %v7594 = vpack.c.b16 %v7482, %v7478
        %v7595 = vpack.c.b16 %v7483, %v7479
        %v7596 = vpack.c.b16 %v7484, %v7480
        %v7597 = vpack.c.b16 %v7485, %v7481
        %v7598 = vpack.c.b16 %v7490, %v7486
        %v7599 = vpack.c.b16 %v7491, %v7487
        %v7600 = vpack.c.b16 %v7492, %v7488
        %v7601 = vpack.c.b16 %v7493, %v7489
        %v7602 = vpack.c.b16 %v7498, %v7494
        %v7603 = vpack.c.b16 %v7499, %v7495
        %v7604 = vpack.c.b16 %v7500, %v7496
        %v7605 = vpack.c.b16 %v7501, %v7497
        %v7606 = vpack.c.b16 %v7506, %v7502
        %v7607 = vpack.c.b16 %v7507, %v7503
        %v7608 = vpack.c.b16 %v7508, %v7504
        %v7609 = vpack.c.b16 %v7509, %v7505
        %v7610 = vpack.c.b16 %v7514, %v7510
        %v7611 = vpack.c.b16 %v7515, %v7511
        %v7612 = vpack.c.b16 %v7516, %v7512
        %v7613 = vpack.c.b16 %v7517, %v7513
        %v7614 = vpack.c.b16 %v7522, %v7518
        %v7615 = vpack.c.b16 %v7523, %v7519
        %v7616 = vpack.c.b16 %v7524, %v7520
        %v7617 = vpack.c.b16 %v7525, %v7521
        %v7618 = vpack.c.b16 %v7530, %v7526
        %v7619 = vpack.c.b16 %v7531, %v7527
        %v7620 = vpack.c.b16 %v7532, %v7528
        %v7621 = vpack.c.b16 %v7533, %v7529
        %v7622 = vpack.c.b16 %v7538, %v7534
        %v7623 = vpack.c.b16 %v7539, %v7535
        %v7624 = vpack.c.b16 %v7540, %v7536
        %v7625 = vpack.c.b16 %v7541, %v7537
        %v7626 = vpack.c.b16 %v7546, %v7542
        %v7627 = vpack.c.b16 %v7547, %v7543
        %v7628 = vpack.c.b16 %v7548, %v7544
        %v7629 = vpack.c.b16 %v7549, %v7545
        %v7630 = vpack.c.b16 %v7554, %v7550
        %v7631 = vpack.c.b16 %v7555, %v7551
        %v7632 = vpack.c.b16 %v7556, %v7552
        %v7633 = vpack.c.b16 %v7557, %v7553
        %v7634 = vpack.c.b16 %v7562, %v7558
        %v7635 = vpack.c.b16 %v7563, %v7559
        %v7636 = vpack.c.b16 %v7564, %v7560
        %v7637 = vpack.c.b16 %v7565, %v7561
        %v7638 = vpack.c.b16 %v7570, %v7566
        %v7639 = vpack.c.b16 %v7571, %v7567
        %v7640 = vpack.c.b16 %v7572, %v7568
        %v7641 = vpack.c.b16 %v7573, %v7569
        %v7642 = vpack.c.b16 %v7578, %v7574
        %v7643 = vpack.c.b16 %v7579, %v7575
        %v7644 = vpack.c.b16 %v7580, %v7576
        %v7645 = vpack.c.b16 %v7581, %v7577
        %7710 = vmatpush.bf16.msra.mxu0 %v7610
        %7711 = vmatpush.bf16.msra.mxu0 %v7606
        %7712 = vmatpush.bf16.msra.mxu0 %v7602
        %7713 = vmatpush.bf16.msra.mxu0 %v7598
        %7714 = vmatpush.bf16.msra.mxu0 %v7594
        %7715 = vmatpush.bf16.msra.mxu0 %v7590
        %7716 = vmatpush.bf16.msra.mxu0 %v7586
        %7717 = vmatpush.bf16.msra.mxu0 %v7582
        %7718 = vmatmul.bf16.gmra.mxu0 %v1090
        %v7719 = vpop.f32.mrf.mxu0
        %v7720 = vadd.f32 %v7382, %v7719
        %v7721 = vpop.f32.mrf.mxu0
        %v7722 = vadd.f32 %v7382, %v7721
        %7723 = vdwg.mxu0
        %7724 = vmatpush.bf16.msra.mxu0 %v7642
        %7725 = vmatpush.bf16.msra.mxu0 %v7638
        %7726 = vmatpush.bf16.msra.mxu0 %v7634
        %7727 = vmatpush.bf16.msra.mxu0 %v7630
        %7728 = vmatpush.bf16.msra.mxu0 %v7626
        %7729 = vmatpush.bf16.msra.mxu0 %v7622
        %7730 = vmatpush.bf16.msra.mxu0 %v7618
        %7731 = vmatpush.bf16.msra.mxu0 %v7614
        %7732 = vmatmul.bf16.gmra.mxu0 %v1091
        %v7733 = vpop.f32.mrf.mxu0
        %v7734 = vadd.f32 %v7720, %v7733
        %v7735 = vpop.f32.mrf.mxu0
        %v7736 = vadd.f32 %v7722, %v7735
        %7737 = vdwg.mxu0
        %7738 = vmatpush.bf16.msra.mxu0 %v7611
        %7739 = vmatpush.bf16.msra.mxu0 %v7607
        %7740 = vmatpush.bf16.msra.mxu0 %v7603
        %7741 = vmatpush.bf16.msra.mxu0 %v7599
        %7742 = vmatpush.bf16.msra.mxu0 %v7595
        %7743 = vmatpush.bf16.msra.mxu0 %v7591
        %7744 = vmatpush.bf16.msra.mxu0 %v7587
        %7745 = vmatpush.bf16.msra.mxu0 %v7583
        %7746 = vmatmul.bf16.gmra.mxu0 %v1090
        %v7747 = vpop.f32.mrf.mxu0
        %v7748 = vadd.f32 %v7383, %v7747
        %v7749 = vpop.f32.mrf.mxu0
        %v7750 = vadd.f32 %v7383, %v7749
        %7751 = vdwg.mxu0
        %7752 = vmatpush.bf16.msra.mxu0 %v7643
        %7753 = vmatpush.bf16.msra.mxu0 %v7639
        %7754 = vmatpush.bf16.msra.mxu0 %v7635
        %7755 = vmatpush.bf16.msra.mxu0 %v7631
        %7756 = vmatpush.bf16.msra.mxu0 %v7627
        %7757 = vmatpush.bf16.msra.mxu0 %v7623
        %7758 = vmatpush.bf16.msra.mxu0 %v7619
        %7759 = vmatpush.bf16.msra.mxu0 %v7615
        %7760 = vmatmul.bf16.gmra.mxu0 %v1091
        %v7761 = vpop.f32.mrf.mxu0
        %v7762 = vadd.f32 %v7748, %v7761
        %v7763 = vpop.f32.mrf.mxu0
        %v7764 = vadd.f32 %v7750, %v7763
        %7765 = vdwg.mxu0
        %7766 = vmatpush.bf16.msra.mxu0 %v7612
        %7767 = vmatpush.bf16.msra.mxu0 %v7608
        %7768 = vmatpush.bf16.msra.mxu0 %v7604
        %7769 = vmatpush.bf16.msra.mxu0 %v7600
        %7770 = vmatpush.bf16.msra.mxu0 %v7596
        %7771 = vmatpush.bf16.msra.mxu0 %v7592
        %7772 = vmatpush.bf16.msra.mxu0 %v7588
        %7773 = vmatpush.bf16.msra.mxu0 %v7584
        %7774 = vmatmul.bf16.gmra.mxu0 %v1090
        %v7775 = vpop.f32.mrf.mxu0
        %v7776 = vadd.f32 %v7384, %v7775
        %v7777 = vpop.f32.mrf.mxu0
        %v7778 = vadd.f32 %v7384, %v7777
        %7779 = vdwg.mxu0
        %7780 = vmatpush.bf16.msra.mxu0 %v7644
        %7781 = vmatpush.bf16.msra.mxu0 %v7640
        %7782 = vmatpush.bf16.msra.mxu0 %v7636
        %7783 = vmatpush.bf16.msra.mxu0 %v7632
        %7784 = vmatpush.bf16.msra.mxu0 %v7628
        %7785 = vmatpush.bf16.msra.mxu0 %v7624
        %7786 = vmatpush.bf16.msra.mxu0 %v7620
        %7787 = vmatpush.bf16.msra.mxu0 %v7616
        %7788 = vmatmul.bf16.gmra.mxu0 %v1091
        %v7789 = vpop.f32.mrf.mxu0
        %v7790 = vadd.f32 %v7776, %v7789
        %v7791 = vpop.f32.mrf.mxu0
        %v7792 = vadd.f32 %v7778, %v7791
        %7793 = vdwg.mxu0
        %7794 = vmatpush.bf16.msra.mxu0 %v7613
        %7795 = vmatpush.bf16.msra.mxu0 %v7609
        %7796 = vmatpush.bf16.msra.mxu0 %v7605
        %7797 = vmatpush.bf16.msra.mxu0 %v7601
        %7798 = vmatpush.bf16.msra.mxu0 %v7597
        %7799 = vmatpush.bf16.msra.mxu0 %v7593
        %7800 = vmatpush.bf16.msra.mxu0 %v7589
        %7801 = vmatpush.bf16.msra.mxu0 %v7585
        %7802 = vmatmul.bf16.gmra.mxu0 %v1090
        %v7803 = vpop.f32.mrf.mxu0
        %v7804 = vadd.f32 %v7385, %v7803
        %v7805 = vpop.f32.mrf.mxu0
        %v7806 = vadd.f32 %v7385, %v7805
        %7807 = vdwg.mxu0
        %7808 = vmatpush.bf16.msra.mxu0 %v7645
        %7809 = vmatpush.bf16.msra.mxu0 %v7641
        %7810 = vmatpush.bf16.msra.mxu0 %v7637
        %7811 = vmatpush.bf16.msra.mxu0 %v7633
        %7812 = vmatpush.bf16.msra.mxu0 %v7629
        %7813 = vmatpush.bf16.msra.mxu0 %v7625
        %7814 = vmatpush.bf16.msra.mxu0 %v7621
        %7815 = vmatpush.bf16.msra.mxu0 %v7617
        %7816 = vmatmul.bf16.gmra.mxu0 %v1091
        %v7817 = vpop.f32.mrf.mxu0
        %v7818 = vadd.f32 %v7804, %v7817
        %v7819 = vpop.f32.mrf.mxu0
        %v7820 = vadd.f32 %v7806, %v7819
        %7821 = vdwg.mxu0
        %s7822 = scalar_lea.vmem [#allocation17], 256
        %v7823 = vld [vmem:[%s7822] sm:$0xff]
        %v7824 = vld [vmem:[%s7822 + $0x8] sm:$0xff]
        %v7825 = vld [vmem:[%s7822 + $0x10] sm:$0xff]
        %v7826 = vld [vmem:[%s7822 + $0x18] sm:$0xff]
        %v7827 = vld [vmem:[%s7822 + $0x20] sm:$0xff]
        %v7828 = vld [vmem:[%s7822 + $0x28] sm:$0xff]
        %v7829 = vld [vmem:[%s7822 + $0x30] sm:$0xff]
        %v7830 = vld [vmem:[%s7822 + $0x38] sm:$0xff]
        %v7831 = vld [vmem:[%s7822 + $0x40] sm:$0xff]
        %v7832 = vld [vmem:[%s7822 + $0x48] sm:$0xff]
        %v7833 = vld [vmem:[%s7822 + $0x50] sm:$0xff]
        %v7834 = vld [vmem:[%s7822 + $0x58] sm:$0xff]
        %v7835 = vld [vmem:[%s7822 + $0x60] sm:$0xff]
        %v7836 = vld [vmem:[%s7822 + $0x68] sm:$0xff]
        %v7837 = vld [vmem:[%s7822 + $0x70] sm:$0xff]
        %v7838 = vld [vmem:[%s7822 + $0x78] sm:$0xff]
        %v7839 = vld [vmem:[%s7822 + $0x80] sm:$0xff]
        %v7840 = vld [vmem:[%s7822 + $0x88] sm:$0xff]
        %v7841 = vld [vmem:[%s7822 + $0x90] sm:$0xff]
        %v7842 = vld [vmem:[%s7822 + $0x98] sm:$0xff]
        %v7843 = vld [vmem:[%s7822 + $0xa0] sm:$0xff]
        %v7844 = vld [vmem:[%s7822 + $0xa8] sm:$0xff]
        %v7845 = vld [vmem:[%s7822 + $0xb0] sm:$0xff]
        %v7846 = vld [vmem:[%s7822 + $0xb8] sm:$0xff]
        %v7847 = vld [vmem:[%s7822 + $0xc0] sm:$0xff]
        %v7848 = vld [vmem:[%s7822 + $0xc8] sm:$0xff]
        %v7849 = vld [vmem:[%s7822 + $0xd0] sm:$0xff]
        %v7850 = vld [vmem:[%s7822 + $0xd8] sm:$0xff]
        %v7851 = vld [vmem:[%s7822 + $0xe0] sm:$0xff]
        %v7852 = vld [vmem:[%s7822 + $0xe8] sm:$0xff]
        %v7853 = vld [vmem:[%s7822 + $0xf0] sm:$0xff]
        %v7854 = vld [vmem:[%s7822 + $0xf8] sm:$0xff]
        %s7855 = scalar_lea.vmem [#allocation19], 2
        %v7856 = vld [vmem:[%s7855] sm:$0x3]
        %7858 = vrot.lane.b32.xlu0 %v7285, 96
        %v7859 = vpop.permute.xlu0 %7858
        %7860 = vrot.lane.b32.xlu0 %v7285, 64
        %v7861 = vpop.permute.xlu0 %7860
        %7862 = vrot.lane.b32.xlu0 %v7285, 32
        %v7863 = vpop.permute.xlu0 %7862
        %7865 = vrot.lane.b32.xlu0 %v7311, 96
        %v7866 = vpop.permute.xlu0 %7865
        %7867 = vrot.lane.b32.xlu0 %v7311, 64
        %v7868 = vpop.permute.xlu0 %7867
        %7869 = vrot.lane.b32.xlu0 %v7311, 32
        %v7870 = vpop.permute.xlu0 %7869
        %7873 = vrot.lane.b32.xlu0 %v7734, 96
        %v7874 = vpop.permute.xlu0 %7873
        %7875 = vrot.lane.b32.xlu0 %v7736, 96
        %v7876 = vpop.permute.xlu0 %7875
        %7877 = vrot.lane.b32.xlu0 %v7734, 64
        %v7878 = vpop.permute.xlu0 %7877
        %7879 = vrot.lane.b32.xlu0 %v7736, 64
        %v7880 = vpop.permute.xlu0 %7879
        %7881 = vrot.lane.b32.xlu0 %v7734, 32
        %v7882 = vpop.permute.xlu0 %7881
        %7883 = vrot.lane.b32.xlu0 %v7736, 32
        %v7884 = vpop.permute.xlu0 %7883
        %7887 = vrot.lane.b32.xlu0 %v7762, 96
        %v7888 = vpop.permute.xlu0 %7887
        %7889 = vrot.lane.b32.xlu0 %v7764, 96
        %v7890 = vpop.permute.xlu0 %7889
        %7891 = vrot.lane.b32.xlu0 %v7762, 64
        %v7892 = vpop.permute.xlu0 %7891
        %7893 = vrot.lane.b32.xlu0 %v7764, 64
        %v7894 = vpop.permute.xlu0 %7893
        %7895 = vrot.lane.b32.xlu0 %v7762, 32
        %v7896 = vpop.permute.xlu0 %7895
        %7897 = vrot.lane.b32.xlu0 %v7764, 32
        %v7898 = vpop.permute.xlu0 %7897
        %7901 = vrot.lane.b32.xlu0 %v7790, 96
        %v7902 = vpop.permute.xlu0 %7901
        %7903 = vrot.lane.b32.xlu0 %v7792, 96
        %v7904 = vpop.permute.xlu0 %7903
        %7907 = vrot.lane.b32.xlu0 %v7790, 64
        %v7908 = vpop.permute.xlu0 %7907
        %7909 = vrot.lane.b32.xlu0 %v7792, 64
        %v7910 = vpop.permute.xlu0 %7909
        %7913 = vrot.lane.b32.xlu0 %v7790, 32
        %v7914 = vpop.permute.xlu0 %7913
        %7915 = vrot.lane.b32.xlu0 %v7792, 32
        %v7916 = vpop.permute.xlu0 %7915
        %7921 = vrot.lane.b32.xlu0 %v7818, 96
        %v7922 = vpop.permute.xlu0 %7921
        %7923 = vrot.lane.b32.xlu0 %v7820, 96
        %v7924 = vpop.permute.xlu0 %7923
        %7927 = vrot.lane.b32.xlu0 %v7818, 64
        %v7928 = vpop.permute.xlu0 %7927
        %7929 = vrot.lane.b32.xlu0 %v7820, 64
        %v7930 = vpop.permute.xlu0 %7929
        %7933 = vrot.lane.b32.xlu0 %v7818, 32
        %v7934 = vpop.permute.xlu0 %7933
        %7935 = vrot.lane.b32.xlu0 %v7820, 32
        %v7936 = vpop.permute.xlu0 %7935
        %v7939 = vsel %vm1974, %v7285, 0
        %v7941 = vsel %vm1974, %v7734, 0
        %v7943 = vsel %vm1974, %v7736, 0
        %7945 = vmatpush.xpose.msra.mxu0 0.0
        %7946 = vmatpush.xpose.msra.mxu0 0.0
        %7947 = vmatpush.xpose.msra.mxu0 0.0
        %7948 = vmatpush.xpose.msra.mxu0 0.0
        %7949 = vmatpush.xpose.msra.mxu0 0.0
        %7950 = vmatpush.xpose.msra.mxu0 0.0
        %7951 = vmatpush.xpose.msra.mxu0 0.0
        %7952 = vmatpush.xpose.msra.mxu0 0.0
        %7953 = vmatpush.xpose.msra.mxu0 0.0
        %7954 = vmatpush.xpose.msra.mxu0 0.0
        %7955 = vmatpush.xpose.msra.mxu0 0.0
        %7956 = vmatpush.xpose.msra.mxu0 0.0
        %7957 = vmatpush.xpose.msra.mxu0 0.0
        %7958 = vmatpush.xpose.msra.mxu0 0.0
        %7959 = vmatpush.xpose.msra.mxu0 %v7943
        %7960 = vmatpush.xpose.msra.mxu0 %v7941
        %7961 = vmatmul.f32.gmra.mxu0 %v7939
        %v7962 = vpop.f32.mrf.mxu0
        %v7963 = vadd.f32 0.0, %v7962
        %7964 = vdwg.mxu0
        %v7965 = vsel %vm1974, %v7859, 0
        %v7967 = vsel %vm1974, %v7874, 0
        %v7969 = vsel %vm1974, %v7876, 0
        %7971 = vmatpush.xpose.msra.mxu0 0.0
        %7972 = vmatpush.xpose.msra.mxu0 0.0
        %7973 = vmatpush.xpose.msra.mxu0 0.0
        %7974 = vmatpush.xpose.msra.mxu0 0.0
        %7975 = vmatpush.xpose.msra.mxu0 0.0
        %7976 = vmatpush.xpose.msra.mxu0 0.0
        %7977 = vmatpush.xpose.msra.mxu0 0.0
        %7978 = vmatpush.xpose.msra.mxu0 0.0
        %7979 = vmatpush.xpose.msra.mxu0 0.0
        %7980 = vmatpush.xpose.msra.mxu0 0.0
        %7981 = vmatpush.xpose.msra.mxu0 0.0
        %7982 = vmatpush.xpose.msra.mxu0 0.0
        %7983 = vmatpush.xpose.msra.mxu0 0.0
        %7984 = vmatpush.xpose.msra.mxu0 0.0
        %7985 = vmatpush.xpose.msra.mxu0 %v7969
        %7986 = vmatpush.xpose.msra.mxu0 %v7967
        %7987 = vmatmul.f32.gmra.mxu0 %v7965
        %v7988 = vpop.f32.mrf.mxu0
        %v7989 = vadd.f32 0.0, %v7988
        %7990 = vdwg.mxu0
        %v7991 = vsel %vm1974, %v7861, 0
        %v7993 = vsel %vm1974, %v7878, 0
        %v7995 = vsel %vm1974, %v7880, 0
        %7997 = vmatpush.xpose.msra.mxu0 0.0
        %7998 = vmatpush.xpose.msra.mxu0 0.0
        %7999 = vmatpush.xpose.msra.mxu0 0.0
        %8000 = vmatpush.xpose.msra.mxu0 0.0
        %8001 = vmatpush.xpose.msra.mxu0 0.0
        %8002 = vmatpush.xpose.msra.mxu0 0.0
        %8003 = vmatpush.xpose.msra.mxu0 0.0
        %8004 = vmatpush.xpose.msra.mxu0 0.0
        %8005 = vmatpush.xpose.msra.mxu0 0.0
        %8006 = vmatpush.xpose.msra.mxu0 0.0
        %8007 = vmatpush.xpose.msra.mxu0 0.0
        %8008 = vmatpush.xpose.msra.mxu0 0.0
        %8009 = vmatpush.xpose.msra.mxu0 0.0
        %8010 = vmatpush.xpose.msra.mxu0 0.0
        %8011 = vmatpush.xpose.msra.mxu0 %v7995
        %8012 = vmatpush.xpose.msra.mxu0 %v7993
        %8013 = vmatmul.f32.gmra.mxu0 %v7991
        %v8014 = vpop.f32.mrf.mxu0
        %v8015 = vadd.f32 0.0, %v8014
        %8016 = vdwg.mxu0
        %v8017 = vsel %vm1974, %v7863, 0
        %v8019 = vsel %vm1974, %v7882, 0
        %v8021 = vsel %vm1974, %v7884, 0
        %8023 = vmatpush.xpose.msra.mxu0 0.0
        %8024 = vmatpush.xpose.msra.mxu0 0.0
        %8025 = vmatpush.xpose.msra.mxu0 0.0
        %8026 = vmatpush.xpose.msra.mxu0 0.0
        %8027 = vmatpush.xpose.msra.mxu0 0.0
        %8028 = vmatpush.xpose.msra.mxu0 0.0
        %8029 = vmatpush.xpose.msra.mxu0 0.0
        %8030 = vmatpush.xpose.msra.mxu0 0.0
        %8031 = vmatpush.xpose.msra.mxu0 0.0
        %8032 = vmatpush.xpose.msra.mxu0 0.0
        %8033 = vmatpush.xpose.msra.mxu0 0.0
        %8034 = vmatpush.xpose.msra.mxu0 0.0
        %8035 = vmatpush.xpose.msra.mxu0 0.0
        %8036 = vmatpush.xpose.msra.mxu0 0.0
        %8037 = vmatpush.xpose.msra.mxu0 %v8021
        %8038 = vmatpush.xpose.msra.mxu0 %v8019
        %8039 = vmatmul.f32.gmra.mxu0 %v8017
        %v8040 = vpop.f32.mrf.mxu0
        %v8041 = vadd.f32 0.0, %v8040
        %8042 = vdwg.mxu0
        %v8043 = vsel %vm1974, %v7311, 0
        %v8045 = vsel %vm1974, %v7762, 0
        %v8047 = vsel %vm1974, %v7764, 0
        %8049 = vmatpush.xpose.msra.mxu0 0.0
        %8050 = vmatpush.xpose.msra.mxu0 0.0
        %8051 = vmatpush.xpose.msra.mxu0 0.0
        %8052 = vmatpush.xpose.msra.mxu0 0.0
        %8053 = vmatpush.xpose.msra.mxu0 0.0
        %8054 = vmatpush.xpose.msra.mxu0 0.0
        %8055 = vmatpush.xpose.msra.mxu0 0.0
        %8056 = vmatpush.xpose.msra.mxu0 0.0
        %8057 = vmatpush.xpose.msra.mxu0 0.0
        %8058 = vmatpush.xpose.msra.mxu0 0.0
        %8059 = vmatpush.xpose.msra.mxu0 0.0
        %8060 = vmatpush.xpose.msra.mxu0 0.0
        %8061 = vmatpush.xpose.msra.mxu0 0.0
        %8062 = vmatpush.xpose.msra.mxu0 0.0
        %8063 = vmatpush.xpose.msra.mxu0 %v8047
        %8064 = vmatpush.xpose.msra.mxu0 %v8045
        %8065 = vmatmul.f32.gmra.mxu0 %v8043
        %v8066 = vpop.f32.mrf.mxu0
        %v8067 = vadd.f32 0.0, %v8066
        %8068 = vdwg.mxu0
        %v8069 = vsel %vm1974, %v7866, 0
        %v8071 = vsel %vm1974, %v7888, 0
        %v8073 = vsel %vm1974, %v7890, 0
        %8075 = vmatpush.xpose.msra.mxu0 0.0
        %8076 = vmatpush.xpose.msra.mxu0 0.0
        %8077 = vmatpush.xpose.msra.mxu0 0.0
        %8078 = vmatpush.xpose.msra.mxu0 0.0
        %8079 = vmatpush.xpose.msra.mxu0 0.0
        %8080 = vmatpush.xpose.msra.mxu0 0.0
        %8081 = vmatpush.xpose.msra.mxu0 0.0
        %8082 = vmatpush.xpose.msra.mxu0 0.0
        %8083 = vmatpush.xpose.msra.mxu0 0.0
        %8084 = vmatpush.xpose.msra.mxu0 0.0
        %8085 = vmatpush.xpose.msra.mxu0 0.0
        %8086 = vmatpush.xpose.msra.mxu0 0.0
        %8087 = vmatpush.xpose.msra.mxu0 0.0
        %8088 = vmatpush.xpose.msra.mxu0 0.0
        %8089 = vmatpush.xpose.msra.mxu0 %v8073
        %8090 = vmatpush.xpose.msra.mxu0 %v8071
        %8091 = vmatmul.f32.gmra.mxu0 %v8069
        %v8092 = vpop.f32.mrf.mxu0
        %v8093 = vadd.f32 0.0, %v8092
        %8094 = vdwg.mxu0
        %v8095 = vsel %vm1974, %v7868, 0
        %v8097 = vsel %vm1974, %v7892, 0
        %v8099 = vsel %vm1974, %v7894, 0
        %8101 = vmatpush.xpose.msra.mxu0 0.0
        %8102 = vmatpush.xpose.msra.mxu0 0.0
        %8103 = vmatpush.xpose.msra.mxu0 0.0
        %8104 = vmatpush.xpose.msra.mxu0 0.0
        %8105 = vmatpush.xpose.msra.mxu0 0.0
        %8106 = vmatpush.xpose.msra.mxu0 0.0
        %8107 = vmatpush.xpose.msra.mxu0 0.0
        %8108 = vmatpush.xpose.msra.mxu0 0.0
        %8109 = vmatpush.xpose.msra.mxu0 0.0
        %8110 = vmatpush.xpose.msra.mxu0 0.0
        %8111 = vmatpush.xpose.msra.mxu0 0.0
        %8112 = vmatpush.xpose.msra.mxu0 0.0
        %8113 = vmatpush.xpose.msra.mxu0 0.0
        %8114 = vmatpush.xpose.msra.mxu0 0.0
        %8115 = vmatpush.xpose.msra.mxu0 %v8099
        %8116 = vmatpush.xpose.msra.mxu0 %v8097
        %8117 = vmatmul.f32.gmra.mxu0 %v8095
        %v8118 = vpop.f32.mrf.mxu0
        %v8119 = vadd.f32 0.0, %v8118
        %8120 = vdwg.mxu0
        %v8121 = vsel %vm1974, %v7870, 0
        %v8123 = vsel %vm1974, %v7896, 0
        %v8125 = vsel %vm1974, %v7898, 0
        %8127 = vmatpush.xpose.msra.mxu0 0.0
        %8128 = vmatpush.xpose.msra.mxu0 0.0
        %8129 = vmatpush.xpose.msra.mxu0 0.0
        %8130 = vmatpush.xpose.msra.mxu0 0.0
        %8131 = vmatpush.xpose.msra.mxu0 0.0
        %8132 = vmatpush.xpose.msra.mxu0 0.0
        %8133 = vmatpush.xpose.msra.mxu0 0.0
        %8134 = vmatpush.xpose.msra.mxu0 0.0
        %8135 = vmatpush.xpose.msra.mxu0 0.0
        %8136 = vmatpush.xpose.msra.mxu0 0.0
        %8137 = vmatpush.xpose.msra.mxu0 0.0
        %8138 = vmatpush.xpose.msra.mxu0 0.0
        %8139 = vmatpush.xpose.msra.mxu0 0.0
        %8140 = vmatpush.xpose.msra.mxu0 0.0
        %8141 = vmatpush.xpose.msra.mxu0 %v8125
        %8142 = vmatpush.xpose.msra.mxu0 %v8123
        %8143 = vmatmul.f32.gmra.mxu0 %v8121
        %v8144 = vpop.f32.mrf.mxu0
        %v8145 = vadd.f32 0.0, %v8144
        %8146 = vdwg.mxu0
        %v8147 = vmul.f32 %v7963, 0.17677669
        %v8148 = vmul.f32 %v7989, 0.17677669
        %v8149 = vmul.f32 %v8015, 0.17677669
        %v8150 = vmul.f32 %v8041, 0.17677669
        %v8151 = vmul.f32 %v8067, 0.17677669
        %v8152 = vmul.f32 %v8093, 0.17677669
        %v8153 = vmul.f32 %v8119, 0.17677669
        %v8154 = vmul.f32 %v8145, 0.17677669
        %v8155 = vsel %vm3841, %v8147, -inf
        %8156 = vmax.xlane.f32.xlu0 %v8155
        %v8157 = vpop.xlane.xlu0 %8156
        %v8158 = vsel %vm3841, %v8148, -inf
        %8159 = vmax.xlane.f32.xlu0 %v8158
        %v8160 = vpop.xlane.xlu0 %8159
        %v8161 = vsel %vm3841, %v8149, -inf
        %8162 = vmax.xlane.f32.xlu0 %v8161
        %v8163 = vpop.xlane.xlu0 %8162
        %v8164 = vsel %vm3841, %v8150, -inf
        %8165 = vmax.xlane.f32.xlu0 %v8164
        %v8166 = vpop.xlane.xlu0 %8165
        %v8167 = vsel %vm3841, %v8151, -inf
        %8168 = vmax.xlane.f32.xlu0 %v8167
        %v8169 = vpop.xlane.xlu0 %8168
        %v8170 = vsel %vm3841, %v8152, -inf
        %8171 = vmax.xlane.f32.xlu0 %v8170
        %v8172 = vpop.xlane.xlu0 %8171
        %v8173 = vsel %vm3841, %v8153, -inf
        %8174 = vmax.xlane.f32.xlu0 %v8173
        %v8175 = vpop.xlane.xlu0 %8174
        %v8176 = vsel %vm3841, %v8154, -inf
        %8177 = vmax.xlane.f32.xlu0 %v8176
        %v8178 = vpop.xlane.xlu0 %8177
        %v8179 = vsub.f32 %v8147, %v8157
        %v8180 = vsub.f32 %v8148, %v8160
        %v8181 = vsub.f32 %v8149, %v8163
        %v8182 = vsub.f32 %v8150, %v8166
        %v8183 = vsub.f32 %v8151, %v8169
        %v8184 = vsub.f32 %v8152, %v8172
        %v8185 = vsub.f32 %v8153, %v8175
        %v8186 = vsub.f32 %v8154, %v8178
        %v8187 = vmul.f32 %v8179, 1.442695
        %v8188 = vpow.pop %v8187
        %v8189 = vmul.f32 %v8180, 1.442695
        %v8190 = vpow.pop %v8189
        %v8191 = vmul.f32 %v8181, 1.442695
        %v8192 = vpow.pop %v8191
        %v8193 = vmul.f32 %v8182, 1.442695
        %v8194 = vpow.pop %v8193
        %v8195 = vmul.f32 %v8183, 1.442695
        %v8196 = vpow.pop %v8195
        %v8197 = vmul.f32 %v8184, 1.442695
        %v8198 = vpow.pop %v8197
        %v8199 = vmul.f32 %v8185, 1.442695
        %v8200 = vpow.pop %v8199
        %v8201 = vmul.f32 %v8186, 1.442695
        %v8202 = vpow.pop %v8201
        %v8203 = vsel %vm3841, %v8188, 0.0
        %8204 = vadd.xlane.f32.xlu0 %v8203
        %v8205 = vpop.xlane.xlu0 %8204
        %v8206 = vsel %vm3841, %v8190, 0.0
        %8207 = vadd.xlane.f32.xlu0 %v8206
        %v8208 = vpop.xlane.xlu0 %8207
        %v8209 = vsel %vm3841, %v8192, 0.0
        %8210 = vadd.xlane.f32.xlu0 %v8209
        %v8211 = vpop.xlane.xlu0 %8210
        %v8212 = vsel %vm3841, %v8194, 0.0
        %8213 = vadd.xlane.f32.xlu0 %v8212
        %v8214 = vpop.xlane.xlu0 %8213
        %v8215 = vsel %vm3841, %v8196, 0.0
        %8216 = vadd.xlane.f32.xlu0 %v8215
        %v8217 = vpop.xlane.xlu0 %8216
        %v8218 = vsel %vm3841, %v8198, 0.0
        %8219 = vadd.xlane.f32.xlu0 %v8218
        %v8220 = vpop.xlane.xlu0 %8219
        %v8221 = vsel %vm3841, %v8200, 0.0
        %8222 = vadd.xlane.f32.xlu0 %v8221
        %v8223 = vpop.xlane.xlu0 %8222
        %v8224 = vsel %vm3841, %v8202, 0.0
        %8225 = vadd.xlane.f32.xlu0 %v8224
        %v8226 = vpop.xlane.xlu0 %8225
        %v8227 = vrcp.pop %v8205
        %v8228 = vrcp.pop %v8208
        %v8229 = vrcp.pop %v8211
        %v8230 = vrcp.pop %v8214
        %v8231 = vrcp.pop %v8217
        %v8232 = vrcp.pop %v8220
        %v8233 = vrcp.pop %v8223
        %v8234 = vrcp.pop %v8226
        %v8235 = vmul.f32 %v8188, %v8227
        %v8236 = vmul.f32 %v8190, %v8228
        %v8237 = vmul.f32 %v8192, %v8229
        %v8238 = vmul.f32 %v8194, %v8230
        %v8239 = vmul.f32 %v8196, %v8231
        %v8240 = vmul.f32 %v8198, %v8232
        %v8241 = vmul.f32 %v8200, %v8233
        %v8242 = vmul.f32 %v8202, %v8234
        %v8244 = vsel %vm3841, %v8235, 0
        %8246 = vmatpush.msra.mxu0 0.0
        %8247 = vmatpush.msra.mxu0 0.0
        %8248 = vmatpush.msra.mxu0 0.0
        %8249 = vmatpush.msra.mxu0 0.0
        %8250 = vmatpush.msra.mxu0 0.0
        %8251 = vmatpush.msra.mxu0 0.0
        %8252 = vmatpush.msra.mxu0 0.0
        %8253 = vmatpush.msra.mxu0 0.0
        %8254 = vmatpush.msra.mxu0 0.0
        %8255 = vmatpush.msra.mxu0 0.0
        %8256 = vmatpush.msra.mxu0 0.0
        %8257 = vmatpush.msra.mxu0 0.0
        %8258 = vmatpush.msra.mxu0 0.0
        %8259 = vmatpush.msra.mxu0 0.0
        %8260 = vmatpush.msra.mxu0 %v7792
        %8261 = vmatpush.msra.mxu0 %v7790
        %8262 = vmatmul.f32.gmra.mxu0 %v8244
        %v8263 = vpop.f32.mrf.mxu0
        %v8264 = vadd.f32 0.0, %v8263
        %8265 = vdwg.mxu0
        %v8267 = vsel %vm3841, %v8236, 0
        %8269 = vmatpush.msra.mxu0 0.0
        %8270 = vmatpush.msra.mxu0 0.0
        %8271 = vmatpush.msra.mxu0 0.0
        %8272 = vmatpush.msra.mxu0 0.0
        %8273 = vmatpush.msra.mxu0 0.0
        %8274 = vmatpush.msra.mxu0 0.0
        %8275 = vmatpush.msra.mxu0 0.0
        %8276 = vmatpush.msra.mxu0 0.0
        %8277 = vmatpush.msra.mxu0 0.0
        %8278 = vmatpush.msra.mxu0 0.0
        %8279 = vmatpush.msra.mxu0 0.0
        %8280 = vmatpush.msra.mxu0 0.0
        %8281 = vmatpush.msra.mxu0 0.0
        %8282 = vmatpush.msra.mxu0 0.0
        %8283 = vmatpush.msra.mxu0 %v7904
        %8284 = vmatpush.msra.mxu0 %v7902
        %8285 = vmatmul.f32.gmra.mxu0 %v8267
        %v8286 = vpop.f32.mrf.mxu0
        %v8287 = vadd.f32 0.0, %v8286
        %8288 = vdwg.mxu0
        %v8290 = vsel %vm3841, %v8237, 0
        %8292 = vmatpush.msra.mxu0 0.0
        %8293 = vmatpush.msra.mxu0 0.0
        %8294 = vmatpush.msra.mxu0 0.0
        %8295 = vmatpush.msra.mxu0 0.0
        %8296 = vmatpush.msra.mxu0 0.0
        %8297 = vmatpush.msra.mxu0 0.0
        %8298 = vmatpush.msra.mxu0 0.0
        %8299 = vmatpush.msra.mxu0 0.0
        %8300 = vmatpush.msra.mxu0 0.0
        %8301 = vmatpush.msra.mxu0 0.0
        %8302 = vmatpush.msra.mxu0 0.0
        %8303 = vmatpush.msra.mxu0 0.0
        %8304 = vmatpush.msra.mxu0 0.0
        %8305 = vmatpush.msra.mxu0 0.0
        %8306 = vmatpush.msra.mxu0 %v7910
        %8307 = vmatpush.msra.mxu0 %v7908
        %8308 = vmatmul.f32.gmra.mxu0 %v8290
        %v8309 = vpop.f32.mrf.mxu0
        %v8310 = vadd.f32 0.0, %v8309
        %8311 = vdwg.mxu0
        %v8313 = vsel %vm3841, %v8238, 0
        %8315 = vmatpush.msra.mxu0 0.0
        %8316 = vmatpush.msra.mxu0 0.0
        %8317 = vmatpush.msra.mxu0 0.0
        %8318 = vmatpush.msra.mxu0 0.0
        %8319 = vmatpush.msra.mxu0 0.0
        %8320 = vmatpush.msra.mxu0 0.0
        %8321 = vmatpush.msra.mxu0 0.0
        %8322 = vmatpush.msra.mxu0 0.0
        %8323 = vmatpush.msra.mxu0 0.0
        %8324 = vmatpush.msra.mxu0 0.0
        %8325 = vmatpush.msra.mxu0 0.0
        %8326 = vmatpush.msra.mxu0 0.0
        %8327 = vmatpush.msra.mxu0 0.0
        %8328 = vmatpush.msra.mxu0 0.0
        %8329 = vmatpush.msra.mxu0 %v7916
        %8330 = vmatpush.msra.mxu0 %v7914
        %8331 = vmatmul.f32.gmra.mxu0 %v8313
        %v8332 = vpop.f32.mrf.mxu0
        %v8333 = vadd.f32 0.0, %v8332
        %8334 = vdwg.mxu0
        %v8336 = vsel %vm3841, %v8239, 0
        %8338 = vmatpush.msra.mxu0 0.0
        %8339 = vmatpush.msra.mxu0 0.0
        %8340 = vmatpush.msra.mxu0 0.0
        %8341 = vmatpush.msra.mxu0 0.0
        %8342 = vmatpush.msra.mxu0 0.0
        %8343 = vmatpush.msra.mxu0 0.0
        %8344 = vmatpush.msra.mxu0 0.0
        %8345 = vmatpush.msra.mxu0 0.0
        %8346 = vmatpush.msra.mxu0 0.0
        %8347 = vmatpush.msra.mxu0 0.0
        %8348 = vmatpush.msra.mxu0 0.0
        %8349 = vmatpush.msra.mxu0 0.0
        %8350 = vmatpush.msra.mxu0 0.0
        %8351 = vmatpush.msra.mxu0 0.0
        %8352 = vmatpush.msra.mxu0 %v7820
        %8353 = vmatpush.msra.mxu0 %v7818
        %8354 = vmatmul.f32.gmra.mxu0 %v8336
        %v8355 = vpop.f32.mrf.mxu0
        %v8356 = vadd.f32 0.0, %v8355
        %8357 = vdwg.mxu0
        %v8359 = vsel %vm3841, %v8240, 0
        %8361 = vmatpush.msra.mxu0 0.0
        %8362 = vmatpush.msra.mxu0 0.0
        %8363 = vmatpush.msra.mxu0 0.0
        %8364 = vmatpush.msra.mxu0 0.0
        %8365 = vmatpush.msra.mxu0 0.0
        %8366 = vmatpush.msra.mxu0 0.0
        %8367 = vmatpush.msra.mxu0 0.0
        %8368 = vmatpush.msra.mxu0 0.0
        %8369 = vmatpush.msra.mxu0 0.0
        %8370 = vmatpush.msra.mxu0 0.0
        %8371 = vmatpush.msra.mxu0 0.0
        %8372 = vmatpush.msra.mxu0 0.0
        %8373 = vmatpush.msra.mxu0 0.0
        %8374 = vmatpush.msra.mxu0 0.0
        %8375 = vmatpush.msra.mxu0 %v7924
        %8376 = vmatpush.msra.mxu0 %v7922
        %8377 = vmatmul.f32.gmra.mxu0 %v8359
        %v8378 = vpop.f32.mrf.mxu0
        %v8379 = vadd.f32 0.0, %v8378
        %8380 = vdwg.mxu0
        %v8382 = vsel %vm3841, %v8241, 0
        %8384 = vmatpush.msra.mxu0 0.0
        %8385 = vmatpush.msra.mxu0 0.0
        %8386 = vmatpush.msra.mxu0 0.0
        %8387 = vmatpush.msra.mxu0 0.0
        %8388 = vmatpush.msra.mxu0 0.0
        %8389 = vmatpush.msra.mxu0 0.0
        %8390 = vmatpush.msra.mxu0 0.0
        %8391 = vmatpush.msra.mxu0 0.0
        %8392 = vmatpush.msra.mxu0 0.0
        %8393 = vmatpush.msra.mxu0 0.0
        %8394 = vmatpush.msra.mxu0 0.0
        %8395 = vmatpush.msra.mxu0 0.0
        %8396 = vmatpush.msra.mxu0 0.0
        %8397 = vmatpush.msra.mxu0 0.0
        %8398 = vmatpush.msra.mxu0 %v7930
        %8399 = vmatpush.msra.mxu0 %v7928
        %8400 = vmatmul.f32.gmra.mxu0 %v8382
        %v8401 = vpop.f32.mrf.mxu0
        %v8402 = vadd.f32 0.0, %v8401
        %8403 = vdwg.mxu0
        %v8405 = vsel %vm3841, %v8242, 0
        %8407 = vmatpush.msra.mxu0 0.0
        %8408 = vmatpush.msra.mxu0 0.0
        %8409 = vmatpush.msra.mxu0 0.0
        %8410 = vmatpush.msra.mxu0 0.0
        %8411 = vmatpush.msra.mxu0 0.0
        %8412 = vmatpush.msra.mxu0 0.0
        %8413 = vmatpush.msra.mxu0 0.0
        %8414 = vmatpush.msra.mxu0 0.0
        %8415 = vmatpush.msra.mxu0 0.0
        %8416 = vmatpush.msra.mxu0 0.0
        %8417 = vmatpush.msra.mxu0 0.0
        %8418 = vmatpush.msra.mxu0 0.0
        %8419 = vmatpush.msra.mxu0 0.0
        %8420 = vmatpush.msra.mxu0 0.0
        %8421 = vmatpush.msra.mxu0 %v7936
        %8422 = vmatpush.msra.mxu0 %v7934
        %8423 = vmatmul.f32.gmra.mxu0 %v8405
        %v8424 = vpop.f32.mrf.mxu0
        %v8425 = vadd.f32 0.0, %v8424
        %8426 = vdwg.mxu0
        %8428 = vrot.lane.b32.xlu0 %v8287, 32
        %v8429 = vpop.permute.xlu0 %8428
        %8432 = vrot.lane.b32.xlu0 %v8310, 64
        %v8433 = vpop.permute.xlu0 %8432
        %8436 = vrot.lane.b32.xlu0 %v8333, 96
        %v8437 = vpop.permute.xlu0 %8436
        %8440 = vrot.lane.b32.xlu0 %v8379, 32
        %v8441 = vpop.permute.xlu0 %8440
        %8444 = vrot.lane.b32.xlu0 %v8402, 64
        %v8445 = vpop.permute.xlu0 %8444
        %8448 = vrot.lane.b32.xlu0 %v8425, 96
        %v8449 = vpop.permute.xlu0 %8448
        %v8451 = vsel %vm1974, %v8264, %v8429
        %v8452 = vsel %vm2483, %v8451, %v8433
        %v8453 = vsel %vm2485, %v8452, %v8437
        %v8454 = vsel %vm1974, %v8356, %v8441
        %v8455 = vsel %vm2483, %v8454, %v8445
        %v8456 = vsel %vm2485, %v8455, %v8449
        %v8457 = vpack.c.bf16 %v8453, %v8453
        %v8458 = vpack.c.bf16 %v8456, %v8456
        %v8460 = vperm.slane %v7856, 0
        %v8461 = vperm.slane %v7856, 1
        %v8496 = vunpack.c.l.b16 %v7823
        %v8497 = vunpack.c.h.b16 %v7823
        %v8498 = vunpack.c.l.b16 %v7824
        %v8499 = vunpack.c.h.b16 %v7824
        %v8500 = vunpack.c.l.b16 %v7825
        %v8501 = vunpack.c.h.b16 %v7825
        %v8502 = vunpack.c.l.b16 %v7826
        %v8503 = vunpack.c.h.b16 %v7826
        %v8504 = vunpack.c.l.b16 %v7827
        %v8505 = vunpack.c.h.b16 %v7827
        %v8506 = vunpack.c.l.b16 %v7828
        %v8507 = vunpack.c.h.b16 %v7828
        %v8508 = vunpack.c.l.b16 %v7829
        %v8509 = vunpack.c.h.b16 %v7829
        %v8510 = vunpack.c.l.b16 %v7830
        %v8511 = vunpack.c.h.b16 %v7830
        %v8512 = vunpack.c.l.b16 %v7831
        %v8513 = vunpack.c.h.b16 %v7831
        %v8514 = vunpack.c.l.b16 %v7832
        %v8515 = vunpack.c.h.b16 %v7832
        %v8516 = vunpack.c.l.b16 %v7833
        %v8517 = vunpack.c.h.b16 %v7833
        %v8518 = vunpack.c.l.b16 %v7834
        %v8519 = vunpack.c.h.b16 %v7834
        %v8520 = vunpack.c.l.b16 %v7835
        %v8521 = vunpack.c.h.b16 %v7835
        %v8522 = vunpack.c.l.b16 %v7836
        %v8523 = vunpack.c.h.b16 %v7836
        %v8524 = vunpack.c.l.b16 %v7837
        %v8525 = vunpack.c.h.b16 %v7837
        %v8526 = vunpack.c.l.b16 %v7838
        %v8527 = vunpack.c.h.b16 %v7838
        %v8528 = vunpack.c.l.b16 %v7839
        %v8529 = vunpack.c.h.b16 %v7839
        %v8530 = vunpack.c.l.b16 %v7840
        %v8531 = vunpack.c.h.b16 %v7840
        %v8532 = vunpack.c.l.b16 %v7841
        %v8533 = vunpack.c.h.b16 %v7841
        %v8534 = vunpack.c.l.b16 %v7842
        %v8535 = vunpack.c.h.b16 %v7842
        %v8536 = vunpack.c.l.b16 %v7843
        %v8537 = vunpack.c.h.b16 %v7843
        %v8538 = vunpack.c.l.b16 %v7844
        %v8539 = vunpack.c.h.b16 %v7844
        %v8540 = vunpack.c.l.b16 %v7845
        %v8541 = vunpack.c.h.b16 %v7845
        %v8542 = vunpack.c.l.b16 %v7846
        %v8543 = vunpack.c.h.b16 %v7846
        %v8544 = vunpack.c.l.b16 %v7847
        %v8545 = vunpack.c.h.b16 %v7847
        %v8546 = vunpack.c.l.b16 %v7848
        %v8547 = vunpack.c.h.b16 %v7848
        %v8548 = vunpack.c.l.b16 %v7849
        %v8549 = vunpack.c.h.b16 %v7849
        %v8550 = vunpack.c.l.b16 %v7850
        %v8551 = vunpack.c.h.b16 %v7850
        %v8552 = vunpack.c.l.b16 %v7851
        %v8553 = vunpack.c.h.b16 %v7851
        %v8554 = vunpack.c.l.b16 %v7852
        %v8555 = vunpack.c.h.b16 %v7852
        %v8556 = vunpack.c.l.b16 %v7853
        %v8557 = vunpack.c.h.b16 %v7853
        %v8558 = vunpack.c.l.b16 %v7854
        %v8559 = vunpack.c.h.b16 %v7854
        %v8560 = vpack.c.b16 %v8498, %v8496
        %v8561 = vpack.c.b16 %v8499, %v8497
        %v8562 = vpack.c.b16 %v8502, %v8500
        %v8563 = vpack.c.b16 %v8503, %v8501
        %v8564 = vpack.c.b16 %v8506, %v8504
        %v8565 = vpack.c.b16 %v8507, %v8505
        %v8566 = vpack.c.b16 %v8510, %v8508
        %v8567 = vpack.c.b16 %v8511, %v8509
        %v8568 = vpack.c.b16 %v8514, %v8512
        %v8569 = vpack.c.b16 %v8515, %v8513
        %v8570 = vpack.c.b16 %v8518, %v8516
        %v8571 = vpack.c.b16 %v8519, %v8517
        %v8572 = vpack.c.b16 %v8522, %v8520
        %v8573 = vpack.c.b16 %v8523, %v8521
        %v8574 = vpack.c.b16 %v8526, %v8524
        %v8575 = vpack.c.b16 %v8527, %v8525
        %v8576 = vpack.c.b16 %v8530, %v8528
        %v8577 = vpack.c.b16 %v8531, %v8529
        %v8578 = vpack.c.b16 %v8534, %v8532
        %v8579 = vpack.c.b16 %v8535, %v8533
        %v8580 = vpack.c.b16 %v8538, %v8536
        %v8581 = vpack.c.b16 %v8539, %v8537
        %v8582 = vpack.c.b16 %v8542, %v8540
        %v8583 = vpack.c.b16 %v8543, %v8541
        %v8584 = vpack.c.b16 %v8546, %v8544
        %v8585 = vpack.c.b16 %v8547, %v8545
        %v8586 = vpack.c.b16 %v8550, %v8548
        %v8587 = vpack.c.b16 %v8551, %v8549
        %v8588 = vpack.c.b16 %v8554, %v8552
        %v8589 = vpack.c.b16 %v8555, %v8553
        %v8590 = vpack.c.b16 %v8558, %v8556
        %v8591 = vpack.c.b16 %v8559, %v8557
        %8624 = vmatpush.bf16.msra.mxu0 %v8574
        %8625 = vmatpush.bf16.msra.mxu0 %v8572
        %8626 = vmatpush.bf16.msra.mxu0 %v8570
        %8627 = vmatpush.bf16.msra.mxu0 %v8568
        %8628 = vmatpush.bf16.msra.mxu0 %v8566
        %8629 = vmatpush.bf16.msra.mxu0 %v8564
        %8630 = vmatpush.bf16.msra.mxu0 %v8562
        %8631 = vmatpush.bf16.msra.mxu0 %v8560
        %8632 = vmatmul.bf16.gmra.mxu0 %v8457
        %v8633 = vpop.f32.mrf.mxu0
        %v8634 = vadd.f32 %v8460, %v8633
        %v8635 = vpop.f32.mrf.mxu0
        %8636 = vdwg.mxu0
        %8637 = vmatpush.bf16.msra.mxu0 %v8590
        %8638 = vmatpush.bf16.msra.mxu0 %v8588
        %8639 = vmatpush.bf16.msra.mxu0 %v8586
        %8640 = vmatpush.bf16.msra.mxu0 %v8584
        %8641 = vmatpush.bf16.msra.mxu0 %v8582
        %8642 = vmatpush.bf16.msra.mxu0 %v8580
        %8643 = vmatpush.bf16.msra.mxu0 %v8578
        %8644 = vmatpush.bf16.msra.mxu0 %v8576
        %8645 = vmatmul.bf16.gmra.mxu0 %v8458
        %v8646 = vpop.f32.mrf.mxu0
        %v8647 = vadd.f32 %v8634, %v8646
        %v8648 = vpop.f32.mrf.mxu0
        %8649 = vdwg.mxu0
        %8650 = vmatpush.bf16.msra.mxu0 %v8575
        %8651 = vmatpush.bf16.msra.mxu0 %v8573
        %8652 = vmatpush.bf16.msra.mxu0 %v8571
        %8653 = vmatpush.bf16.msra.mxu0 %v8569
        %8654 = vmatpush.bf16.msra.mxu0 %v8567
        %8655 = vmatpush.bf16.msra.mxu0 %v8565
        %8656 = vmatpush.bf16.msra.mxu0 %v8563
        %8657 = vmatpush.bf16.msra.mxu0 %v8561
        %8658 = vmatmul.bf16.gmra.mxu0 %v8457
        %v8659 = vpop.f32.mrf.mxu0
        %v8660 = vadd.f32 %v8461, %v8659
        %v8661 = vpop.f32.mrf.mxu0
        %8662 = vdwg.mxu0
        %8663 = vmatpush.bf16.msra.mxu0 %v8591
        %8664 = vmatpush.bf16.msra.mxu0 %v8589
        %8665 = vmatpush.bf16.msra.mxu0 %v8587
        %8666 = vmatpush.bf16.msra.mxu0 %v8585
        %8667 = vmatpush.bf16.msra.mxu0 %v8583
        %8668 = vmatpush.bf16.msra.mxu0 %v8581
        %8669 = vmatpush.bf16.msra.mxu0 %v8579
        %8670 = vmatpush.bf16.msra.mxu0 %v8577
        %8671 = vmatmul.bf16.gmra.mxu0 %v8458
        %v8672 = vpop.f32.mrf.mxu0
        %v8673 = vadd.f32 %v8660, %v8672
        %v8674 = vpop.f32.mrf.mxu0
        %8675 = vdwg.mxu0
        %v8676 = vadd.f32 %v7015, %v8647
        %v8677 = vadd.f32 %v7016, %v8673
        %s8678 = scalar_lea.vmem [#allocation20], 2
        %v8679 = vld [vmem:[%s8678] sm:$0x3]
        %s8680 = scalar_lea.vmem [#allocation22], 2
        %v8681 = vld [vmem:[%s8680] sm:$0x3]
        %v8682 = vadd.f32 %v8676, %v8677
        %8683 = vadd.xlane.f32.xlu0 %v8682
        %v8684 = vpop.xlane.xlu0 %8683
        %v8685 = vmul.f32 %v8684, %v1108
        %v8686 = vsub.f32 %v8676, %v8685
        %v8687 = vsub.f32 %v8677, %v8685
        %v8688 = vmul.f32 %v8686, %v8686
        %v8689 = vmul.f32 %v8687, %v8687
        %v8690 = vadd.f32 %v8688, %v8689
        %8691 = vadd.xlane.f32.xlu0 %v8690
        %v8692 = vpop.xlane.xlu0 %8691
        %v8693 = vmul.f32 %v8692, %v1108
        %v8694 = vadd.f32 %v8693, 1e-05
        %v8695 = vrsqrt.pop %v8694
        %v8696 = vmul.f32 %v8695, %v8694
        %v8697 = vmul.f32 %v8696, %v8695
        %v8698 = vmul.f32 0.5, %v8697
        %v8699 = vsub.f32 1.5, %v8698
        %v8700 = vmul.f32 %v8695, %v8699
        %vm8701 = vweird.f32 %v8694
        %vm8702 = vweird.f32 %v8695
        %vm8703 = vmor %vm8701, %vm8702
        %v8704 = vsel %vm8703, %v8695, %v8700
        %v8705 = vmul.f32 %v8686, %v8704
        %v8706 = vmul.f32 %v8687, %v8704
        %v8708 = vperm.slane %v8679, 0
        %v8709 = vperm.slane %v8679, 1
        %v8712 = vmul.f32 %v8705, %v8708
        %v8713 = vmul.f32 %v8706, %v8709
        %v8715 = vperm.slane %v8681, 0
        %v8716 = vperm.slane %v8681, 1
        %v8719 = vadd.f32 %v8712, %v8715
        %v8720 = vadd.f32 %v8713, %v8716
        %v8721 = vpack.c.bf16 %v8719, %v8719
        %v8722 = vpack.c.bf16 %v8720, %v8720
        %s8723 = scalar_lea.vmem [#allocation23], 512
        %v8724 = vld [vmem:[%s8723] sm:$0xff]
        %v8725 = vld [vmem:[%s8723 + $0x8] sm:$0xff]
        %v8726 = vld [vmem:[%s8723 + $0x10] sm:$0xff]
        %v8727 = vld [vmem:[%s8723 + $0x18] sm:$0xff]
        %v8728 = vld [vmem:[%s8723 + $0x20] sm:$0xff]
        %v8729 = vld [vmem:[%s8723 + $0x28] sm:$0xff]
        %v8730 = vld [vmem:[%s8723 + $0x30] sm:$0xff]
        %v8731 = vld [vmem:[%s8723 + $0x38] sm:$0xff]
        %v8732 = vld [vmem:[%s8723 + $0x40] sm:$0xff]
        %v8733 = vld [vmem:[%s8723 + $0x48] sm:$0xff]
        %v8734 = vld [vmem:[%s8723 + $0x50] sm:$0xff]
        %v8735 = vld [vmem:[%s8723 + $0x58] sm:$0xff]
        %v8736 = vld [vmem:[%s8723 + $0x60] sm:$0xff]
        %v8737 = vld [vmem:[%s8723 + $0x68] sm:$0xff]
        %v8738 = vld [vmem:[%s8723 + $0x70] sm:$0xff]
        %v8739 = vld [vmem:[%s8723 + $0x78] sm:$0xff]
        %v8740 = vld [vmem:[%s8723 + $0x80] sm:$0xff]
        %v8741 = vld [vmem:[%s8723 + $0x88] sm:$0xff]
        %v8742 = vld [vmem:[%s8723 + $0x90] sm:$0xff]
        %v8743 = vld [vmem:[%s8723 + $0x98] sm:$0xff]
        %v8744 = vld [vmem:[%s8723 + $0xa0] sm:$0xff]
        %v8745 = vld [vmem:[%s8723 + $0xa8] sm:$0xff]
        %v8746 = vld [vmem:[%s8723 + $0xb0] sm:$0xff]
        %v8747 = vld [vmem:[%s8723 + $0xb8] sm:$0xff]
        %v8748 = vld [vmem:[%s8723 + $0xc0] sm:$0xff]
        %v8749 = vld [vmem:[%s8723 + $0xc8] sm:$0xff]
        %v8750 = vld [vmem:[%s8723 + $0xd0] sm:$0xff]
        %v8751 = vld [vmem:[%s8723 + $0xd8] sm:$0xff]
        %v8752 = vld [vmem:[%s8723 + $0xe0] sm:$0xff]
        %v8753 = vld [vmem:[%s8723 + $0xe8] sm:$0xff]
        %v8754 = vld [vmem:[%s8723 + $0xf0] sm:$0xff]
        %v8755 = vld [vmem:[%s8723 + $0xf8] sm:$0xff]
        %v8756 = vld [vmem:[%s8723 + $0x100] sm:$0xff]
        %v8757 = vld [vmem:[%s8723 + $0x108] sm:$0xff]
        %v8758 = vld [vmem:[%s8723 + $0x110] sm:$0xff]
        %v8759 = vld [vmem:[%s8723 + $0x118] sm:$0xff]
        %v8760 = vld [vmem:[%s8723 + $0x120] sm:$0xff]
        %v8761 = vld [vmem:[%s8723 + $0x128] sm:$0xff]
        %v8762 = vld [vmem:[%s8723 + $0x130] sm:$0xff]
        %v8763 = vld [vmem:[%s8723 + $0x138] sm:$0xff]
        %v8764 = vld [vmem:[%s8723 + $0x140] sm:$0xff]
        %v8765 = vld [vmem:[%s8723 + $0x148] sm:$0xff]
        %v8766 = vld [vmem:[%s8723 + $0x150] sm:$0xff]
        %v8767 = vld [vmem:[%s8723 + $0x158] sm:$0xff]
        %v8768 = vld [vmem:[%s8723 + $0x160] sm:$0xff]
        %v8769 = vld [vmem:[%s8723 + $0x168] sm:$0xff]
        %v8770 = vld [vmem:[%s8723 + $0x170] sm:$0xff]
        %v8771 = vld [vmem:[%s8723 + $0x178] sm:$0xff]
        %v8772 = vld [vmem:[%s8723 + $0x180] sm:$0xff]
        %v8773 = vld [vmem:[%s8723 + $0x188] sm:$0xff]
        %v8774 = vld [vmem:[%s8723 + $0x190] sm:$0xff]
        %v8775 = vld [vmem:[%s8723 + $0x198] sm:$0xff]
        %v8776 = vld [vmem:[%s8723 + $0x1a0] sm:$0xff]
        %v8777 = vld [vmem:[%s8723 + $0x1a8] sm:$0xff]
        %v8778 = vld [vmem:[%s8723 + $0x1b0] sm:$0xff]
        %v8779 = vld [vmem:[%s8723 + $0x1b8] sm:$0xff]
        %v8780 = vld [vmem:[%s8723 + $0x1c0] sm:$0xff]
        %v8781 = vld [vmem:[%s8723 + $0x1c8] sm:$0xff]
        %v8782 = vld [vmem:[%s8723 + $0x1d0] sm:$0xff]
        %v8783 = vld [vmem:[%s8723 + $0x1d8] sm:$0xff]
        %v8784 = vld [vmem:[%s8723 + $0x1e0] sm:$0xff]
        %v8785 = vld [vmem:[%s8723 + $0x1e8] sm:$0xff]
        %v8786 = vld [vmem:[%s8723 + $0x1f0] sm:$0xff]
        %v8787 = vld [vmem:[%s8723 + $0x1f8] sm:$0xff]
        %s8788 = scalar_lea.vmem %s20, 4
        %v8789 = vld [vmem:[%s8788] sm:$0xf]
        %v8791 = vperm.slane %v8789, 0
        %v8792 = vperm.slane %v8789, 1
        %v8793 = vperm.slane %v8789, 2
        %v8794 = vperm.slane %v8789, 3
        %v8863 = vunpack.c.l.b16 %v8724
        %v8864 = vunpack.c.h.b16 %v8724
        %v8865 = vunpack.c.l.b16 %v8725
        %v8866 = vunpack.c.h.b16 %v8725
        %v8867 = vunpack.c.l.b16 %v8726
        %v8868 = vunpack.c.h.b16 %v8726
        %v8869 = vunpack.c.l.b16 %v8727
        %v8870 = vunpack.c.h.b16 %v8727
        %v8871 = vunpack.c.l.b16 %v8728
        %v8872 = vunpack.c.h.b16 %v8728
        %v8873 = vunpack.c.l.b16 %v8729
        %v8874 = vunpack.c.h.b16 %v8729
        %v8875 = vunpack.c.l.b16 %v8730
        %v8876 = vunpack.c.h.b16 %v8730
        %v8877 = vunpack.c.l.b16 %v8731
        %v8878 = vunpack.c.h.b16 %v8731
        %v8879 = vunpack.c.l.b16 %v8732
        %v8880 = vunpack.c.h.b16 %v8732
        %v8881 = vunpack.c.l.b16 %v8733
        %v8882 = vunpack.c.h.b16 %v8733
        %v8883 = vunpack.c.l.b16 %v8734
        %v8884 = vunpack.c.h.b16 %v8734
        %v8885 = vunpack.c.l.b16 %v8735
        %v8886 = vunpack.c.h.b16 %v8735
        %v8887 = vunpack.c.l.b16 %v8736
        %v8888 = vunpack.c.h.b16 %v8736
        %v8889 = vunpack.c.l.b16 %v8737
        %v8890 = vunpack.c.h.b16 %v8737
        %v8891 = vunpack.c.l.b16 %v8738
        %v8892 = vunpack.c.h.b16 %v8738
        %v8893 = vunpack.c.l.b16 %v8739
        %v8894 = vunpack.c.h.b16 %v8739
        %v8895 = vunpack.c.l.b16 %v8740
        %v8896 = vunpack.c.h.b16 %v8740
        %v8897 = vunpack.c.l.b16 %v8741
        %v8898 = vunpack.c.h.b16 %v8741
        %v8899 = vunpack.c.l.b16 %v8742
        %v8900 = vunpack.c.h.b16 %v8742
        %v8901 = vunpack.c.l.b16 %v8743
        %v8902 = vunpack.c.h.b16 %v8743
        %v8903 = vunpack.c.l.b16 %v8744
        %v8904 = vunpack.c.h.b16 %v8744
        %v8905 = vunpack.c.l.b16 %v8745
        %v8906 = vunpack.c.h.b16 %v8745
        %v8907 = vunpack.c.l.b16 %v8746
        %v8908 = vunpack.c.h.b16 %v8746
        %v8909 = vunpack.c.l.b16 %v8747
        %v8910 = vunpack.c.h.b16 %v8747
        %v8911 = vunpack.c.l.b16 %v8748
        %v8912 = vunpack.c.h.b16 %v8748
        %v8913 = vunpack.c.l.b16 %v8749
        %v8914 = vunpack.c.h.b16 %v8749
        %v8915 = vunpack.c.l.b16 %v8750
        %v8916 = vunpack.c.h.b16 %v8750
        %v8917 = vunpack.c.l.b16 %v8751
        %v8918 = vunpack.c.h.b16 %v8751
        %v8919 = vunpack.c.l.b16 %v8752
        %v8920 = vunpack.c.h.b16 %v8752
        %v8921 = vunpack.c.l.b16 %v8753
        %v8922 = vunpack.c.h.b16 %v8753
        %v8923 = vunpack.c.l.b16 %v8754
        %v8924 = vunpack.c.h.b16 %v8754
        %v8925 = vunpack.c.l.b16 %v8755
        %v8926 = vunpack.c.h.b16 %v8755
        %v8927 = vunpack.c.l.b16 %v8756
        %v8928 = vunpack.c.h.b16 %v8756
        %v8929 = vunpack.c.l.b16 %v8757
        %v8930 = vunpack.c.h.b16 %v8757
        %v8931 = vunpack.c.l.b16 %v8758
        %v8932 = vunpack.c.h.b16 %v8758
        %v8933 = vunpack.c.l.b16 %v8759
        %v8934 = vunpack.c.h.b16 %v8759
        %v8935 = vunpack.c.l.b16 %v8760
        %v8936 = vunpack.c.h.b16 %v8760
        %v8937 = vunpack.c.l.b16 %v8761
        %v8938 = vunpack.c.h.b16 %v8761
        %v8939 = vunpack.c.l.b16 %v8762
        %v8940 = vunpack.c.h.b16 %v8762
        %v8941 = vunpack.c.l.b16 %v8763
        %v8942 = vunpack.c.h.b16 %v8763
        %v8943 = vunpack.c.l.b16 %v8764
        %v8944 = vunpack.c.h.b16 %v8764
        %v8945 = vunpack.c.l.b16 %v8765
        %v8946 = vunpack.c.h.b16 %v8765
        %v8947 = vunpack.c.l.b16 %v8766
        %v8948 = vunpack.c.h.b16 %v8766
        %v8949 = vunpack.c.l.b16 %v8767
        %v8950 = vunpack.c.h.b16 %v8767
        %v8951 = vunpack.c.l.b16 %v8768
        %v8952 = vunpack.c.h.b16 %v8768
        %v8953 = vunpack.c.l.b16 %v8769
        %v8954 = vunpack.c.h.b16 %v8769
        %v8955 = vunpack.c.l.b16 %v8770
        %v8956 = vunpack.c.h.b16 %v8770
        %v8957 = vunpack.c.l.b16 %v8771
        %v8958 = vunpack.c.h.b16 %v8771
        %v8959 = vunpack.c.l.b16 %v8772
        %v8960 = vunpack.c.h.b16 %v8772
        %v8961 = vunpack.c.l.b16 %v8773
        %v8962 = vunpack.c.h.b16 %v8773
        %v8963 = vunpack.c.l.b16 %v8774
        %v8964 = vunpack.c.h.b16 %v8774
        %v8965 = vunpack.c.l.b16 %v8775
        %v8966 = vunpack.c.h.b16 %v8775
        %v8967 = vunpack.c.l.b16 %v8776
        %v8968 = vunpack.c.h.b16 %v8776
        %v8969 = vunpack.c.l.b16 %v8777
        %v8970 = vunpack.c.h.b16 %v8777
        %v8971 = vunpack.c.l.b16 %v8778
        %v8972 = vunpack.c.h.b16 %v8778
        %v8973 = vunpack.c.l.b16 %v8779
        %v8974 = vunpack.c.h.b16 %v8779
        %v8975 = vunpack.c.l.b16 %v8780
        %v8976 = vunpack.c.h.b16 %v8780
        %v8977 = vunpack.c.l.b16 %v8781
        %v8978 = vunpack.c.h.b16 %v8781
        %v8979 = vunpack.c.l.b16 %v8782
        %v8980 = vunpack.c.h.b16 %v8782
        %v8981 = vunpack.c.l.b16 %v8783
        %v8982 = vunpack.c.h.b16 %v8783
        %v8983 = vunpack.c.l.b16 %v8784
        %v8984 = vunpack.c.h.b16 %v8784
        %v8985 = vunpack.c.l.b16 %v8785
        %v8986 = vunpack.c.h.b16 %v8785
        %v8987 = vunpack.c.l.b16 %v8786
        %v8988 = vunpack.c.h.b16 %v8786
        %v8989 = vunpack.c.l.b16 %v8787
        %v8990 = vunpack.c.h.b16 %v8787
        %v8991 = vpack.c.b16 %v8867, %v8863
        %v8992 = vpack.c.b16 %v8868, %v8864
        %v8993 = vpack.c.b16 %v8869, %v8865
        %v8994 = vpack.c.b16 %v8870, %v8866
        %v8995 = vpack.c.b16 %v8875, %v8871
        %v8996 = vpack.c.b16 %v8876, %v8872
        %v8997 = vpack.c.b16 %v8877, %v8873
        %v8998 = vpack.c.b16 %v8878, %v8874
        %v8999 = vpack.c.b16 %v8883, %v8879
        %v9000 = vpack.c.b16 %v8884, %v8880
        %v9001 = vpack.c.b16 %v8885, %v8881
        %v9002 = vpack.c.b16 %v8886, %v8882
        %v9003 = vpack.c.b16 %v8891, %v8887
        %v9004 = vpack.c.b16 %v8892, %v8888
        %v9005 = vpack.c.b16 %v8893, %v8889
        %v9006 = vpack.c.b16 %v8894, %v8890
        %v9007 = vpack.c.b16 %v8899, %v8895
        %v9008 = vpack.c.b16 %v8900, %v8896
        %v9009 = vpack.c.b16 %v8901, %v8897
        %v9010 = vpack.c.b16 %v8902, %v8898
        %v9011 = vpack.c.b16 %v8907, %v8903
        %v9012 = vpack.c.b16 %v8908, %v8904
        %v9013 = vpack.c.b16 %v8909, %v8905
        %v9014 = vpack.c.b16 %v8910, %v8906
        %v9015 = vpack.c.b16 %v8915, %v8911
        %v9016 = vpack.c.b16 %v8916, %v8912
        %v9017 = vpack.c.b16 %v8917, %v8913
        %v9018 = vpack.c.b16 %v8918, %v8914
        %v9019 = vpack.c.b16 %v8923, %v8919
        %v9020 = vpack.c.b16 %v8924, %v8920
        %v9021 = vpack.c.b16 %v8925, %v8921
        %v9022 = vpack.c.b16 %v8926, %v8922
        %v9023 = vpack.c.b16 %v8931, %v8927
        %v9024 = vpack.c.b16 %v8932, %v8928
        %v9025 = vpack.c.b16 %v8933, %v8929
        %v9026 = vpack.c.b16 %v8934, %v8930
        %v9027 = vpack.c.b16 %v8939, %v8935
        %v9028 = vpack.c.b16 %v8940, %v8936
        %v9029 = vpack.c.b16 %v8941, %v8937
        %v9030 = vpack.c.b16 %v8942, %v8938
        %v9031 = vpack.c.b16 %v8947, %v8943
        %v9032 = vpack.c.b16 %v8948, %v8944
        %v9033 = vpack.c.b16 %v8949, %v8945
        %v9034 = vpack.c.b16 %v8950, %v8946
        %v9035 = vpack.c.b16 %v8955, %v8951
        %v9036 = vpack.c.b16 %v8956, %v8952
        %v9037 = vpack.c.b16 %v8957, %v8953
        %v9038 = vpack.c.b16 %v8958, %v8954
        %v9039 = vpack.c.b16 %v8963, %v8959
        %v9040 = vpack.c.b16 %v8964, %v8960
        %v9041 = vpack.c.b16 %v8965, %v8961
        %v9042 = vpack.c.b16 %v8966, %v8962
        %v9043 = vpack.c.b16 %v8971, %v8967
        %v9044 = vpack.c.b16 %v8972, %v8968
        %v9045 = vpack.c.b16 %v8973, %v8969
        %v9046 = vpack.c.b16 %v8974, %v8970
        %v9047 = vpack.c.b16 %v8979, %v8975
        %v9048 = vpack.c.b16 %v8980, %v8976
        %v9049 = vpack.c.b16 %v8981, %v8977
        %v9050 = vpack.c.b16 %v8982, %v8978
        %v9051 = vpack.c.b16 %v8987, %v8983
        %v9052 = vpack.c.b16 %v8988, %v8984
        %v9053 = vpack.c.b16 %v8989, %v8985
        %v9054 = vpack.c.b16 %v8990, %v8986
        %9119 = vmatpush.bf16.msra.mxu0 %v9019
        %9120 = vmatpush.bf16.msra.mxu0 %v9015
        %9121 = vmatpush.bf16.msra.mxu0 %v9011
        %9122 = vmatpush.bf16.msra.mxu0 %v9007
        %9123 = vmatpush.bf16.msra.mxu0 %v9003
        %9124 = vmatpush.bf16.msra.mxu0 %v8999
        %9125 = vmatpush.bf16.msra.mxu0 %v8995
        %9126 = vmatpush.bf16.msra.mxu0 %v8991
        %9127 = vmatmul.bf16.gmra.mxu0 %v8721
        %v9128 = vpop.f32.mrf.mxu0
        %v9129 = vadd.f32 %v8791, %v9128
        %v9130 = vpop.f32.mrf.mxu0
        %9131 = vdwg.mxu0
        %9132 = vmatpush.bf16.msra.mxu0 %v9051
        %9133 = vmatpush.bf16.msra.mxu0 %v9047
        %9134 = vmatpush.bf16.msra.mxu0 %v9043
        %9135 = vmatpush.bf16.msra.mxu0 %v9039
        %9136 = vmatpush.bf16.msra.mxu0 %v9035
        %9137 = vmatpush.bf16.msra.mxu0 %v9031
        %9138 = vmatpush.bf16.msra.mxu0 %v9027
        %9139 = vmatpush.bf16.msra.mxu0 %v9023
        %9140 = vmatmul.bf16.gmra.mxu0 %v8722
        %v9141 = vpop.f32.mrf.mxu0
        %v9142 = vadd.f32 %v9129, %v9141
        %v9143 = vpop.f32.mrf.mxu0
        %9144 = vdwg.mxu0
        %9145 = vmatpush.bf16.msra.mxu0 %v9020
        %9146 = vmatpush.bf16.msra.mxu0 %v9016
        %9147 = vmatpush.bf16.msra.mxu0 %v9012
        %9148 = vmatpush.bf16.msra.mxu0 %v9008
        %9149 = vmatpush.bf16.msra.mxu0 %v9004
        %9150 = vmatpush.bf16.msra.mxu0 %v9000
        %9151 = vmatpush.bf16.msra.mxu0 %v8996
        %9152 = vmatpush.bf16.msra.mxu0 %v8992
        %9153 = vmatmul.bf16.gmra.mxu0 %v8721
        %v9154 = vpop.f32.mrf.mxu0
        %v9155 = vadd.f32 %v8792, %v9154
        %v9156 = vpop.f32.mrf.mxu0
        %9157 = vdwg.mxu0
        %9158 = vmatpush.bf16.msra.mxu0 %v9052
        %9159 = vmatpush.bf16.msra.mxu0 %v9048
        %9160 = vmatpush.bf16.msra.mxu0 %v9044
        %9161 = vmatpush.bf16.msra.mxu0 %v9040
        %9162 = vmatpush.bf16.msra.mxu0 %v9036
        %9163 = vmatpush.bf16.msra.mxu0 %v9032
        %9164 = vmatpush.bf16.msra.mxu0 %v9028
        %9165 = vmatpush.bf16.msra.mxu0 %v9024
        %9166 = vmatmul.bf16.gmra.mxu0 %v8722
        %v9167 = vpop.f32.mrf.mxu0
        %v9168 = vadd.f32 %v9155, %v9167
        %v9169 = vpop.f32.mrf.mxu0
        %9170 = vdwg.mxu0
        %9171 = vmatpush.bf16.msra.mxu0 %v9021
        %9172 = vmatpush.bf16.msra.mxu0 %v9017
        %9173 = vmatpush.bf16.msra.mxu0 %v9013
        %9174 = vmatpush.bf16.msra.mxu0 %v9009
        %9175 = vmatpush.bf16.msra.mxu0 %v9005
        %9176 = vmatpush.bf16.msra.mxu0 %v9001
        %9177 = vmatpush.bf16.msra.mxu0 %v8997
        %9178 = vmatpush.bf16.msra.mxu0 %v8993
        %9179 = vmatmul.bf16.gmra.mxu0 %v8721
        %v9180 = vpop.f32.mrf.mxu0
        %v9181 = vadd.f32 %v8793, %v9180
        %v9182 = vpop.f32.mrf.mxu0
        %9183 = vdwg.mxu0
        %9184 = vmatpush.bf16.msra.mxu0 %v9053
        %9185 = vmatpush.bf16.msra.mxu0 %v9049
        %9186 = vmatpush.bf16.msra.mxu0 %v9045
        %9187 = vmatpush.bf16.msra.mxu0 %v9041
        %9188 = vmatpush.bf16.msra.mxu0 %v9037
        %9189 = vmatpush.bf16.msra.mxu0 %v9033
        %9190 = vmatpush.bf16.msra.mxu0 %v9029
        %9191 = vmatpush.bf16.msra.mxu0 %v9025
        %9192 = vmatmul.bf16.gmra.mxu0 %v8722
        %v9193 = vpop.f32.mrf.mxu0
        %v9194 = vadd.f32 %v9181, %v9193
        %v9195 = vpop.f32.mrf.mxu0
        %9196 = vdwg.mxu0
        %9197 = vmatpush.bf16.msra.mxu0 %v9022
        %9198 = vmatpush.bf16.msra.mxu0 %v9018
        %9199 = vmatpush.bf16.msra.mxu0 %v9014
        %9200 = vmatpush.bf16.msra.mxu0 %v9010
        %9201 = vmatpush.bf16.msra.mxu0 %v9006
        %9202 = vmatpush.bf16.msra.mxu0 %v9002
        %9203 = vmatpush.bf16.msra.mxu0 %v8998
        %9204 = vmatpush.bf16.msra.mxu0 %v8994
        %9205 = vmatmul.bf16.gmra.mxu0 %v8721
        %v9206 = vpop.f32.mrf.mxu0
        %v9207 = vadd.f32 %v8794, %v9206
        %v9208 = vpop.f32.mrf.mxu0
        %9209 = vdwg.mxu0
        %9210 = vmatpush.bf16.msra.mxu0 %v9054
        %9211 = vmatpush.bf16.msra.mxu0 %v9050
        %9212 = vmatpush.bf16.msra.mxu0 %v9046
        %9213 = vmatpush.bf16.msra.mxu0 %v9042
        %9214 = vmatpush.bf16.msra.mxu0 %v9038
        %9215 = vmatpush.bf16.msra.mxu0 %v9034
        %9216 = vmatpush.bf16.msra.mxu0 %v9030
        %9217 = vmatpush.bf16.msra.mxu0 %v9026
        %9218 = vmatmul.bf16.gmra.mxu0 %v8722
        %v9219 = vpop.f32.mrf.mxu0
        %v9220 = vadd.f32 %v9207, %v9219
        %v9221 = vpop.f32.mrf.mxu0
        %9222 = vdwg.mxu0
        %v9223 = vmax.f32 %v9142, 0.0
        %v9224 = vmax.f32 %v9168, 0.0
        %v9225 = vmax.f32 %v9194, 0.0
        %v9226 = vmax.f32 %v9220, 0.0
        %v9227 = vpack.c.bf16 %v9223, %v9223
        %v9228 = vpack.c.bf16 %v9224, %v9224
        %v9229 = vpack.c.bf16 %v9225, %v9225
        %v9230 = vpack.c.bf16 %v9226, %v9226
        %s9231 = scalar_lea.vmem [#allocation25], 512
        %v9232 = vld [vmem:[%s9231] sm:$0xff]
        %v9233 = vld [vmem:[%s9231 + $0x8] sm:$0xff]
        %v9234 = vld [vmem:[%s9231 + $0x10] sm:$0xff]
        %v9235 = vld [vmem:[%s9231 + $0x18] sm:$0xff]
        %v9236 = vld [vmem:[%s9231 + $0x20] sm:$0xff]
        %v9237 = vld [vmem:[%s9231 + $0x28] sm:$0xff]
        %v9238 = vld [vmem:[%s9231 + $0x30] sm:$0xff]
        %v9239 = vld [vmem:[%s9231 + $0x38] sm:$0xff]
        %v9240 = vld [vmem:[%s9231 + $0x40] sm:$0xff]
        %v9241 = vld [vmem:[%s9231 + $0x48] sm:$0xff]
        %v9242 = vld [vmem:[%s9231 + $0x50] sm:$0xff]
        %v9243 = vld [vmem:[%s9231 + $0x58] sm:$0xff]
        %v9244 = vld [vmem:[%s9231 + $0x60] sm:$0xff]
        %v9245 = vld [vmem:[%s9231 + $0x68] sm:$0xff]
        %v9246 = vld [vmem:[%s9231 + $0x70] sm:$0xff]
        %v9247 = vld [vmem:[%s9231 + $0x78] sm:$0xff]
        %v9248 = vld [vmem:[%s9231 + $0x80] sm:$0xff]
        %v9249 = vld [vmem:[%s9231 + $0x88] sm:$0xff]
        %v9250 = vld [vmem:[%s9231 + $0x90] sm:$0xff]
        %v9251 = vld [vmem:[%s9231 + $0x98] sm:$0xff]
        %v9252 = vld [vmem:[%s9231 + $0xa0] sm:$0xff]
        %v9253 = vld [vmem:[%s9231 + $0xa8] sm:$0xff]
        %v9254 = vld [vmem:[%s9231 + $0xb0] sm:$0xff]
        %v9255 = vld [vmem:[%s9231 + $0xb8] sm:$0xff]
        %v9256 = vld [vmem:[%s9231 + $0xc0] sm:$0xff]
        %v9257 = vld [vmem:[%s9231 + $0xc8] sm:$0xff]
        %v9258 = vld [vmem:[%s9231 + $0xd0] sm:$0xff]
        %v9259 = vld [vmem:[%s9231 + $0xd8] sm:$0xff]
        %v9260 = vld [vmem:[%s9231 + $0xe0] sm:$0xff]
        %v9261 = vld [vmem:[%s9231 + $0xe8] sm:$0xff]
        %v9262 = vld [vmem:[%s9231 + $0xf0] sm:$0xff]
        %v9263 = vld [vmem:[%s9231 + $0xf8] sm:$0xff]
        %v9264 = vld [vmem:[%s9231 + $0x100] sm:$0xff]
        %v9265 = vld [vmem:[%s9231 + $0x108] sm:$0xff]
        %v9266 = vld [vmem:[%s9231 + $0x110] sm:$0xff]
        %v9267 = vld [vmem:[%s9231 + $0x118] sm:$0xff]
        %v9268 = vld [vmem:[%s9231 + $0x120] sm:$0xff]
        %v9269 = vld [vmem:[%s9231 + $0x128] sm:$0xff]
        %v9270 = vld [vmem:[%s9231 + $0x130] sm:$0xff]
        %v9271 = vld [vmem:[%s9231 + $0x138] sm:$0xff]
        %v9272 = vld [vmem:[%s9231 + $0x140] sm:$0xff]
        %v9273 = vld [vmem:[%s9231 + $0x148] sm:$0xff]
        %v9274 = vld [vmem:[%s9231 + $0x150] sm:$0xff]
        %v9275 = vld [vmem:[%s9231 + $0x158] sm:$0xff]
        %v9276 = vld [vmem:[%s9231 + $0x160] sm:$0xff]
        %v9277 = vld [vmem:[%s9231 + $0x168] sm:$0xff]
        %v9278 = vld [vmem:[%s9231 + $0x170] sm:$0xff]
        %v9279 = vld [vmem:[%s9231 + $0x178] sm:$0xff]
        %v9280 = vld [vmem:[%s9231 + $0x180] sm:$0xff]
        %v9281 = vld [vmem:[%s9231 + $0x188] sm:$0xff]
        %v9282 = vld [vmem:[%s9231 + $0x190] sm:$0xff]
        %v9283 = vld [vmem:[%s9231 + $0x198] sm:$0xff]
        %v9284 = vld [vmem:[%s9231 + $0x1a0] sm:$0xff]
        %v9285 = vld [vmem:[%s9231 + $0x1a8] sm:$0xff]
        %v9286 = vld [vmem:[%s9231 + $0x1b0] sm:$0xff]
        %v9287 = vld [vmem:[%s9231 + $0x1b8] sm:$0xff]
        %v9288 = vld [vmem:[%s9231 + $0x1c0] sm:$0xff]
        %v9289 = vld [vmem:[%s9231 + $0x1c8] sm:$0xff]
        %v9290 = vld [vmem:[%s9231 + $0x1d0] sm:$0xff]
        %v9291 = vld [vmem:[%s9231 + $0x1d8] sm:$0xff]
        %v9292 = vld [vmem:[%s9231 + $0x1e0] sm:$0xff]
        %v9293 = vld [vmem:[%s9231 + $0x1e8] sm:$0xff]
        %v9294 = vld [vmem:[%s9231 + $0x1f0] sm:$0xff]
        %v9295 = vld [vmem:[%s9231 + $0x1f8] sm:$0xff]
        %s9296 = scalar_lea.vmem [#allocation26], 2
        %v9297 = vld [vmem:[%s9296] sm:$0x3]
        %v9299 = vperm.slane %v9297, 0
        %v9300 = vperm.slane %v9297, 1
        %v9367 = vunpack.c.l.b16 %v9232
        %v9368 = vunpack.c.h.b16 %v9232
        %v9369 = vunpack.c.l.b16 %v9233
        %v9370 = vunpack.c.h.b16 %v9233
        %v9371 = vunpack.c.l.b16 %v9234
        %v9372 = vunpack.c.h.b16 %v9234
        %v9373 = vunpack.c.l.b16 %v9235
        %v9374 = vunpack.c.h.b16 %v9235
        %v9375 = vunpack.c.l.b16 %v9236
        %v9376 = vunpack.c.h.b16 %v9236
        %v9377 = vunpack.c.l.b16 %v9237
        %v9378 = vunpack.c.h.b16 %v9237
        %v9379 = vunpack.c.l.b16 %v9238
        %v9380 = vunpack.c.h.b16 %v9238
        %v9381 = vunpack.c.l.b16 %v9239
        %v9382 = vunpack.c.h.b16 %v9239
        %v9383 = vunpack.c.l.b16 %v9240
        %v9384 = vunpack.c.h.b16 %v9240
        %v9385 = vunpack.c.l.b16 %v9241
        %v9386 = vunpack.c.h.b16 %v9241
        %v9387 = vunpack.c.l.b16 %v9242
        %v9388 = vunpack.c.h.b16 %v9242
        %v9389 = vunpack.c.l.b16 %v9243
        %v9390 = vunpack.c.h.b16 %v9243
        %v9391 = vunpack.c.l.b16 %v9244
        %v9392 = vunpack.c.h.b16 %v9244
        %v9393 = vunpack.c.l.b16 %v9245
        %v9394 = vunpack.c.h.b16 %v9245
        %v9395 = vunpack.c.l.b16 %v9246
        %v9396 = vunpack.c.h.b16 %v9246
        %v9397 = vunpack.c.l.b16 %v9247
        %v9398 = vunpack.c.h.b16 %v9247
        %v9399 = vunpack.c.l.b16 %v9248
        %v9400 = vunpack.c.h.b16 %v9248
        %v9401 = vunpack.c.l.b16 %v9249
        %v9402 = vunpack.c.h.b16 %v9249
        %v9403 = vunpack.c.l.b16 %v9250
        %v9404 = vunpack.c.h.b16 %v9250
        %v9405 = vunpack.c.l.b16 %v9251
        %v9406 = vunpack.c.h.b16 %v9251
        %v9407 = vunpack.c.l.b16 %v9252
        %v9408 = vunpack.c.h.b16 %v9252
        %v9409 = vunpack.c.l.b16 %v9253
        %v9410 = vunpack.c.h.b16 %v9253
        %v9411 = vunpack.c.l.b16 %v9254
        %v9412 = vunpack.c.h.b16 %v9254
        %v9413 = vunpack.c.l.b16 %v9255
        %v9414 = vunpack.c.h.b16 %v9255
        %v9415 = vunpack.c.l.b16 %v9256
        %v9416 = vunpack.c.h.b16 %v9256
        %v9417 = vunpack.c.l.b16 %v9257
        %v9418 = vunpack.c.h.b16 %v9257
        %v9419 = vunpack.c.l.b16 %v9258
        %v9420 = vunpack.c.h.b16 %v9258
        %v9421 = vunpack.c.l.b16 %v9259
        %v9422 = vunpack.c.h.b16 %v9259
        %v9423 = vunpack.c.l.b16 %v9260
        %v9424 = vunpack.c.h.b16 %v9260
        %v9425 = vunpack.c.l.b16 %v9261
        %v9426 = vunpack.c.h.b16 %v9261
        %v9427 = vunpack.c.l.b16 %v9262
        %v9428 = vunpack.c.h.b16 %v9262
        %v9429 = vunpack.c.l.b16 %v9263
        %v9430 = vunpack.c.h.b16 %v9263
        %v9431 = vunpack.c.l.b16 %v9264
        %v9432 = vunpack.c.h.b16 %v9264
        %v9433 = vunpack.c.l.b16 %v9265
        %v9434 = vunpack.c.h.b16 %v9265
        %v9435 = vunpack.c.l.b16 %v9266
        %v9436 = vunpack.c.h.b16 %v9266
        %v9437 = vunpack.c.l.b16 %v9267
        %v9438 = vunpack.c.h.b16 %v9267
        %v9439 = vunpack.c.l.b16 %v9268
        %v9440 = vunpack.c.h.b16 %v9268
        %v9441 = vunpack.c.l.b16 %v9269
        %v9442 = vunpack.c.h.b16 %v9269
        %v9443 = vunpack.c.l.b16 %v9270
        %v9444 = vunpack.c.h.b16 %v9270
        %v9445 = vunpack.c.l.b16 %v9271
        %v9446 = vunpack.c.h.b16 %v9271
        %v9447 = vunpack.c.l.b16 %v9272
        %v9448 = vunpack.c.h.b16 %v9272
        %v9449 = vunpack.c.l.b16 %v9273
        %v9450 = vunpack.c.h.b16 %v9273
        %v9451 = vunpack.c.l.b16 %v9274
        %v9452 = vunpack.c.h.b16 %v9274
        %v9453 = vunpack.c.l.b16 %v9275
        %v9454 = vunpack.c.h.b16 %v9275
        %v9455 = vunpack.c.l.b16 %v9276
        %v9456 = vunpack.c.h.b16 %v9276
        %v9457 = vunpack.c.l.b16 %v9277
        %v9458 = vunpack.c.h.b16 %v9277
        %v9459 = vunpack.c.l.b16 %v9278
        %v9460 = vunpack.c.h.b16 %v9278
        %v9461 = vunpack.c.l.b16 %v9279
        %v9462 = vunpack.c.h.b16 %v9279
        %v9463 = vunpack.c.l.b16 %v9280
        %v9464 = vunpack.c.h.b16 %v9280
        %v9465 = vunpack.c.l.b16 %v9281
        %v9466 = vunpack.c.h.b16 %v9281
        %v9467 = vunpack.c.l.b16 %v9282
        %v9468 = vunpack.c.h.b16 %v9282
        %v9469 = vunpack.c.l.b16 %v9283
        %v9470 = vunpack.c.h.b16 %v9283
        %v9471 = vunpack.c.l.b16 %v9284
        %v9472 = vunpack.c.h.b16 %v9284
        %v9473 = vunpack.c.l.b16 %v9285
        %v9474 = vunpack.c.h.b16 %v9285
        %v9475 = vunpack.c.l.b16 %v9286
        %v9476 = vunpack.c.h.b16 %v9286
        %v9477 = vunpack.c.l.b16 %v9287
        %v9478 = vunpack.c.h.b16 %v9287
        %v9479 = vunpack.c.l.b16 %v9288
        %v9480 = vunpack.c.h.b16 %v9288
        %v9481 = vunpack.c.l.b16 %v9289
        %v9482 = vunpack.c.h.b16 %v9289
        %v9483 = vunpack.c.l.b16 %v9290
        %v9484 = vunpack.c.h.b16 %v9290
        %v9485 = vunpack.c.l.b16 %v9291
        %v9486 = vunpack.c.h.b16 %v9291
        %v9487 = vunpack.c.l.b16 %v9292
        %v9488 = vunpack.c.h.b16 %v9292
        %v9489 = vunpack.c.l.b16 %v9293
        %v9490 = vunpack.c.h.b16 %v9293
        %v9491 = vunpack.c.l.b16 %v9294
        %v9492 = vunpack.c.h.b16 %v9294
        %v9493 = vunpack.c.l.b16 %v9295
        %v9494 = vunpack.c.h.b16 %v9295
        %v9495 = vpack.c.b16 %v9369, %v9367
        %v9496 = vpack.c.b16 %v9370, %v9368
        %v9497 = vpack.c.b16 %v9373, %v9371
        %v9498 = vpack.c.b16 %v9374, %v9372
        %v9499 = vpack.c.b16 %v9377, %v9375
        %v9500 = vpack.c.b16 %v9378, %v9376
        %v9501 = vpack.c.b16 %v9381, %v9379
        %v9502 = vpack.c.b16 %v9382, %v9380
        %v9503 = vpack.c.b16 %v9385, %v9383
        %v9504 = vpack.c.b16 %v9386, %v9384
        %v9505 = vpack.c.b16 %v9389, %v9387
        %v9506 = vpack.c.b16 %v9390, %v9388
        %v9507 = vpack.c.b16 %v9393, %v9391
        %v9508 = vpack.c.b16 %v9394, %v9392
        %v9509 = vpack.c.b16 %v9397, %v9395
        %v9510 = vpack.c.b16 %v9398, %v9396
        %v9511 = vpack.c.b16 %v9401, %v9399
        %v9512 = vpack.c.b16 %v9402, %v9400
        %v9513 = vpack.c.b16 %v9405, %v9403
        %v9514 = vpack.c.b16 %v9406, %v9404
        %v9515 = vpack.c.b16 %v9409, %v9407
        %v9516 = vpack.c.b16 %v9410, %v9408
        %v9517 = vpack.c.b16 %v9413, %v9411
        %v9518 = vpack.c.b16 %v9414, %v9412
        %v9519 = vpack.c.b16 %v9417, %v9415
        %v9520 = vpack.c.b16 %v9418, %v9416
        %v9521 = vpack.c.b16 %v9421, %v9419
        %v9522 = vpack.c.b16 %v9422, %v9420
        %v9523 = vpack.c.b16 %v9425, %v9423
        %v9524 = vpack.c.b16 %v9426, %v9424
        %v9525 = vpack.c.b16 %v9429, %v9427
        %v9526 = vpack.c.b16 %v9430, %v9428
        %v9527 = vpack.c.b16 %v9433, %v9431
        %v9528 = vpack.c.b16 %v9434, %v9432
        %v9529 = vpack.c.b16 %v9437, %v9435
        %v9530 = vpack.c.b16 %v9438, %v9436
        %v9531 = vpack.c.b16 %v9441, %v9439
        %v9532 = vpack.c.b16 %v9442, %v9440
        %v9533 = vpack.c.b16 %v9445, %v9443
        %v9534 = vpack.c.b16 %v9446, %v9444
        %v9535 = vpack.c.b16 %v9449, %v9447
        %v9536 = vpack.c.b16 %v9450, %v9448
        %v9537 = vpack.c.b16 %v9453, %v9451
        %v9538 = vpack.c.b16 %v9454, %v9452
        %v9539 = vpack.c.b16 %v9457, %v9455
        %v9540 = vpack.c.b16 %v9458, %v9456
        %v9541 = vpack.c.b16 %v9461, %v9459
        %v9542 = vpack.c.b16 %v9462, %v9460
        %v9543 = vpack.c.b16 %v9465, %v9463
        %v9544 = vpack.c.b16 %v9466, %v9464
        %v9545 = vpack.c.b16 %v9469, %v9467
        %v9546 = vpack.c.b16 %v9470, %v9468
        %v9547 = vpack.c.b16 %v9473, %v9471
        %v9548 = vpack.c.b16 %v9474, %v9472
        %v9549 = vpack.c.b16 %v9477, %v9475
        %v9550 = vpack.c.b16 %v9478, %v9476
        %v9551 = vpack.c.b16 %v9481, %v9479
        %v9552 = vpack.c.b16 %v9482, %v9480
        %v9553 = vpack.c.b16 %v9485, %v9483
        %v9554 = vpack.c.b16 %v9486, %v9484
        %v9555 = vpack.c.b16 %v9489, %v9487
        %v9556 = vpack.c.b16 %v9490, %v9488
        %v9557 = vpack.c.b16 %v9493, %v9491
        %v9558 = vpack.c.b16 %v9494, %v9492
        %9623 = vmatpush.bf16.msra.mxu0 %v9509
        %9624 = vmatpush.bf16.msra.mxu0 %v9507
        %9625 = vmatpush.bf16.msra.mxu0 %v9505
        %9626 = vmatpush.bf16.msra.mxu0 %v9503
        %9627 = vmatpush.bf16.msra.mxu0 %v9501
        %9628 = vmatpush.bf16.msra.mxu0 %v9499
        %9629 = vmatpush.bf16.msra.mxu0 %v9497
        %9630 = vmatpush.bf16.msra.mxu0 %v9495
        %9631 = vmatmul.bf16.gmra.mxu0 %v9227
        %v9632 = vpop.f32.mrf.mxu0
        %v9633 = vadd.f32 %v9299, %v9632
        %v9634 = vpop.f32.mrf.mxu0
        %9635 = vdwg.mxu0
        %9636 = vmatpush.bf16.msra.mxu0 %v9525
        %9637 = vmatpush.bf16.msra.mxu0 %v9523
        %9638 = vmatpush.bf16.msra.mxu0 %v9521
        %9639 = vmatpush.bf16.msra.mxu0 %v9519
        %9640 = vmatpush.bf16.msra.mxu0 %v9517
        %9641 = vmatpush.bf16.msra.mxu0 %v9515
        %9642 = vmatpush.bf16.msra.mxu0 %v9513
        %9643 = vmatpush.bf16.msra.mxu0 %v9511
        %9644 = vmatmul.bf16.gmra.mxu0 %v9228
        %v9645 = vpop.f32.mrf.mxu0
        %v9646 = vadd.f32 %v9633, %v9645
        %v9647 = vpop.f32.mrf.mxu0
        %9648 = vdwg.mxu0
        %9649 = vmatpush.bf16.msra.mxu0 %v9541
        %9650 = vmatpush.bf16.msra.mxu0 %v9539
        %9651 = vmatpush.bf16.msra.mxu0 %v9537
        %9652 = vmatpush.bf16.msra.mxu0 %v9535
        %9653 = vmatpush.bf16.msra.mxu0 %v9533
        %9654 = vmatpush.bf16.msra.mxu0 %v9531
        %9655 = vmatpush.bf16.msra.mxu0 %v9529
        %9656 = vmatpush.bf16.msra.mxu0 %v9527
        %9657 = vmatmul.bf16.gmra.mxu0 %v9229
        %v9658 = vpop.f32.mrf.mxu0
        %v9659 = vadd.f32 %v9646, %v9658
        %v9660 = vpop.f32.mrf.mxu0
        %9661 = vdwg.mxu0
        %9662 = vmatpush.bf16.msra.mxu0 %v9557
        %9663 = vmatpush.bf16.msra.mxu0 %v9555
        %9664 = vmatpush.bf16.msra.mxu0 %v9553
        %9665 = vmatpush.bf16.msra.mxu0 %v9551
        %9666 = vmatpush.bf16.msra.mxu0 %v9549
        %9667 = vmatpush.bf16.msra.mxu0 %v9547
        %9668 = vmatpush.bf16.msra.mxu0 %v9545
        %9669 = vmatpush.bf16.msra.mxu0 %v9543
        %9670 = vmatmul.bf16.gmra.mxu0 %v9230
        %v9671 = vpop.f32.mrf.mxu0
        %v9672 = vadd.f32 %v9659, %v9671
        %v9673 = vpop.f32.mrf.mxu0
        %9674 = vdwg.mxu0
        %9675 = vmatpush.bf16.msra.mxu0 %v9510
        %9676 = vmatpush.bf16.msra.mxu0 %v9508
        %9677 = vmatpush.bf16.msra.mxu0 %v9506
        %9678 = vmatpush.bf16.msra.mxu0 %v9504
        %9679 = vmatpush.bf16.msra.mxu0 %v9502
        %9680 = vmatpush.bf16.msra.mxu0 %v9500
        %9681 = vmatpush.bf16.msra.mxu0 %v9498
        %9682 = vmatpush.bf16.msra.mxu0 %v9496
        %9683 = vmatmul.bf16.gmra.mxu0 %v9227
        %v9684 = vpop.f32.mrf.mxu0
        %v9685 = vadd.f32 %v9300, %v9684
        %v9686 = vpop.f32.mrf.mxu0
        %9687 = vdwg.mxu0
        %9688 = vmatpush.bf16.msra.mxu0 %v9526
        %9689 = vmatpush.bf16.msra.mxu0 %v9524
        %9690 = vmatpush.bf16.msra.mxu0 %v9522
        %9691 = vmatpush.bf16.msra.mxu0 %v9520
        %9692 = vmatpush.bf16.msra.mxu0 %v9518
        %9693 = vmatpush.bf16.msra.mxu0 %v9516
        %9694 = vmatpush.bf16.msra.mxu0 %v9514
        %9695 = vmatpush.bf16.msra.mxu0 %v9512
        %9696 = vmatmul.bf16.gmra.mxu0 %v9228
        %v9697 = vpop.f32.mrf.mxu0
        %v9698 = vadd.f32 %v9685, %v9697
        %v9699 = vpop.f32.mrf.mxu0
        %9700 = vdwg.mxu0
        %9701 = vmatpush.bf16.msra.mxu0 %v9542
        %9702 = vmatpush.bf16.msra.mxu0 %v9540
        %9703 = vmatpush.bf16.msra.mxu0 %v9538
        %9704 = vmatpush.bf16.msra.mxu0 %v9536
        %9705 = vmatpush.bf16.msra.mxu0 %v9534
        %9706 = vmatpush.bf16.msra.mxu0 %v9532
        %9707 = vmatpush.bf16.msra.mxu0 %v9530
        %9708 = vmatpush.bf16.msra.mxu0 %v9528
        %9709 = vmatmul.bf16.gmra.mxu0 %v9229
        %v9710 = vpop.f32.mrf.mxu0
        %v9711 = vadd.f32 %v9698, %v9710
        %v9712 = vpop.f32.mrf.mxu0
        %9713 = vdwg.mxu0
        %9714 = vmatpush.bf16.msra.mxu0 %v9558
        %9715 = vmatpush.bf16.msra.mxu0 %v9556
        %9716 = vmatpush.bf16.msra.mxu0 %v9554
        %9717 = vmatpush.bf16.msra.mxu0 %v9552
        %9718 = vmatpush.bf16.msra.mxu0 %v9550
        %9719 = vmatpush.bf16.msra.mxu0 %v9548
        %9720 = vmatpush.bf16.msra.mxu0 %v9546
        %9721 = vmatpush.bf16.msra.mxu0 %v9544
        %9722 = vmatmul.bf16.gmra.mxu0 %v9230
        %v9723 = vpop.f32.mrf.mxu0
        %v9724 = vadd.f32 %v9711, %v9723
        %v9725 = vpop.f32.mrf.mxu0
        %9726 = vdwg.mxu0
        %v9727 = vadd.f32 %v8676, %v9672
        %v9728 = vadd.f32 %v8677, %v9724
        %v9729 = vld [vmem:[#allocation28] sm:$0x3]
        %v9730 = vld [vmem:[#allocation29] sm:$0x3]
        %v9731 = vadd.f32 %v9727, %v9728
        %9732 = vadd.xlane.f32.xlu0 %v9731
        %v9733 = vpop.xlane.xlu0 %9732
        %v9734 = vmul.f32 %v9733, %v1108
        %v9735 = vsub.f32 %v9727, %v9734
        %v9736 = vsub.f32 %v9728, %v9734
        %v9737 = vmul.f32 %v9735, %v9735
        %v9738 = vmul.f32 %v9736, %v9736
        %v9739 = vadd.f32 %v9737, %v9738
        %9740 = vadd.xlane.f32.xlu0 %v9739
        %v9741 = vpop.xlane.xlu0 %9740
        %v9742 = vmul.f32 %v9741, %v1108
        %v9743 = vadd.f32 %v9742, 1e-05
        %v9744 = vrsqrt.pop %v9743
        %v9745 = vmul.f32 %v9744, %v9743
        %v9746 = vmul.f32 %v9745, %v9744
        %v9747 = vmul.f32 0.5, %v9746
        %v9748 = vsub.f32 1.5, %v9747
        %v9749 = vmul.f32 %v9744, %v9748
        %vm9750 = vweird.f32 %v9743
        %vm9751 = vweird.f32 %v9744
        %vm9752 = vmor %vm9750, %vm9751
        %v9753 = vsel %vm9752, %v9744, %v9749
        %v9754 = vmul.f32 %v9735, %v9753
        %v9755 = vmul.f32 %v9736, %v9753
        %v9757 = vperm.slane %v9729, 0
        %v9758 = vperm.slane %v9729, 1
        %v9761 = vmul.f32 %v9754, %v9757
        %v9762 = vmul.f32 %v9755, %v9758
        %v9764 = vperm.slane %v9730, 0
        %v9765 = vperm.slane %v9730, 1
        %v9768 = vadd.f32 %v9761, %v9764
        %v9769 = vadd.f32 %v9762, %v9765
        %9770 = vst [vmem:[%s1074] sm:$0xff] %v9768
        %9771 = vst [vmem:[%s1074 + $0x8] sm:$0xff] %v9769
        %s9772 = sand.u32 %s594, 1
        %s9773 = scalar_lea.sflag [#allocation4], %s9772
        %s9774 = sand.u32 %s594, 1
        %s9775 = smul.addr %s9774, 16
        %s9776 = scalar_lea.vmem [#allocation31], %s9775
        // Predicated region
        $region193: #{decoder_forward.1} parent=119 // pred_check
          %p9777 = pneg %p604
        $region194: #{decoder_forward.1} parent=119 // pred_check_branch
          %9779 = sbr.rel (%p9777) target = $region196
        $region195: #{decoder_forward.1} parent=119 // pred_region
          %9781 = vsyncadd %s9773, 0
          %s9782 = smul.addr %s51, 2
          %s9783 = smul.addr %s9782, 8
          %s9784 = scalar_lea.hbm %s25, %s9783
          %s9786 = sshll.u32 %s9776, 4
          %s9787 = int_to_ptr.vmem [resolvable:$true] %s9786
          %s9788 = sshll.u32 %s9784, 4
          %s9789 = int_to_ptr.hbm [resolvable:$true] %s9788
          %9791 = dma.vmem_to_hbm [thread:$0]  %s9787, 256, %s9789, %s9773
        $region196: #{decoder_forward.1} parent=119 // pred_fallthru
          _
      $region120: #{decoder_forward.1} parent=5 // pred_fallthru
        _
      %p9792 = scmp.le.s32.totalorder 2, %s46
      // Predicated region
      $region197: #{decoder_forward.1} parent=5 // pred_check
        %p9793 = pneg %p9792
      $region198: #{decoder_forward.1} parent=5 // pred_check_branch
        %9795 = sbr.rel (%p9793) target = $region200
      $region199: #{decoder_forward.1} parent=5 // pred_region
        %s9796 = ssub.s32 %s46, 2
        // Predicated region
        $region201: #{decoder_forward.1} parent=199 // pred_check
          %p9797 = pneg %p610
        $region202: #{decoder_forward.1} parent=199 // pred_check_branch
          %9799 = sbr.rel (%p9797) target = $region204
        $region203: #{decoder_forward.1} parent=199 // pred_region
          %s9800 = sand.u32 %s595, 1
          %s9801 = scalar_lea.sflag [#allocation4], %s9800
          %s9802 = sand.u32 %s595, 1
          %s9803 = smul.addr %s9802, 16
          %s9804 = scalar_lea.vmem [#allocation31], %s9803
          %9806 = dma.done %s9801, 256
        $region204: #{decoder_forward.1} parent=199 // pred_fallthru
          _
      $region200: #{decoder_forward.1} parent=5 // pred_fallthru
        _
    $region6: #{decoder_forward.1} parent=1 // loop_footer
      %s50 = sadd.s32 1, %s46
    $region7: #{decoder_forward.1} parent=1 // loop_footer_branch
      %45 = sbr.rel target = $region3
    $region8: #{decoder_forward.1} parent=1 // loop_exit
      _
    %9807 = vsyncpa [#allocation3], 1
    %s9808 = scalar_lea.sflag [#allocation3], 1
    %9809 = vsyncpa %s9808, 1
    %9810 = vsyncpa [#allocation6], 1
    %9811 = vsyncpa [#allocation9], 1
    %9812 = vsyncpa [#allocation12], 1
    %9813 = vsyncpa [#allocation15], 1
    %9814 = vsyncpa [#allocation18], 1
    %9815 = vsyncpa [#allocation21], 1
    %9816 = vsyncpa [#allocation24], 1
    %9817 = vsyncpa [#allocation27], 1
    %9818 = vsyncpa [#allocation30], 1
    %9819 = vsyncpa [#allocation4], 1
    %s9820 = scalar_lea.sflag [#allocation4], 1
    %9821 = vsyncpa %s9820, 1

</llo_original>
